<compile_context>
chip_gen: v6e
topology: v6e:2x2x1
jax: 0.10.0
libtpu: 0.0.40
codegen_flags: <defaults>
</compile_context>

<pallas_src>
import numpy as np

import jax
import jax.numpy as jnp
from jax.experimental import pallas as pl
from jax.experimental.pallas import tpu as pltpu


# --------------------------- static network dims ---------------------------
H_IN, W_IN = 28, 28       # MNIST input
W_PAD = 32                # input width padded for the conv1 contraction
KK = 5                    # conv kernel size
HO1, HP1 = 24, 12         # conv1 output rows (pre-pool / pooled)
HO2, HP2 = 8, 4           # conv2 output rows (pre-pool / pooled)
C1, C1P = 20, 32          # conv1 channels (true, lane-padded)
C2, C2P = 50, 64          # conv2 channels (true, lane-padded)
F1, F1P = 500, 512        # fc1 width (true, padded)
NCLS, NCLS_P = 10, 128    # classes (true, lane-padded output slab)

NPE1 = HP1 * C1P          # 384: conv1 (pooled col, chan) columns per width-parity
NPE2 = HP2 * C2P          # 256: conv2 (pooled col, chan) columns per width-parity
K1 = KK * W_PAD           # 160: conv1 contraction depth
K2 = KK * NPE1            # 1920: conv2 contraction depth
KFC1 = HP2 * NPE2         # 1024: fc1 contraction depth


# ------------------------------ Pallas kernel -------------------------------

def _mnistnet_kernel(x_ref, w1_ref, b1_ref, w2_ref, b2_ref, w3_ref, b3_ref,
                     w4_ref, b4_ref, o_ref, p1_ref):
    """Whole MnistNet forward for one batch block (tb images, height-major input)."""
    tb = x_ref.shape[1]
    f32, bf16 = jnp.float32, jnp.bfloat16

    # ---- conv1: one K=160 matmul; width pooling via parity column halves ----------
    xb = x_ref[...]                                             # (28, tb, 32) bf16
    lhs1 = jnp.concatenate([xb[ki:ki + HO1] for ki in range(KK)], axis=-1)
    lhs1 = lhs1.reshape(HO1 * tb, K1)                           # (24*tb, 160)
    acc1 = jnp.dot(lhs1, w1_ref[...], preferred_element_type=f32)   # (24*tb, 768)
    a1 = jnp.maximum(jnp.maximum(acc1[:, :NPE1], acc1[:, NPE1:]) + b1_ref[...], 0.0)
    a1 = a1.reshape(HO1, tb, NPE1)
    # height pooling: pairwise max over adjacent output-row slabs, dense bf16 stores
    for i in range(HP1):
        p1_ref[i, :, :] = jnp.maximum(a1[2 * i], a1[2 * i + 1]).astype(bf16)

    # ---- conv2: one K=1920 matmul; same fused pooling ------------------------------
    lhs2 = jnp.concatenate([p1_ref[ki:ki + HO2, :, :] for ki in range(KK)], axis=-1)
    lhs2 = lhs2.reshape(HO2 * tb, K2)                           # (8*tb, 1920) bf16
    acc2 = jnp.dot(lhs2, w2_ref[...], preferred_element_type=f32)   # (8*tb, 512)
    a2 = jnp.maximum(jnp.maximum(acc2[:, :NPE2], acc2[:, NPE2:]) + b2_ref[...], 0.0)
    a2 = a2.reshape(HO2, tb, NPE2)
    # height pooling + NCHW-compatible flatten: lane-concat of the pooled row slabs
    flat = jnp.concatenate(
        [jnp.maximum(a2[2 * i], a2[2 * i + 1]).astype(bf16) for i in range(HP2)],
        axis=-1)                                                # (tb, 1024) bf16

    # ---- fc1 + ReLU: one K=1024 matmul ---------------------------------------------
    h = jnp.dot(flat, w3_ref[...], preferred_element_type=f32)
    h = jnp.maximum(h + b3_ref[...], 0.0)

    # ---- fc2 + masked log_softmax over the 10 real classes -------------------------
    logits = jnp.dot(h.astype(bf16), w4_ref[...], preferred_element_type=f32)
    logits = logits + b4_ref[...]
    col = jax.lax.broadcasted_iota(jnp.int32, logits.shape, 1)
    valid = col < NCLS
    z = jnp.where(valid, logits, -1e30)
    m = jnp.max(z, axis=-1, keepdims=True)
    e = jnp.where(valid, jnp.exp(z - m), 0.0)
    lse = jnp.log(jnp.sum(e, axis=-1, keepdims=True))
    o_ref[...] = jnp.where(valid, (z - m) - lse, 0.0)


# ------------------------------- JAX wrapper --------------------------------

def _round_up(v, m):
    return (v + m - 1) // m * m


def _chip_config():
    """(max batch tile, vmem limit) per chip generation; conservative fallback."""
    try:
        info = pltpu.get_tpu_info()
        vmem = int(getattr(info, "vmem_capacity_bytes", 0) or 0)
    except Exception:
        vmem = 0
    if vmem >= 100 * 1024 * 1024:            # v5e / v6e: 128 MiB VMEM
        return 256, 96 * 1024 * 1024
    return 128, 48 * 1024 * 1024             # v7x (64 MiB) or unknown: safe everywhere


_MAX_BLOCK_N, _VMEM_LIMIT = _chip_config()


@jax.jit
def mnistnet_forward(prepared, x_nchw):
    """x_nchw: (N, 1, 28, 28) float32 -> log-probs (N, 10)."""
    n = x_nchw.shape[0]
    # shrink the tile for small batches so the "parallel" grid keeps both cores busy
    block_n = min(_MAX_BLOCK_N, max(8, _round_up((n + 1) // 2, 8)))
    n_pad = _round_up(n, block_n)
    grid = (n_pad // block_n,)

    x = x_nchw.reshape(n, H_IN, W_IN).astype(jnp.float32)
    x = jnp.pad(x, ((0, n_pad - n), (0, 0), (0, W_PAD - W_IN)))
    xt = jnp.transpose(x, (1, 0, 2)).astype(jnp.bfloat16)       # (28, n_pad, 32)

    macs_per_img = (HO1 * K1 * 2 * NPE1          # conv1
                    + HO2 * K2 * 2 * NPE2        # conv2
                    + KFC1 * F1P                 # fc1
                    + F1P * NCLS_P)              # fc2
    weight_bytes = sum(int(v.size) * v.dtype.itemsize for v in prepared.values())
    cost = pl.CostEstimate(
        flops=2 * macs_per_img * n_pad,
        transcendentals=n_pad * (NCLS_P + 1),
        bytes_accessed=int(xt.size) * 2 + n_pad * NCLS_P * 4 + weight_bytes,
    )

    out = pl.pallas_call(
        _mnistnet_kernel,
        out_shape=jax.ShapeDtypeStruct((n_pad, NCLS_P), jnp.float32),
        grid_spec=pltpu.PrefetchScalarGridSpec(
            num_scalar_prefetch=0,
            grid=grid,
            in_specs=[
                pl.BlockSpec((H_IN, block_n, W_PAD), lambda b: (0, b, 0)),  # x (h-major)
                pl.BlockSpec((K1, 2 * NPE1), lambda b: (0, 0)),             # conv1 band
                pl.BlockSpec((1, NPE1), lambda b: (0, 0)),                  # conv1 bias
                pl.BlockSpec((K2, 2 * NPE2), lambda b: (0, 0)),             # conv2 band
                pl.BlockSpec((1, NPE2), lambda b: (0, 0)),                  # conv2 bias
                pl.BlockSpec((KFC1, F1P), lambda b: (0, 0)),                # fc1 weight
                pl.BlockSpec((1, F1P), lambda b: (0, 0)),                   # fc1 bias
                pl.BlockSpec((F1P, NCLS_P), lambda b: (0, 0)),              # fc2 weight
                pl.BlockSpec((1, NCLS_P), lambda b: (0, 0)),                # fc2 bias
            ],
            out_specs=pl.BlockSpec((block_n, NCLS_P), lambda b: (b, 0)),
            scratch_shapes=[pltpu.VMEM((HP1, block_n, NPE1), jnp.bfloat16)],
        ),
        compiler_params=pltpu.CompilerParams(
            dimension_semantics=("parallel",),
            vmem_limit_bytes=_VMEM_LIMIT,
        ),
        cost_estimate=cost,
    )(xt, prepared["B1"], prepared["b1"], prepared["B2"], prepared["b2"],
      prepared["W3"], prepared["b3"], prepared["W4"], prepared["b4"])
    return out[:n, :NCLS]


# ---------------------- parameter init / preprocessing ----------------------

def init_params(key):
    """Deterministic synthetic params in PyTorch layouts, U(-1/sqrt(fan_in), +)."""
    ks = jax.random.split(key, 8)

    def u(k, shape, fan_in):
        bound = 1.0 / float(np.sqrt(fan_in))
        return jax.random.uniform(k, shape, jnp.float32, -bound, bound)

    return {
        "conv1_w": u(ks[0], (C1, 1, KK, KK), 25),
        "conv1_b": u(ks[1], (C1,), 25),
        "conv2_w": u(ks[2], (C2, C1, KK, KK), 500),
        "conv2_b": u(ks[3], (C2,), 500),
        "fc1_w":   u(ks[4], (F1, HP2 * HP2 * C2), 800),   # (out, in) like nn.Linear
        "fc1_b":   u(ks[5], (F1,), 800),
        "fc2_w":   u(ks[6], (NCLS, F1), 500),
        "fc2_b":   u(ks[7], (NCLS,), 500),
    }


def prepare_params(params):
    """One-time repack of PyTorch-layout params into the kernel's banded/padded form."""
    w1 = np.asarray(params["conv1_w"], np.float32)   # (20, 1, 5, 5)
    b1 = np.asarray(params["conv1_b"], np.float32)
    w2 = np.asarray(params["conv2_w"], np.float32)   # (50, 20, 5, 5)
    b2 = np.asarray(params["conv2_b"], np.float32)
    fw1 = np.asarray(params["fc1_w"], np.float32)    # (500, 800)
    fb1 = np.asarray(params["fc1_b"], np.float32)
    fw2 = np.asarray(params["fc2_w"], np.float32)    # (10, 500)
    fb2 = np.asarray(params["fc2_b"], np.float32)

    # conv1 band matrix, parity-merged along N: (160, 768)
    # B1[ki*32 + w, par*384 + j*32 + c] = w1[c, 0, ki, w - (2j + par)]
    B1 = np.zeros((K1, 2 * NPE1), np.float32)
    for ki in range(KK):
        for par in range(2):
            for j in range(HP1):
                for kj in range(KK):
                    w = 2 * j + par + kj
                    B1[ki * W_PAD + w,
                       par * NPE1 + j * C1P: par * NPE1 + j * C1P + C1] = w1[:, 0, ki, kj]
    b1t = np.zeros((1, NPE1), np.float32)
    for j in range(HP1):
        b1t[0, j * C1P: j * C1P + C1] = b1

    # conv2 band matrix, parity-merged along N: (1920, 512)
    # B2[ki*384 + wp*32 + ci, par*256 + j2*64 + co] = w2[co, ci, ki, wp - (2*j2 + par)]
    B2 = np.zeros((K2, 2 * NPE2), np.float32)
    for ki in range(KK):
        for par in range(2):
            for j2 in range(HP2):
                for kj in range(KK):
                    wp = 2 * j2 + par + kj
                    B2[ki * NPE1 + wp * C1P: ki * NPE1 + wp * C1P + C1,
                       par * NPE2 + j2 * C2P: par * NPE2 + j2 * C2P + C2] = w2[:, :, ki, kj].T
    b2t = np.zeros((1, NPE2), np.float32)
    for j2 in range(HP2):
        b2t[0, j2 * C2P: j2 * C2P + C2] = b2

    # fc1: absorbs PyTorch NCHW flatten (idx = c*16 + i*4 + j) and channel padding
    W3 = np.zeros((KFC1, F1P), np.float32)
    for i in range(HP2):
        for j in range(HP2):
            for c in range(C2):
                W3[i * NPE2 + j * C2P + c, :F1] = fw1[:, c * (HP2 * HP2) + i * HP2 + j]
    b3t = np.zeros((1, F1P), np.float32)
    b3t[0, :F1] = fb1

    # fc2, padded to a lane-dense 128-wide output
    W4 = np.zeros((F1P, NCLS_P), np.float32)
    W4[:F1, :NCLS] = fw2.T
    b4t = np.zeros((1, NCLS_P), np.float32)
    b4t[0, :NCLS] = fb2

    bf = jnp.bfloat16
    return {
        "B1": jnp.asarray(B1, bf), "b1": jnp.asarray(b1t),
        "B2": jnp.asarray(B2, bf), "b2": jnp.asarray(b2t),
        "W3": jnp.asarray(W3, bf), "b3": jnp.asarray(b3t),
        "W4": jnp.asarray(W4, bf), "b4": jnp.asarray(b4t),
    }


# --------------------------- pure-JAX reference -----------------------------

def mnistnet_reference(params, x_nchw):
    x = x_nchw.astype(jnp.float32)
    y = jax.lax.conv_general_dilated(x, params["conv1_w"], (1, 1), "VALID",
                                     dimension_numbers=("NCHW", "OIHW", "NCHW"))
    y = jax.nn.relu(y + params["conv1_b"][None, :, None, None])
    y = jax.lax.reduce_window(y, -jnp.inf, jax.lax.max, (1, 1, 2, 2), (1, 1, 2, 2), "VALID")
    y = jax.lax.conv_general_dilated(y, params["conv2_w"], (1, 1), "VALID",
                                     dimension_numbers=("NCHW", "OIHW", "NCHW"))
    y = jax.nn.relu(y + params["conv2_b"][None, :, None, None])
    y = jax.lax.reduce_window(y, -jnp.inf, jax.lax.max, (1, 1, 2, 2), (1, 1, 2, 2), "VALID")
    y = y.reshape(y.shape[0], -1)                                 # NCHW flatten (c, h, w)
    y = jax.nn.relu(y @ params["fc1_w"].T + params["fc1_b"])
    y = y @ params["fc2_w"].T + params["fc2_b"]
    return jax.nn.log_softmax(y, axis=-1)


# ----------------------------------- main ------------------------------------

if __name__ == "__main__":
    key = jax.random.PRNGKey(0)
    pkey, xkey = jax.random.split(key)
    params = init_params(pkey)
    prepared = prepare_params(params)

    # MNIST-shaped input (28x28 is required by the fixed 4*4*50 flatten).
    x = jax.random.normal(xkey, (2, 1, 28, 28), jnp.float32)

    logp = jax.block_until_ready(mnistnet_forward(prepared, x))
    ref = jax.block_until_ready(mnistnet_reference(params, x))

    assert logp.shape == (2, 10)
    assert bool(jnp.all(jnp.isfinite(logp)))
    row_sums = jnp.sum(jnp.exp(logp), axis=1)
    assert bool(jnp.all(jnp.abs(row_sums - 1.0) < 1e-4))
    max_err = float(jnp.max(jnp.abs(logp - ref)))
    assert max_err < 3e-2, f"mismatch vs reference: {max_err}"

    # Exercise a multi-step ("parallel") grid + the batch-padding path.
    x2 = jax.random.normal(jax.random.PRNGKey(1), (40, 1, 28, 28), jnp.float32)
    logp2 = jax.block_until_ready(mnistnet_forward(prepared, x2))
    ref2 = mnistnet_reference(params, x2)
    assert logp2.shape == (40, 10)
    assert bool(jnp.all(jnp.isfinite(logp2)))
    assert float(jnp.max(jnp.abs(logp2 - ref2))) < 3e-2

    print("KERNEL_OK")
</pallas_src>

<mosaic_0001>
module attributes {stable_mosaic.version = 11 : i64} {
  func.func @_mnistnet_kernel(%arg0: i32, %arg1: memref<28x8x32xbf16, #tpu.memory_space<vmem>>, %arg2: memref<160x768xbf16, #tpu.memory_space<vmem>>, %arg3: memref<1x384xf32, #tpu.memory_space<vmem>>, %arg4: memref<1920x512xbf16, #tpu.memory_space<vmem>>, %arg5: memref<1x256xf32, #tpu.memory_space<vmem>>, %arg6: memref<1024x512xbf16, #tpu.memory_space<vmem>>, %arg7: memref<1x512xf32, #tpu.memory_space<vmem>>, %arg8: memref<512x128xbf16, #tpu.memory_space<vmem>>, %arg9: memref<1x128xf32, #tpu.memory_space<vmem>>, %arg10: memref<8x128xf32, #tpu.memory_space<vmem>>, %arg11: memref<12x8x384xbf16, #tpu.memory_space<vmem>>) attributes {dimension_semantics = [#tpu.dimension_semantics<parallel>], iteration_bounds = array<i64: 1>, scalar_prefetch = 0 : i64, scratch_operands = 1 : i64, tpu.core_type = #tpu.core_type<tc>, window_params = [{transform_indices = @transform_0, window_bounds = array<i64: 28, 8, 32>}, {pipeline_mode = #tpu.pipeline_mode<synchronous>, transform_indices = @transform_1, window_bounds = array<i64: 160, 768>}, {pipeline_mode = #tpu.pipeline_mode<synchronous>, transform_indices = @transform_2, window_bounds = array<i64: 1, 384>}, {pipeline_mode = #tpu.pipeline_mode<synchronous>, transform_indices = @transform_3, window_bounds = array<i64: 1920, 512>}, {pipeline_mode = #tpu.pipeline_mode<synchronous>, transform_indices = @transform_4, window_bounds = array<i64: 1, 256>}, {pipeline_mode = #tpu.pipeline_mode<synchronous>, transform_indices = @transform_5, window_bounds = array<i64: 1024, 512>}, {pipeline_mode = #tpu.pipeline_mode<synchronous>, transform_indices = @transform_6, window_bounds = array<i64: 1, 512>}, {pipeline_mode = #tpu.pipeline_mode<synchronous>, transform_indices = @transform_7, window_bounds = array<i64: 512, 128>}, {pipeline_mode = #tpu.pipeline_mode<synchronous>, transform_indices = @transform_8, window_bounds = array<i64: 1, 128>}, {transform_indices = @transform_9, window_bounds = array<i64: 8, 128>}]} {
    %c0 = arith.constant 0 : index
    %c0_0 = arith.constant 0 : index
    %c0_1 = arith.constant 0 : index
    %0 = vector.load %arg1[%c0, %c0_0, %c0_1] : memref<28x8x32xbf16, #tpu.memory_space<vmem>>, vector<28x8x32xbf16>
    %1 = vector.extract_strided_slice %0 {offsets = [0, 0, 0], sizes = [24, 8, 32], strides = [1, 1, 1]} : vector<28x8x32xbf16> to vector<24x8x32xbf16>
    %2 = vector.extract_strided_slice %0 {offsets = [1, 0, 0], sizes = [24, 8, 32], strides = [1, 1, 1]} : vector<28x8x32xbf16> to vector<24x8x32xbf16>
    %3 = vector.extract_strided_slice %0 {offsets = [2, 0, 0], sizes = [24, 8, 32], strides = [1, 1, 1]} : vector<28x8x32xbf16> to vector<24x8x32xbf16>
    %4 = vector.extract_strided_slice %0 {offsets = [3, 0, 0], sizes = [24, 8, 32], strides = [1, 1, 1]} : vector<28x8x32xbf16> to vector<24x8x32xbf16>
    %5 = vector.extract_strided_slice %0 {offsets = [4, 0, 0], sizes = [24, 8, 32], strides = [1, 1, 1]} : vector<28x8x32xbf16> to vector<24x8x32xbf16>
    %6 = tpu.concatenate %1, %2, %3, %4, %5 in 2 : vector<24x8x32xbf16>, vector<24x8x32xbf16>, vector<24x8x32xbf16>, vector<24x8x32xbf16>, vector<24x8x32xbf16> -> vector<24x8x160xbf16>
    %7 = vector.shape_cast %6 : vector<24x8x160xbf16> to vector<192x160xbf16>
    %c0_2 = arith.constant 0 : index
    %c0_3 = arith.constant 0 : index
    %8 = vector.load %arg2[%c0_2, %c0_3] : memref<160x768xbf16, #tpu.memory_space<vmem>>, vector<160x768xbf16>
    %cst = arith.constant dense<0.000000e+00> : vector<192x768xf32>
    %9 = tpu.matmul %7, %8, %cst {dimension_numbers = #tpu.dot_dimension_numbers<[1], [0], [0], [1], [0, 0, 1, 1], [], []>} : vector<192x160xbf16>, vector<160x768xbf16>, vector<192x768xf32> -> vector<192x768xf32>
    %10 = vector.extract_strided_slice %9 {offsets = [0, 0], sizes = [192, 384], strides = [1, 1]} : vector<192x768xf32> to vector<192x384xf32>
    %11 = vector.extract_strided_slice %9 {offsets = [0, 384], sizes = [192, 384], strides = [1, 1]} : vector<192x768xf32> to vector<192x384xf32>
    %12 = arith.maximumf %10, %11 : vector<192x384xf32>
    %c0_4 = arith.constant 0 : index
    %c0_5 = arith.constant 0 : index
    %13 = vector.load %arg3[%c0_4, %c0_5] : memref<1x384xf32, #tpu.memory_space<vmem>>, vector<1x384xf32>
    %14 = vector.broadcast %13 : vector<1x384xf32> to vector<192x384xf32>
    %15 = arith.addf %12, %14 : vector<192x384xf32>
    %cst_6 = arith.constant 0.000000e+00 : f32
    %16 = vector.broadcast %cst_6 : f32 to vector<192x384xf32>
    %17 = arith.maximumf %15, %16 : vector<192x384xf32>
    %18 = vector.shape_cast %17 : vector<192x384xf32> to vector<24x8x384xf32>
    %19 = vector.extract_strided_slice %18 {offsets = [0, 0, 0], sizes = [1, 8, 384], strides = [1, 1, 1]} : vector<24x8x384xf32> to vector<1x8x384xf32>
    %20 = vector.shape_cast %19 : vector<1x8x384xf32> to vector<8x384xf32>
    %21 = vector.extract_strided_slice %18 {offsets = [1, 0, 0], sizes = [1, 8, 384], strides = [1, 1, 1]} : vector<24x8x384xf32> to vector<1x8x384xf32>
    %22 = vector.shape_cast %21 : vector<1x8x384xf32> to vector<8x384xf32>
    %23 = arith.maximumf %20, %22 : vector<8x384xf32>
    %24 = arith.truncf %23 : vector<8x384xf32> to vector<8x384xbf16>
    %c0_7 = arith.constant 0 : index
    %c0_8 = arith.constant 0 : index
    %c0_9 = arith.constant 0 : index
    %25 = vector.load %arg11[%c0_7, %c0_8, %c0_9] : memref<12x8x384xbf16, #tpu.memory_space<vmem>>, vector<1x8x384xbf16>
    %26 = vector.shape_cast %25 : vector<1x8x384xbf16> to vector<8x384xbf16>
    %27 = vector.shape_cast %24 : vector<8x384xbf16> to vector<1x8x384xbf16>
    tpu.vector_store %arg11[%c0_7, %c0_8, %c0_9], %27 {strides = array<i32>} : memref<12x8x384xbf16, #tpu.memory_space<vmem>>, vector<1x8x384xbf16>,
    %28 = vector.extract_strided_slice %18 {offsets = [2, 0, 0], sizes = [1, 8, 384], strides = [1, 1, 1]} : vector<24x8x384xf32> to vector<1x8x384xf32>
    %29 = vector.shape_cast %28 : vector<1x8x384xf32> to vector<8x384xf32>
    %30 = vector.extract_strided_slice %18 {offsets = [3, 0, 0], sizes = [1, 8, 384], strides = [1, 1, 1]} : vector<24x8x384xf32> to vector<1x8x384xf32>
    %31 = vector.shape_cast %30 : vector<1x8x384xf32> to vector<8x384xf32>
    %32 = arith.maximumf %29, %31 : vector<8x384xf32>
    %33 = arith.truncf %32 : vector<8x384xf32> to vector<8x384xbf16>
    %c1 = arith.constant 1 : index
    %c0_10 = arith.constant 0 : index
    %c0_11 = arith.constant 0 : index
    %34 = vector.load %arg11[%c1, %c0_10, %c0_11] : memref<12x8x384xbf16, #tpu.memory_space<vmem>>, vector<1x8x384xbf16>
    %35 = vector.shape_cast %34 : vector<1x8x384xbf16> to vector<8x384xbf16>
    %36 = vector.shape_cast %33 : vector<8x384xbf16> to vector<1x8x384xbf16>
    tpu.vector_store %arg11[%c1, %c0_10, %c0_11], %36 {strides = array<i32>} : memref<12x8x384xbf16, #tpu.memory_space<vmem>>, vector<1x8x384xbf16>,
    %37 = vector.extract_strided_slice %18 {offsets = [4, 0, 0], sizes = [1, 8, 384], strides = [1, 1, 1]} : vector<24x8x384xf32> to vector<1x8x384xf32>
    %38 = vector.shape_cast %37 : vector<1x8x384xf32> to vector<8x384xf32>
    %39 = vector.extract_strided_slice %18 {offsets = [5, 0, 0], sizes = [1, 8, 384], strides = [1, 1, 1]} : vector<24x8x384xf32> to vector<1x8x384xf32>
    %40 = vector.shape_cast %39 : vector<1x8x384xf32> to vector<8x384xf32>
    %41 = arith.maximumf %38, %40 : vector<8x384xf32>
    %42 = arith.truncf %41 : vector<8x384xf32> to vector<8x384xbf16>
    %c2 = arith.constant 2 : index
    %c0_12 = arith.constant 0 : index
    %c0_13 = arith.constant 0 : index
    %43 = vector.load %arg11[%c2, %c0_12, %c0_13] : memref<12x8x384xbf16, #tpu.memory_space<vmem>>, vector<1x8x384xbf16>
    %44 = vector.shape_cast %43 : vector<1x8x384xbf16> to vector<8x384xbf16>
    %45 = vector.shape_cast %42 : vector<8x384xbf16> to vector<1x8x384xbf16>
    tpu.vector_store %arg11[%c2, %c0_12, %c0_13], %45 {strides = array<i32>} : memref<12x8x384xbf16, #tpu.memory_space<vmem>>, vector<1x8x384xbf16>,
    %46 = vector.extract_strided_slice %18 {offsets = [6, 0, 0], sizes = [1, 8, 384], strides = [1, 1, 1]} : vector<24x8x384xf32> to vector<1x8x384xf32>
    %47 = vector.shape_cast %46 : vector<1x8x384xf32> to vector<8x384xf32>
    %48 = vector.extract_strided_slice %18 {offsets = [7, 0, 0], sizes = [1, 8, 384], strides = [1, 1, 1]} : vector<24x8x384xf32> to vector<1x8x384xf32>
    %49 = vector.shape_cast %48 : vector<1x8x384xf32> to vector<8x384xf32>
    %50 = arith.maximumf %47, %49 : vector<8x384xf32>
    %51 = arith.truncf %50 : vector<8x384xf32> to vector<8x384xbf16>
    %c3 = arith.constant 3 : index
    %c0_14 = arith.constant 0 : index
    %c0_15 = arith.constant 0 : index
    %52 = vector.load %arg11[%c3, %c0_14, %c0_15] : memref<12x8x384xbf16, #tpu.memory_space<vmem>>, vector<1x8x384xbf16>
    %53 = vector.shape_cast %52 : vector<1x8x384xbf16> to vector<8x384xbf16>
    %54 = vector.shape_cast %51 : vector<8x384xbf16> to vector<1x8x384xbf16>
    tpu.vector_store %arg11[%c3, %c0_14, %c0_15], %54 {strides = array<i32>} : memref<12x8x384xbf16, #tpu.memory_space<vmem>>, vector<1x8x384xbf16>,
    %55 = vector.extract_strided_slice %18 {offsets = [8, 0, 0], sizes = [1, 8, 384], strides = [1, 1, 1]} : vector<24x8x384xf32> to vector<1x8x384xf32>
    %56 = vector.shape_cast %55 : vector<1x8x384xf32> to vector<8x384xf32>
    %57 = vector.extract_strided_slice %18 {offsets = [9, 0, 0], sizes = [1, 8, 384], strides = [1, 1, 1]} : vector<24x8x384xf32> to vector<1x8x384xf32>
    %58 = vector.shape_cast %57 : vector<1x8x384xf32> to vector<8x384xf32>
    %59 = arith.maximumf %56, %58 : vector<8x384xf32>
    %60 = arith.truncf %59 : vector<8x384xf32> to vector<8x384xbf16>
    %c4 = arith.constant 4 : index
    %c0_16 = arith.constant 0 : index
    %c0_17 = arith.constant 0 : index
    %61 = vector.load %arg11[%c4, %c0_16, %c0_17] : memref<12x8x384xbf16, #tpu.memory_space<vmem>>, vector<1x8x384xbf16>
    %62 = vector.shape_cast %61 : vector<1x8x384xbf16> to vector<8x384xbf16>
    %63 = vector.shape_cast %60 : vector<8x384xbf16> to vector<1x8x384xbf16>
    tpu.vector_store %arg11[%c4, %c0_16, %c0_17], %63 {strides = array<i32>} : memref<12x8x384xbf16, #tpu.memory_space<vmem>>, vector<1x8x384xbf16>,
    %64 = vector.extract_strided_slice %18 {offsets = [10, 0, 0], sizes = [1, 8, 384], strides = [1, 1, 1]} : vector<24x8x384xf32> to vector<1x8x384xf32>
    %65 = vector.shape_cast %64 : vector<1x8x384xf32> to vector<8x384xf32>
    %66 = vector.extract_strided_slice %18 {offsets = [11, 0, 0], sizes = [1, 8, 384], strides = [1, 1, 1]} : vector<24x8x384xf32> to vector<1x8x384xf32>
    %67 = vector.shape_cast %66 : vector<1x8x384xf32> to vector<8x384xf32>
    %68 = arith.maximumf %65, %67 : vector<8x384xf32>
    %69 = arith.truncf %68 : vector<8x384xf32> to vector<8x384xbf16>
    %c5 = arith.constant 5 : index
    %c0_18 = arith.constant 0 : index
    %c0_19 = arith.constant 0 : index
    %70 = vector.load %arg11[%c5, %c0_18, %c0_19] : memref<12x8x384xbf16, #tpu.memory_space<vmem>>, vector<1x8x384xbf16>
    %71 = vector.shape_cast %70 : vector<1x8x384xbf16> to vector<8x384xbf16>
    %72 = vector.shape_cast %69 : vector<8x384xbf16> to vector<1x8x384xbf16>
    tpu.vector_store %arg11[%c5, %c0_18, %c0_19], %72 {strides = array<i32>} : memref<12x8x384xbf16, #tpu.memory_space<vmem>>, vector<1x8x384xbf16>,
    %73 = vector.extract_strided_slice %18 {offsets = [12, 0, 0], sizes = [1, 8, 384], strides = [1, 1, 1]} : vector<24x8x384xf32> to vector<1x8x384xf32>
    %74 = vector.shape_cast %73 : vector<1x8x384xf32> to vector<8x384xf32>
    %75 = vector.extract_strided_slice %18 {offsets = [13, 0, 0], sizes = [1, 8, 384], strides = [1, 1, 1]} : vector<24x8x384xf32> to vector<1x8x384xf32>
    %76 = vector.shape_cast %75 : vector<1x8x384xf32> to vector<8x384xf32>
    %77 = arith.maximumf %74, %76 : vector<8x384xf32>
    %78 = arith.truncf %77 : vector<8x384xf32> to vector<8x384xbf16>
    %c6 = arith.constant 6 : index
    %c0_20 = arith.constant 0 : index
    %c0_21 = arith.constant 0 : index
    %79 = vector.load %arg11[%c6, %c0_20, %c0_21] : memref<12x8x384xbf16, #tpu.memory_space<vmem>>, vector<1x8x384xbf16>
    %80 = vector.shape_cast %79 : vector<1x8x384xbf16> to vector<8x384xbf16>
    %81 = vector.shape_cast %78 : vector<8x384xbf16> to vector<1x8x384xbf16>
    tpu.vector_store %arg11[%c6, %c0_20, %c0_21], %81 {strides = array<i32>} : memref<12x8x384xbf16, #tpu.memory_space<vmem>>, vector<1x8x384xbf16>,
    %82 = vector.extract_strided_slice %18 {offsets = [14, 0, 0], sizes = [1, 8, 384], strides = [1, 1, 1]} : vector<24x8x384xf32> to vector<1x8x384xf32>
    %83 = vector.shape_cast %82 : vector<1x8x384xf32> to vector<8x384xf32>
    %84 = vector.extract_strided_slice %18 {offsets = [15, 0, 0], sizes = [1, 8, 384], strides = [1, 1, 1]} : vector<24x8x384xf32> to vector<1x8x384xf32>
    %85 = vector.shape_cast %84 : vector<1x8x384xf32> to vector<8x384xf32>
    %86 = arith.maximumf %83, %85 : vector<8x384xf32>
    %87 = arith.truncf %86 : vector<8x384xf32> to vector<8x384xbf16>
    %c7 = arith.constant 7 : index
    %c0_22 = arith.constant 0 : index
    %c0_23 = arith.constant 0 : index
    %88 = vector.load %arg11[%c7, %c0_22, %c0_23] : memref<12x8x384xbf16, #tpu.memory_space<vmem>>, vector<1x8x384xbf16>
    %89 = vector.shape_cast %88 : vector<1x8x384xbf16> to vector<8x384xbf16>
    %90 = vector.shape_cast %87 : vector<8x384xbf16> to vector<1x8x384xbf16>
    tpu.vector_store %arg11[%c7, %c0_22, %c0_23], %90 {strides = array<i32>} : memref<12x8x384xbf16, #tpu.memory_space<vmem>>, vector<1x8x384xbf16>,
    %91 = vector.extract_strided_slice %18 {offsets = [16, 0, 0], sizes = [1, 8, 384], strides = [1, 1, 1]} : vector<24x8x384xf32> to vector<1x8x384xf32>
    %92 = vector.shape_cast %91 : vector<1x8x384xf32> to vector<8x384xf32>
    %93 = vector.extract_strided_slice %18 {offsets = [17, 0, 0], sizes = [1, 8, 384], strides = [1, 1, 1]} : vector<24x8x384xf32> to vector<1x8x384xf32>
    %94 = vector.shape_cast %93 : vector<1x8x384xf32> to vector<8x384xf32>
    %95 = arith.maximumf %92, %94 : vector<8x384xf32>
    %96 = arith.truncf %95 : vector<8x384xf32> to vector<8x384xbf16>
    %c8 = arith.constant 8 : index
    %c0_24 = arith.constant 0 : index
    %c0_25 = arith.constant 0 : index
    %97 = vector.load %arg11[%c8, %c0_24, %c0_25] : memref<12x8x384xbf16, #tpu.memory_space<vmem>>, vector<1x8x384xbf16>
    %98 = vector.shape_cast %97 : vector<1x8x384xbf16> to vector<8x384xbf16>
    %99 = vector.shape_cast %96 : vector<8x384xbf16> to vector<1x8x384xbf16>
    tpu.vector_store %arg11[%c8, %c0_24, %c0_25], %99 {strides = array<i32>} : memref<12x8x384xbf16, #tpu.memory_space<vmem>>, vector<1x8x384xbf16>,
    %100 = vector.extract_strided_slice %18 {offsets = [18, 0, 0], sizes = [1, 8, 384], strides = [1, 1, 1]} : vector<24x8x384xf32> to vector<1x8x384xf32>
    %101 = vector.shape_cast %100 : vector<1x8x384xf32> to vector<8x384xf32>
    %102 = vector.extract_strided_slice %18 {offsets = [19, 0, 0], sizes = [1, 8, 384], strides = [1, 1, 1]} : vector<24x8x384xf32> to vector<1x8x384xf32>
    %103 = vector.shape_cast %102 : vector<1x8x384xf32> to vector<8x384xf32>
    %104 = arith.maximumf %101, %103 : vector<8x384xf32>
    %105 = arith.truncf %104 : vector<8x384xf32> to vector<8x384xbf16>
    %c9 = arith.constant 9 : index
    %c0_26 = arith.constant 0 : index
    %c0_27 = arith.constant 0 : index
    %106 = vector.load %arg11[%c9, %c0_26, %c0_27] : memref<12x8x384xbf16, #tpu.memory_space<vmem>>, vector<1x8x384xbf16>
    %107 = vector.shape_cast %106 : vector<1x8x384xbf16> to vector<8x384xbf16>
    %108 = vector.shape_cast %105 : vector<8x384xbf16> to vector<1x8x384xbf16>
    tpu.vector_store %arg11[%c9, %c0_26, %c0_27], %108 {strides = array<i32>} : memref<12x8x384xbf16, #tpu.memory_space<vmem>>, vector<1x8x384xbf16>,
    %109 = vector.extract_strided_slice %18 {offsets = [20, 0, 0], sizes = [1, 8, 384], strides = [1, 1, 1]} : vector<24x8x384xf32> to vector<1x8x384xf32>
    %110 = vector.shape_cast %109 : vector<1x8x384xf32> to vector<8x384xf32>
    %111 = vector.extract_strided_slice %18 {offsets = [21, 0, 0], sizes = [1, 8, 384], strides = [1, 1, 1]} : vector<24x8x384xf32> to vector<1x8x384xf32>
    %112 = vector.shape_cast %111 : vector<1x8x384xf32> to vector<8x384xf32>
    %113 = arith.maximumf %110, %112 : vector<8x384xf32>
    %114 = arith.truncf %113 : vector<8x384xf32> to vector<8x384xbf16>
    %c10 = arith.constant 10 : index
    %c0_28 = arith.constant 0 : index
    %c0_29 = arith.constant 0 : index
    %115 = vector.load %arg11[%c10, %c0_28, %c0_29] : memref<12x8x384xbf16, #tpu.memory_space<vmem>>, vector<1x8x384xbf16>
    %116 = vector.shape_cast %115 : vector<1x8x384xbf16> to vector<8x384xbf16>
    %117 = vector.shape_cast %114 : vector<8x384xbf16> to vector<1x8x384xbf16>
    tpu.vector_store %arg11[%c10, %c0_28, %c0_29], %117 {strides = array<i32>} : memref<12x8x384xbf16, #tpu.memory_space<vmem>>, vector<1x8x384xbf16>,
    %118 = vector.extract_strided_slice %18 {offsets = [22, 0, 0], sizes = [1, 8, 384], strides = [1, 1, 1]} : vector<24x8x384xf32> to vector<1x8x384xf32>
    %119 = vector.shape_cast %118 : vector<1x8x384xf32> to vector<8x384xf32>
    %120 = vector.extract_strided_slice %18 {offsets = [23, 0, 0], sizes = [1, 8, 384], strides = [1, 1, 1]} : vector<24x8x384xf32> to vector<1x8x384xf32>
    %121 = vector.shape_cast %120 : vector<1x8x384xf32> to vector<8x384xf32>
    %122 = arith.maximumf %119, %121 : vector<8x384xf32>
    %123 = arith.truncf %122 : vector<8x384xf32> to vector<8x384xbf16>
    %c11 = arith.constant 11 : index
    %c0_30 = arith.constant 0 : index
    %c0_31 = arith.constant 0 : index
    %124 = vector.load %arg11[%c11, %c0_30, %c0_31] : memref<12x8x384xbf16, #tpu.memory_space<vmem>>, vector<1x8x384xbf16>
    %125 = vector.shape_cast %124 : vector<1x8x384xbf16> to vector<8x384xbf16>
    %126 = vector.shape_cast %123 : vector<8x384xbf16> to vector<1x8x384xbf16>
    tpu.vector_store %arg11[%c11, %c0_30, %c0_31], %126 {strides = array<i32>} : memref<12x8x384xbf16, #tpu.memory_space<vmem>>, vector<1x8x384xbf16>,
    %c0_32 = arith.constant 0 : index
    %c0_33 = arith.constant 0 : index
    %c0_34 = arith.constant 0 : index
    %127 = vector.load %arg11[%c0_32, %c0_33, %c0_34] : memref<12x8x384xbf16, #tpu.memory_space<vmem>>, vector<8x8x384xbf16>
    %c1_35 = arith.constant 1 : index
    %c0_36 = arith.constant 0 : index
    %c0_37 = arith.constant 0 : index
    %128 = vector.load %arg11[%c1_35, %c0_36, %c0_37] : memref<12x8x384xbf16, #tpu.memory_space<vmem>>, vector<8x8x384xbf16>
    %c2_38 = arith.constant 2 : index
    %c0_39 = arith.constant 0 : index
    %c0_40 = arith.constant 0 : index
    %129 = vector.load %arg11[%c2_38, %c0_39, %c0_40] : memref<12x8x384xbf16, #tpu.memory_space<vmem>>, vector<8x8x384xbf16>
    %c3_41 = arith.constant 3 : index
    %c0_42 = arith.constant 0 : index
    %c0_43 = arith.constant 0 : index
    %130 = vector.load %arg11[%c3_41, %c0_42, %c0_43] : memref<12x8x384xbf16, #tpu.memory_space<vmem>>, vector<8x8x384xbf16>
    %c4_44 = arith.constant 4 : index
    %c0_45 = arith.constant 0 : index
    %c0_46 = arith.constant 0 : index
    %131 = vector.load %arg11[%c4_44, %c0_45, %c0_46] : memref<12x8x384xbf16, #tpu.memory_space<vmem>>, vector<8x8x384xbf16>
    %132 = tpu.concatenate %127, %128, %129, %130, %131 in 2 : vector<8x8x384xbf16>, vector<8x8x384xbf16>, vector<8x8x384xbf16>, vector<8x8x384xbf16>, vector<8x8x384xbf16> -> vector<8x8x1920xbf16>
    %133 = vector.shape_cast %132 : vector<8x8x1920xbf16> to vector<64x1920xbf16>
    %c0_47 = arith.constant 0 : index
    %c0_48 = arith.constant 0 : index
    %134 = vector.load %arg4[%c0_47, %c0_48] : memref<1920x512xbf16, #tpu.memory_space<vmem>>, vector<1920x512xbf16>
    %cst_49 = arith.constant dense<0.000000e+00> : vector<64x512xf32>
    %135 = tpu.matmul %133, %134, %cst_49 {dimension_numbers = #tpu.dot_dimension_numbers<[1], [0], [0], [1], [0, 0, 1, 1], [], []>} : vector<64x1920xbf16>, vector<1920x512xbf16>, vector<64x512xf32> -> vector<64x512xf32>
    %136 = vector.extract_strided_slice %135 {offsets = [0, 0], sizes = [64, 256], strides = [1, 1]} : vector<64x512xf32> to vector<64x256xf32>
    %137 = vector.extract_strided_slice %135 {offsets = [0, 256], sizes = [64, 256], strides = [1, 1]} : vector<64x512xf32> to vector<64x256xf32>
    %138 = arith.maximumf %136, %137 : vector<64x256xf32>
    %c0_50 = arith.constant 0 : index
    %c0_51 = arith.constant 0 : index
    %139 = vector.load %arg5[%c0_50, %c0_51] : memref<1x256xf32, #tpu.memory_space<vmem>>, vector<1x256xf32>
    %140 = vector.broadcast %139 : vector<1x256xf32> to vector<64x256xf32>
    %141 = arith.addf %138, %140 : vector<64x256xf32>
    %cst_52 = arith.constant 0.000000e+00 : f32
    %142 = vector.broadcast %cst_52 : f32 to vector<64x256xf32>
    %143 = arith.maximumf %141, %142 : vector<64x256xf32>
    %144 = vector.shape_cast %143 : vector<64x256xf32> to vector<8x8x256xf32>
    %145 = vector.extract_strided_slice %144 {offsets = [0, 0, 0], sizes = [1, 8, 256], strides = [1, 1, 1]} : vector<8x8x256xf32> to vector<1x8x256xf32>
    %146 = vector.shape_cast %145 : vector<1x8x256xf32> to vector<8x256xf32>
    %147 = vector.extract_strided_slice %144 {offsets = [1, 0, 0], sizes = [1, 8, 256], strides = [1, 1, 1]} : vector<8x8x256xf32> to vector<1x8x256xf32>
    %148 = vector.shape_cast %147 : vector<1x8x256xf32> to vector<8x256xf32>
    %149 = arith.maximumf %146, %148 : vector<8x256xf32>
    %150 = arith.truncf %149 : vector<8x256xf32> to vector<8x256xbf16>
    %151 = vector.extract_strided_slice %144 {offsets = [2, 0, 0], sizes = [1, 8, 256], strides = [1, 1, 1]} : vector<8x8x256xf32> to vector<1x8x256xf32>
    %152 = vector.shape_cast %151 : vector<1x8x256xf32> to vector<8x256xf32>
    %153 = vector.extract_strided_slice %144 {offsets = [3, 0, 0], sizes = [1, 8, 256], strides = [1, 1, 1]} : vector<8x8x256xf32> to vector<1x8x256xf32>
    %154 = vector.shape_cast %153 : vector<1x8x256xf32> to vector<8x256xf32>
    %155 = arith.maximumf %152, %154 : vector<8x256xf32>
    %156 = arith.truncf %155 : vector<8x256xf32> to vector<8x256xbf16>
    %157 = vector.extract_strided_slice %144 {offsets = [4, 0, 0], sizes = [1, 8, 256], strides = [1, 1, 1]} : vector<8x8x256xf32> to vector<1x8x256xf32>
    %158 = vector.shape_cast %157 : vector<1x8x256xf32> to vector<8x256xf32>
    %159 = vector.extract_strided_slice %144 {offsets = [5, 0, 0], sizes = [1, 8, 256], strides = [1, 1, 1]} : vector<8x8x256xf32> to vector<1x8x256xf32>
    %160 = vector.shape_cast %159 : vector<1x8x256xf32> to vector<8x256xf32>
    %161 = arith.maximumf %158, %160 : vector<8x256xf32>
    %162 = arith.truncf %161 : vector<8x256xf32> to vector<8x256xbf16>
    %163 = vector.extract_strided_slice %144 {offsets = [6, 0, 0], sizes = [1, 8, 256], strides = [1, 1, 1]} : vector<8x8x256xf32> to vector<1x8x256xf32>
    %164 = vector.shape_cast %163 : vector<1x8x256xf32> to vector<8x256xf32>
    %165 = vector.extract_strided_slice %144 {offsets = [7, 0, 0], sizes = [1, 8, 256], strides = [1, 1, 1]} : vector<8x8x256xf32> to vector<1x8x256xf32>
    %166 = vector.shape_cast %165 : vector<1x8x256xf32> to vector<8x256xf32>
    %167 = arith.maximumf %164, %166 : vector<8x256xf32>
    %168 = arith.truncf %167 : vector<8x256xf32> to vector<8x256xbf16>
    %169 = tpu.concatenate %150, %156, %162, %168 in 1 : vector<8x256xbf16>, vector<8x256xbf16>, vector<8x256xbf16>, vector<8x256xbf16> -> vector<8x1024xbf16>
    %c0_53 = arith.constant 0 : index
    %c0_54 = arith.constant 0 : index
    %170 = vector.load %arg6[%c0_53, %c0_54] : memref<1024x512xbf16, #tpu.memory_space<vmem>>, vector<1024x512xbf16>
    %cst_55 = arith.constant dense<0.000000e+00> : vector<8x512xf32>
    %171 = tpu.matmul %169, %170, %cst_55 {dimension_numbers = #tpu.dot_dimension_numbers<[1], [0], [0], [1], [0, 0, 1, 1], [], []>} : vector<8x1024xbf16>, vector<1024x512xbf16>, vector<8x512xf32> -> vector<8x512xf32>
    %c0_56 = arith.constant 0 : index
    %c0_57 = arith.constant 0 : index
    %172 = vector.load %arg7[%c0_56, %c0_57] : memref<1x512xf32, #tpu.memory_space<vmem>>, vector<1x512xf32>
    %173 = vector.broadcast %172 : vector<1x512xf32> to vector<8x512xf32>
    %174 = arith.addf %171, %173 : vector<8x512xf32>
    %cst_58 = arith.constant 0.000000e+00 : f32
    %175 = vector.broadcast %cst_58 : f32 to vector<8x512xf32>
    %176 = arith.maximumf %174, %175 : vector<8x512xf32>
    %177 = arith.truncf %176 : vector<8x512xf32> to vector<8x512xbf16>
    %c0_59 = arith.constant 0 : index
    %c0_60 = arith.constant 0 : index
    %178 = vector.load %arg8[%c0_59, %c0_60] : memref<512x128xbf16, #tpu.memory_space<vmem>>, vector<512x128xbf16>
    %cst_61 = arith.constant dense<0.000000e+00> : vector<8x128xf32>
    %179 = tpu.matmul %177, %178, %cst_61 {dimension_numbers = #tpu.dot_dimension_numbers<[1], [0], [0], [1], [0, 0, 1, 1], [], []>} : vector<8x512xbf16>, vector<512x128xbf16>, vector<8x128xf32> -> vector<8x128xf32>
    %c0_62 = arith.constant 0 : index
    %c0_63 = arith.constant 0 : index
    %180 = vector.load %arg9[%c0_62, %c0_63] : memref<1x128xf32, #tpu.memory_space<vmem>>, vector<1x128xf32>
    %181 = vector.broadcast %180 : vector<1x128xf32> to vector<8x128xf32>
    %182 = arith.addf %179, %181 : vector<8x128xf32>
    %183 = tpu.iota {dimensions = array<i32: 1>} : vector<8x128xi32>
    %c10_i32 = arith.constant 10 : i32
    %184 = vector.broadcast %c10_i32 : i32 to vector<8x128xi32>
    %185 = arith.cmpi slt, %183, %184 : vector<8x128xi32>
    %cst_64 = arith.constant -1.000000e+30 : f32
    %186 = vector.broadcast %cst_64 : f32 to vector<8x128xf32>
    %187 = arith.select %185, %182, %186 : vector<8x128xi1>, vector<8x128xf32>
    %cst_65 = arith.constant dense<0xFF800000> : vector<8xf32>
    %188 = vector.multi_reduction <maximumf>, %187, %cst_65 [1] : vector<8x128xf32> to vector<8xf32>
    %189 = vector.shape_cast %188 : vector<8xf32> to vector<8x1xf32>
    %190 = vector.broadcast %189 : vector<8x1xf32> to vector<8x128xf32>
    %191 = arith.subf %187, %190 : vector<8x128xf32>
    %192 = math.exp %191 : vector<8x128xf32>
    %cst_66 = arith.constant 0.000000e+00 : f32
    %193 = vector.broadcast %cst_66 : f32 to vector<8x128xf32>
    %194 = arith.select %185, %192, %193 : vector<8x128xi1>, vector<8x128xf32>
    %cst_67 = arith.constant dense<0.000000e+00> : vector<8xf32>
    %195 = vector.multi_reduction <add>, %194, %cst_67 [1] : vector<8x128xf32> to vector<8xf32>
    %196 = vector.shape_cast %195 : vector<8xf32> to vector<8x1xf32>
    %197 = math.log %196 : vector<8x1xf32>
    %198 = vector.broadcast %189 : vector<8x1xf32> to vector<8x128xf32>
    %199 = arith.subf %187, %198 : vector<8x128xf32>
    %200 = vector.broadcast %197 : vector<8x1xf32> to vector<8x128xf32>
    %201 = arith.subf %199, %200 : vector<8x128xf32>
    %cst_68 = arith.constant 0.000000e+00 : f32
    %202 = vector.broadcast %cst_68 : f32 to vector<8x128xf32>
    %203 = arith.select %185, %201, %202 : vector<8x128xi1>, vector<8x128xf32>
    %c0_69 = arith.constant 0 : index
    %c0_70 = arith.constant 0 : index
    %204 = vector.load %arg10[%c0_69, %c0_70] : memref<8x128xf32, #tpu.memory_space<vmem>>, vector<8x128xf32>
    tpu.vector_store %arg10[%c0_69, %c0_70], %203 {strides = array<i32>} : memref<8x128xf32, #tpu.memory_space<vmem>>, vector<8x128xf32>,
    return
  }
  func.func @transform_0(%arg0: i32) -> (i32, i32, i32) {
    %c0_i32 = arith.constant 0 : i32
    %c0_i32_0 = arith.constant 0 : i32
    %c0_i32_1 = arith.constant 0 : i32
    return %c0_i32, %arg0, %c0_i32_0 : i32, i32, i32
  }
  func.func @transform_1(%arg0: i32) -> (i32, i32) {
    %c0_i32 = arith.constant 0 : i32
    %c0_i32_0 = arith.constant 0 : i32
    %c0_i32_1 = arith.constant 0 : i32
    return %c0_i32, %c0_i32_0 : i32, i32
  }
  func.func @transform_2(%arg0: i32) -> (i32, i32) {
    %c0_i32 = arith.constant 0 : i32
    %c0_i32_0 = arith.constant 0 : i32
    %c0_i32_1 = arith.constant 0 : i32
    return %c0_i32, %c0_i32_0 : i32, i32
  }
  func.func @transform_3(%arg0: i32) -> (i32, i32) {
    %c0_i32 = arith.constant 0 : i32
    %c0_i32_0 = arith.constant 0 : i32
    %c0_i32_1 = arith.constant 0 : i32
    return %c0_i32, %c0_i32_0 : i32, i32
  }
  func.func @transform_4(%arg0: i32) -> (i32, i32) {
    %c0_i32 = arith.constant 0 : i32
    %c0_i32_0 = arith.constant 0 : i32
    %c0_i32_1 = arith.constant 0 : i32
    return %c0_i32, %c0_i32_0 : i32, i32
  }
  func.func @transform_5(%arg0: i32) -> (i32, i32) {
    %c0_i32 = arith.constant 0 : i32
    %c0_i32_0 = arith.constant 0 : i32
    %c0_i32_1 = arith.constant 0 : i32
    return %c0_i32, %c0_i32_0 : i32, i32
  }
  func.func @transform_6(%arg0: i32) -> (i32, i32) {
    %c0_i32 = arith.constant 0 : i32
    %c0_i32_0 = arith.constant 0 : i32
    %c0_i32_1 = arith.constant 0 : i32
    return %c0_i32, %c0_i32_0 : i32, i32
  }
  func.func @transform_7(%arg0: i32) -> (i32, i32) {
    %c0_i32 = arith.constant 0 : i32
    %c0_i32_0 = arith.constant 0 : i32
    %c0_i32_1 = arith.constant 0 : i32
    return %c0_i32, %c0_i32_0 : i32, i32
  }
  func.func @transform_8(%arg0: i32) -> (i32, i32) {
    %c0_i32 = arith.constant 0 : i32
    %c0_i32_0 = arith.constant 0 : i32
    %c0_i32_1 = arith.constant 0 : i32
    return %c0_i32, %c0_i32_0 : i32, i32
  }
  func.func @transform_9(%arg0: i32) -> (i32, i32) {
    %c0_i32 = arith.constant 0 : i32
    %c0_i32_0 = arith.constant 0 : i32
    return %arg0, %c0_i32 : i32, i32
  }
}

</mosaic_0001>

<llo_original>
// kernel: mnistnet_forward.1
$region0: #{mnistnet_forward.1}
  #allocation0 [shape = 'u32[]', space=smem, size = 0x4, offset = 0x4, fixed_abs, tag = 'smem constant byte address 0x4 - core index']
  #allocation1 [shape = 'u32[144,128]{1,0:T(1,128)}', space=vmem, size = 0x12000, scoped, tag = 'internal scratch']
  #allocation2 [shape = 'bf16[12,8,384]{2,1,0:T(8,128)(2,1)}', space=vmem, size = 0x12000, scoped, tag = 'scratch operand']
  %s0 = inlined_call_operand.vmem [shape: bf16[28,8,32], index: 0, kind: input, shape index: {}]
  %s1 = inlined_call_operand.hbm [shape: bf16[160,768], index: 1, kind: input, shape index: {}]
  %s2 = inlined_call_operand.hbm [shape: f32[1,384], index: 2, kind: input, shape index: {}]
  %s3 = inlined_call_operand.hbm [shape: bf16[1920,512], index: 3, kind: input, shape index: {}]
  %s4 = inlined_call_operand.hbm [shape: f32[1,256], index: 4, kind: input, shape index: {}]
  %s5 = inlined_call_operand.hbm [shape: bf16[1024,512], index: 5, kind: input, shape index: {}]
  %s6 = inlined_call_operand.hbm [shape: f32[1,512], index: 6, kind: input, shape index: {}]
  %s7 = inlined_call_operand.hbm [shape: bf16[512,128], index: 7, kind: input, shape index: {}]
  %s8 = inlined_call_operand.hbm [shape: f32[1,128], index: 8, kind: input, shape index: {}]
  %s9 = inlined_call_operand.vmem [shape: f32[8,128], index: 9, kind: output, shape index: {}]
  %s10 = sld [smem:[#allocation0]]
  $region78: #{mnistnet_forward.1} parent=0
    _
  %s12 = ssub.s32 1, %s10
  %s13 = scalar_select 0, %s12, %s10
  $region1: #{mnistnet_forward.1} parent=0
    #allocation3 [shape = 'u8[245760]{0}', space=vmem, size = 0x3c000, scoped, tag = 'input window, operand 1, single buffered']
    #allocation4 [shape = 's32[1]{0}', space=sflag, size = 0x4, scoped, tag = 'scoped memory for mnistnet_forward.1']
    #allocation5 [shape = 'u8[1536]{0}', space=vmem, size = 0x800, scoped, tag = 'input window, operand 2, single buffered']
    #allocation6 [shape = 's32[1]{0}', space=sflag, size = 0x4, scoped, tag = 'scoped memory for mnistnet_forward.1']
    #allocation7 [shape = 'u8[1966080]{0}', space=vmem, size = 0x1e0000, scoped, tag = 'input window, operand 3, single buffered']
    #allocation8 [shape = 'u8[1024]{0}', space=vmem, size = 0x400, scoped, tag = 'input window, operand 4, single buffered']
    #allocation9 [shape = 's32[1]{0}', space=sflag, size = 0x4, scoped, tag = 'scoped memory for mnistnet_forward.1']
    #allocation10 [shape = 'u8[1048576]{0}', space=vmem, size = 0x100000, scoped, tag = 'input window, operand 5, single buffered']
    #allocation11 [shape = 'u8[2048]{0}', space=vmem, size = 0x800, scoped, tag = 'input window, operand 6, single buffered']
    #allocation12 [shape = 's32[1]{0}', space=sflag, size = 0x4, scoped, tag = 'scoped memory for mnistnet_forward.1']
    #allocation13 [shape = 'u8[131072]{0}', space=vmem, size = 0x20000, scoped, tag = 'input window, operand 7, single buffered']
    #allocation14 [shape = 'u8[512]{0}', space=vmem, size = 0x400, scoped, tag = 'input window, operand 8, single buffered']
    #allocation15 [shape = 's32[1]{0}', space=sflag, size = 0x4, scoped, tag = 'scoped memory for mnistnet_forward.1']
    %14 = vsyncpa [#allocation4], 0
    %15 = vsyncpa [#allocation6], 0
    %16 = vsyncpa [#allocation9], 0
    %17 = vsyncpa [#allocation12], 0
    %18 = vsyncpa [#allocation15], 0
    // Predicated region
    $region2: #{mnistnet_forward.1} parent=1 // pred_check
      _
    $region3: #{mnistnet_forward.1} parent=1 // pred_check_branch
      %20 = sbr.rel (0) target = $region5
    $region4: #{mnistnet_forward.1} parent=1 // pred_region
      _
    $region5: #{mnistnet_forward.1} parent=1 // pred_fallthru
      _
    // Predicated region
    $region6: #{mnistnet_forward.1} parent=1 // pred_check
      _
    $region7: #{mnistnet_forward.1} parent=1 // pred_check_branch
      %22 = sbr.rel (0) target = $region9
    $region8: #{mnistnet_forward.1} parent=1 // pred_region
      %s24 = ssub.s32 7680, 7680
      %25 = vsyncadd [#allocation4], %s24
      %s26 = sshll.u32 [#allocation3], 4
      %s27 = int_to_ptr.vmem [resolvable:$true] %s26
      %32 = dma.hbm_to_vmem [thread:$0]  %s1, 7680, %s27, [#allocation4], 384, 384, 24
    $region9: #{mnistnet_forward.1} parent=1 // pred_fallthru
      _
    // Predicated region
    $region10: #{mnistnet_forward.1} parent=1 // pred_check
      _
    $region11: #{mnistnet_forward.1} parent=1 // pred_check_branch
      %34 = sbr.rel (0) target = $region13
    $region12: #{mnistnet_forward.1} parent=1 // pred_region
      %s36 = ssub.s32 48, 48
      %37 = vsyncadd [#allocation6], %s36
      %s39 = sshll.u32 [#allocation5], 4
      %s40 = int_to_ptr.vmem [resolvable:$true] %s39
      %42 = dma.hbm_to_vmem [thread:$0]  %s2, 48, %s40, [#allocation6]
    $region13: #{mnistnet_forward.1} parent=1 // pred_fallthru
      _
    // Predicated region
    $region14: #{mnistnet_forward.1} parent=1 // pred_check
      _
    $region15: #{mnistnet_forward.1} parent=1 // pred_check_branch
      %44 = sbr.rel (0) target = $region17
    $region16: #{mnistnet_forward.1} parent=1 // pred_region
      %s46 = ssub.s32 61440, 61440
      %47 = vsyncadd [#allocation6], %s46
      %s48 = sshll.u32 [#allocation7], 4
      %s49 = int_to_ptr.vmem [resolvable:$true] %s48
      %54 = dma.hbm_to_vmem [thread:$0]  %s3, 61440, %s49, [#allocation6], 256, 256, 16
    $region17: #{mnistnet_forward.1} parent=1 // pred_fallthru
      _
    // Predicated region
    $region18: #{mnistnet_forward.1} parent=1 // pred_check
      _
    $region19: #{mnistnet_forward.1} parent=1 // pred_check_branch
      %56 = sbr.rel (0) target = $region21
    $region20: #{mnistnet_forward.1} parent=1 // pred_region
      %s58 = ssub.s32 32, 32
      %59 = vsyncadd [#allocation9], %s58
      %s61 = sshll.u32 [#allocation8], 4
      %s62 = int_to_ptr.vmem [resolvable:$true] %s61
      %64 = dma.hbm_to_vmem [thread:$0]  %s4, 32, %s62, [#allocation9]
    $region21: #{mnistnet_forward.1} parent=1 // pred_fallthru
      _
    // Predicated region
    $region22: #{mnistnet_forward.1} parent=1 // pred_check
      _
    $region23: #{mnistnet_forward.1} parent=1 // pred_check_branch
      %66 = sbr.rel (0) target = $region25
    $region24: #{mnistnet_forward.1} parent=1 // pred_region
      %s68 = ssub.s32 32768, 32768
      %69 = vsyncadd [#allocation9], %s68
      %s70 = sshll.u32 [#allocation10], 4
      %s71 = int_to_ptr.vmem [resolvable:$true] %s70
      %76 = dma.hbm_to_vmem [thread:$0]  %s5, 32768, %s71, [#allocation9], 256, 256, 16
    $region25: #{mnistnet_forward.1} parent=1 // pred_fallthru
      _
    // Predicated region
    $region26: #{mnistnet_forward.1} parent=1 // pred_check
      _
    $region27: #{mnistnet_forward.1} parent=1 // pred_check_branch
      %78 = sbr.rel (0) target = $region29
    $region28: #{mnistnet_forward.1} parent=1 // pred_region
      %s80 = ssub.s32 64, 64
      %81 = vsyncadd [#allocation12], %s80
      %s83 = sshll.u32 [#allocation11], 4
      %s84 = int_to_ptr.vmem [resolvable:$true] %s83
      %86 = dma.hbm_to_vmem [thread:$0]  %s6, 64, %s84, [#allocation12]
    $region29: #{mnistnet_forward.1} parent=1 // pred_fallthru
      _
    // Predicated region
    $region30: #{mnistnet_forward.1} parent=1 // pred_check
      _
    $region31: #{mnistnet_forward.1} parent=1 // pred_check_branch
      %88 = sbr.rel (0) target = $region33
    $region32: #{mnistnet_forward.1} parent=1 // pred_region
      %s90 = ssub.s32 4096, 4096
      %91 = vsyncadd [#allocation12], %s90
      %s92 = sshll.u32 [#allocation13], 4
      %s93 = int_to_ptr.vmem [resolvable:$true] %s92
      %98 = dma.hbm_to_vmem [thread:$0]  %s7, 4096, %s93, [#allocation12], 64, 64, 4
    $region33: #{mnistnet_forward.1} parent=1 // pred_fallthru
      _
    // Predicated region
    $region34: #{mnistnet_forward.1} parent=1 // pred_check
      _
    $region35: #{mnistnet_forward.1} parent=1 // pred_check_branch
      %100 = sbr.rel (0) target = $region37
    $region36: #{mnistnet_forward.1} parent=1 // pred_region
      %s102 = ssub.s32 16, 16
      %103 = vsyncadd [#allocation15], %s102
      %s105 = sshll.u32 [#allocation14], 4
      %s106 = int_to_ptr.vmem [resolvable:$true] %s105
      %108 = dma.hbm_to_vmem [thread:$0]  %s8, 16, %s106, [#allocation15]
    $region37: #{mnistnet_forward.1} parent=1 // pred_fallthru
      _
    // Predicated region
    $region38: #{mnistnet_forward.1} parent=1 // pred_check
      _
    $region39: #{mnistnet_forward.1} parent=1 // pred_check_branch
      %110 = sbr.rel (0) target = $region41
    $region40: #{mnistnet_forward.1} parent=1 // pred_region
      %111 = dma.done [#allocation4], 7680
    $region41: #{mnistnet_forward.1} parent=1 // pred_fallthru
      _
    // Predicated region
    $region42: #{mnistnet_forward.1} parent=1 // pred_check
      _
    $region43: #{mnistnet_forward.1} parent=1 // pred_check_branch
      %113 = sbr.rel (0) target = $region45
    $region44: #{mnistnet_forward.1} parent=1 // pred_region
      %114 = dma.done [#allocation6], 48
    $region45: #{mnistnet_forward.1} parent=1 // pred_fallthru
      _
    // Predicated region
    $region46: #{mnistnet_forward.1} parent=1 // pred_check
      _
    $region47: #{mnistnet_forward.1} parent=1 // pred_check_branch
      %116 = sbr.rel (0) target = $region49
    $region48: #{mnistnet_forward.1} parent=1 // pred_region
      %117 = dma.done [#allocation6], 61440
    $region49: #{mnistnet_forward.1} parent=1 // pred_fallthru
      _
    // Predicated region
    $region50: #{mnistnet_forward.1} parent=1 // pred_check
      _
    $region51: #{mnistnet_forward.1} parent=1 // pred_check_branch
      %119 = sbr.rel (0) target = $region53
    $region52: #{mnistnet_forward.1} parent=1 // pred_region
      %120 = dma.done [#allocation9], 32
    $region53: #{mnistnet_forward.1} parent=1 // pred_fallthru
      _
    // Predicated region
    $region54: #{mnistnet_forward.1} parent=1 // pred_check
      _
    $region55: #{mnistnet_forward.1} parent=1 // pred_check_branch
      %122 = sbr.rel (0) target = $region57
    $region56: #{mnistnet_forward.1} parent=1 // pred_region
      %123 = dma.done [#allocation9], 32768
    $region57: #{mnistnet_forward.1} parent=1 // pred_fallthru
      _
    // Predicated region
    $region58: #{mnistnet_forward.1} parent=1 // pred_check
      _
    $region59: #{mnistnet_forward.1} parent=1 // pred_check_branch
      %125 = sbr.rel (0) target = $region61
    $region60: #{mnistnet_forward.1} parent=1 // pred_region
      %126 = dma.done [#allocation12], 64
    $region61: #{mnistnet_forward.1} parent=1 // pred_fallthru
      _
    // Predicated region
    $region62: #{mnistnet_forward.1} parent=1 // pred_check
      _
    $region63: #{mnistnet_forward.1} parent=1 // pred_check_branch
      %128 = sbr.rel (0) target = $region65
    $region64: #{mnistnet_forward.1} parent=1 // pred_region
      %129 = dma.done [#allocation12], 4096
    $region65: #{mnistnet_forward.1} parent=1 // pred_fallthru
      _
    // Predicated region
    $region66: #{mnistnet_forward.1} parent=1 // pred_check
      _
    $region67: #{mnistnet_forward.1} parent=1 // pred_check_branch
      %131 = sbr.rel (0) target = $region69
    $region68: #{mnistnet_forward.1} parent=1 // pred_region
      %132 = dma.done [#allocation15], 16
    $region69: #{mnistnet_forward.1} parent=1 // pred_fallthru
      _
    %v134 = vld [vmem:[%s0] sm:$0xf]
    %v135 = vld [vmem:[%s0 + $0x4] sm:$0xf]
    %v136 = vld [vmem:[%s0 + $0x8] sm:$0xf]
    %v137 = vld [vmem:[%s0 + $0xc] sm:$0xf]
    %v138 = vld [vmem:[%s0 + $0x10] sm:$0xf]
    %v139 = vld [vmem:[%s0 + $0x14] sm:$0xf]
    %v140 = vld [vmem:[%s0 + $0x18] sm:$0xf]
    %v141 = vld [vmem:[%s0 + $0x1c] sm:$0xf]
    %v142 = vld [vmem:[%s0 + $0x20] sm:$0xf]
    %v143 = vld [vmem:[%s0 + $0x24] sm:$0xf]
    %v144 = vld [vmem:[%s0 + $0x28] sm:$0xf]
    %v145 = vld [vmem:[%s0 + $0x2c] sm:$0xf]
    %v146 = vld [vmem:[%s0 + $0x30] sm:$0xf]
    %v147 = vld [vmem:[%s0 + $0x34] sm:$0xf]
    %v148 = vld [vmem:[%s0 + $0x38] sm:$0xf]
    %v149 = vld [vmem:[%s0 + $0x3c] sm:$0xf]
    %v150 = vld [vmem:[%s0 + $0x40] sm:$0xf]
    %v151 = vld [vmem:[%s0 + $0x44] sm:$0xf]
    %v152 = vld [vmem:[%s0 + $0x48] sm:$0xf]
    %v153 = vld [vmem:[%s0 + $0x4c] sm:$0xf]
    %v154 = vld [vmem:[%s0 + $0x50] sm:$0xf]
    %v155 = vld [vmem:[%s0 + $0x54] sm:$0xf]
    %v156 = vld [vmem:[%s0 + $0x58] sm:$0xf]
    %v157 = vld [vmem:[%s0 + $0x5c] sm:$0xf]
    %v158 = vld [vmem:[%s0 + $0x60] sm:$0xf]
    %v159 = vld [vmem:[%s0 + $0x64] sm:$0xf]
    %v160 = vld [vmem:[%s0 + $0x68] sm:$0xf]
    %v161 = vld [vmem:[%s0 + $0x6c] sm:$0xf]
    %v186 = vunpack.c.l.b16 %v135
    %v187 = vunpack.c.l.b16 %v136
    %v188 = vunpack.c.l.b16 %v137
    %v189 = vunpack.c.l.b16 %v138
    %v190 = vunpack.c.l.b16 %v139
    %v191 = vunpack.c.l.b16 %v140
    %v192 = vunpack.c.l.b16 %v141
    %v193 = vunpack.c.l.b16 %v142
    %v194 = vunpack.c.l.b16 %v143
    %v195 = vunpack.c.l.b16 %v144
    %v196 = vunpack.c.l.b16 %v145
    %v197 = vunpack.c.l.b16 %v146
    %v198 = vunpack.c.l.b16 %v147
    %v199 = vunpack.c.l.b16 %v148
    %v200 = vunpack.c.l.b16 %v149
    %v201 = vunpack.c.l.b16 %v150
    %v202 = vunpack.c.l.b16 %v151
    %v203 = vunpack.c.l.b16 %v152
    %v204 = vunpack.c.l.b16 %v153
    %v205 = vunpack.c.l.b16 %v154
    %v206 = vunpack.c.l.b16 %v155
    %v207 = vunpack.c.l.b16 %v156
    %v208 = vunpack.c.l.b16 %v157
    %v209 = vunpack.c.l.b16 %v158
    %v210 = vpack.c.b16 %v186, %v186
    %v211 = vpack.c.b16 %v187, %v187
    %v212 = vpack.c.b16 %v188, %v188
    %v213 = vpack.c.b16 %v189, %v189
    %v214 = vpack.c.b16 %v190, %v190
    %v215 = vpack.c.b16 %v191, %v191
    %v216 = vpack.c.b16 %v192, %v192
    %v217 = vpack.c.b16 %v193, %v193
    %v218 = vpack.c.b16 %v194, %v194
    %v219 = vpack.c.b16 %v195, %v195
    %v220 = vpack.c.b16 %v196, %v196
    %v221 = vpack.c.b16 %v197, %v197
    %v222 = vpack.c.b16 %v198, %v198
    %v223 = vpack.c.b16 %v199, %v199
    %v224 = vpack.c.b16 %v200, %v200
    %v225 = vpack.c.b16 %v201, %v201
    %v226 = vpack.c.b16 %v202, %v202
    %v227 = vpack.c.b16 %v203, %v203
    %v228 = vpack.c.b16 %v204, %v204
    %v229 = vpack.c.b16 %v205, %v205
    %v230 = vpack.c.b16 %v206, %v206
    %v231 = vpack.c.b16 %v207, %v207
    %v232 = vpack.c.b16 %v208, %v208
    %v233 = vpack.c.b16 %v209, %v209
    %234 = vrot.lane.b32.xlu0 %v210, 32
    %v235 = vpop.permute.xlu0 %234
    %236 = vrot.lane.b32.xlu0 %v211, 32
    %v237 = vpop.permute.xlu0 %236
    %238 = vrot.lane.b32.xlu0 %v212, 32
    %v239 = vpop.permute.xlu0 %238
    %240 = vrot.lane.b32.xlu0 %v213, 32
    %v241 = vpop.permute.xlu0 %240
    %242 = vrot.lane.b32.xlu0 %v214, 32
    %v243 = vpop.permute.xlu0 %242
    %244 = vrot.lane.b32.xlu0 %v215, 32
    %v245 = vpop.permute.xlu0 %244
    %246 = vrot.lane.b32.xlu0 %v216, 32
    %v247 = vpop.permute.xlu0 %246
    %248 = vrot.lane.b32.xlu0 %v217, 32
    %v249 = vpop.permute.xlu0 %248
    %250 = vrot.lane.b32.xlu0 %v218, 32
    %v251 = vpop.permute.xlu0 %250
    %252 = vrot.lane.b32.xlu0 %v219, 32
    %v253 = vpop.permute.xlu0 %252
    %254 = vrot.lane.b32.xlu0 %v220, 32
    %v255 = vpop.permute.xlu0 %254
    %256 = vrot.lane.b32.xlu0 %v221, 32
    %v257 = vpop.permute.xlu0 %256
    %258 = vrot.lane.b32.xlu0 %v222, 32
    %v259 = vpop.permute.xlu0 %258
    %260 = vrot.lane.b32.xlu0 %v223, 32
    %v261 = vpop.permute.xlu0 %260
    %262 = vrot.lane.b32.xlu0 %v224, 32
    %v263 = vpop.permute.xlu0 %262
    %264 = vrot.lane.b32.xlu0 %v225, 32
    %v265 = vpop.permute.xlu0 %264
    %266 = vrot.lane.b32.xlu0 %v226, 32
    %v267 = vpop.permute.xlu0 %266
    %268 = vrot.lane.b32.xlu0 %v227, 32
    %v269 = vpop.permute.xlu0 %268
    %270 = vrot.lane.b32.xlu0 %v228, 32
    %v271 = vpop.permute.xlu0 %270
    %272 = vrot.lane.b32.xlu0 %v229, 32
    %v273 = vpop.permute.xlu0 %272
    %274 = vrot.lane.b32.xlu0 %v230, 32
    %v275 = vpop.permute.xlu0 %274
    %276 = vrot.lane.b32.xlu0 %v231, 32
    %v277 = vpop.permute.xlu0 %276
    %278 = vrot.lane.b32.xlu0 %v232, 32
    %v279 = vpop.permute.xlu0 %278
    %280 = vrot.lane.b32.xlu0 %v233, 32
    %v281 = vpop.permute.xlu0 %280
    %v283 = vunpack.c.l.b16 %v159
    %v284 = vpack.c.b16 %v283, %v283
    %285 = vrot.lane.b32.xlu0 %v211, 64
    %v286 = vpop.permute.xlu0 %285
    %287 = vrot.lane.b32.xlu0 %v212, 64
    %v288 = vpop.permute.xlu0 %287
    %289 = vrot.lane.b32.xlu0 %v213, 64
    %v290 = vpop.permute.xlu0 %289
    %291 = vrot.lane.b32.xlu0 %v214, 64
    %v292 = vpop.permute.xlu0 %291
    %293 = vrot.lane.b32.xlu0 %v215, 64
    %v294 = vpop.permute.xlu0 %293
    %295 = vrot.lane.b32.xlu0 %v216, 64
    %v296 = vpop.permute.xlu0 %295
    %297 = vrot.lane.b32.xlu0 %v217, 64
    %v298 = vpop.permute.xlu0 %297
    %299 = vrot.lane.b32.xlu0 %v218, 64
    %v300 = vpop.permute.xlu0 %299
    %301 = vrot.lane.b32.xlu0 %v219, 64
    %v302 = vpop.permute.xlu0 %301
    %303 = vrot.lane.b32.xlu0 %v220, 64
    %v304 = vpop.permute.xlu0 %303
    %305 = vrot.lane.b32.xlu0 %v221, 64
    %v306 = vpop.permute.xlu0 %305
    %307 = vrot.lane.b32.xlu0 %v222, 64
    %v308 = vpop.permute.xlu0 %307
    %309 = vrot.lane.b32.xlu0 %v223, 64
    %v310 = vpop.permute.xlu0 %309
    %311 = vrot.lane.b32.xlu0 %v224, 64
    %v312 = vpop.permute.xlu0 %311
    %313 = vrot.lane.b32.xlu0 %v225, 64
    %v314 = vpop.permute.xlu0 %313
    %315 = vrot.lane.b32.xlu0 %v226, 64
    %v316 = vpop.permute.xlu0 %315
    %317 = vrot.lane.b32.xlu0 %v227, 64
    %v318 = vpop.permute.xlu0 %317
    %319 = vrot.lane.b32.xlu0 %v228, 64
    %v320 = vpop.permute.xlu0 %319
    %321 = vrot.lane.b32.xlu0 %v229, 64
    %v322 = vpop.permute.xlu0 %321
    %323 = vrot.lane.b32.xlu0 %v230, 64
    %v324 = vpop.permute.xlu0 %323
    %325 = vrot.lane.b32.xlu0 %v231, 64
    %v326 = vpop.permute.xlu0 %325
    %327 = vrot.lane.b32.xlu0 %v232, 64
    %v328 = vpop.permute.xlu0 %327
    %329 = vrot.lane.b32.xlu0 %v233, 64
    %v330 = vpop.permute.xlu0 %329
    %331 = vrot.lane.b32.xlu0 %v284, 64
    %v332 = vpop.permute.xlu0 %331
    %v334 = vunpack.c.l.b16 %v160
    %v335 = vpack.c.b16 %v334, %v334
    %336 = vrot.lane.b32.xlu0 %v212, 96
    %v337 = vpop.permute.xlu0 %336
    %338 = vrot.lane.b32.xlu0 %v213, 96
    %v339 = vpop.permute.xlu0 %338
    %340 = vrot.lane.b32.xlu0 %v214, 96
    %v341 = vpop.permute.xlu0 %340
    %342 = vrot.lane.b32.xlu0 %v215, 96
    %v343 = vpop.permute.xlu0 %342
    %344 = vrot.lane.b32.xlu0 %v216, 96
    %v345 = vpop.permute.xlu0 %344
    %346 = vrot.lane.b32.xlu0 %v217, 96
    %v347 = vpop.permute.xlu0 %346
    %348 = vrot.lane.b32.xlu0 %v218, 96
    %v349 = vpop.permute.xlu0 %348
    %350 = vrot.lane.b32.xlu0 %v219, 96
    %v351 = vpop.permute.xlu0 %350
    %352 = vrot.lane.b32.xlu0 %v220, 96
    %v353 = vpop.permute.xlu0 %352
    %354 = vrot.lane.b32.xlu0 %v221, 96
    %v355 = vpop.permute.xlu0 %354
    %356 = vrot.lane.b32.xlu0 %v222, 96
    %v357 = vpop.permute.xlu0 %356
    %358 = vrot.lane.b32.xlu0 %v223, 96
    %v359 = vpop.permute.xlu0 %358
    %360 = vrot.lane.b32.xlu0 %v224, 96
    %v361 = vpop.permute.xlu0 %360
    %362 = vrot.lane.b32.xlu0 %v225, 96
    %v363 = vpop.permute.xlu0 %362
    %364 = vrot.lane.b32.xlu0 %v226, 96
    %v365 = vpop.permute.xlu0 %364
    %366 = vrot.lane.b32.xlu0 %v227, 96
    %v367 = vpop.permute.xlu0 %366
    %368 = vrot.lane.b32.xlu0 %v228, 96
    %v369 = vpop.permute.xlu0 %368
    %370 = vrot.lane.b32.xlu0 %v229, 96
    %v371 = vpop.permute.xlu0 %370
    %372 = vrot.lane.b32.xlu0 %v230, 96
    %v373 = vpop.permute.xlu0 %372
    %374 = vrot.lane.b32.xlu0 %v231, 96
    %v375 = vpop.permute.xlu0 %374
    %376 = vrot.lane.b32.xlu0 %v232, 96
    %v377 = vpop.permute.xlu0 %376
    %378 = vrot.lane.b32.xlu0 %v233, 96
    %v379 = vpop.permute.xlu0 %378
    %380 = vrot.lane.b32.xlu0 %v284, 96
    %v381 = vpop.permute.xlu0 %380
    %382 = vrot.lane.b32.xlu0 %v335, 96
    %v383 = vpop.permute.xlu0 %382
    %vm384 = vcmask 261120
    %v387 = vsel %vm384, %v134, %v235
    %v390 = vsel %vm384, %v135, %v237
    %v393 = vsel %vm384, %v136, %v239
    %v396 = vsel %vm384, %v137, %v241
    %v399 = vsel %vm384, %v138, %v243
    %v402 = vsel %vm384, %v139, %v245
    %v405 = vsel %vm384, %v140, %v247
    %v408 = vsel %vm384, %v141, %v249
    %v411 = vsel %vm384, %v142, %v251
    %v414 = vsel %vm384, %v143, %v253
    %v417 = vsel %vm384, %v144, %v255
    %v420 = vsel %vm384, %v145, %v257
    %v423 = vsel %vm384, %v146, %v259
    %v426 = vsel %vm384, %v147, %v261
    %v429 = vsel %vm384, %v148, %v263
    %v432 = vsel %vm384, %v149, %v265
    %v435 = vsel %vm384, %v150, %v267
    %v438 = vsel %vm384, %v151, %v269
    %v441 = vsel %vm384, %v152, %v271
    %v444 = vsel %vm384, %v153, %v273
    %v447 = vsel %vm384, %v154, %v275
    %v450 = vsel %vm384, %v155, %v277
    %v453 = vsel %vm384, %v156, %v279
    %v456 = vsel %vm384, %v157, %v281
    %vm457 = vcmask 523264
    %v459 = vsel %vm457, %v387, %v286
    %v461 = vsel %vm457, %v390, %v288
    %v463 = vsel %vm457, %v393, %v290
    %v465 = vsel %vm457, %v396, %v292
    %v467 = vsel %vm457, %v399, %v294
    %v469 = vsel %vm457, %v402, %v296
    %v471 = vsel %vm457, %v405, %v298
    %v473 = vsel %vm457, %v408, %v300
    %v475 = vsel %vm457, %v411, %v302
    %v477 = vsel %vm457, %v414, %v304
    %v479 = vsel %vm457, %v417, %v306
    %v481 = vsel %vm457, %v420, %v308
    %v483 = vsel %vm457, %v423, %v310
    %v485 = vsel %vm457, %v426, %v312
    %v487 = vsel %vm457, %v429, %v314
    %v489 = vsel %vm457, %v432, %v316
    %v491 = vsel %vm457, %v435, %v318
    %v493 = vsel %vm457, %v438, %v320
    %v495 = vsel %vm457, %v441, %v322
    %v497 = vsel %vm457, %v444, %v324
    %v499 = vsel %vm457, %v447, %v326
    %v501 = vsel %vm457, %v450, %v328
    %v503 = vsel %vm457, %v453, %v330
    %v505 = vsel %vm457, %v456, %v332
    %vm506 = vcmask 785408
    %v508 = vsel %vm506, %v459, %v337
    %v510 = vsel %vm506, %v461, %v339
    %v512 = vsel %vm506, %v463, %v341
    %v514 = vsel %vm506, %v465, %v343
    %v516 = vsel %vm506, %v467, %v345
    %v518 = vsel %vm506, %v469, %v347
    %v520 = vsel %vm506, %v471, %v349
    %v522 = vsel %vm506, %v473, %v351
    %v524 = vsel %vm506, %v475, %v353
    %v526 = vsel %vm506, %v477, %v355
    %v528 = vsel %vm506, %v479, %v357
    %v530 = vsel %vm506, %v481, %v359
    %v532 = vsel %vm506, %v483, %v361
    %v534 = vsel %vm506, %v485, %v363
    %v536 = vsel %vm506, %v487, %v365
    %v538 = vsel %vm506, %v489, %v367
    %v540 = vsel %vm506, %v491, %v369
    %v542 = vsel %vm506, %v493, %v371
    %v544 = vsel %vm506, %v495, %v373
    %v546 = vsel %vm506, %v497, %v375
    %v548 = vsel %vm506, %v499, %v377
    %v550 = vsel %vm506, %v501, %v379
    %v552 = vsel %vm506, %v503, %v381
    %v554 = vsel %vm506, %v505, %v383
    %v580 = vunpack.c.l.b16 %v508
    %v581 = vunpack.c.l.b16 %v510
    %v582 = vunpack.c.l.b16 %v512
    %v583 = vunpack.c.l.b16 %v514
    %v584 = vunpack.c.l.b16 %v516
    %v585 = vunpack.c.l.b16 %v518
    %v586 = vunpack.c.l.b16 %v520
    %v587 = vunpack.c.l.b16 %v522
    %v588 = vunpack.c.l.b16 %v524
    %v589 = vunpack.c.l.b16 %v526
    %v590 = vunpack.c.l.b16 %v528
    %v591 = vunpack.c.l.b16 %v530
    %v592 = vunpack.c.l.b16 %v532
    %v593 = vunpack.c.l.b16 %v534
    %v594 = vunpack.c.l.b16 %v536
    %v595 = vunpack.c.l.b16 %v538
    %v596 = vunpack.c.l.b16 %v540
    %v597 = vunpack.c.l.b16 %v542
    %v598 = vunpack.c.l.b16 %v544
    %v599 = vunpack.c.l.b16 %v546
    %v600 = vunpack.c.l.b16 %v548
    %v601 = vunpack.c.l.b16 %v550
    %v602 = vunpack.c.l.b16 %v552
    %v603 = vunpack.c.l.b16 %v554
    %v604 = vunpack.c.l.b16 %v161
    %v605 = vld [vmem:[#allocation3] sm:$0xff]
    %v606 = vld [vmem:[#allocation3 + $0x8] sm:$0xff]
    %v607 = vld [vmem:[#allocation3 + $0x10] sm:$0xff]
    %v608 = vld [vmem:[#allocation3 + $0x18] sm:$0xff]
    %v609 = vld [vmem:[#allocation3 + $0x20] sm:$0xff]
    %v610 = vld [vmem:[#allocation3 + $0x28] sm:$0xff]
    %v611 = vld [vmem:[#allocation3 + $0x30] sm:$0xff]
    %v612 = vld [vmem:[#allocation3 + $0x38] sm:$0xff]
    %v613 = vld [vmem:[#allocation3 + $0x40] sm:$0xff]
    %v614 = vld [vmem:[#allocation3 + $0x48] sm:$0xff]
    %v615 = vld [vmem:[#allocation3 + $0x50] sm:$0xff]
    %v616 = vld [vmem:[#allocation3 + $0x58] sm:$0xff]
    %v617 = vld [vmem:[#allocation3 + $0x60] sm:$0xff]
    %v618 = vld [vmem:[#allocation3 + $0x68] sm:$0xff]
    %v619 = vld [vmem:[#allocation3 + $0x70] sm:$0xff]
    %v620 = vld [vmem:[#allocation3 + $0x78] sm:$0xff]
    %v621 = vld [vmem:[#allocation3 + $0x80] sm:$0xff]
    %v622 = vld [vmem:[#allocation3 + $0x88] sm:$0xff]
    %v623 = vld [vmem:[#allocation3 + $0x90] sm:$0xff]
    %v624 = vld [vmem:[#allocation3 + $0x98] sm:$0xff]
    %v625 = vld [vmem:[#allocation3 + $0xa0] sm:$0xff]
    %v626 = vld [vmem:[#allocation3 + $0xa8] sm:$0xff]
    %v627 = vld [vmem:[#allocation3 + $0xb0] sm:$0xff]
    %v628 = vld [vmem:[#allocation3 + $0xb8] sm:$0xff]
    %v629 = vld [vmem:[#allocation3 + $0xc0] sm:$0xff]
    %v630 = vld [vmem:[#allocation3 + $0xc8] sm:$0xff]
    %v631 = vld [vmem:[#allocation3 + $0xd0] sm:$0xff]
    %v632 = vld [vmem:[#allocation3 + $0xd8] sm:$0xff]
    %v633 = vld [vmem:[#allocation3 + $0xe0] sm:$0xff]
    %v634 = vld [vmem:[#allocation3 + $0xe8] sm:$0xff]
    %v635 = vld [vmem:[#allocation3 + $0xf0] sm:$0xff]
    %v636 = vld [vmem:[#allocation3 + $0xf8] sm:$0xff]
    %v637 = vld [vmem:[#allocation3 + $0x100] sm:$0xff]
    %v638 = vld [vmem:[#allocation3 + $0x108] sm:$0xff]
    %v639 = vld [vmem:[#allocation3 + $0x110] sm:$0xff]
    %v640 = vld [vmem:[#allocation3 + $0x118] sm:$0xff]
    %v641 = vld [vmem:[#allocation3 + $0x120] sm:$0xff]
    %v642 = vld [vmem:[#allocation3 + $0x128] sm:$0xff]
    %v643 = vld [vmem:[#allocation3 + $0x130] sm:$0xff]
    %v644 = vld [vmem:[#allocation3 + $0x138] sm:$0xff]
    %v645 = vld [vmem:[#allocation3 + $0x140] sm:$0xff]
    %v646 = vld [vmem:[#allocation3 + $0x148] sm:$0xff]
    %v647 = vld [vmem:[#allocation3 + $0x150] sm:$0xff]
    %v648 = vld [vmem:[#allocation3 + $0x158] sm:$0xff]
    %v649 = vld [vmem:[#allocation3 + $0x160] sm:$0xff]
    %v650 = vld [vmem:[#allocation3 + $0x168] sm:$0xff]
    %v651 = vld [vmem:[#allocation3 + $0x170] sm:$0xff]
    %v652 = vld [vmem:[#allocation3 + $0x178] sm:$0xff]
    %v653 = vld [vmem:[#allocation3 + $0x180] sm:$0xff]
    %v654 = vld [vmem:[#allocation3 + $0x188] sm:$0xff]
    %v655 = vld [vmem:[#allocation3 + $0x190] sm:$0xff]
    %v656 = vld [vmem:[#allocation3 + $0x198] sm:$0xff]
    %v657 = vld [vmem:[#allocation3 + $0x1a0] sm:$0xff]
    %v658 = vld [vmem:[#allocation3 + $0x1a8] sm:$0xff]
    %v659 = vld [vmem:[#allocation3 + $0x1b0] sm:$0xff]
    %v660 = vld [vmem:[#allocation3 + $0x1b8] sm:$0xff]
    %v661 = vld [vmem:[#allocation3 + $0x1c0] sm:$0xff]
    %v662 = vld [vmem:[#allocation3 + $0x1c8] sm:$0xff]
    %v663 = vld [vmem:[#allocation3 + $0x1d0] sm:$0xff]
    %v664 = vld [vmem:[#allocation3 + $0x1d8] sm:$0xff]
    %v665 = vpack.c.b16 %v581, %v580
    %v666 = vpack.c.b16 %v190, %v189
    %v667 = vpack.c.b16 %v583, %v582
    %v668 = vpack.c.b16 %v192, %v191
    %v669 = vpack.c.b16 %v585, %v584
    %v670 = vpack.c.b16 %v194, %v193
    %v671 = vpack.c.b16 %v587, %v586
    %v672 = vpack.c.b16 %v196, %v195
    %v673 = vpack.c.b16 %v589, %v588
    %v674 = vpack.c.b16 %v198, %v197
    %v675 = vpack.c.b16 %v591, %v590
    %v676 = vpack.c.b16 %v200, %v199
    %v677 = vpack.c.b16 %v593, %v592
    %v678 = vpack.c.b16 %v202, %v201
    %v679 = vpack.c.b16 %v595, %v594
    %v680 = vpack.c.b16 %v204, %v203
    %v681 = vpack.c.b16 %v597, %v596
    %v682 = vpack.c.b16 %v206, %v205
    %v683 = vpack.c.b16 %v599, %v598
    %v684 = vpack.c.b16 %v208, %v207
    %v685 = vpack.c.b16 %v601, %v600
    %v686 = vpack.c.b16 %v283, %v209
    %v687 = vpack.c.b16 %v603, %v602
    %v688 = vpack.c.b16 %v604, %v334
    %v761 = vunpack.c.l.b16 %v605
    %v762 = vunpack.c.h.b16 %v605
    %v763 = vunpack.c.l.b16 %v606
    %v764 = vunpack.c.h.b16 %v606
    %v765 = vunpack.c.l.b16 %v607
    %v766 = vunpack.c.h.b16 %v607
    %v767 = vunpack.c.l.b16 %v608
    %v768 = vunpack.c.h.b16 %v608
    %v769 = vunpack.c.l.b16 %v609
    %v770 = vunpack.c.h.b16 %v609
    %v771 = vunpack.c.l.b16 %v610
    %v772 = vunpack.c.h.b16 %v610
    %v773 = vunpack.c.l.b16 %v611
    %v774 = vunpack.c.h.b16 %v611
    %v775 = vunpack.c.l.b16 %v612
    %v776 = vunpack.c.h.b16 %v612
    %v777 = vunpack.c.l.b16 %v613
    %v778 = vunpack.c.h.b16 %v613
    %v779 = vunpack.c.l.b16 %v614
    %v780 = vunpack.c.h.b16 %v614
    %v781 = vunpack.c.l.b16 %v615
    %v782 = vunpack.c.h.b16 %v615
    %v783 = vunpack.c.l.b16 %v616
    %v784 = vunpack.c.h.b16 %v616
    %v785 = vunpack.c.l.b16 %v617
    %v786 = vunpack.c.h.b16 %v617
    %v787 = vunpack.c.l.b16 %v618
    %v788 = vunpack.c.h.b16 %v618
    %v789 = vunpack.c.l.b16 %v619
    %v790 = vunpack.c.h.b16 %v619
    %v791 = vunpack.c.l.b16 %v620
    %v792 = vunpack.c.h.b16 %v620
    %v793 = vunpack.c.l.b16 %v621
    %v794 = vunpack.c.h.b16 %v621
    %v795 = vunpack.c.l.b16 %v622
    %v796 = vunpack.c.h.b16 %v622
    %v797 = vunpack.c.l.b16 %v623
    %v798 = vunpack.c.h.b16 %v623
    %v799 = vunpack.c.l.b16 %v624
    %v800 = vunpack.c.h.b16 %v624
    %v801 = vunpack.c.l.b16 %v625
    %v802 = vunpack.c.h.b16 %v625
    %v803 = vunpack.c.l.b16 %v626
    %v804 = vunpack.c.h.b16 %v626
    %v805 = vunpack.c.l.b16 %v627
    %v806 = vunpack.c.h.b16 %v627
    %v807 = vunpack.c.l.b16 %v628
    %v808 = vunpack.c.h.b16 %v628
    %v809 = vunpack.c.l.b16 %v629
    %v810 = vunpack.c.h.b16 %v629
    %v811 = vunpack.c.l.b16 %v630
    %v812 = vunpack.c.h.b16 %v630
    %v813 = vunpack.c.l.b16 %v631
    %v814 = vunpack.c.h.b16 %v631
    %v815 = vunpack.c.l.b16 %v632
    %v816 = vunpack.c.h.b16 %v632
    %v817 = vunpack.c.l.b16 %v633
    %v818 = vunpack.c.h.b16 %v633
    %v819 = vunpack.c.l.b16 %v634
    %v820 = vunpack.c.h.b16 %v634
    %v821 = vunpack.c.l.b16 %v635
    %v822 = vunpack.c.h.b16 %v635
    %v823 = vunpack.c.l.b16 %v636
    %v824 = vunpack.c.h.b16 %v636
    %v825 = vunpack.c.l.b16 %v637
    %v826 = vunpack.c.h.b16 %v637
    %v827 = vunpack.c.l.b16 %v638
    %v828 = vunpack.c.h.b16 %v638
    %v829 = vunpack.c.l.b16 %v639
    %v830 = vunpack.c.h.b16 %v639
    %v831 = vunpack.c.l.b16 %v640
    %v832 = vunpack.c.h.b16 %v640
    %v833 = vunpack.c.l.b16 %v641
    %v834 = vunpack.c.h.b16 %v641
    %v835 = vunpack.c.l.b16 %v642
    %v836 = vunpack.c.h.b16 %v642
    %v837 = vunpack.c.l.b16 %v643
    %v838 = vunpack.c.h.b16 %v643
    %v839 = vunpack.c.l.b16 %v644
    %v840 = vunpack.c.h.b16 %v644
    %v841 = vunpack.c.l.b16 %v645
    %v842 = vunpack.c.h.b16 %v645
    %v843 = vunpack.c.l.b16 %v646
    %v844 = vunpack.c.h.b16 %v646
    %v845 = vunpack.c.l.b16 %v647
    %v846 = vunpack.c.h.b16 %v647
    %v847 = vunpack.c.l.b16 %v648
    %v848 = vunpack.c.h.b16 %v648
    %v849 = vunpack.c.l.b16 %v649
    %v850 = vunpack.c.h.b16 %v649
    %v851 = vunpack.c.l.b16 %v650
    %v852 = vunpack.c.h.b16 %v650
    %v853 = vunpack.c.l.b16 %v651
    %v854 = vunpack.c.h.b16 %v651
    %v855 = vunpack.c.l.b16 %v652
    %v856 = vunpack.c.h.b16 %v652
    %v857 = vunpack.c.l.b16 %v653
    %v858 = vunpack.c.h.b16 %v653
    %v859 = vunpack.c.l.b16 %v654
    %v860 = vunpack.c.h.b16 %v654
    %v861 = vunpack.c.l.b16 %v655
    %v862 = vunpack.c.h.b16 %v655
    %v863 = vunpack.c.l.b16 %v656
    %v864 = vunpack.c.h.b16 %v656
    %v865 = vunpack.c.l.b16 %v657
    %v866 = vunpack.c.h.b16 %v657
    %v867 = vunpack.c.l.b16 %v658
    %v868 = vunpack.c.h.b16 %v658
    %v869 = vunpack.c.l.b16 %v659
    %v870 = vunpack.c.h.b16 %v659
    %v871 = vunpack.c.l.b16 %v660
    %v872 = vunpack.c.h.b16 %v660
    %v873 = vunpack.c.l.b16 %v661
    %v874 = vunpack.c.h.b16 %v661
    %v875 = vunpack.c.l.b16 %v662
    %v876 = vunpack.c.h.b16 %v662
    %v877 = vunpack.c.l.b16 %v663
    %v878 = vunpack.c.h.b16 %v663
    %v879 = vunpack.c.l.b16 %v664
    %v880 = vunpack.c.h.b16 %v664
    %v881 = vpack.c.b16 %v767, %v761
    %v882 = vpack.c.b16 %v768, %v762
    %v883 = vpack.c.b16 %v769, %v763
    %v884 = vpack.c.b16 %v770, %v764
    %v885 = vpack.c.b16 %v771, %v765
    %v886 = vpack.c.b16 %v772, %v766
    %v887 = vpack.c.b16 %v779, %v773
    %v888 = vpack.c.b16 %v780, %v774
    %v889 = vpack.c.b16 %v781, %v775
    %v890 = vpack.c.b16 %v782, %v776
    %v891 = vpack.c.b16 %v783, %v777
    %v892 = vpack.c.b16 %v784, %v778
    %v893 = vpack.c.b16 %v791, %v785
    %v894 = vpack.c.b16 %v792, %v786
    %v895 = vpack.c.b16 %v793, %v787
    %v896 = vpack.c.b16 %v794, %v788
    %v897 = vpack.c.b16 %v795, %v789
    %v898 = vpack.c.b16 %v796, %v790
    %v899 = vpack.c.b16 %v803, %v797
    %v900 = vpack.c.b16 %v804, %v798
    %v901 = vpack.c.b16 %v805, %v799
    %v902 = vpack.c.b16 %v806, %v800
    %v903 = vpack.c.b16 %v807, %v801
    %v904 = vpack.c.b16 %v808, %v802
    %v905 = vpack.c.b16 %v815, %v809
    %v906 = vpack.c.b16 %v816, %v810
    %v907 = vpack.c.b16 %v817, %v811
    %v908 = vpack.c.b16 %v818, %v812
    %v909 = vpack.c.b16 %v819, %v813
    %v910 = vpack.c.b16 %v820, %v814
    %v911 = vpack.c.b16 %v827, %v821
    %v912 = vpack.c.b16 %v828, %v822
    %v913 = vpack.c.b16 %v829, %v823
    %v914 = vpack.c.b16 %v830, %v824
    %v915 = vpack.c.b16 %v831, %v825
    %v916 = vpack.c.b16 %v832, %v826
    %v917 = vpack.c.b16 %v839, %v833
    %v918 = vpack.c.b16 %v840, %v834
    %v919 = vpack.c.b16 %v841, %v835
    %v920 = vpack.c.b16 %v842, %v836
    %v921 = vpack.c.b16 %v843, %v837
    %v922 = vpack.c.b16 %v844, %v838
    %v923 = vpack.c.b16 %v851, %v845
    %v924 = vpack.c.b16 %v852, %v846
    %v925 = vpack.c.b16 %v853, %v847
    %v926 = vpack.c.b16 %v854, %v848
    %v927 = vpack.c.b16 %v855, %v849
    %v928 = vpack.c.b16 %v856, %v850
    %v929 = vpack.c.b16 %v863, %v857
    %v930 = vpack.c.b16 %v864, %v858
    %v931 = vpack.c.b16 %v865, %v859
    %v932 = vpack.c.b16 %v866, %v860
    %v933 = vpack.c.b16 %v867, %v861
    %v934 = vpack.c.b16 %v868, %v862
    %v935 = vpack.c.b16 %v875, %v869
    %v936 = vpack.c.b16 %v876, %v870
    %v937 = vpack.c.b16 %v877, %v871
    %v938 = vpack.c.b16 %v878, %v872
    %v939 = vpack.c.b16 %v879, %v873
    %v940 = vpack.c.b16 %v880, %v874
    %v1002 = vsel %vm384, %v666, 0
    %v1005 = vsel %vm384, %v668, 0
    %v1008 = vsel %vm384, %v670, 0
    %v1011 = vsel %vm384, %v672, 0
    %v1014 = vsel %vm384, %v674, 0
    %v1017 = vsel %vm384, %v676, 0
    %v1020 = vsel %vm384, %v678, 0
    %v1023 = vsel %vm384, %v680, 0
    %v1026 = vsel %vm384, %v682, 0
    %v1029 = vsel %vm384, %v684, 0
    %v1032 = vsel %vm384, %v686, 0
    %v1035 = vsel %vm384, %v688, 0
    %1037 = vmatprep.subr.bf16.mxu0 %v924
    %1038 = vmatpush1.bf16.msra.mxu0 %v923
    %1039 = vmatprep.subr.bf16.mxu0 %v918
    %1040 = vmatpush1.bf16.msra.mxu0 %v917
    %1041 = vmatprep.subr.bf16.mxu0 %v912
    %1042 = vmatpush1.bf16.msra.mxu0 %v911
    %1043 = vmatprep.subr.bf16.mxu0 %v906
    %1044 = vmatpush1.bf16.msra.mxu0 %v905
    %1045 = vmatprep.subr.bf16.mxu0 %v900
    %1046 = vmatpush1.bf16.msra.mxu0 %v899
    %1047 = vmatprep.subr.bf16.mxu0 %v894
    %1048 = vmatpush1.bf16.msra.mxu0 %v893
    %1049 = vmatprep.subr.bf16.mxu0 %v888
    %1050 = vmatpush1.bf16.msra.mxu0 %v887
    %1051 = vmatprep.subr.bf16.mxu0 %v882
    %1052 = vmatpush1.bf16.msra.mxu0 %v881
    %1053 = vmatprep.subr.bf16.mxu0 0
    %1054 = vmatpush2.bf16.msra.mxu0 0
    %1055 = vmatprep.subr.bf16.mxu0 0
    %1056 = vmatpush2.bf16.msra.mxu0 0
    %1057 = vmatprep.subr.bf16.mxu0 0
    %1058 = vmatpush2.bf16.msra.mxu0 0
    %1059 = vmatprep.subr.bf16.mxu0 0
    %1060 = vmatpush2.bf16.msra.mxu0 0
    %1061 = vmatprep.subr.bf16.mxu0 0
    %1062 = vmatpush2.bf16.msra.mxu0 0
    %1063 = vmatprep.subr.bf16.mxu0 0
    %1064 = vmatpush2.bf16.msra.mxu0 0
    %1065 = vmatprep.subr.bf16.mxu0 %v936
    %1066 = vmatpush2.bf16.msra.mxu0 %v935
    %1067 = vmatprep.subr.bf16.mxu0 %v930
    %1068 = vmatpush2.bf16.msra.mxu0 %v929
    %1069 = vmatprep.mubr.bf16.mxu0 %v1002
    %1070 = vmatmul.mubr.bf16.gmra.mxu0 %v665
    %v1071 = vpop.f32.mrf.mxu0
    %v1072 = vadd.f32 0.0, %v1071
    %v1073 = vpop.f32.mrf.mxu0
    %v1074 = vadd.f32 0.0, %v1073
    %v1075 = vpop.f32.mrf.mxu0
    %v1076 = vadd.f32 0.0, %v1075
    %v1077 = vpop.f32.mrf.mxu0
    %v1078 = vadd.f32 0.0, %v1077
    %1079 = vmatprep.mubr.bf16.mxu0 %v1005
    %1080 = vmatmul.mubr.bf16.gmra.mxu0 %v667
    %v1081 = vpop.f32.mrf.mxu0
    %v1082 = vadd.f32 0.0, %v1081
    %v1083 = vpop.f32.mrf.mxu0
    %v1084 = vadd.f32 0.0, %v1083
    %v1085 = vpop.f32.mrf.mxu0
    %v1086 = vadd.f32 0.0, %v1085
    %v1087 = vpop.f32.mrf.mxu0
    %v1088 = vadd.f32 0.0, %v1087
    %1089 = vmatprep.mubr.bf16.mxu0 %v1008
    %1090 = vmatmul.mubr.bf16.gmra.mxu0 %v669
    %v1091 = vpop.f32.mrf.mxu0
    %v1092 = vadd.f32 0.0, %v1091
    %v1093 = vpop.f32.mrf.mxu0
    %v1094 = vadd.f32 0.0, %v1093
    %v1095 = vpop.f32.mrf.mxu0
    %v1096 = vadd.f32 0.0, %v1095
    %v1097 = vpop.f32.mrf.mxu0
    %v1098 = vadd.f32 0.0, %v1097
    %1099 = vmatprep.mubr.bf16.mxu0 %v1011
    %1100 = vmatmul.mubr.bf16.gmra.mxu0 %v671
    %v1101 = vpop.f32.mrf.mxu0
    %v1102 = vadd.f32 0.0, %v1101
    %v1103 = vpop.f32.mrf.mxu0
    %v1104 = vadd.f32 0.0, %v1103
    %v1105 = vpop.f32.mrf.mxu0
    %v1106 = vadd.f32 0.0, %v1105
    %v1107 = vpop.f32.mrf.mxu0
    %v1108 = vadd.f32 0.0, %v1107
    %1109 = vmatprep.mubr.bf16.mxu0 %v1014
    %1110 = vmatmul.mubr.bf16.gmra.mxu0 %v673
    %v1111 = vpop.f32.mrf.mxu0
    %v1112 = vadd.f32 0.0, %v1111
    %v1113 = vpop.f32.mrf.mxu0
    %v1114 = vadd.f32 0.0, %v1113
    %v1115 = vpop.f32.mrf.mxu0
    %v1116 = vadd.f32 0.0, %v1115
    %v1117 = vpop.f32.mrf.mxu0
    %v1118 = vadd.f32 0.0, %v1117
    %1119 = vmatprep.mubr.bf16.mxu0 %v1017
    %1120 = vmatmul.mubr.bf16.gmra.mxu0 %v675
    %v1121 = vpop.f32.mrf.mxu0
    %v1122 = vadd.f32 0.0, %v1121
    %v1123 = vpop.f32.mrf.mxu0
    %v1124 = vadd.f32 0.0, %v1123
    %v1125 = vpop.f32.mrf.mxu0
    %v1126 = vadd.f32 0.0, %v1125
    %v1127 = vpop.f32.mrf.mxu0
    %v1128 = vadd.f32 0.0, %v1127
    %1129 = vmatprep.mubr.bf16.mxu0 %v1020
    %1130 = vmatmul.mubr.bf16.gmra.mxu0 %v677
    %v1131 = vpop.f32.mrf.mxu0
    %v1132 = vadd.f32 0.0, %v1131
    %v1133 = vpop.f32.mrf.mxu0
    %v1134 = vadd.f32 0.0, %v1133
    %v1135 = vpop.f32.mrf.mxu0
    %v1136 = vadd.f32 0.0, %v1135
    %v1137 = vpop.f32.mrf.mxu0
    %v1138 = vadd.f32 0.0, %v1137
    %1139 = vmatprep.mubr.bf16.mxu0 %v1023
    %1140 = vmatmul.mubr.bf16.gmra.mxu0 %v679
    %v1141 = vpop.f32.mrf.mxu0
    %v1142 = vadd.f32 0.0, %v1141
    %v1143 = vpop.f32.mrf.mxu0
    %v1144 = vadd.f32 0.0, %v1143
    %v1145 = vpop.f32.mrf.mxu0
    %v1146 = vadd.f32 0.0, %v1145
    %v1147 = vpop.f32.mrf.mxu0
    %v1148 = vadd.f32 0.0, %v1147
    %1149 = vmatprep.mubr.bf16.mxu0 %v1026
    %1150 = vmatmul.mubr.bf16.gmra.mxu0 %v681
    %v1151 = vpop.f32.mrf.mxu0
    %v1152 = vadd.f32 0.0, %v1151
    %v1153 = vpop.f32.mrf.mxu0
    %v1154 = vadd.f32 0.0, %v1153
    %v1155 = vpop.f32.mrf.mxu0
    %v1156 = vadd.f32 0.0, %v1155
    %v1157 = vpop.f32.mrf.mxu0
    %v1158 = vadd.f32 0.0, %v1157
    %1159 = vmatprep.mubr.bf16.mxu0 %v1029
    %1160 = vmatmul.mubr.bf16.gmra.mxu0 %v683
    %v1161 = vpop.f32.mrf.mxu0
    %v1162 = vadd.f32 0.0, %v1161
    %v1163 = vpop.f32.mrf.mxu0
    %v1164 = vadd.f32 0.0, %v1163
    %v1165 = vpop.f32.mrf.mxu0
    %v1166 = vadd.f32 0.0, %v1165
    %v1167 = vpop.f32.mrf.mxu0
    %v1168 = vadd.f32 0.0, %v1167
    %1169 = vmatprep.mubr.bf16.mxu0 %v1032
    %1170 = vmatmul.mubr.bf16.gmra.mxu0 %v685
    %v1171 = vpop.f32.mrf.mxu0
    %v1172 = vadd.f32 0.0, %v1171
    %v1173 = vpop.f32.mrf.mxu0
    %v1174 = vadd.f32 0.0, %v1173
    %v1175 = vpop.f32.mrf.mxu0
    %v1176 = vadd.f32 0.0, %v1175
    %v1177 = vpop.f32.mrf.mxu0
    %v1178 = vadd.f32 0.0, %v1177
    %1179 = vmatprep.mubr.bf16.mxu0 %v1035
    %1180 = vmatmul.mubr.bf16.gmra.mxu0 %v687
    %v1181 = vpop.f32.mrf.mxu0
    %v1182 = vadd.f32 0.0, %v1181
    %v1183 = vpop.f32.mrf.mxu0
    %v1184 = vadd.f32 0.0, %v1183
    %v1185 = vpop.f32.mrf.mxu0
    %v1186 = vadd.f32 0.0, %v1185
    %v1187 = vpop.f32.mrf.mxu0
    %v1188 = vadd.f32 0.0, %v1187
    %1189 = vdwg.mxu0
    %1190 = vmatprep.subr.bf16.mxu0 %v926
    %1191 = vmatpush1.bf16.msra.mxu0 %v925
    %1192 = vmatprep.subr.bf16.mxu0 %v920
    %1193 = vmatpush1.bf16.msra.mxu0 %v919
    %1194 = vmatprep.subr.bf16.mxu0 %v914
    %1195 = vmatpush1.bf16.msra.mxu0 %v913
    %1196 = vmatprep.subr.bf16.mxu0 %v908
    %1197 = vmatpush1.bf16.msra.mxu0 %v907
    %1198 = vmatprep.subr.bf16.mxu0 %v902
    %1199 = vmatpush1.bf16.msra.mxu0 %v901
    %1200 = vmatprep.subr.bf16.mxu0 %v896
    %1201 = vmatpush1.bf16.msra.mxu0 %v895
    %1202 = vmatprep.subr.bf16.mxu0 %v890
    %1203 = vmatpush1.bf16.msra.mxu0 %v889
    %1204 = vmatprep.subr.bf16.mxu0 %v884
    %1205 = vmatpush1.bf16.msra.mxu0 %v883
    %1206 = vmatprep.subr.bf16.mxu0 0
    %1207 = vmatpush2.bf16.msra.mxu0 0
    %1208 = vmatprep.subr.bf16.mxu0 0
    %1209 = vmatpush2.bf16.msra.mxu0 0
    %1210 = vmatprep.subr.bf16.mxu0 0
    %1211 = vmatpush2.bf16.msra.mxu0 0
    %1212 = vmatprep.subr.bf16.mxu0 0
    %1213 = vmatpush2.bf16.msra.mxu0 0
    %1214 = vmatprep.subr.bf16.mxu0 0
    %1215 = vmatpush2.bf16.msra.mxu0 0
    %1216 = vmatprep.subr.bf16.mxu0 0
    %1217 = vmatpush2.bf16.msra.mxu0 0
    %1218 = vmatprep.subr.bf16.mxu0 %v938
    %1219 = vmatpush2.bf16.msra.mxu0 %v937
    %1220 = vmatprep.subr.bf16.mxu0 %v932
    %1221 = vmatpush2.bf16.msra.mxu0 %v931
    %1222 = vmatprep.mubr.bf16.mxu0 %v1002
    %1223 = vmatmul.mubr.bf16.gmra.mxu0 %v665
    %v1224 = vpop.f32.mrf.mxu0
    %v1225 = vadd.f32 0.0, %v1224
    %v1226 = vpop.f32.mrf.mxu0
    %v1227 = vadd.f32 0.0, %v1226
    %v1228 = vpop.f32.mrf.mxu0
    %v1229 = vadd.f32 0.0, %v1228
    %v1230 = vpop.f32.mrf.mxu0
    %v1231 = vadd.f32 0.0, %v1230
    %1232 = vmatprep.mubr.bf16.mxu0 %v1005
    %1233 = vmatmul.mubr.bf16.gmra.mxu0 %v667
    %v1234 = vpop.f32.mrf.mxu0
    %v1235 = vadd.f32 0.0, %v1234
    %v1236 = vpop.f32.mrf.mxu0
    %v1237 = vadd.f32 0.0, %v1236
    %v1238 = vpop.f32.mrf.mxu0
    %v1239 = vadd.f32 0.0, %v1238
    %v1240 = vpop.f32.mrf.mxu0
    %v1241 = vadd.f32 0.0, %v1240
    %1242 = vmatprep.mubr.bf16.mxu0 %v1008
    %1243 = vmatmul.mubr.bf16.gmra.mxu0 %v669
    %v1244 = vpop.f32.mrf.mxu0
    %v1245 = vadd.f32 0.0, %v1244
    %v1246 = vpop.f32.mrf.mxu0
    %v1247 = vadd.f32 0.0, %v1246
    %v1248 = vpop.f32.mrf.mxu0
    %v1249 = vadd.f32 0.0, %v1248
    %v1250 = vpop.f32.mrf.mxu0
    %v1251 = vadd.f32 0.0, %v1250
    %1252 = vmatprep.mubr.bf16.mxu0 %v1011
    %1253 = vmatmul.mubr.bf16.gmra.mxu0 %v671
    %v1254 = vpop.f32.mrf.mxu0
    %v1255 = vadd.f32 0.0, %v1254
    %v1256 = vpop.f32.mrf.mxu0
    %v1257 = vadd.f32 0.0, %v1256
    %v1258 = vpop.f32.mrf.mxu0
    %v1259 = vadd.f32 0.0, %v1258
    %v1260 = vpop.f32.mrf.mxu0
    %v1261 = vadd.f32 0.0, %v1260
    %1262 = vmatprep.mubr.bf16.mxu0 %v1014
    %1263 = vmatmul.mubr.bf16.gmra.mxu0 %v673
    %v1264 = vpop.f32.mrf.mxu0
    %v1265 = vadd.f32 0.0, %v1264
    %v1266 = vpop.f32.mrf.mxu0
    %v1267 = vadd.f32 0.0, %v1266
    %v1268 = vpop.f32.mrf.mxu0
    %v1269 = vadd.f32 0.0, %v1268
    %v1270 = vpop.f32.mrf.mxu0
    %v1271 = vadd.f32 0.0, %v1270
    %1272 = vmatprep.mubr.bf16.mxu0 %v1017
    %1273 = vmatmul.mubr.bf16.gmra.mxu0 %v675
    %v1274 = vpop.f32.mrf.mxu0
    %v1275 = vadd.f32 0.0, %v1274
    %v1276 = vpop.f32.mrf.mxu0
    %v1277 = vadd.f32 0.0, %v1276
    %v1278 = vpop.f32.mrf.mxu0
    %v1279 = vadd.f32 0.0, %v1278
    %v1280 = vpop.f32.mrf.mxu0
    %v1281 = vadd.f32 0.0, %v1280
    %1282 = vmatprep.mubr.bf16.mxu0 %v1020
    %1283 = vmatmul.mubr.bf16.gmra.mxu0 %v677
    %v1284 = vpop.f32.mrf.mxu0
    %v1285 = vadd.f32 0.0, %v1284
    %v1286 = vpop.f32.mrf.mxu0
    %v1287 = vadd.f32 0.0, %v1286
    %v1288 = vpop.f32.mrf.mxu0
    %v1289 = vadd.f32 0.0, %v1288
    %v1290 = vpop.f32.mrf.mxu0
    %v1291 = vadd.f32 0.0, %v1290
    %1292 = vmatprep.mubr.bf16.mxu0 %v1023
    %1293 = vmatmul.mubr.bf16.gmra.mxu0 %v679
    %v1294 = vpop.f32.mrf.mxu0
    %v1295 = vadd.f32 0.0, %v1294
    %v1296 = vpop.f32.mrf.mxu0
    %v1297 = vadd.f32 0.0, %v1296
    %v1298 = vpop.f32.mrf.mxu0
    %v1299 = vadd.f32 0.0, %v1298
    %v1300 = vpop.f32.mrf.mxu0
    %v1301 = vadd.f32 0.0, %v1300
    %1302 = vmatprep.mubr.bf16.mxu0 %v1026
    %1303 = vmatmul.mubr.bf16.gmra.mxu0 %v681
    %v1304 = vpop.f32.mrf.mxu0
    %v1305 = vadd.f32 0.0, %v1304
    %v1306 = vpop.f32.mrf.mxu0
    %v1307 = vadd.f32 0.0, %v1306
    %v1308 = vpop.f32.mrf.mxu0
    %v1309 = vadd.f32 0.0, %v1308
    %v1310 = vpop.f32.mrf.mxu0
    %v1311 = vadd.f32 0.0, %v1310
    %1312 = vmatprep.mubr.bf16.mxu0 %v1029
    %1313 = vmatmul.mubr.bf16.gmra.mxu0 %v683
    %v1314 = vpop.f32.mrf.mxu0
    %v1315 = vadd.f32 0.0, %v1314
    %v1316 = vpop.f32.mrf.mxu0
    %v1317 = vadd.f32 0.0, %v1316
    %v1318 = vpop.f32.mrf.mxu0
    %v1319 = vadd.f32 0.0, %v1318
    %v1320 = vpop.f32.mrf.mxu0
    %v1321 = vadd.f32 0.0, %v1320
    %1322 = vmatprep.mubr.bf16.mxu0 %v1032
    %1323 = vmatmul.mubr.bf16.gmra.mxu0 %v685
    %v1324 = vpop.f32.mrf.mxu0
    %v1325 = vadd.f32 0.0, %v1324
    %v1326 = vpop.f32.mrf.mxu0
    %v1327 = vadd.f32 0.0, %v1326
    %v1328 = vpop.f32.mrf.mxu0
    %v1329 = vadd.f32 0.0, %v1328
    %v1330 = vpop.f32.mrf.mxu0
    %v1331 = vadd.f32 0.0, %v1330
    %1332 = vmatprep.mubr.bf16.mxu0 %v1035
    %1333 = vmatmul.mubr.bf16.gmra.mxu0 %v687
    %v1334 = vpop.f32.mrf.mxu0
    %v1335 = vadd.f32 0.0, %v1334
    %v1336 = vpop.f32.mrf.mxu0
    %v1337 = vadd.f32 0.0, %v1336
    %v1338 = vpop.f32.mrf.mxu0
    %v1339 = vadd.f32 0.0, %v1338
    %v1340 = vpop.f32.mrf.mxu0
    %v1341 = vadd.f32 0.0, %v1340
    %1342 = vdwg.mxu0
    %1343 = vmatprep.subr.bf16.mxu0 %v928
    %1344 = vmatpush1.bf16.msra.mxu0 %v927
    %1345 = vmatprep.subr.bf16.mxu0 %v922
    %1346 = vmatpush1.bf16.msra.mxu0 %v921
    %1347 = vmatprep.subr.bf16.mxu0 %v916
    %1348 = vmatpush1.bf16.msra.mxu0 %v915
    %1349 = vmatprep.subr.bf16.mxu0 %v910
    %1350 = vmatpush1.bf16.msra.mxu0 %v909
    %1351 = vmatprep.subr.bf16.mxu0 %v904
    %1352 = vmatpush1.bf16.msra.mxu0 %v903
    %1353 = vmatprep.subr.bf16.mxu0 %v898
    %1354 = vmatpush1.bf16.msra.mxu0 %v897
    %1355 = vmatprep.subr.bf16.mxu0 %v892
    %1356 = vmatpush1.bf16.msra.mxu0 %v891
    %1357 = vmatprep.subr.bf16.mxu0 %v886
    %1358 = vmatpush1.bf16.msra.mxu0 %v885
    %1359 = vmatprep.subr.bf16.mxu0 0
    %1360 = vmatpush2.bf16.msra.mxu0 0
    %1361 = vmatprep.subr.bf16.mxu0 0
    %1362 = vmatpush2.bf16.msra.mxu0 0
    %1363 = vmatprep.subr.bf16.mxu0 0
    %1364 = vmatpush2.bf16.msra.mxu0 0
    %1365 = vmatprep.subr.bf16.mxu0 0
    %1366 = vmatpush2.bf16.msra.mxu0 0
    %1367 = vmatprep.subr.bf16.mxu0 0
    %1368 = vmatpush2.bf16.msra.mxu0 0
    %1369 = vmatprep.subr.bf16.mxu0 0
    %1370 = vmatpush2.bf16.msra.mxu0 0
    %1371 = vmatprep.subr.bf16.mxu0 %v940
    %1372 = vmatpush2.bf16.msra.mxu0 %v939
    %1373 = vmatprep.subr.bf16.mxu0 %v934
    %1374 = vmatpush2.bf16.msra.mxu0 %v933
    %1375 = vmatprep.mubr.bf16.mxu0 %v1002
    %1376 = vmatmul.mubr.bf16.gmra.mxu0 %v665
    %v1377 = vpop.f32.mrf.mxu0
    %v1378 = vadd.f32 0.0, %v1377
    %v1379 = vpop.f32.mrf.mxu0
    %v1380 = vadd.f32 0.0, %v1379
    %v1381 = vpop.f32.mrf.mxu0
    %v1382 = vadd.f32 0.0, %v1381
    %v1383 = vpop.f32.mrf.mxu0
    %v1384 = vadd.f32 0.0, %v1383
    %1385 = vmatprep.mubr.bf16.mxu0 %v1005
    %1386 = vmatmul.mubr.bf16.gmra.mxu0 %v667
    %v1387 = vpop.f32.mrf.mxu0
    %v1388 = vadd.f32 0.0, %v1387
    %v1389 = vpop.f32.mrf.mxu0
    %v1390 = vadd.f32 0.0, %v1389
    %v1391 = vpop.f32.mrf.mxu0
    %v1392 = vadd.f32 0.0, %v1391
    %v1393 = vpop.f32.mrf.mxu0
    %v1394 = vadd.f32 0.0, %v1393
    %1395 = vmatprep.mubr.bf16.mxu0 %v1008
    %1396 = vmatmul.mubr.bf16.gmra.mxu0 %v669
    %v1397 = vpop.f32.mrf.mxu0
    %v1398 = vadd.f32 0.0, %v1397
    %v1399 = vpop.f32.mrf.mxu0
    %v1400 = vadd.f32 0.0, %v1399
    %v1401 = vpop.f32.mrf.mxu0
    %v1402 = vadd.f32 0.0, %v1401
    %v1403 = vpop.f32.mrf.mxu0
    %v1404 = vadd.f32 0.0, %v1403
    %1405 = vmatprep.mubr.bf16.mxu0 %v1011
    %1406 = vmatmul.mubr.bf16.gmra.mxu0 %v671
    %v1407 = vpop.f32.mrf.mxu0
    %v1408 = vadd.f32 0.0, %v1407
    %v1409 = vpop.f32.mrf.mxu0
    %v1410 = vadd.f32 0.0, %v1409
    %v1411 = vpop.f32.mrf.mxu0
    %v1412 = vadd.f32 0.0, %v1411
    %v1413 = vpop.f32.mrf.mxu0
    %v1414 = vadd.f32 0.0, %v1413
    %1415 = vmatprep.mubr.bf16.mxu0 %v1014
    %1416 = vmatmul.mubr.bf16.gmra.mxu0 %v673
    %v1417 = vpop.f32.mrf.mxu0
    %v1418 = vadd.f32 0.0, %v1417
    %v1419 = vpop.f32.mrf.mxu0
    %v1420 = vadd.f32 0.0, %v1419
    %v1421 = vpop.f32.mrf.mxu0
    %v1422 = vadd.f32 0.0, %v1421
    %v1423 = vpop.f32.mrf.mxu0
    %v1424 = vadd.f32 0.0, %v1423
    %1425 = vmatprep.mubr.bf16.mxu0 %v1017
    %1426 = vmatmul.mubr.bf16.gmra.mxu0 %v675
    %v1427 = vpop.f32.mrf.mxu0
    %v1428 = vadd.f32 0.0, %v1427
    %v1429 = vpop.f32.mrf.mxu0
    %v1430 = vadd.f32 0.0, %v1429
    %v1431 = vpop.f32.mrf.mxu0
    %v1432 = vadd.f32 0.0, %v1431
    %v1433 = vpop.f32.mrf.mxu0
    %v1434 = vadd.f32 0.0, %v1433
    %1435 = vmatprep.mubr.bf16.mxu0 %v1020
    %1436 = vmatmul.mubr.bf16.gmra.mxu0 %v677
    %v1437 = vpop.f32.mrf.mxu0
    %v1438 = vadd.f32 0.0, %v1437
    %v1439 = vpop.f32.mrf.mxu0
    %v1440 = vadd.f32 0.0, %v1439
    %v1441 = vpop.f32.mrf.mxu0
    %v1442 = vadd.f32 0.0, %v1441
    %v1443 = vpop.f32.mrf.mxu0
    %v1444 = vadd.f32 0.0, %v1443
    %1445 = vmatprep.mubr.bf16.mxu0 %v1023
    %1446 = vmatmul.mubr.bf16.gmra.mxu0 %v679
    %v1447 = vpop.f32.mrf.mxu0
    %v1448 = vadd.f32 0.0, %v1447
    %v1449 = vpop.f32.mrf.mxu0
    %v1450 = vadd.f32 0.0, %v1449
    %v1451 = vpop.f32.mrf.mxu0
    %v1452 = vadd.f32 0.0, %v1451
    %v1453 = vpop.f32.mrf.mxu0
    %v1454 = vadd.f32 0.0, %v1453
    %1455 = vmatprep.mubr.bf16.mxu0 %v1026
    %1456 = vmatmul.mubr.bf16.gmra.mxu0 %v681
    %v1457 = vpop.f32.mrf.mxu0
    %v1458 = vadd.f32 0.0, %v1457
    %v1459 = vpop.f32.mrf.mxu0
    %v1460 = vadd.f32 0.0, %v1459
    %v1461 = vpop.f32.mrf.mxu0
    %v1462 = vadd.f32 0.0, %v1461
    %v1463 = vpop.f32.mrf.mxu0
    %v1464 = vadd.f32 0.0, %v1463
    %1465 = vmatprep.mubr.bf16.mxu0 %v1029
    %1466 = vmatmul.mubr.bf16.gmra.mxu0 %v683
    %v1467 = vpop.f32.mrf.mxu0
    %v1468 = vadd.f32 0.0, %v1467
    %v1469 = vpop.f32.mrf.mxu0
    %v1470 = vadd.f32 0.0, %v1469
    %v1471 = vpop.f32.mrf.mxu0
    %v1472 = vadd.f32 0.0, %v1471
    %v1473 = vpop.f32.mrf.mxu0
    %v1474 = vadd.f32 0.0, %v1473
    %1475 = vmatprep.mubr.bf16.mxu0 %v1032
    %1476 = vmatmul.mubr.bf16.gmra.mxu0 %v685
    %v1477 = vpop.f32.mrf.mxu0
    %v1478 = vadd.f32 0.0, %v1477
    %v1479 = vpop.f32.mrf.mxu0
    %v1480 = vadd.f32 0.0, %v1479
    %v1481 = vpop.f32.mrf.mxu0
    %v1482 = vadd.f32 0.0, %v1481
    %v1483 = vpop.f32.mrf.mxu0
    %v1484 = vadd.f32 0.0, %v1483
    %1485 = vmatprep.mubr.bf16.mxu0 %v1035
    %1486 = vmatmul.mubr.bf16.gmra.mxu0 %v687
    %v1487 = vpop.f32.mrf.mxu0
    %v1488 = vadd.f32 0.0, %v1487
    %v1489 = vpop.f32.mrf.mxu0
    %v1490 = vadd.f32 0.0, %v1489
    %v1491 = vpop.f32.mrf.mxu0
    %v1492 = vadd.f32 0.0, %v1491
    %v1493 = vpop.f32.mrf.mxu0
    %v1494 = vadd.f32 0.0, %v1493
    %1495 = vdwg.mxu0
    %v1496 = vmax.f32 %v1072, %v1227
    %v1497 = vmax.f32 %v1074, %v1378
    %v1498 = vmax.f32 %v1225, %v1380
    %v1499 = vmax.f32 %v1076, %v1231
    %v1500 = vmax.f32 %v1078, %v1382
    %v1501 = vmax.f32 %v1229, %v1384
    %v1502 = vmax.f32 %v1082, %v1237
    %v1503 = vmax.f32 %v1084, %v1388
    %v1504 = vmax.f32 %v1235, %v1390
    %v1505 = vmax.f32 %v1086, %v1241
    %v1506 = vmax.f32 %v1088, %v1392
    %v1507 = vmax.f32 %v1239, %v1394
    %v1508 = vmax.f32 %v1092, %v1247
    %v1509 = vmax.f32 %v1094, %v1398
    %v1510 = vmax.f32 %v1245, %v1400
    %v1511 = vmax.f32 %v1096, %v1251
    %v1512 = vmax.f32 %v1098, %v1402
    %v1513 = vmax.f32 %v1249, %v1404
    %v1514 = vmax.f32 %v1102, %v1257
    %v1515 = vmax.f32 %v1104, %v1408
    %v1516 = vmax.f32 %v1255, %v1410
    %v1517 = vmax.f32 %v1106, %v1261
    %v1518 = vmax.f32 %v1108, %v1412
    %v1519 = vmax.f32 %v1259, %v1414
    %v1520 = vmax.f32 %v1112, %v1267
    %v1521 = vmax.f32 %v1114, %v1418
    %v1522 = vmax.f32 %v1265, %v1420
    %v1523 = vmax.f32 %v1116, %v1271
    %v1524 = vmax.f32 %v1118, %v1422
    %v1525 = vmax.f32 %v1269, %v1424
    %v1526 = vmax.f32 %v1122, %v1277
    %v1527 = vmax.f32 %v1124, %v1428
    %v1528 = vmax.f32 %v1275, %v1430
    %v1529 = vmax.f32 %v1126, %v1281
    %v1530 = vmax.f32 %v1128, %v1432
    %v1531 = vmax.f32 %v1279, %v1434
    %v1532 = vmax.f32 %v1132, %v1287
    %v1533 = vmax.f32 %v1134, %v1438
    %v1534 = vmax.f32 %v1285, %v1440
    %v1535 = vmax.f32 %v1136, %v1291
    %v1536 = vmax.f32 %v1138, %v1442
    %v1537 = vmax.f32 %v1289, %v1444
    %v1538 = vmax.f32 %v1142, %v1297
    %v1539 = vmax.f32 %v1144, %v1448
    %v1540 = vmax.f32 %v1295, %v1450
    %v1541 = vmax.f32 %v1146, %v1301
    %v1542 = vmax.f32 %v1148, %v1452
    %v1543 = vmax.f32 %v1299, %v1454
    %v1544 = vmax.f32 %v1152, %v1307
    %v1545 = vmax.f32 %v1154, %v1458
    %v1546 = vmax.f32 %v1305, %v1460
    %v1547 = vmax.f32 %v1156, %v1311
    %v1548 = vmax.f32 %v1158, %v1462
    %v1549 = vmax.f32 %v1309, %v1464
    %v1550 = vmax.f32 %v1162, %v1317
    %v1551 = vmax.f32 %v1164, %v1468
    %v1552 = vmax.f32 %v1315, %v1470
    %v1553 = vmax.f32 %v1166, %v1321
    %v1554 = vmax.f32 %v1168, %v1472
    %v1555 = vmax.f32 %v1319, %v1474
    %v1556 = vmax.f32 %v1172, %v1327
    %v1557 = vmax.f32 %v1174, %v1478
    %v1558 = vmax.f32 %v1325, %v1480
    %v1559 = vmax.f32 %v1176, %v1331
    %v1560 = vmax.f32 %v1178, %v1482
    %v1561 = vmax.f32 %v1329, %v1484
    %v1562 = vmax.f32 %v1182, %v1337
    %v1563 = vmax.f32 %v1184, %v1488
    %v1564 = vmax.f32 %v1335, %v1490
    %v1565 = vmax.f32 %v1186, %v1341
    %v1566 = vmax.f32 %v1188, %v1492
    %v1567 = vmax.f32 %v1339, %v1494
    %v1568 = vld [vmem:[#allocation5] sm:$0x7]
    %v1570 = vlaneseq
    %v1571 = vshrl.u32 %v1570, 7
    %v1572 = vsub.s32 0, %v1571
    %v1573 = vrot.slane %v1568, %v1572
    %v1574 = vlaneseq
    %v1575 = vshrl.u32 %v1574, 7
    %v1576 = vsub.s32 1, %v1575
    %v1577 = vrot.slane %v1568, %v1576
    %v1578 = vlaneseq
    %v1579 = vshrl.u32 %v1578, 7
    %v1580 = vsub.s32 2, %v1579
    %v1581 = vrot.slane %v1568, %v1580
    %v1585 = vadd.f32 %v1496, %v1573
    %v1586 = vadd.f32 %v1497, %v1577
    %v1587 = vadd.f32 %v1498, %v1581
    %v1588 = vadd.f32 %v1499, %v1573
    %v1589 = vadd.f32 %v1500, %v1577
    %v1590 = vadd.f32 %v1501, %v1581
    %v1591 = vadd.f32 %v1502, %v1573
    %v1592 = vadd.f32 %v1503, %v1577
    %v1593 = vadd.f32 %v1504, %v1581
    %v1594 = vadd.f32 %v1505, %v1573
    %v1595 = vadd.f32 %v1506, %v1577
    %v1596 = vadd.f32 %v1507, %v1581
    %v1597 = vadd.f32 %v1508, %v1573
    %v1598 = vadd.f32 %v1509, %v1577
    %v1599 = vadd.f32 %v1510, %v1581
    %v1600 = vadd.f32 %v1511, %v1573
    %v1601 = vadd.f32 %v1512, %v1577
    %v1602 = vadd.f32 %v1513, %v1581
    %v1603 = vadd.f32 %v1514, %v1573
    %v1604 = vadd.f32 %v1515, %v1577
    %v1605 = vadd.f32 %v1516, %v1581
    %v1606 = vadd.f32 %v1517, %v1573
    %v1607 = vadd.f32 %v1518, %v1577
    %v1608 = vadd.f32 %v1519, %v1581
    %v1609 = vadd.f32 %v1520, %v1573
    %v1610 = vadd.f32 %v1521, %v1577
    %v1611 = vadd.f32 %v1522, %v1581
    %v1612 = vadd.f32 %v1523, %v1573
    %v1613 = vadd.f32 %v1524, %v1577
    %v1614 = vadd.f32 %v1525, %v1581
    %v1615 = vadd.f32 %v1526, %v1573
    %v1616 = vadd.f32 %v1527, %v1577
    %v1617 = vadd.f32 %v1528, %v1581
    %v1618 = vadd.f32 %v1529, %v1573
    %v1619 = vadd.f32 %v1530, %v1577
    %v1620 = vadd.f32 %v1531, %v1581
    %v1621 = vadd.f32 %v1532, %v1573
    %v1622 = vadd.f32 %v1533, %v1577
    %v1623 = vadd.f32 %v1534, %v1581
    %v1624 = vadd.f32 %v1535, %v1573
    %v1625 = vadd.f32 %v1536, %v1577
    %v1626 = vadd.f32 %v1537, %v1581
    %v1627 = vadd.f32 %v1538, %v1573
    %v1628 = vadd.f32 %v1539, %v1577
    %v1629 = vadd.f32 %v1540, %v1581
    %v1630 = vadd.f32 %v1541, %v1573
    %v1631 = vadd.f32 %v1542, %v1577
    %v1632 = vadd.f32 %v1543, %v1581
    %v1633 = vadd.f32 %v1544, %v1573
    %v1634 = vadd.f32 %v1545, %v1577
    %v1635 = vadd.f32 %v1546, %v1581
    %v1636 = vadd.f32 %v1547, %v1573
    %v1637 = vadd.f32 %v1548, %v1577
    %v1638 = vadd.f32 %v1549, %v1581
    %v1639 = vadd.f32 %v1550, %v1573
    %v1640 = vadd.f32 %v1551, %v1577
    %v1641 = vadd.f32 %v1552, %v1581
    %v1642 = vadd.f32 %v1553, %v1573
    %v1643 = vadd.f32 %v1554, %v1577
    %v1644 = vadd.f32 %v1555, %v1581
    %v1645 = vadd.f32 %v1556, %v1573
    %v1646 = vadd.f32 %v1557, %v1577
    %v1647 = vadd.f32 %v1558, %v1581
    %v1648 = vadd.f32 %v1559, %v1573
    %v1649 = vadd.f32 %v1560, %v1577
    %v1650 = vadd.f32 %v1561, %v1581
    %v1651 = vadd.f32 %v1562, %v1573
    %v1652 = vadd.f32 %v1563, %v1577
    %v1653 = vadd.f32 %v1564, %v1581
    %v1654 = vadd.f32 %v1565, %v1573
    %v1655 = vadd.f32 %v1566, %v1577
    %v1656 = vadd.f32 %v1567, %v1581
    %v1657 = vmax.f32 %v1585, 0.0
    %v1658 = vmax.f32 %v1586, 0.0
    %v1659 = vmax.f32 %v1587, 0.0
    %v1660 = vmax.f32 %v1588, 0.0
    %v1661 = vmax.f32 %v1589, 0.0
    %v1662 = vmax.f32 %v1590, 0.0
    %v1663 = vmax.f32 %v1591, 0.0
    %v1664 = vmax.f32 %v1592, 0.0
    %v1665 = vmax.f32 %v1593, 0.0
    %v1666 = vmax.f32 %v1594, 0.0
    %v1667 = vmax.f32 %v1595, 0.0
    %v1668 = vmax.f32 %v1596, 0.0
    %v1669 = vmax.f32 %v1597, 0.0
    %v1670 = vmax.f32 %v1598, 0.0
    %v1671 = vmax.f32 %v1599, 0.0
    %v1672 = vmax.f32 %v1600, 0.0
    %v1673 = vmax.f32 %v1601, 0.0
    %v1674 = vmax.f32 %v1602, 0.0
    %v1675 = vmax.f32 %v1603, 0.0
    %v1676 = vmax.f32 %v1604, 0.0
    %v1677 = vmax.f32 %v1605, 0.0
    %v1678 = vmax.f32 %v1606, 0.0
    %v1679 = vmax.f32 %v1607, 0.0
    %v1680 = vmax.f32 %v1608, 0.0
    %v1681 = vmax.f32 %v1609, 0.0
    %v1682 = vmax.f32 %v1610, 0.0
    %v1683 = vmax.f32 %v1611, 0.0
    %v1684 = vmax.f32 %v1612, 0.0
    %v1685 = vmax.f32 %v1613, 0.0
    %v1686 = vmax.f32 %v1614, 0.0
    %v1687 = vmax.f32 %v1615, 0.0
    %v1688 = vmax.f32 %v1616, 0.0
    %v1689 = vmax.f32 %v1617, 0.0
    %v1690 = vmax.f32 %v1618, 0.0
    %v1691 = vmax.f32 %v1619, 0.0
    %v1692 = vmax.f32 %v1620, 0.0
    %v1693 = vmax.f32 %v1621, 0.0
    %v1694 = vmax.f32 %v1622, 0.0
    %v1695 = vmax.f32 %v1623, 0.0
    %v1696 = vmax.f32 %v1624, 0.0
    %v1697 = vmax.f32 %v1625, 0.0
    %v1698 = vmax.f32 %v1626, 0.0
    %v1699 = vmax.f32 %v1627, 0.0
    %v1700 = vmax.f32 %v1628, 0.0
    %v1701 = vmax.f32 %v1629, 0.0
    %v1702 = vmax.f32 %v1630, 0.0
    %v1703 = vmax.f32 %v1631, 0.0
    %v1704 = vmax.f32 %v1632, 0.0
    %v1705 = vmax.f32 %v1633, 0.0
    %v1706 = vmax.f32 %v1634, 0.0
    %v1707 = vmax.f32 %v1635, 0.0
    %v1708 = vmax.f32 %v1636, 0.0
    %v1709 = vmax.f32 %v1637, 0.0
    %v1710 = vmax.f32 %v1638, 0.0
    %v1711 = vmax.f32 %v1639, 0.0
    %v1712 = vmax.f32 %v1640, 0.0
    %v1713 = vmax.f32 %v1641, 0.0
    %v1714 = vmax.f32 %v1642, 0.0
    %v1715 = vmax.f32 %v1643, 0.0
    %v1716 = vmax.f32 %v1644, 0.0
    %v1717 = vmax.f32 %v1645, 0.0
    %v1718 = vmax.f32 %v1646, 0.0
    %v1719 = vmax.f32 %v1647, 0.0
    %v1720 = vmax.f32 %v1648, 0.0
    %v1721 = vmax.f32 %v1649, 0.0
    %v1722 = vmax.f32 %v1650, 0.0
    %v1723 = vmax.f32 %v1651, 0.0
    %v1724 = vmax.f32 %v1652, 0.0
    %v1725 = vmax.f32 %v1653, 0.0
    %v1726 = vmax.f32 %v1654, 0.0
    %v1727 = vmax.f32 %v1655, 0.0
    %v1728 = vmax.f32 %v1656, 0.0
    %v1729 = vmax.f32 %v1657, %v1660
    %v1730 = vmax.f32 %v1658, %v1661
    %v1731 = vmax.f32 %v1659, %v1662
    %v1732 = vpack.c.bf16 %v1729, %v1729
    %v1733 = vpack.c.bf16 %v1730, %v1730
    %v1734 = vpack.c.bf16 %v1731, %v1731
    %v1738 = vunpack.c.l.b16 %v1732
    %v1739 = vunpack.c.l.b16 %v1733
    %v1740 = vunpack.c.l.b16 %v1734
    %v1741 = vpack.c.b16 %v1739, %v1738
    %v1742 = vpack.c.b16 %v1740, %v1740
    %1745 = vst [vmem:[#allocation2] sm:$0xff] %v1741
    %1746 = vst [vmem:[#allocation2 + $0x8] sm:$0xf] %v1742
    %v1747 = vmax.f32 %v1663, %v1666
    %v1748 = vmax.f32 %v1664, %v1667
    %v1749 = vmax.f32 %v1665, %v1668
    %v1750 = vpack.c.bf16 %v1747, %v1747
    %v1751 = vpack.c.bf16 %v1748, %v1748
    %v1752 = vpack.c.bf16 %v1749, %v1749
    %v1756 = vunpack.c.l.b16 %v1750
    %v1757 = vunpack.c.l.b16 %v1751
    %v1758 = vunpack.c.l.b16 %v1752
    %v1759 = vpack.c.b16 %v1757, %v1756
    %v1760 = vpack.c.b16 %v1758, %v1758
    %s1763 = scalar_lea.vmem [#allocation2], 12
    %1764 = vst [vmem:[%s1763] sm:$0xff] %v1759
    %1765 = vst [vmem:[%s1763 + $0x8] sm:$0xf] %v1760
    %v1766 = vmax.f32 %v1669, %v1672
    %v1767 = vmax.f32 %v1670, %v1673
    %v1768 = vmax.f32 %v1671, %v1674
    %v1769 = vpack.c.bf16 %v1766, %v1766
    %v1770 = vpack.c.bf16 %v1767, %v1767
    %v1771 = vpack.c.bf16 %v1768, %v1768
    %v1775 = vunpack.c.l.b16 %v1769
    %v1776 = vunpack.c.l.b16 %v1770
    %v1777 = vunpack.c.l.b16 %v1771
    %v1778 = vpack.c.b16 %v1776, %v1775
    %v1779 = vpack.c.b16 %v1777, %v1777
    %s1782 = scalar_lea.vmem [#allocation2], 24
    %1783 = vst [vmem:[%s1782] sm:$0xff] %v1778
    %1784 = vst [vmem:[%s1782 + $0x8] sm:$0xf] %v1779
    %v1785 = vmax.f32 %v1675, %v1678
    %v1786 = vmax.f32 %v1676, %v1679
    %v1787 = vmax.f32 %v1677, %v1680
    %v1788 = vpack.c.bf16 %v1785, %v1785
    %v1789 = vpack.c.bf16 %v1786, %v1786
    %v1790 = vpack.c.bf16 %v1787, %v1787
    %v1794 = vunpack.c.l.b16 %v1788
    %v1795 = vunpack.c.l.b16 %v1789
    %v1796 = vunpack.c.l.b16 %v1790
    %v1797 = vpack.c.b16 %v1795, %v1794
    %v1798 = vpack.c.b16 %v1796, %v1796
    %s1801 = scalar_lea.vmem [#allocation2], 36
    %1802 = vst [vmem:[%s1801] sm:$0xff] %v1797
    %1803 = vst [vmem:[%s1801 + $0x8] sm:$0xf] %v1798
    %v1804 = vmax.f32 %v1681, %v1684
    %v1805 = vmax.f32 %v1682, %v1685
    %v1806 = vmax.f32 %v1683, %v1686
    %v1807 = vpack.c.bf16 %v1804, %v1804
    %v1808 = vpack.c.bf16 %v1805, %v1805
    %v1809 = vpack.c.bf16 %v1806, %v1806
    %v1813 = vunpack.c.l.b16 %v1807
    %v1814 = vunpack.c.l.b16 %v1808
    %v1815 = vunpack.c.l.b16 %v1809
    %v1816 = vpack.c.b16 %v1814, %v1813
    %v1817 = vpack.c.b16 %v1815, %v1815
    %s1820 = scalar_lea.vmem [#allocation2], 48
    %1821 = vst [vmem:[%s1820] sm:$0xff] %v1816
    %1822 = vst [vmem:[%s1820 + $0x8] sm:$0xf] %v1817
    %v1823 = vmax.f32 %v1687, %v1690
    %v1824 = vmax.f32 %v1688, %v1691
    %v1825 = vmax.f32 %v1689, %v1692
    %v1826 = vpack.c.bf16 %v1823, %v1823
    %v1827 = vpack.c.bf16 %v1824, %v1824
    %v1828 = vpack.c.bf16 %v1825, %v1825
    %v1832 = vunpack.c.l.b16 %v1826
    %v1833 = vunpack.c.l.b16 %v1827
    %v1834 = vunpack.c.l.b16 %v1828
    %v1835 = vpack.c.b16 %v1833, %v1832
    %v1836 = vpack.c.b16 %v1834, %v1834
    %s1839 = scalar_lea.vmem [#allocation2], 60
    %1840 = vst [vmem:[%s1839] sm:$0xff] %v1835
    %1841 = vst [vmem:[%s1839 + $0x8] sm:$0xf] %v1836
    %v1842 = vmax.f32 %v1693, %v1696
    %v1843 = vmax.f32 %v1694, %v1697
    %v1844 = vmax.f32 %v1695, %v1698
    %v1845 = vpack.c.bf16 %v1842, %v1842
    %v1846 = vpack.c.bf16 %v1843, %v1843
    %v1847 = vpack.c.bf16 %v1844, %v1844
    %v1851 = vunpack.c.l.b16 %v1845
    %v1852 = vunpack.c.l.b16 %v1846
    %v1853 = vunpack.c.l.b16 %v1847
    %v1854 = vpack.c.b16 %v1852, %v1851
    %v1855 = vpack.c.b16 %v1853, %v1853
    %s1858 = scalar_lea.vmem [#allocation2], 72
    %1859 = vst [vmem:[%s1858] sm:$0xff] %v1854
    %1860 = vst [vmem:[%s1858 + $0x8] sm:$0xf] %v1855
    %v1861 = vmax.f32 %v1699, %v1702
    %v1862 = vmax.f32 %v1700, %v1703
    %v1863 = vmax.f32 %v1701, %v1704
    %v1864 = vpack.c.bf16 %v1861, %v1861
    %v1865 = vpack.c.bf16 %v1862, %v1862
    %v1866 = vpack.c.bf16 %v1863, %v1863
    %v1870 = vunpack.c.l.b16 %v1864
    %v1871 = vunpack.c.l.b16 %v1865
    %v1872 = vunpack.c.l.b16 %v1866
    %v1873 = vpack.c.b16 %v1871, %v1870
    %v1874 = vpack.c.b16 %v1872, %v1872
    %s1877 = scalar_lea.vmem [#allocation2], 84
    %1878 = vst [vmem:[%s1877] sm:$0xff] %v1873
    %1879 = vst [vmem:[%s1877 + $0x8] sm:$0xf] %v1874
    %v1880 = vmax.f32 %v1705, %v1708
    %v1881 = vmax.f32 %v1706, %v1709
    %v1882 = vmax.f32 %v1707, %v1710
    %v1883 = vpack.c.bf16 %v1880, %v1880
    %v1884 = vpack.c.bf16 %v1881, %v1881
    %v1885 = vpack.c.bf16 %v1882, %v1882
    %v1889 = vunpack.c.l.b16 %v1883
    %v1890 = vunpack.c.l.b16 %v1884
    %v1891 = vunpack.c.l.b16 %v1885
    %v1892 = vpack.c.b16 %v1890, %v1889
    %v1893 = vpack.c.b16 %v1891, %v1891
    %s1896 = scalar_lea.vmem [#allocation2], 96
    %1897 = vst [vmem:[%s1896] sm:$0xff] %v1892
    %1898 = vst [vmem:[%s1896 + $0x8] sm:$0xf] %v1893
    %v1899 = vmax.f32 %v1711, %v1714
    %v1900 = vmax.f32 %v1712, %v1715
    %v1901 = vmax.f32 %v1713, %v1716
    %v1902 = vpack.c.bf16 %v1899, %v1899
    %v1903 = vpack.c.bf16 %v1900, %v1900
    %v1904 = vpack.c.bf16 %v1901, %v1901
    %v1908 = vunpack.c.l.b16 %v1902
    %v1909 = vunpack.c.l.b16 %v1903
    %v1910 = vunpack.c.l.b16 %v1904
    %v1911 = vpack.c.b16 %v1909, %v1908
    %v1912 = vpack.c.b16 %v1910, %v1910
    %s1915 = scalar_lea.vmem [#allocation2], 108
    %1916 = vst [vmem:[%s1915] sm:$0xff] %v1911
    %1917 = vst [vmem:[%s1915 + $0x8] sm:$0xf] %v1912
    %v1918 = vmax.f32 %v1717, %v1720
    %v1919 = vmax.f32 %v1718, %v1721
    %v1920 = vmax.f32 %v1719, %v1722
    %v1921 = vpack.c.bf16 %v1918, %v1918
    %v1922 = vpack.c.bf16 %v1919, %v1919
    %v1923 = vpack.c.bf16 %v1920, %v1920
    %v1927 = vunpack.c.l.b16 %v1921
    %v1928 = vunpack.c.l.b16 %v1922
    %v1929 = vunpack.c.l.b16 %v1923
    %v1930 = vpack.c.b16 %v1928, %v1927
    %v1931 = vpack.c.b16 %v1929, %v1929
    %s1934 = scalar_lea.vmem [#allocation2], 120
    %1935 = vst [vmem:[%s1934] sm:$0xff] %v1930
    %1936 = vst [vmem:[%s1934 + $0x8] sm:$0xf] %v1931
    %v1937 = vmax.f32 %v1723, %v1726
    %v1938 = vmax.f32 %v1724, %v1727
    %v1939 = vmax.f32 %v1725, %v1728
    %v1940 = vpack.c.bf16 %v1937, %v1937
    %v1941 = vpack.c.bf16 %v1938, %v1938
    %v1942 = vpack.c.bf16 %v1939, %v1939
    %v1946 = vunpack.c.l.b16 %v1940
    %v1947 = vunpack.c.l.b16 %v1941
    %v1948 = vunpack.c.l.b16 %v1942
    %v1949 = vpack.c.b16 %v1947, %v1946
    %v1950 = vpack.c.b16 %v1948, %v1948
    %s1953 = scalar_lea.vmem [#allocation2], 132
    %1954 = vst [vmem:[%s1953] sm:$0xff] %v1949
    %1955 = vst [vmem:[%s1953 + $0x8] sm:$0xf] %v1950
    %v1956 = vld [vmem:[#allocation2] sm:$0xff]
    %v1957 = vld [vmem:[#allocation2 + $0x8] sm:$0xf]
    %v1958 = vld [vmem:[#allocation2 + $0xc] sm:$0xff]
    %v1959 = vld [vmem:[#allocation2 + $0x14] sm:$0xf]
    %v1960 = vld [vmem:[#allocation2 + $0x18] sm:$0xff]
    %v1961 = vld [vmem:[#allocation2 + $0x20] sm:$0xf]
    %v1962 = vld [vmem:[#allocation2 + $0x24] sm:$0xff]
    %v1963 = vld [vmem:[#allocation2 + $0x2c] sm:$0xf]
    %v1964 = vld [vmem:[#allocation2 + $0x30] sm:$0xff]
    %v1965 = vld [vmem:[#allocation2 + $0x38] sm:$0xf]
    %v1966 = vld [vmem:[#allocation2 + $0x3c] sm:$0xff]
    %v1967 = vld [vmem:[#allocation2 + $0x44] sm:$0xf]
    %v1968 = vld [vmem:[#allocation2 + $0x48] sm:$0xff]
    %v1969 = vld [vmem:[#allocation2 + $0x50] sm:$0xf]
    %v1970 = vld [vmem:[#allocation2 + $0x54] sm:$0xff]
    %v1971 = vld [vmem:[#allocation2 + $0x5c] sm:$0xf]
    %v1972 = vld [vmem:[%s1763] sm:$0xff]
    %v1973 = vld [vmem:[%s1763 + $0x8] sm:$0xf]
    %v1974 = vld [vmem:[%s1763 + $0xc] sm:$0xff]
    %v1975 = vld [vmem:[%s1763 + $0x14] sm:$0xf]
    %v1976 = vld [vmem:[%s1763 + $0x18] sm:$0xff]
    %v1977 = vld [vmem:[%s1763 + $0x20] sm:$0xf]
    %v1978 = vld [vmem:[%s1763 + $0x24] sm:$0xff]
    %v1979 = vld [vmem:[%s1763 + $0x2c] sm:$0xf]
    %v1980 = vld [vmem:[%s1763 + $0x30] sm:$0xff]
    %v1981 = vld [vmem:[%s1763 + $0x38] sm:$0xf]
    %v1982 = vld [vmem:[%s1763 + $0x3c] sm:$0xff]
    %v1983 = vld [vmem:[%s1763 + $0x44] sm:$0xf]
    %v1984 = vld [vmem:[%s1763 + $0x48] sm:$0xff]
    %v1985 = vld [vmem:[%s1763 + $0x50] sm:$0xf]
    %v1986 = vld [vmem:[%s1763 + $0x54] sm:$0xff]
    %v1987 = vld [vmem:[%s1763 + $0x5c] sm:$0xf]
    %v1988 = vld [vmem:[%s1782] sm:$0xff]
    %v1989 = vld [vmem:[%s1782 + $0x8] sm:$0xf]
    %v1990 = vld [vmem:[%s1782 + $0xc] sm:$0xff]
    %v1991 = vld [vmem:[%s1782 + $0x14] sm:$0xf]
    %v1992 = vld [vmem:[%s1782 + $0x18] sm:$0xff]
    %v1993 = vld [vmem:[%s1782 + $0x20] sm:$0xf]
    %v1994 = vld [vmem:[%s1782 + $0x24] sm:$0xff]
    %v1995 = vld [vmem:[%s1782 + $0x2c] sm:$0xf]
    %v1996 = vld [vmem:[%s1782 + $0x30] sm:$0xff]
    %v1997 = vld [vmem:[%s1782 + $0x38] sm:$0xf]
    %v1998 = vld [vmem:[%s1782 + $0x3c] sm:$0xff]
    %v1999 = vld [vmem:[%s1782 + $0x44] sm:$0xf]
    %v2000 = vld [vmem:[%s1782 + $0x48] sm:$0xff]
    %v2001 = vld [vmem:[%s1782 + $0x50] sm:$0xf]
    %v2002 = vld [vmem:[%s1782 + $0x54] sm:$0xff]
    %v2003 = vld [vmem:[%s1782 + $0x5c] sm:$0xf]
    %v2004 = vld [vmem:[%s1801] sm:$0xff]
    %v2005 = vld [vmem:[%s1801 + $0x8] sm:$0xf]
    %v2006 = vld [vmem:[%s1801 + $0xc] sm:$0xff]
    %v2007 = vld [vmem:[%s1801 + $0x14] sm:$0xf]
    %v2008 = vld [vmem:[%s1801 + $0x18] sm:$0xff]
    %v2009 = vld [vmem:[%s1801 + $0x20] sm:$0xf]
    %v2010 = vld [vmem:[%s1801 + $0x24] sm:$0xff]
    %v2011 = vld [vmem:[%s1801 + $0x2c] sm:$0xf]
    %v2012 = vld [vmem:[%s1801 + $0x30] sm:$0xff]
    %v2013 = vld [vmem:[%s1801 + $0x38] sm:$0xf]
    %v2014 = vld [vmem:[%s1801 + $0x3c] sm:$0xff]
    %v2015 = vld [vmem:[%s1801 + $0x44] sm:$0xf]
    %v2016 = vld [vmem:[%s1801 + $0x48] sm:$0xff]
    %v2017 = vld [vmem:[%s1801 + $0x50] sm:$0xf]
    %v2018 = vld [vmem:[%s1801 + $0x54] sm:$0xff]
    %v2019 = vld [vmem:[%s1801 + $0x5c] sm:$0xf]
    %v2020 = vld [vmem:[%s1820] sm:$0xff]
    %v2021 = vld [vmem:[%s1820 + $0x8] sm:$0xf]
    %v2022 = vld [vmem:[%s1820 + $0xc] sm:$0xff]
    %v2023 = vld [vmem:[%s1820 + $0x14] sm:$0xf]
    %v2024 = vld [vmem:[%s1820 + $0x18] sm:$0xff]
    %v2025 = vld [vmem:[%s1820 + $0x20] sm:$0xf]
    %v2026 = vld [vmem:[%s1820 + $0x24] sm:$0xff]
    %v2027 = vld [vmem:[%s1820 + $0x2c] sm:$0xf]
    %v2028 = vld [vmem:[%s1820 + $0x30] sm:$0xff]
    %v2029 = vld [vmem:[%s1820 + $0x38] sm:$0xf]
    %v2030 = vld [vmem:[%s1820 + $0x3c] sm:$0xff]
    %v2031 = vld [vmem:[%s1820 + $0x44] sm:$0xf]
    %v2032 = vld [vmem:[%s1820 + $0x48] sm:$0xff]
    %v2033 = vld [vmem:[%s1820 + $0x50] sm:$0xf]
    %v2034 = vld [vmem:[%s1820 + $0x54] sm:$0xff]
    %v2035 = vld [vmem:[%s1820 + $0x5c] sm:$0xf]
    %v2052 = vunpack.c.l.b16 %v1956
    %v2053 = vunpack.c.h.b16 %v1956
    %v2054 = vunpack.c.l.b16 %v1957
    %v2055 = vunpack.c.l.b16 %v1958
    %v2056 = vunpack.c.h.b16 %v1958
    %v2057 = vunpack.c.l.b16 %v1959
    %v2058 = vunpack.c.l.b16 %v1960
    %v2059 = vunpack.c.h.b16 %v1960
    %v2060 = vunpack.c.l.b16 %v1961
    %v2061 = vunpack.c.l.b16 %v1962
    %v2062 = vunpack.c.h.b16 %v1962
    %v2063 = vunpack.c.l.b16 %v1963
    %v2064 = vunpack.c.l.b16 %v1964
    %v2065 = vunpack.c.h.b16 %v1964
    %v2066 = vunpack.c.l.b16 %v1965
    %v2067 = vunpack.c.l.b16 %v1966
    %v2068 = vunpack.c.h.b16 %v1966
    %v2069 = vunpack.c.l.b16 %v1967
    %v2070 = vunpack.c.l.b16 %v1968
    %v2071 = vunpack.c.h.b16 %v1968
    %v2072 = vunpack.c.l.b16 %v1969
    %v2073 = vunpack.c.l.b16 %v1970
    %v2074 = vunpack.c.h.b16 %v1970
    %v2075 = vunpack.c.l.b16 %v1971
    %v2092 = vunpack.c.l.b16 %v1972
    %v2093 = vunpack.c.h.b16 %v1972
    %v2094 = vunpack.c.l.b16 %v1973
    %v2095 = vunpack.c.l.b16 %v1974
    %v2096 = vunpack.c.h.b16 %v1974
    %v2097 = vunpack.c.l.b16 %v1975
    %v2098 = vunpack.c.l.b16 %v1976
    %v2099 = vunpack.c.h.b16 %v1976
    %v2100 = vunpack.c.l.b16 %v1977
    %v2101 = vunpack.c.l.b16 %v1978
    %v2102 = vunpack.c.h.b16 %v1978
    %v2103 = vunpack.c.l.b16 %v1979
    %v2104 = vunpack.c.l.b16 %v1980
    %v2105 = vunpack.c.h.b16 %v1980
    %v2106 = vunpack.c.l.b16 %v1981
    %v2107 = vunpack.c.l.b16 %v1982
    %v2108 = vunpack.c.h.b16 %v1982
    %v2109 = vunpack.c.l.b16 %v1983
    %v2110 = vunpack.c.l.b16 %v1984
    %v2111 = vunpack.c.h.b16 %v1984
    %v2112 = vunpack.c.l.b16 %v1985
    %v2113 = vunpack.c.l.b16 %v1986
    %v2114 = vunpack.c.h.b16 %v1986
    %v2115 = vunpack.c.l.b16 %v1987
    %v2132 = vunpack.c.l.b16 %v1988
    %v2133 = vunpack.c.h.b16 %v1988
    %v2134 = vunpack.c.l.b16 %v1989
    %v2135 = vunpack.c.l.b16 %v1990
    %v2136 = vunpack.c.h.b16 %v1990
    %v2137 = vunpack.c.l.b16 %v1991
    %v2138 = vunpack.c.l.b16 %v1992
    %v2139 = vunpack.c.h.b16 %v1992
    %v2140 = vunpack.c.l.b16 %v1993
    %v2141 = vunpack.c.l.b16 %v1994
    %v2142 = vunpack.c.h.b16 %v1994
    %v2143 = vunpack.c.l.b16 %v1995
    %v2144 = vunpack.c.l.b16 %v1996
    %v2145 = vunpack.c.h.b16 %v1996
    %v2146 = vunpack.c.l.b16 %v1997
    %v2147 = vunpack.c.l.b16 %v1998
    %v2148 = vunpack.c.h.b16 %v1998
    %v2149 = vunpack.c.l.b16 %v1999
    %v2150 = vunpack.c.l.b16 %v2000
    %v2151 = vunpack.c.h.b16 %v2000
    %v2152 = vunpack.c.l.b16 %v2001
    %v2153 = vunpack.c.l.b16 %v2002
    %v2154 = vunpack.c.h.b16 %v2002
    %v2155 = vunpack.c.l.b16 %v2003
    %v2172 = vunpack.c.l.b16 %v2004
    %v2173 = vunpack.c.h.b16 %v2004
    %v2174 = vunpack.c.l.b16 %v2005
    %v2175 = vunpack.c.l.b16 %v2006
    %v2176 = vunpack.c.h.b16 %v2006
    %v2177 = vunpack.c.l.b16 %v2007
    %v2178 = vunpack.c.l.b16 %v2008
    %v2179 = vunpack.c.h.b16 %v2008
    %v2180 = vunpack.c.l.b16 %v2009
    %v2181 = vunpack.c.l.b16 %v2010
    %v2182 = vunpack.c.h.b16 %v2010
    %v2183 = vunpack.c.l.b16 %v2011
    %v2184 = vunpack.c.l.b16 %v2012
    %v2185 = vunpack.c.h.b16 %v2012
    %v2186 = vunpack.c.l.b16 %v2013
    %v2187 = vunpack.c.l.b16 %v2014
    %v2188 = vunpack.c.h.b16 %v2014
    %v2189 = vunpack.c.l.b16 %v2015
    %v2190 = vunpack.c.l.b16 %v2016
    %v2191 = vunpack.c.h.b16 %v2016
    %v2192 = vunpack.c.l.b16 %v2017
    %v2193 = vunpack.c.l.b16 %v2018
    %v2194 = vunpack.c.h.b16 %v2018
    %v2195 = vunpack.c.l.b16 %v2019
    %v2212 = vunpack.c.l.b16 %v2020
    %v2213 = vunpack.c.h.b16 %v2020
    %v2214 = vunpack.c.l.b16 %v2021
    %v2215 = vunpack.c.l.b16 %v2022
    %v2216 = vunpack.c.h.b16 %v2022
    %v2217 = vunpack.c.l.b16 %v2023
    %v2218 = vunpack.c.l.b16 %v2024
    %v2219 = vunpack.c.h.b16 %v2024
    %v2220 = vunpack.c.l.b16 %v2025
    %v2221 = vunpack.c.l.b16 %v2026
    %v2222 = vunpack.c.h.b16 %v2026
    %v2223 = vunpack.c.l.b16 %v2027
    %v2224 = vunpack.c.l.b16 %v2028
    %v2225 = vunpack.c.h.b16 %v2028
    %v2226 = vunpack.c.l.b16 %v2029
    %v2227 = vunpack.c.l.b16 %v2030
    %v2228 = vunpack.c.h.b16 %v2030
    %v2229 = vunpack.c.l.b16 %v2031
    %v2230 = vunpack.c.l.b16 %v2032
    %v2231 = vunpack.c.h.b16 %v2032
    %v2232 = vunpack.c.l.b16 %v2033
    %v2233 = vunpack.c.l.b16 %v2034
    %v2234 = vunpack.c.h.b16 %v2034
    %v2235 = vunpack.c.l.b16 %v2035
    %v2236 = vld [vmem:[#allocation7] sm:$0xff]
    %v2237 = vld [vmem:[#allocation7 + $0x8] sm:$0xff]
    %v2238 = vld [vmem:[#allocation7 + $0x10] sm:$0xff]
    %v2239 = vld [vmem:[#allocation7 + $0x18] sm:$0xff]
    %v2240 = vld [vmem:[#allocation7 + $0x20] sm:$0xff]
    %v2241 = vld [vmem:[#allocation7 + $0x28] sm:$0xff]
    %v2242 = vld [vmem:[#allocation7 + $0x30] sm:$0xff]
    %v2243 = vld [vmem:[#allocation7 + $0x38] sm:$0xff]
    %v2244 = vld [vmem:[#allocation7 + $0x40] sm:$0xff]
    %v2245 = vld [vmem:[#allocation7 + $0x48] sm:$0xff]
    %v2246 = vld [vmem:[#allocation7 + $0x50] sm:$0xff]
    %v2247 = vld [vmem:[#allocation7 + $0x58] sm:$0xff]
    %v2248 = vld [vmem:[#allocation7 + $0x60] sm:$0xff]
    %v2249 = vld [vmem:[#allocation7 + $0x68] sm:$0xff]
    %v2250 = vld [vmem:[#allocation7 + $0x70] sm:$0xff]
    %v2251 = vld [vmem:[#allocation7 + $0x78] sm:$0xff]
    %v2252 = vld [vmem:[#allocation7 + $0x80] sm:$0xff]
    %v2253 = vld [vmem:[#allocation7 + $0x88] sm:$0xff]
    %v2254 = vld [vmem:[#allocation7 + $0x90] sm:$0xff]
    %v2255 = vld [vmem:[#allocation7 + $0x98] sm:$0xff]
    %v2256 = vld [vmem:[#allocation7 + $0xa0] sm:$0xff]
    %v2257 = vld [vmem:[#allocation7 + $0xa8] sm:$0xff]
    %v2258 = vld [vmem:[#allocation7 + $0xb0] sm:$0xff]
    %v2259 = vld [vmem:[#allocation7 + $0xb8] sm:$0xff]
    %v2260 = vld [vmem:[#allocation7 + $0xc0] sm:$0xff]
    %v2261 = vld [vmem:[#allocation7 + $0xc8] sm:$0xff]
    %v2262 = vld [vmem:[#allocation7 + $0xd0] sm:$0xff]
    %v2263 = vld [vmem:[#allocation7 + $0xd8] sm:$0xff]
    %v2264 = vld [vmem:[#allocation7 + $0xe0] sm:$0xff]
    %v2265 = vld [vmem:[#allocation7 + $0xe8] sm:$0xff]
    %v2266 = vld [vmem:[#allocation7 + $0xf0] sm:$0xff]
    %v2267 = vld [vmem:[#allocation7 + $0xf8] sm:$0xff]
    %v2268 = vld [vmem:[#allocation7 + $0x100] sm:$0xff]
    %v2269 = vld [vmem:[#allocation7 + $0x108] sm:$0xff]
    %v2270 = vld [vmem:[#allocation7 + $0x110] sm:$0xff]
    %v2271 = vld [vmem:[#allocation7 + $0x118] sm:$0xff]
    %v2272 = vld [vmem:[#allocation7 + $0x120] sm:$0xff]
    %v2273 = vld [vmem:[#allocation7 + $0x128] sm:$0xff]
    %v2274 = vld [vmem:[#allocation7 + $0x130] sm:$0xff]
    %v2275 = vld [vmem:[#allocation7 + $0x138] sm:$0xff]
    %v2276 = vld [vmem:[#allocation7 + $0x140] sm:$0xff]
    %v2277 = vld [vmem:[#allocation7 + $0x148] sm:$0xff]
    %v2278 = vld [vmem:[#allocation7 + $0x150] sm:$0xff]
    %v2279 = vld [vmem:[#allocation7 + $0x158] sm:$0xff]
    %v2280 = vld [vmem:[#allocation7 + $0x160] sm:$0xff]
    %v2281 = vld [vmem:[#allocation7 + $0x168] sm:$0xff]
    %v2282 = vld [vmem:[#allocation7 + $0x170] sm:$0xff]
    %v2283 = vld [vmem:[#allocation7 + $0x178] sm:$0xff]
    %v2284 = vld [vmem:[#allocation7 + $0x180] sm:$0xff]
    %v2285 = vld [vmem:[#allocation7 + $0x188] sm:$0xff]
    %v2286 = vld [vmem:[#allocation7 + $0x190] sm:$0xff]
    %v2287 = vld [vmem:[#allocation7 + $0x198] sm:$0xff]
    %v2288 = vld [vmem:[#allocation7 + $0x1a0] sm:$0xff]
    %v2289 = vld [vmem:[#allocation7 + $0x1a8] sm:$0xff]
    %v2290 = vld [vmem:[#allocation7 + $0x1b0] sm:$0xff]
    %v2291 = vld [vmem:[#allocation7 + $0x1b8] sm:$0xff]
    %v2292 = vld [vmem:[#allocation7 + $0x1c0] sm:$0xff]
    %v2293 = vld [vmem:[#allocation7 + $0x1c8] sm:$0xff]
    %v2294 = vld [vmem:[#allocation7 + $0x1d0] sm:$0xff]
    %v2295 = vld [vmem:[#allocation7 + $0x1d8] sm:$0xff]
    %v2296 = vld [vmem:[#allocation7 + $0x1e0] sm:$0xff]
    %v2297 = vld [vmem:[#allocation7 + $0x1e8] sm:$0xff]
    %v2298 = vld [vmem:[#allocation7 + $0x1f0] sm:$0xff]
    %v2299 = vld [vmem:[#allocation7 + $0x1f8] sm:$0xff]
    %v2300 = vld [vmem:[#allocation7 + $0x200] sm:$0xff]
    %v2301 = vld [vmem:[#allocation7 + $0x208] sm:$0xff]
    %v2302 = vld [vmem:[#allocation7 + $0x210] sm:$0xff]
    %v2303 = vld [vmem:[#allocation7 + $0x218] sm:$0xff]
    %v2304 = vld [vmem:[#allocation7 + $0x220] sm:$0xff]
    %v2305 = vld [vmem:[#allocation7 + $0x228] sm:$0xff]
    %v2306 = vld [vmem:[#allocation7 + $0x230] sm:$0xff]
    %v2307 = vld [vmem:[#allocation7 + $0x238] sm:$0xff]
    %v2308 = vld [vmem:[#allocation7 + $0x240] sm:$0xff]
    %v2309 = vld [vmem:[#allocation7 + $0x248] sm:$0xff]
    %v2310 = vld [vmem:[#allocation7 + $0x250] sm:$0xff]
    %v2311 = vld [vmem:[#allocation7 + $0x258] sm:$0xff]
    %v2312 = vld [vmem:[#allocation7 + $0x260] sm:$0xff]
    %v2313 = vld [vmem:[#allocation7 + $0x268] sm:$0xff]
    %v2314 = vld [vmem:[#allocation7 + $0x270] sm:$0xff]
    %v2315 = vld [vmem:[#allocation7 + $0x278] sm:$0xff]
    %v2316 = vld [vmem:[#allocation7 + $0x280] sm:$0xff]
    %v2317 = vld [vmem:[#allocation7 + $0x288] sm:$0xff]
    %v2318 = vld [vmem:[#allocation7 + $0x290] sm:$0xff]
    %v2319 = vld [vmem:[#allocation7 + $0x298] sm:$0xff]
    %v2320 = vld [vmem:[#allocation7 + $0x2a0] sm:$0xff]
    %v2321 = vld [vmem:[#allocation7 + $0x2a8] sm:$0xff]
    %v2322 = vld [vmem:[#allocation7 + $0x2b0] sm:$0xff]
    %v2323 = vld [vmem:[#allocation7 + $0x2b8] sm:$0xff]
    %v2324 = vld [vmem:[#allocation7 + $0x2c0] sm:$0xff]
    %v2325 = vld [vmem:[#allocation7 + $0x2c8] sm:$0xff]
    %v2326 = vld [vmem:[#allocation7 + $0x2d0] sm:$0xff]
    %v2327 = vld [vmem:[#allocation7 + $0x2d8] sm:$0xff]
    %v2328 = vld [vmem:[#allocation7 + $0x2e0] sm:$0xff]
    %v2329 = vld [vmem:[#allocation7 + $0x2e8] sm:$0xff]
    %v2330 = vld [vmem:[#allocation7 + $0x2f0] sm:$0xff]
    %v2331 = vld [vmem:[#allocation7 + $0x2f8] sm:$0xff]
    %v2332 = vld [vmem:[#allocation7 + $0x300] sm:$0xff]
    %v2333 = vld [vmem:[#allocation7 + $0x308] sm:$0xff]
    %v2334 = vld [vmem:[#allocation7 + $0x310] sm:$0xff]
    %v2335 = vld [vmem:[#allocation7 + $0x318] sm:$0xff]
    %v2336 = vld [vmem:[#allocation7 + $0x320] sm:$0xff]
    %v2337 = vld [vmem:[#allocation7 + $0x328] sm:$0xff]
    %v2338 = vld [vmem:[#allocation7 + $0x330] sm:$0xff]
    %v2339 = vld [vmem:[#allocation7 + $0x338] sm:$0xff]
    %v2340 = vld [vmem:[#allocation7 + $0x340] sm:$0xff]
    %v2341 = vld [vmem:[#allocation7 + $0x348] sm:$0xff]
    %v2342 = vld [vmem:[#allocation7 + $0x350] sm:$0xff]
    %v2343 = vld [vmem:[#allocation7 + $0x358] sm:$0xff]
    %v2344 = vld [vmem:[#allocation7 + $0x360] sm:$0xff]
    %v2345 = vld [vmem:[#allocation7 + $0x368] sm:$0xff]
    %v2346 = vld [vmem:[#allocation7 + $0x370] sm:$0xff]
    %v2347 = vld [vmem:[#allocation7 + $0x378] sm:$0xff]
    %v2348 = vld [vmem:[#allocation7 + $0x380] sm:$0xff]
    %v2349 = vld [vmem:[#allocation7 + $0x388] sm:$0xff]
    %v2350 = vld [vmem:[#allocation7 + $0x390] sm:$0xff]
    %v2351 = vld [vmem:[#allocation7 + $0x398] sm:$0xff]
    %v2352 = vld [vmem:[#allocation7 + $0x3a0] sm:$0xff]
    %v2353 = vld [vmem:[#allocation7 + $0x3a8] sm:$0xff]
    %v2354 = vld [vmem:[#allocation7 + $0x3b0] sm:$0xff]
    %v2355 = vld [vmem:[#allocation7 + $0x3b8] sm:$0xff]
    %v2356 = vld [vmem:[#allocation7 + $0x3c0] sm:$0xff]
    %v2357 = vld [vmem:[#allocation7 + $0x3c8] sm:$0xff]
    %v2358 = vld [vmem:[#allocation7 + $0x3d0] sm:$0xff]
    %v2359 = vld [vmem:[#allocation7 + $0x3d8] sm:$0xff]
    %v2360 = vld [vmem:[#allocation7 + $0x3e0] sm:$0xff]
    %v2361 = vld [vmem:[#allocation7 + $0x3e8] sm:$0xff]
    %v2362 = vld [vmem:[#allocation7 + $0x3f0] sm:$0xff]
    %v2363 = vld [vmem:[#allocation7 + $0x3f8] sm:$0xff]
    %v2364 = vld [vmem:[#allocation7 + $0x400] sm:$0xff]
    %v2365 = vld [vmem:[#allocation7 + $0x408] sm:$0xff]
    %v2366 = vld [vmem:[#allocation7 + $0x410] sm:$0xff]
    %v2367 = vld [vmem:[#allocation7 + $0x418] sm:$0xff]
    %v2368 = vld [vmem:[#allocation7 + $0x420] sm:$0xff]
    %v2369 = vld [vmem:[#allocation7 + $0x428] sm:$0xff]
    %v2370 = vld [vmem:[#allocation7 + $0x430] sm:$0xff]
    %v2371 = vld [vmem:[#allocation7 + $0x438] sm:$0xff]
    %v2372 = vld [vmem:[#allocation7 + $0x440] sm:$0xff]
    %v2373 = vld [vmem:[#allocation7 + $0x448] sm:$0xff]
    %v2374 = vld [vmem:[#allocation7 + $0x450] sm:$0xff]
    %v2375 = vld [vmem:[#allocation7 + $0x458] sm:$0xff]
    %v2376 = vld [vmem:[#allocation7 + $0x460] sm:$0xff]
    %v2377 = vld [vmem:[#allocation7 + $0x468] sm:$0xff]
    %v2378 = vld [vmem:[#allocation7 + $0x470] sm:$0xff]
    %v2379 = vld [vmem:[#allocation7 + $0x478] sm:$0xff]
    %v2380 = vld [vmem:[#allocation7 + $0x480] sm:$0xff]
    %v2381 = vld [vmem:[#allocation7 + $0x488] sm:$0xff]
    %v2382 = vld [vmem:[#allocation7 + $0x490] sm:$0xff]
    %v2383 = vld [vmem:[#allocation7 + $0x498] sm:$0xff]
    %v2384 = vld [vmem:[#allocation7 + $0x4a0] sm:$0xff]
    %v2385 = vld [vmem:[#allocation7 + $0x4a8] sm:$0xff]
    %v2386 = vld [vmem:[#allocation7 + $0x4b0] sm:$0xff]
    %v2387 = vld [vmem:[#allocation7 + $0x4b8] sm:$0xff]
    %v2388 = vld [vmem:[#allocation7 + $0x4c0] sm:$0xff]
    %v2389 = vld [vmem:[#allocation7 + $0x4c8] sm:$0xff]
    %v2390 = vld [vmem:[#allocation7 + $0x4d0] sm:$0xff]
    %v2391 = vld [vmem:[#allocation7 + $0x4d8] sm:$0xff]
    %v2392 = vld [vmem:[#allocation7 + $0x4e0] sm:$0xff]
    %v2393 = vld [vmem:[#allocation7 + $0x4e8] sm:$0xff]
    %v2394 = vld [vmem:[#allocation7 + $0x4f0] sm:$0xff]
    %v2395 = vld [vmem:[#allocation7 + $0x4f8] sm:$0xff]
    %v2396 = vld [vmem:[#allocation7 + $0x500] sm:$0xff]
    %v2397 = vld [vmem:[#allocation7 + $0x508] sm:$0xff]
    %v2398 = vld [vmem:[#allocation7 + $0x510] sm:$0xff]
    %v2399 = vld [vmem:[#allocation7 + $0x518] sm:$0xff]
    %v2400 = vld [vmem:[#allocation7 + $0x520] sm:$0xff]
    %v2401 = vld [vmem:[#allocation7 + $0x528] sm:$0xff]
    %v2402 = vld [vmem:[#allocation7 + $0x530] sm:$0xff]
    %v2403 = vld [vmem:[#allocation7 + $0x538] sm:$0xff]
    %v2404 = vld [vmem:[#allocation7 + $0x540] sm:$0xff]
    %v2405 = vld [vmem:[#allocation7 + $0x548] sm:$0xff]
    %v2406 = vld [vmem:[#allocation7 + $0x550] sm:$0xff]
    %v2407 = vld [vmem:[#allocation7 + $0x558] sm:$0xff]
    %v2408 = vld [vmem:[#allocation7 + $0x560] sm:$0xff]
    %v2409 = vld [vmem:[#allocation7 + $0x568] sm:$0xff]
    %v2410 = vld [vmem:[#allocation7 + $0x570] sm:$0xff]
    %v2411 = vld [vmem:[#allocation7 + $0x578] sm:$0xff]
    %v2412 = vld [vmem:[#allocation7 + $0x580] sm:$0xff]
    %v2413 = vld [vmem:[#allocation7 + $0x588] sm:$0xff]
    %v2414 = vld [vmem:[#allocation7 + $0x590] sm:$0xff]
    %v2415 = vld [vmem:[#allocation7 + $0x598] sm:$0xff]
    %v2416 = vld [vmem:[#allocation7 + $0x5a0] sm:$0xff]
    %v2417 = vld [vmem:[#allocation7 + $0x5a8] sm:$0xff]
    %v2418 = vld [vmem:[#allocation7 + $0x5b0] sm:$0xff]
    %v2419 = vld [vmem:[#allocation7 + $0x5b8] sm:$0xff]
    %v2420 = vld [vmem:[#allocation7 + $0x5c0] sm:$0xff]
    %v2421 = vld [vmem:[#allocation7 + $0x5c8] sm:$0xff]
    %v2422 = vld [vmem:[#allocation7 + $0x5d0] sm:$0xff]
    %v2423 = vld [vmem:[#allocation7 + $0x5d8] sm:$0xff]
    %v2424 = vld [vmem:[#allocation7 + $0x5e0] sm:$0xff]
    %v2425 = vld [vmem:[#allocation7 + $0x5e8] sm:$0xff]
    %v2426 = vld [vmem:[#allocation7 + $0x5f0] sm:$0xff]
    %v2427 = vld [vmem:[#allocation7 + $0x5f8] sm:$0xff]
    %v2428 = vld [vmem:[#allocation7 + $0x600] sm:$0xff]
    %v2429 = vld [vmem:[#allocation7 + $0x608] sm:$0xff]
    %v2430 = vld [vmem:[#allocation7 + $0x610] sm:$0xff]
    %v2431 = vld [vmem:[#allocation7 + $0x618] sm:$0xff]
    %v2432 = vld [vmem:[#allocation7 + $0x620] sm:$0xff]
    %v2433 = vld [vmem:[#allocation7 + $0x628] sm:$0xff]
    %v2434 = vld [vmem:[#allocation7 + $0x630] sm:$0xff]
    %v2435 = vld [vmem:[#allocation7 + $0x638] sm:$0xff]
    %v2436 = vld [vmem:[#allocation7 + $0x640] sm:$0xff]
    %v2437 = vld [vmem:[#allocation7 + $0x648] sm:$0xff]
    %v2438 = vld [vmem:[#allocation7 + $0x650] sm:$0xff]
    %v2439 = vld [vmem:[#allocation7 + $0x658] sm:$0xff]
    %v2440 = vld [vmem:[#allocation7 + $0x660] sm:$0xff]
    %v2441 = vld [vmem:[#allocation7 + $0x668] sm:$0xff]
    %v2442 = vld [vmem:[#allocation7 + $0x670] sm:$0xff]
    %v2443 = vld [vmem:[#allocation7 + $0x678] sm:$0xff]
    %v2444 = vld [vmem:[#allocation7 + $0x680] sm:$0xff]
    %v2445 = vld [vmem:[#allocation7 + $0x688] sm:$0xff]
    %v2446 = vld [vmem:[#allocation7 + $0x690] sm:$0xff]
    %v2447 = vld [vmem:[#allocation7 + $0x698] sm:$0xff]
    %v2448 = vld [vmem:[#allocation7 + $0x6a0] sm:$0xff]
    %v2449 = vld [vmem:[#allocation7 + $0x6a8] sm:$0xff]
    %v2450 = vld [vmem:[#allocation7 + $0x6b0] sm:$0xff]
    %v2451 = vld [vmem:[#allocation7 + $0x6b8] sm:$0xff]
    %v2452 = vld [vmem:[#allocation7 + $0x6c0] sm:$0xff]
    %v2453 = vld [vmem:[#allocation7 + $0x6c8] sm:$0xff]
    %v2454 = vld [vmem:[#allocation7 + $0x6d0] sm:$0xff]
    %v2455 = vld [vmem:[#allocation7 + $0x6d8] sm:$0xff]
    %v2456 = vld [vmem:[#allocation7 + $0x6e0] sm:$0xff]
    %v2457 = vld [vmem:[#allocation7 + $0x6e8] sm:$0xff]
    %v2458 = vld [vmem:[#allocation7 + $0x6f0] sm:$0xff]
    %v2459 = vld [vmem:[#allocation7 + $0x6f8] sm:$0xff]
    %v2460 = vld [vmem:[#allocation7 + $0x700] sm:$0xff]
    %v2461 = vld [vmem:[#allocation7 + $0x708] sm:$0xff]
    %v2462 = vld [vmem:[#allocation7 + $0x710] sm:$0xff]
    %v2463 = vld [vmem:[#allocation7 + $0x718] sm:$0xff]
    %v2464 = vld [vmem:[#allocation7 + $0x720] sm:$0xff]
    %v2465 = vld [vmem:[#allocation7 + $0x728] sm:$0xff]
    %v2466 = vld [vmem:[#allocation7 + $0x730] sm:$0xff]
    %v2467 = vld [vmem:[#allocation7 + $0x738] sm:$0xff]
    %v2468 = vld [vmem:[#allocation7 + $0x740] sm:$0xff]
    %v2469 = vld [vmem:[#allocation7 + $0x748] sm:$0xff]
    %v2470 = vld [vmem:[#allocation7 + $0x750] sm:$0xff]
    %v2471 = vld [vmem:[#allocation7 + $0x758] sm:$0xff]
    %v2472 = vld [vmem:[#allocation7 + $0x760] sm:$0xff]
    %v2473 = vld [vmem:[#allocation7 + $0x768] sm:$0xff]
    %v2474 = vld [vmem:[#allocation7 + $0x770] sm:$0xff]
    %v2475 = vld [vmem:[#allocation7 + $0x778] sm:$0xff]
    %v2476 = vld [vmem:[#allocation7 + $0x780] sm:$0xff]
    %v2477 = vld [vmem:[#allocation7 + $0x788] sm:$0xff]
    %v2478 = vld [vmem:[#allocation7 + $0x790] sm:$0xff]
    %v2479 = vld [vmem:[#allocation7 + $0x798] sm:$0xff]
    %v2480 = vld [vmem:[#allocation7 + $0x7a0] sm:$0xff]
    %v2481 = vld [vmem:[#allocation7 + $0x7a8] sm:$0xff]
    %v2482 = vld [vmem:[#allocation7 + $0x7b0] sm:$0xff]
    %v2483 = vld [vmem:[#allocation7 + $0x7b8] sm:$0xff]
    %v2484 = vld [vmem:[#allocation7 + $0x7c0] sm:$0xff]
    %v2485 = vld [vmem:[#allocation7 + $0x7c8] sm:$0xff]
    %v2486 = vld [vmem:[#allocation7 + $0x7d0] sm:$0xff]
    %v2487 = vld [vmem:[#allocation7 + $0x7d8] sm:$0xff]
    %v2488 = vld [vmem:[#allocation7 + $0x7e0] sm:$0xff]
    %v2489 = vld [vmem:[#allocation7 + $0x7e8] sm:$0xff]
    %v2490 = vld [vmem:[#allocation7 + $0x7f0] sm:$0xff]
    %v2491 = vld [vmem:[#allocation7 + $0x7f8] sm:$0xff]
    %v2492 = vld [vmem:[#allocation7 + $0x800] sm:$0xff]
    %v2493 = vld [vmem:[#allocation7 + $0x808] sm:$0xff]
    %v2494 = vld [vmem:[#allocation7 + $0x810] sm:$0xff]
    %v2495 = vld [vmem:[#allocation7 + $0x818] sm:$0xff]
    %v2496 = vld [vmem:[#allocation7 + $0x820] sm:$0xff]
    %v2497 = vld [vmem:[#allocation7 + $0x828] sm:$0xff]
    %v2498 = vld [vmem:[#allocation7 + $0x830] sm:$0xff]
    %v2499 = vld [vmem:[#allocation7 + $0x838] sm:$0xff]
    %v2500 = vld [vmem:[#allocation7 + $0x840] sm:$0xff]
    %v2501 = vld [vmem:[#allocation7 + $0x848] sm:$0xff]
    %v2502 = vld [vmem:[#allocation7 + $0x850] sm:$0xff]
    %v2503 = vld [vmem:[#allocation7 + $0x858] sm:$0xff]
    %v2504 = vld [vmem:[#allocation7 + $0x860] sm:$0xff]
    %v2505 = vld [vmem:[#allocation7 + $0x868] sm:$0xff]
    %v2506 = vld [vmem:[#allocation7 + $0x870] sm:$0xff]
    %v2507 = vld [vmem:[#allocation7 + $0x878] sm:$0xff]
    %v2508 = vld [vmem:[#allocation7 + $0x880] sm:$0xff]
    %v2509 = vld [vmem:[#allocation7 + $0x888] sm:$0xff]
    %v2510 = vld [vmem:[#allocation7 + $0x890] sm:$0xff]
    %v2511 = vld [vmem:[#allocation7 + $0x898] sm:$0xff]
    %v2512 = vld [vmem:[#allocation7 + $0x8a0] sm:$0xff]
    %v2513 = vld [vmem:[#allocation7 + $0x8a8] sm:$0xff]
    %v2514 = vld [vmem:[#allocation7 + $0x8b0] sm:$0xff]
    %v2515 = vld [vmem:[#allocation7 + $0x8b8] sm:$0xff]
    %v2516 = vld [vmem:[#allocation7 + $0x8c0] sm:$0xff]
    %v2517 = vld [vmem:[#allocation7 + $0x8c8] sm:$0xff]
    %v2518 = vld [vmem:[#allocation7 + $0x8d0] sm:$0xff]
    %v2519 = vld [vmem:[#allocation7 + $0x8d8] sm:$0xff]
    %v2520 = vld [vmem:[#allocation7 + $0x8e0] sm:$0xff]
    %v2521 = vld [vmem:[#allocation7 + $0x8e8] sm:$0xff]
    %v2522 = vld [vmem:[#allocation7 + $0x8f0] sm:$0xff]
    %v2523 = vld [vmem:[#allocation7 + $0x8f8] sm:$0xff]
    %v2524 = vld [vmem:[#allocation7 + $0x900] sm:$0xff]
    %v2525 = vld [vmem:[#allocation7 + $0x908] sm:$0xff]
    %v2526 = vld [vmem:[#allocation7 + $0x910] sm:$0xff]
    %v2527 = vld [vmem:[#allocation7 + $0x918] sm:$0xff]
    %v2528 = vld [vmem:[#allocation7 + $0x920] sm:$0xff]
    %v2529 = vld [vmem:[#allocation7 + $0x928] sm:$0xff]
    %v2530 = vld [vmem:[#allocation7 + $0x930] sm:$0xff]
    %v2531 = vld [vmem:[#allocation7 + $0x938] sm:$0xff]
    %v2532 = vld [vmem:[#allocation7 + $0x940] sm:$0xff]
    %v2533 = vld [vmem:[#allocation7 + $0x948] sm:$0xff]
    %v2534 = vld [vmem:[#allocation7 + $0x950] sm:$0xff]
    %v2535 = vld [vmem:[#allocation7 + $0x958] sm:$0xff]
    %v2536 = vld [vmem:[#allocation7 + $0x960] sm:$0xff]
    %v2537 = vld [vmem:[#allocation7 + $0x968] sm:$0xff]
    %v2538 = vld [vmem:[#allocation7 + $0x970] sm:$0xff]
    %v2539 = vld [vmem:[#allocation7 + $0x978] sm:$0xff]
    %v2540 = vld [vmem:[#allocation7 + $0x980] sm:$0xff]
    %v2541 = vld [vmem:[#allocation7 + $0x988] sm:$0xff]
    %v2542 = vld [vmem:[#allocation7 + $0x990] sm:$0xff]
    %v2543 = vld [vmem:[#allocation7 + $0x998] sm:$0xff]
    %v2544 = vld [vmem:[#allocation7 + $0x9a0] sm:$0xff]
    %v2545 = vld [vmem:[#allocation7 + $0x9a8] sm:$0xff]
    %v2546 = vld [vmem:[#allocation7 + $0x9b0] sm:$0xff]
    %v2547 = vld [vmem:[#allocation7 + $0x9b8] sm:$0xff]
    %v2548 = vld [vmem:[#allocation7 + $0x9c0] sm:$0xff]
    %v2549 = vld [vmem:[#allocation7 + $0x9c8] sm:$0xff]
    %v2550 = vld [vmem:[#allocation7 + $0x9d0] sm:$0xff]
    %v2551 = vld [vmem:[#allocation7 + $0x9d8] sm:$0xff]
    %v2552 = vld [vmem:[#allocation7 + $0x9e0] sm:$0xff]
    %v2553 = vld [vmem:[#allocation7 + $0x9e8] sm:$0xff]
    %v2554 = vld [vmem:[#allocation7 + $0x9f0] sm:$0xff]
    %v2555 = vld [vmem:[#allocation7 + $0x9f8] sm:$0xff]
    %v2556 = vld [vmem:[#allocation7 + $0xa00] sm:$0xff]
    %v2557 = vld [vmem:[#allocation7 + $0xa08] sm:$0xff]
    %v2558 = vld [vmem:[#allocation7 + $0xa10] sm:$0xff]
    %v2559 = vld [vmem:[#allocation7 + $0xa18] sm:$0xff]
    %v2560 = vld [vmem:[#allocation7 + $0xa20] sm:$0xff]
    %v2561 = vld [vmem:[#allocation7 + $0xa28] sm:$0xff]
    %v2562 = vld [vmem:[#allocation7 + $0xa30] sm:$0xff]
    %v2563 = vld [vmem:[#allocation7 + $0xa38] sm:$0xff]
    %v2564 = vld [vmem:[#allocation7 + $0xa40] sm:$0xff]
    %v2565 = vld [vmem:[#allocation7 + $0xa48] sm:$0xff]
    %v2566 = vld [vmem:[#allocation7 + $0xa50] sm:$0xff]
    %v2567 = vld [vmem:[#allocation7 + $0xa58] sm:$0xff]
    %v2568 = vld [vmem:[#allocation7 + $0xa60] sm:$0xff]
    %v2569 = vld [vmem:[#allocation7 + $0xa68] sm:$0xff]
    %v2570 = vld [vmem:[#allocation7 + $0xa70] sm:$0xff]
    %v2571 = vld [vmem:[#allocation7 + $0xa78] sm:$0xff]
    %v2572 = vld [vmem:[#allocation7 + $0xa80] sm:$0xff]
    %v2573 = vld [vmem:[#allocation7 + $0xa88] sm:$0xff]
    %v2574 = vld [vmem:[#allocation7 + $0xa90] sm:$0xff]
    %v2575 = vld [vmem:[#allocation7 + $0xa98] sm:$0xff]
    %v2576 = vld [vmem:[#allocation7 + $0xaa0] sm:$0xff]
    %v2577 = vld [vmem:[#allocation7 + $0xaa8] sm:$0xff]
    %v2578 = vld [vmem:[#allocation7 + $0xab0] sm:$0xff]
    %v2579 = vld [vmem:[#allocation7 + $0xab8] sm:$0xff]
    %v2580 = vld [vmem:[#allocation7 + $0xac0] sm:$0xff]
    %v2581 = vld [vmem:[#allocation7 + $0xac8] sm:$0xff]
    %v2582 = vld [vmem:[#allocation7 + $0xad0] sm:$0xff]
    %v2583 = vld [vmem:[#allocation7 + $0xad8] sm:$0xff]
    %v2584 = vld [vmem:[#allocation7 + $0xae0] sm:$0xff]
    %v2585 = vld [vmem:[#allocation7 + $0xae8] sm:$0xff]
    %v2586 = vld [vmem:[#allocation7 + $0xaf0] sm:$0xff]
    %v2587 = vld [vmem:[#allocation7 + $0xaf8] sm:$0xff]
    %v2588 = vld [vmem:[#allocation7 + $0xb00] sm:$0xff]
    %v2589 = vld [vmem:[#allocation7 + $0xb08] sm:$0xff]
    %v2590 = vld [vmem:[#allocation7 + $0xb10] sm:$0xff]
    %v2591 = vld [vmem:[#allocation7 + $0xb18] sm:$0xff]
    %v2592 = vld [vmem:[#allocation7 + $0xb20] sm:$0xff]
    %v2593 = vld [vmem:[#allocation7 + $0xb28] sm:$0xff]
    %v2594 = vld [vmem:[#allocation7 + $0xb30] sm:$0xff]
    %v2595 = vld [vmem:[#allocation7 + $0xb38] sm:$0xff]
    %v2596 = vld [vmem:[#allocation7 + $0xb40] sm:$0xff]
    %v2597 = vld [vmem:[#allocation7 + $0xb48] sm:$0xff]
    %v2598 = vld [vmem:[#allocation7 + $0xb50] sm:$0xff]
    %v2599 = vld [vmem:[#allocation7 + $0xb58] sm:$0xff]
    %v2600 = vld [vmem:[#allocation7 + $0xb60] sm:$0xff]
    %v2601 = vld [vmem:[#allocation7 + $0xb68] sm:$0xff]
    %v2602 = vld [vmem:[#allocation7 + $0xb70] sm:$0xff]
    %v2603 = vld [vmem:[#allocation7 + $0xb78] sm:$0xff]
    %v2604 = vld [vmem:[#allocation7 + $0xb80] sm:$0xff]
    %v2605 = vld [vmem:[#allocation7 + $0xb88] sm:$0xff]
    %v2606 = vld [vmem:[#allocation7 + $0xb90] sm:$0xff]
    %v2607 = vld [vmem:[#allocation7 + $0xb98] sm:$0xff]
    %v2608 = vld [vmem:[#allocation7 + $0xba0] sm:$0xff]
    %v2609 = vld [vmem:[#allocation7 + $0xba8] sm:$0xff]
    %v2610 = vld [vmem:[#allocation7 + $0xbb0] sm:$0xff]
    %v2611 = vld [vmem:[#allocation7 + $0xbb8] sm:$0xff]
    %v2612 = vld [vmem:[#allocation7 + $0xbc0] sm:$0xff]
    %v2613 = vld [vmem:[#allocation7 + $0xbc8] sm:$0xff]
    %v2614 = vld [vmem:[#allocation7 + $0xbd0] sm:$0xff]
    %v2615 = vld [vmem:[#allocation7 + $0xbd8] sm:$0xff]
    %v2616 = vld [vmem:[#allocation7 + $0xbe0] sm:$0xff]
    %v2617 = vld [vmem:[#allocation7 + $0xbe8] sm:$0xff]
    %v2618 = vld [vmem:[#allocation7 + $0xbf0] sm:$0xff]
    %v2619 = vld [vmem:[#allocation7 + $0xbf8] sm:$0xff]
    %v2620 = vld [vmem:[#allocation7 + $0xc00] sm:$0xff]
    %v2621 = vld [vmem:[#allocation7 + $0xc08] sm:$0xff]
    %v2622 = vld [vmem:[#allocation7 + $0xc10] sm:$0xff]
    %v2623 = vld [vmem:[#allocation7 + $0xc18] sm:$0xff]
    %v2624 = vld [vmem:[#allocation7 + $0xc20] sm:$0xff]
    %v2625 = vld [vmem:[#allocation7 + $0xc28] sm:$0xff]
    %v2626 = vld [vmem:[#allocation7 + $0xc30] sm:$0xff]
    %v2627 = vld [vmem:[#allocation7 + $0xc38] sm:$0xff]
    %v2628 = vld [vmem:[#allocation7 + $0xc40] sm:$0xff]
    %v2629 = vld [vmem:[#allocation7 + $0xc48] sm:$0xff]
    %v2630 = vld [vmem:[#allocation7 + $0xc50] sm:$0xff]
    %v2631 = vld [vmem:[#allocation7 + $0xc58] sm:$0xff]
    %v2632 = vld [vmem:[#allocation7 + $0xc60] sm:$0xff]
    %v2633 = vld [vmem:[#allocation7 + $0xc68] sm:$0xff]
    %v2634 = vld [vmem:[#allocation7 + $0xc70] sm:$0xff]
    %v2635 = vld [vmem:[#allocation7 + $0xc78] sm:$0xff]
    %v2636 = vld [vmem:[#allocation7 + $0xc80] sm:$0xff]
    %v2637 = vld [vmem:[#allocation7 + $0xc88] sm:$0xff]
    %v2638 = vld [vmem:[#allocation7 + $0xc90] sm:$0xff]
    %v2639 = vld [vmem:[#allocation7 + $0xc98] sm:$0xff]
    %v2640 = vld [vmem:[#allocation7 + $0xca0] sm:$0xff]
    %v2641 = vld [vmem:[#allocation7 + $0xca8] sm:$0xff]
    %v2642 = vld [vmem:[#allocation7 + $0xcb0] sm:$0xff]
    %v2643 = vld [vmem:[#allocation7 + $0xcb8] sm:$0xff]
    %v2644 = vld [vmem:[#allocation7 + $0xcc0] sm:$0xff]
    %v2645 = vld [vmem:[#allocation7 + $0xcc8] sm:$0xff]
    %v2646 = vld [vmem:[#allocation7 + $0xcd0] sm:$0xff]
    %v2647 = vld [vmem:[#allocation7 + $0xcd8] sm:$0xff]
    %v2648 = vld [vmem:[#allocation7 + $0xce0] sm:$0xff]
    %v2649 = vld [vmem:[#allocation7 + $0xce8] sm:$0xff]
    %v2650 = vld [vmem:[#allocation7 + $0xcf0] sm:$0xff]
    %v2651 = vld [vmem:[#allocation7 + $0xcf8] sm:$0xff]
    %v2652 = vld [vmem:[#allocation7 + $0xd00] sm:$0xff]
    %v2653 = vld [vmem:[#allocation7 + $0xd08] sm:$0xff]
    %v2654 = vld [vmem:[#allocation7 + $0xd10] sm:$0xff]
    %v2655 = vld [vmem:[#allocation7 + $0xd18] sm:$0xff]
    %v2656 = vld [vmem:[#allocation7 + $0xd20] sm:$0xff]
    %v2657 = vld [vmem:[#allocation7 + $0xd28] sm:$0xff]
    %v2658 = vld [vmem:[#allocation7 + $0xd30] sm:$0xff]
    %v2659 = vld [vmem:[#allocation7 + $0xd38] sm:$0xff]
    %v2660 = vld [vmem:[#allocation7 + $0xd40] sm:$0xff]
    %v2661 = vld [vmem:[#allocation7 + $0xd48] sm:$0xff]
    %v2662 = vld [vmem:[#allocation7 + $0xd50] sm:$0xff]
    %v2663 = vld [vmem:[#allocation7 + $0xd58] sm:$0xff]
    %v2664 = vld [vmem:[#allocation7 + $0xd60] sm:$0xff]
    %v2665 = vld [vmem:[#allocation7 + $0xd68] sm:$0xff]
    %v2666 = vld [vmem:[#allocation7 + $0xd70] sm:$0xff]
    %v2667 = vld [vmem:[#allocation7 + $0xd78] sm:$0xff]
    %v2668 = vld [vmem:[#allocation7 + $0xd80] sm:$0xff]
    %v2669 = vld [vmem:[#allocation7 + $0xd88] sm:$0xff]
    %v2670 = vld [vmem:[#allocation7 + $0xd90] sm:$0xff]
    %v2671 = vld [vmem:[#allocation7 + $0xd98] sm:$0xff]
    %v2672 = vld [vmem:[#allocation7 + $0xda0] sm:$0xff]
    %v2673 = vld [vmem:[#allocation7 + $0xda8] sm:$0xff]
    %v2674 = vld [vmem:[#allocation7 + $0xdb0] sm:$0xff]
    %v2675 = vld [vmem:[#allocation7 + $0xdb8] sm:$0xff]
    %v2676 = vld [vmem:[#allocation7 + $0xdc0] sm:$0xff]
    %v2677 = vld [vmem:[#allocation7 + $0xdc8] sm:$0xff]
    %v2678 = vld [vmem:[#allocation7 + $0xdd0] sm:$0xff]
    %v2679 = vld [vmem:[#allocation7 + $0xdd8] sm:$0xff]
    %v2680 = vld [vmem:[#allocation7 + $0xde0] sm:$0xff]
    %v2681 = vld [vmem:[#allocation7 + $0xde8] sm:$0xff]
    %v2682 = vld [vmem:[#allocation7 + $0xdf0] sm:$0xff]
    %v2683 = vld [vmem:[#allocation7 + $0xdf8] sm:$0xff]
    %v2684 = vld [vmem:[#allocation7 + $0xe00] sm:$0xff]
    %v2685 = vld [vmem:[#allocation7 + $0xe08] sm:$0xff]
    %v2686 = vld [vmem:[#allocation7 + $0xe10] sm:$0xff]
    %v2687 = vld [vmem:[#allocation7 + $0xe18] sm:$0xff]
    %v2688 = vld [vmem:[#allocation7 + $0xe20] sm:$0xff]
    %v2689 = vld [vmem:[#allocation7 + $0xe28] sm:$0xff]
    %v2690 = vld [vmem:[#allocation7 + $0xe30] sm:$0xff]
    %v2691 = vld [vmem:[#allocation7 + $0xe38] sm:$0xff]
    %v2692 = vld [vmem:[#allocation7 + $0xe40] sm:$0xff]
    %v2693 = vld [vmem:[#allocation7 + $0xe48] sm:$0xff]
    %v2694 = vld [vmem:[#allocation7 + $0xe50] sm:$0xff]
    %v2695 = vld [vmem:[#allocation7 + $0xe58] sm:$0xff]
    %v2696 = vld [vmem:[#allocation7 + $0xe60] sm:$0xff]
    %v2697 = vld [vmem:[#allocation7 + $0xe68] sm:$0xff]
    %v2698 = vld [vmem:[#allocation7 + $0xe70] sm:$0xff]
    %v2699 = vld [vmem:[#allocation7 + $0xe78] sm:$0xff]
    %v2700 = vld [vmem:[#allocation7 + $0xe80] sm:$0xff]
    %v2701 = vld [vmem:[#allocation7 + $0xe88] sm:$0xff]
    %v2702 = vld [vmem:[#allocation7 + $0xe90] sm:$0xff]
    %v2703 = vld [vmem:[#allocation7 + $0xe98] sm:$0xff]
    %v2704 = vld [vmem:[#allocation7 + $0xea0] sm:$0xff]
    %v2705 = vld [vmem:[#allocation7 + $0xea8] sm:$0xff]
    %v2706 = vld [vmem:[#allocation7 + $0xeb0] sm:$0xff]
    %v2707 = vld [vmem:[#allocation7 + $0xeb8] sm:$0xff]
    %v2708 = vld [vmem:[#allocation7 + $0xec0] sm:$0xff]
    %v2709 = vld [vmem:[#allocation7 + $0xec8] sm:$0xff]
    %v2710 = vld [vmem:[#allocation7 + $0xed0] sm:$0xff]
    %v2711 = vld [vmem:[#allocation7 + $0xed8] sm:$0xff]
    %v2712 = vld [vmem:[#allocation7 + $0xee0] sm:$0xff]
    %v2713 = vld [vmem:[#allocation7 + $0xee8] sm:$0xff]
    %v2714 = vld [vmem:[#allocation7 + $0xef0] sm:$0xff]
    %v2715 = vld [vmem:[#allocation7 + $0xef8] sm:$0xff]
    %v2716 = vpack.c.b16 %v2055, %v2052
    %v2717 = vpack.c.b16 %v2056, %v2053
    %v2718 = vpack.c.b16 %v2057, %v2054
    %v2719 = vpack.c.b16 %v2095, %v2092
    %v2720 = vpack.c.b16 %v2096, %v2093
    %v2721 = vpack.c.b16 %v2097, %v2094
    %v2722 = vpack.c.b16 %v2135, %v2132
    %v2723 = vpack.c.b16 %v2136, %v2133
    %v2724 = vpack.c.b16 %v2137, %v2134
    %v2725 = vpack.c.b16 %v2175, %v2172
    %v2726 = vpack.c.b16 %v2176, %v2173
    %v2727 = vpack.c.b16 %v2177, %v2174
    %v2728 = vpack.c.b16 %v2215, %v2212
    %v2729 = vpack.c.b16 %v2216, %v2213
    %v2730 = vpack.c.b16 %v2217, %v2214
    %v2731 = vpack.c.b16 %v2061, %v2058
    %v2732 = vpack.c.b16 %v2062, %v2059
    %v2733 = vpack.c.b16 %v2063, %v2060
    %v2734 = vpack.c.b16 %v2101, %v2098
    %v2735 = vpack.c.b16 %v2102, %v2099
    %v2736 = vpack.c.b16 %v2103, %v2100
    %v2737 = vpack.c.b16 %v2141, %v2138
    %v2738 = vpack.c.b16 %v2142, %v2139
    %v2739 = vpack.c.b16 %v2143, %v2140
    %v2740 = vpack.c.b16 %v2181, %v2178
    %v2741 = vpack.c.b16 %v2182, %v2179
    %v2742 = vpack.c.b16 %v2183, %v2180
    %v2743 = vpack.c.b16 %v2221, %v2218
    %v2744 = vpack.c.b16 %v2222, %v2219
    %v2745 = vpack.c.b16 %v2223, %v2220
    %v2746 = vpack.c.b16 %v2067, %v2064
    %v2747 = vpack.c.b16 %v2068, %v2065
    %v2748 = vpack.c.b16 %v2069, %v2066
    %v2749 = vpack.c.b16 %v2107, %v2104
    %v2750 = vpack.c.b16 %v2108, %v2105
    %v2751 = vpack.c.b16 %v2109, %v2106
    %v2752 = vpack.c.b16 %v2147, %v2144
    %v2753 = vpack.c.b16 %v2148, %v2145
    %v2754 = vpack.c.b16 %v2149, %v2146
    %v2755 = vpack.c.b16 %v2187, %v2184
    %v2756 = vpack.c.b16 %v2188, %v2185
    %v2757 = vpack.c.b16 %v2189, %v2186
    %v2758 = vpack.c.b16 %v2227, %v2224
    %v2759 = vpack.c.b16 %v2228, %v2225
    %v2760 = vpack.c.b16 %v2229, %v2226
    %v2761 = vpack.c.b16 %v2073, %v2070
    %v2762 = vpack.c.b16 %v2074, %v2071
    %v2763 = vpack.c.b16 %v2075, %v2072
    %v2764 = vpack.c.b16 %v2113, %v2110
    %v2765 = vpack.c.b16 %v2114, %v2111
    %v2766 = vpack.c.b16 %v2115, %v2112
    %v2767 = vpack.c.b16 %v2153, %v2150
    %v2768 = vpack.c.b16 %v2154, %v2151
    %v2769 = vpack.c.b16 %v2155, %v2152
    %v2770 = vpack.c.b16 %v2193, %v2190
    %v2771 = vpack.c.b16 %v2194, %v2191
    %v2772 = vpack.c.b16 %v2195, %v2192
    %v2773 = vpack.c.b16 %v2233, %v2230
    %v2774 = vpack.c.b16 %v2234, %v2231
    %v2775 = vpack.c.b16 %v2235, %v2232
    %v3316 = vunpack.c.l.b16 %v2236
    %v3317 = vunpack.c.h.b16 %v2236
    %v3318 = vunpack.c.l.b16 %v2237
    %v3319 = vunpack.c.h.b16 %v2237
    %v3320 = vunpack.c.l.b16 %v2238
    %v3321 = vunpack.c.h.b16 %v2238
    %v3322 = vunpack.c.l.b16 %v2239
    %v3323 = vunpack.c.h.b16 %v2239
    %v3324 = vunpack.c.l.b16 %v2240
    %v3325 = vunpack.c.h.b16 %v2240
    %v3326 = vunpack.c.l.b16 %v2241
    %v3327 = vunpack.c.h.b16 %v2241
    %v3328 = vunpack.c.l.b16 %v2242
    %v3329 = vunpack.c.h.b16 %v2242
    %v3330 = vunpack.c.l.b16 %v2243
    %v3331 = vunpack.c.h.b16 %v2243
    %v3332 = vunpack.c.l.b16 %v2244
    %v3333 = vunpack.c.h.b16 %v2244
    %v3334 = vunpack.c.l.b16 %v2245
    %v3335 = vunpack.c.h.b16 %v2245
    %v3336 = vunpack.c.l.b16 %v2246
    %v3337 = vunpack.c.h.b16 %v2246
    %v3338 = vunpack.c.l.b16 %v2247
    %v3339 = vunpack.c.h.b16 %v2247
    %v3340 = vunpack.c.l.b16 %v2248
    %v3341 = vunpack.c.h.b16 %v2248
    %v3342 = vunpack.c.l.b16 %v2249
    %v3343 = vunpack.c.h.b16 %v2249
    %v3344 = vunpack.c.l.b16 %v2250
    %v3345 = vunpack.c.h.b16 %v2250
    %v3346 = vunpack.c.l.b16 %v2251
    %v3347 = vunpack.c.h.b16 %v2251
    %v3348 = vunpack.c.l.b16 %v2252
    %v3349 = vunpack.c.h.b16 %v2252
    %v3350 = vunpack.c.l.b16 %v2253
    %v3351 = vunpack.c.h.b16 %v2253
    %v3352 = vunpack.c.l.b16 %v2254
    %v3353 = vunpack.c.h.b16 %v2254
    %v3354 = vunpack.c.l.b16 %v2255
    %v3355 = vunpack.c.h.b16 %v2255
    %v3356 = vunpack.c.l.b16 %v2256
    %v3357 = vunpack.c.h.b16 %v2256
    %v3358 = vunpack.c.l.b16 %v2257
    %v3359 = vunpack.c.h.b16 %v2257
    %v3360 = vunpack.c.l.b16 %v2258
    %v3361 = vunpack.c.h.b16 %v2258
    %v3362 = vunpack.c.l.b16 %v2259
    %v3363 = vunpack.c.h.b16 %v2259
    %v3364 = vunpack.c.l.b16 %v2260
    %v3365 = vunpack.c.h.b16 %v2260
    %v3366 = vunpack.c.l.b16 %v2261
    %v3367 = vunpack.c.h.b16 %v2261
    %v3368 = vunpack.c.l.b16 %v2262
    %v3369 = vunpack.c.h.b16 %v2262
    %v3370 = vunpack.c.l.b16 %v2263
    %v3371 = vunpack.c.h.b16 %v2263
    %v3372 = vunpack.c.l.b16 %v2264
    %v3373 = vunpack.c.h.b16 %v2264
    %v3374 = vunpack.c.l.b16 %v2265
    %v3375 = vunpack.c.h.b16 %v2265
    %v3376 = vunpack.c.l.b16 %v2266
    %v3377 = vunpack.c.h.b16 %v2266
    %v3378 = vunpack.c.l.b16 %v2267
    %v3379 = vunpack.c.h.b16 %v2267
    %v3380 = vunpack.c.l.b16 %v2268
    %v3381 = vunpack.c.h.b16 %v2268
    %v3382 = vunpack.c.l.b16 %v2269
    %v3383 = vunpack.c.h.b16 %v2269
    %v3384 = vunpack.c.l.b16 %v2270
    %v3385 = vunpack.c.h.b16 %v2270
    %v3386 = vunpack.c.l.b16 %v2271
    %v3387 = vunpack.c.h.b16 %v2271
    %v3388 = vunpack.c.l.b16 %v2272
    %v3389 = vunpack.c.h.b16 %v2272
    %v3390 = vunpack.c.l.b16 %v2273
    %v3391 = vunpack.c.h.b16 %v2273
    %v3392 = vunpack.c.l.b16 %v2274
    %v3393 = vunpack.c.h.b16 %v2274
    %v3394 = vunpack.c.l.b16 %v2275
    %v3395 = vunpack.c.h.b16 %v2275
    %v3396 = vunpack.c.l.b16 %v2276
    %v3397 = vunpack.c.h.b16 %v2276
    %v3398 = vunpack.c.l.b16 %v2277
    %v3399 = vunpack.c.h.b16 %v2277
    %v3400 = vunpack.c.l.b16 %v2278
    %v3401 = vunpack.c.h.b16 %v2278
    %v3402 = vunpack.c.l.b16 %v2279
    %v3403 = vunpack.c.h.b16 %v2279
    %v3404 = vunpack.c.l.b16 %v2280
    %v3405 = vunpack.c.h.b16 %v2280
    %v3406 = vunpack.c.l.b16 %v2281
    %v3407 = vunpack.c.h.b16 %v2281
    %v3408 = vunpack.c.l.b16 %v2282
    %v3409 = vunpack.c.h.b16 %v2282
    %v3410 = vunpack.c.l.b16 %v2283
    %v3411 = vunpack.c.h.b16 %v2283
    %v3412 = vunpack.c.l.b16 %v2284
    %v3413 = vunpack.c.h.b16 %v2284
    %v3414 = vunpack.c.l.b16 %v2285
    %v3415 = vunpack.c.h.b16 %v2285
    %v3416 = vunpack.c.l.b16 %v2286
    %v3417 = vunpack.c.h.b16 %v2286
    %v3418 = vunpack.c.l.b16 %v2287
    %v3419 = vunpack.c.h.b16 %v2287
    %v3420 = vunpack.c.l.b16 %v2288
    %v3421 = vunpack.c.h.b16 %v2288
    %v3422 = vunpack.c.l.b16 %v2289
    %v3423 = vunpack.c.h.b16 %v2289
    %v3424 = vunpack.c.l.b16 %v2290
    %v3425 = vunpack.c.h.b16 %v2290
    %v3426 = vunpack.c.l.b16 %v2291
    %v3427 = vunpack.c.h.b16 %v2291
    %v3428 = vunpack.c.l.b16 %v2292
    %v3429 = vunpack.c.h.b16 %v2292
    %v3430 = vunpack.c.l.b16 %v2293
    %v3431 = vunpack.c.h.b16 %v2293
    %v3432 = vunpack.c.l.b16 %v2294
    %v3433 = vunpack.c.h.b16 %v2294
    %v3434 = vunpack.c.l.b16 %v2295
    %v3435 = vunpack.c.h.b16 %v2295
    %v3436 = vunpack.c.l.b16 %v2296
    %v3437 = vunpack.c.h.b16 %v2296
    %v3438 = vunpack.c.l.b16 %v2297
    %v3439 = vunpack.c.h.b16 %v2297
    %v3440 = vunpack.c.l.b16 %v2298
    %v3441 = vunpack.c.h.b16 %v2298
    %v3442 = vunpack.c.l.b16 %v2299
    %v3443 = vunpack.c.h.b16 %v2299
    %v3444 = vunpack.c.l.b16 %v2300
    %v3445 = vunpack.c.h.b16 %v2300
    %v3446 = vunpack.c.l.b16 %v2301
    %v3447 = vunpack.c.h.b16 %v2301
    %v3448 = vunpack.c.l.b16 %v2302
    %v3449 = vunpack.c.h.b16 %v2302
    %v3450 = vunpack.c.l.b16 %v2303
    %v3451 = vunpack.c.h.b16 %v2303
    %v3452 = vunpack.c.l.b16 %v2304
    %v3453 = vunpack.c.h.b16 %v2304
    %v3454 = vunpack.c.l.b16 %v2305
    %v3455 = vunpack.c.h.b16 %v2305
    %v3456 = vunpack.c.l.b16 %v2306
    %v3457 = vunpack.c.h.b16 %v2306
    %v3458 = vunpack.c.l.b16 %v2307
    %v3459 = vunpack.c.h.b16 %v2307
    %v3460 = vunpack.c.l.b16 %v2308
    %v3461 = vunpack.c.h.b16 %v2308
    %v3462 = vunpack.c.l.b16 %v2309
    %v3463 = vunpack.c.h.b16 %v2309
    %v3464 = vunpack.c.l.b16 %v2310
    %v3465 = vunpack.c.h.b16 %v2310
    %v3466 = vunpack.c.l.b16 %v2311
    %v3467 = vunpack.c.h.b16 %v2311
    %v3468 = vunpack.c.l.b16 %v2312
    %v3469 = vunpack.c.h.b16 %v2312
    %v3470 = vunpack.c.l.b16 %v2313
    %v3471 = vunpack.c.h.b16 %v2313
    %v3472 = vunpack.c.l.b16 %v2314
    %v3473 = vunpack.c.h.b16 %v2314
    %v3474 = vunpack.c.l.b16 %v2315
    %v3475 = vunpack.c.h.b16 %v2315
    %v3476 = vunpack.c.l.b16 %v2316
    %v3477 = vunpack.c.h.b16 %v2316
    %v3478 = vunpack.c.l.b16 %v2317
    %v3479 = vunpack.c.h.b16 %v2317
    %v3480 = vunpack.c.l.b16 %v2318
    %v3481 = vunpack.c.h.b16 %v2318
    %v3482 = vunpack.c.l.b16 %v2319
    %v3483 = vunpack.c.h.b16 %v2319
    %v3484 = vunpack.c.l.b16 %v2320
    %v3485 = vunpack.c.h.b16 %v2320
    %v3486 = vunpack.c.l.b16 %v2321
    %v3487 = vunpack.c.h.b16 %v2321
    %v3488 = vunpack.c.l.b16 %v2322
    %v3489 = vunpack.c.h.b16 %v2322
    %v3490 = vunpack.c.l.b16 %v2323
    %v3491 = vunpack.c.h.b16 %v2323
    %v3492 = vunpack.c.l.b16 %v2324
    %v3493 = vunpack.c.h.b16 %v2324
    %v3494 = vunpack.c.l.b16 %v2325
    %v3495 = vunpack.c.h.b16 %v2325
    %v3496 = vunpack.c.l.b16 %v2326
    %v3497 = vunpack.c.h.b16 %v2326
    %v3498 = vunpack.c.l.b16 %v2327
    %v3499 = vunpack.c.h.b16 %v2327
    %v3500 = vunpack.c.l.b16 %v2328
    %v3501 = vunpack.c.h.b16 %v2328
    %v3502 = vunpack.c.l.b16 %v2329
    %v3503 = vunpack.c.h.b16 %v2329
    %v3504 = vunpack.c.l.b16 %v2330
    %v3505 = vunpack.c.h.b16 %v2330
    %v3506 = vunpack.c.l.b16 %v2331
    %v3507 = vunpack.c.h.b16 %v2331
    %v3508 = vunpack.c.l.b16 %v2332
    %v3509 = vunpack.c.h.b16 %v2332
    %v3510 = vunpack.c.l.b16 %v2333
    %v3511 = vunpack.c.h.b16 %v2333
    %v3512 = vunpack.c.l.b16 %v2334
    %v3513 = vunpack.c.h.b16 %v2334
    %v3514 = vunpack.c.l.b16 %v2335
    %v3515 = vunpack.c.h.b16 %v2335
    %v3516 = vunpack.c.l.b16 %v2336
    %v3517 = vunpack.c.h.b16 %v2336
    %v3518 = vunpack.c.l.b16 %v2337
    %v3519 = vunpack.c.h.b16 %v2337
    %v3520 = vunpack.c.l.b16 %v2338
    %v3521 = vunpack.c.h.b16 %v2338
    %v3522 = vunpack.c.l.b16 %v2339
    %v3523 = vunpack.c.h.b16 %v2339
    %v3524 = vunpack.c.l.b16 %v2340
    %v3525 = vunpack.c.h.b16 %v2340
    %v3526 = vunpack.c.l.b16 %v2341
    %v3527 = vunpack.c.h.b16 %v2341
    %v3528 = vunpack.c.l.b16 %v2342
    %v3529 = vunpack.c.h.b16 %v2342
    %v3530 = vunpack.c.l.b16 %v2343
    %v3531 = vunpack.c.h.b16 %v2343
    %v3532 = vunpack.c.l.b16 %v2344
    %v3533 = vunpack.c.h.b16 %v2344
    %v3534 = vunpack.c.l.b16 %v2345
    %v3535 = vunpack.c.h.b16 %v2345
    %v3536 = vunpack.c.l.b16 %v2346
    %v3537 = vunpack.c.h.b16 %v2346
    %v3538 = vunpack.c.l.b16 %v2347
    %v3539 = vunpack.c.h.b16 %v2347
    %v3540 = vunpack.c.l.b16 %v2348
    %v3541 = vunpack.c.h.b16 %v2348
    %v3542 = vunpack.c.l.b16 %v2349
    %v3543 = vunpack.c.h.b16 %v2349
    %v3544 = vunpack.c.l.b16 %v2350
    %v3545 = vunpack.c.h.b16 %v2350
    %v3546 = vunpack.c.l.b16 %v2351
    %v3547 = vunpack.c.h.b16 %v2351
    %v3548 = vunpack.c.l.b16 %v2352
    %v3549 = vunpack.c.h.b16 %v2352
    %v3550 = vunpack.c.l.b16 %v2353
    %v3551 = vunpack.c.h.b16 %v2353
    %v3552 = vunpack.c.l.b16 %v2354
    %v3553 = vunpack.c.h.b16 %v2354
    %v3554 = vunpack.c.l.b16 %v2355
    %v3555 = vunpack.c.h.b16 %v2355
    %v3556 = vunpack.c.l.b16 %v2356
    %v3557 = vunpack.c.h.b16 %v2356
    %v3558 = vunpack.c.l.b16 %v2357
    %v3559 = vunpack.c.h.b16 %v2357
    %v3560 = vunpack.c.l.b16 %v2358
    %v3561 = vunpack.c.h.b16 %v2358
    %v3562 = vunpack.c.l.b16 %v2359
    %v3563 = vunpack.c.h.b16 %v2359
    %v3564 = vunpack.c.l.b16 %v2360
    %v3565 = vunpack.c.h.b16 %v2360
    %v3566 = vunpack.c.l.b16 %v2361
    %v3567 = vunpack.c.h.b16 %v2361
    %v3568 = vunpack.c.l.b16 %v2362
    %v3569 = vunpack.c.h.b16 %v2362
    %v3570 = vunpack.c.l.b16 %v2363
    %v3571 = vunpack.c.h.b16 %v2363
    %v3572 = vunpack.c.l.b16 %v2364
    %v3573 = vunpack.c.h.b16 %v2364
    %v3574 = vunpack.c.l.b16 %v2365
    %v3575 = vunpack.c.h.b16 %v2365
    %v3576 = vunpack.c.l.b16 %v2366
    %v3577 = vunpack.c.h.b16 %v2366
    %v3578 = vunpack.c.l.b16 %v2367
    %v3579 = vunpack.c.h.b16 %v2367
    %v3580 = vunpack.c.l.b16 %v2368
    %v3581 = vunpack.c.h.b16 %v2368
    %v3582 = vunpack.c.l.b16 %v2369
    %v3583 = vunpack.c.h.b16 %v2369
    %v3584 = vunpack.c.l.b16 %v2370
    %v3585 = vunpack.c.h.b16 %v2370
    %v3586 = vunpack.c.l.b16 %v2371
    %v3587 = vunpack.c.h.b16 %v2371
    %v3588 = vunpack.c.l.b16 %v2372
    %v3589 = vunpack.c.h.b16 %v2372
    %v3590 = vunpack.c.l.b16 %v2373
    %v3591 = vunpack.c.h.b16 %v2373
    %v3592 = vunpack.c.l.b16 %v2374
    %v3593 = vunpack.c.h.b16 %v2374
    %v3594 = vunpack.c.l.b16 %v2375
    %v3595 = vunpack.c.h.b16 %v2375
    %v3596 = vunpack.c.l.b16 %v2376
    %v3597 = vunpack.c.h.b16 %v2376
    %v3598 = vunpack.c.l.b16 %v2377
    %v3599 = vunpack.c.h.b16 %v2377
    %v3600 = vunpack.c.l.b16 %v2378
    %v3601 = vunpack.c.h.b16 %v2378
    %v3602 = vunpack.c.l.b16 %v2379
    %v3603 = vunpack.c.h.b16 %v2379
    %v3604 = vunpack.c.l.b16 %v2380
    %v3605 = vunpack.c.h.b16 %v2380
    %v3606 = vunpack.c.l.b16 %v2381
    %v3607 = vunpack.c.h.b16 %v2381
    %v3608 = vunpack.c.l.b16 %v2382
    %v3609 = vunpack.c.h.b16 %v2382
    %v3610 = vunpack.c.l.b16 %v2383
    %v3611 = vunpack.c.h.b16 %v2383
    %v3612 = vunpack.c.l.b16 %v2384
    %v3613 = vunpack.c.h.b16 %v2384
    %v3614 = vunpack.c.l.b16 %v2385
    %v3615 = vunpack.c.h.b16 %v2385
    %v3616 = vunpack.c.l.b16 %v2386
    %v3617 = vunpack.c.h.b16 %v2386
    %v3618 = vunpack.c.l.b16 %v2387
    %v3619 = vunpack.c.h.b16 %v2387
    %v3620 = vunpack.c.l.b16 %v2388
    %v3621 = vunpack.c.h.b16 %v2388
    %v3622 = vunpack.c.l.b16 %v2389
    %v3623 = vunpack.c.h.b16 %v2389
    %v3624 = vunpack.c.l.b16 %v2390
    %v3625 = vunpack.c.h.b16 %v2390
    %v3626 = vunpack.c.l.b16 %v2391
    %v3627 = vunpack.c.h.b16 %v2391
    %v3628 = vunpack.c.l.b16 %v2392
    %v3629 = vunpack.c.h.b16 %v2392
    %v3630 = vunpack.c.l.b16 %v2393
    %v3631 = vunpack.c.h.b16 %v2393
    %v3632 = vunpack.c.l.b16 %v2394
    %v3633 = vunpack.c.h.b16 %v2394
    %v3634 = vunpack.c.l.b16 %v2395
    %v3635 = vunpack.c.h.b16 %v2395
    %v3636 = vunpack.c.l.b16 %v2396
    %v3637 = vunpack.c.h.b16 %v2396
    %v3638 = vunpack.c.l.b16 %v2397
    %v3639 = vunpack.c.h.b16 %v2397
    %v3640 = vunpack.c.l.b16 %v2398
    %v3641 = vunpack.c.h.b16 %v2398
    %v3642 = vunpack.c.l.b16 %v2399
    %v3643 = vunpack.c.h.b16 %v2399
    %v3644 = vunpack.c.l.b16 %v2400
    %v3645 = vunpack.c.h.b16 %v2400
    %v3646 = vunpack.c.l.b16 %v2401
    %v3647 = vunpack.c.h.b16 %v2401
    %v3648 = vunpack.c.l.b16 %v2402
    %v3649 = vunpack.c.h.b16 %v2402
    %v3650 = vunpack.c.l.b16 %v2403
    %v3651 = vunpack.c.h.b16 %v2403
    %v3652 = vunpack.c.l.b16 %v2404
    %v3653 = vunpack.c.h.b16 %v2404
    %v3654 = vunpack.c.l.b16 %v2405
    %v3655 = vunpack.c.h.b16 %v2405
    %v3656 = vunpack.c.l.b16 %v2406
    %v3657 = vunpack.c.h.b16 %v2406
    %v3658 = vunpack.c.l.b16 %v2407
    %v3659 = vunpack.c.h.b16 %v2407
    %v3660 = vunpack.c.l.b16 %v2408
    %v3661 = vunpack.c.h.b16 %v2408
    %v3662 = vunpack.c.l.b16 %v2409
    %v3663 = vunpack.c.h.b16 %v2409
    %v3664 = vunpack.c.l.b16 %v2410
    %v3665 = vunpack.c.h.b16 %v2410
    %v3666 = vunpack.c.l.b16 %v2411
    %v3667 = vunpack.c.h.b16 %v2411
    %v3668 = vunpack.c.l.b16 %v2412
    %v3669 = vunpack.c.h.b16 %v2412
    %v3670 = vunpack.c.l.b16 %v2413
    %v3671 = vunpack.c.h.b16 %v2413
    %v3672 = vunpack.c.l.b16 %v2414
    %v3673 = vunpack.c.h.b16 %v2414
    %v3674 = vunpack.c.l.b16 %v2415
    %v3675 = vunpack.c.h.b16 %v2415
    %v3676 = vunpack.c.l.b16 %v2416
    %v3677 = vunpack.c.h.b16 %v2416
    %v3678 = vunpack.c.l.b16 %v2417
    %v3679 = vunpack.c.h.b16 %v2417
    %v3680 = vunpack.c.l.b16 %v2418
    %v3681 = vunpack.c.h.b16 %v2418
    %v3682 = vunpack.c.l.b16 %v2419
    %v3683 = vunpack.c.h.b16 %v2419
    %v3684 = vunpack.c.l.b16 %v2420
    %v3685 = vunpack.c.h.b16 %v2420
    %v3686 = vunpack.c.l.b16 %v2421
    %v3687 = vunpack.c.h.b16 %v2421
    %v3688 = vunpack.c.l.b16 %v2422
    %v3689 = vunpack.c.h.b16 %v2422
    %v3690 = vunpack.c.l.b16 %v2423
    %v3691 = vunpack.c.h.b16 %v2423
    %v3692 = vunpack.c.l.b16 %v2424
    %v3693 = vunpack.c.h.b16 %v2424
    %v3694 = vunpack.c.l.b16 %v2425
    %v3695 = vunpack.c.h.b16 %v2425
    %v3696 = vunpack.c.l.b16 %v2426
    %v3697 = vunpack.c.h.b16 %v2426
    %v3698 = vunpack.c.l.b16 %v2427
    %v3699 = vunpack.c.h.b16 %v2427
    %v3700 = vunpack.c.l.b16 %v2428
    %v3701 = vunpack.c.h.b16 %v2428
    %v3702 = vunpack.c.l.b16 %v2429
    %v3703 = vunpack.c.h.b16 %v2429
    %v3704 = vunpack.c.l.b16 %v2430
    %v3705 = vunpack.c.h.b16 %v2430
    %v3706 = vunpack.c.l.b16 %v2431
    %v3707 = vunpack.c.h.b16 %v2431
    %v3708 = vunpack.c.l.b16 %v2432
    %v3709 = vunpack.c.h.b16 %v2432
    %v3710 = vunpack.c.l.b16 %v2433
    %v3711 = vunpack.c.h.b16 %v2433
    %v3712 = vunpack.c.l.b16 %v2434
    %v3713 = vunpack.c.h.b16 %v2434
    %v3714 = vunpack.c.l.b16 %v2435
    %v3715 = vunpack.c.h.b16 %v2435
    %v3716 = vunpack.c.l.b16 %v2436
    %v3717 = vunpack.c.h.b16 %v2436
    %v3718 = vunpack.c.l.b16 %v2437
    %v3719 = vunpack.c.h.b16 %v2437
    %v3720 = vunpack.c.l.b16 %v2438
    %v3721 = vunpack.c.h.b16 %v2438
    %v3722 = vunpack.c.l.b16 %v2439
    %v3723 = vunpack.c.h.b16 %v2439
    %v3724 = vunpack.c.l.b16 %v2440
    %v3725 = vunpack.c.h.b16 %v2440
    %v3726 = vunpack.c.l.b16 %v2441
    %v3727 = vunpack.c.h.b16 %v2441
    %v3728 = vunpack.c.l.b16 %v2442
    %v3729 = vunpack.c.h.b16 %v2442
    %v3730 = vunpack.c.l.b16 %v2443
    %v3731 = vunpack.c.h.b16 %v2443
    %v3732 = vunpack.c.l.b16 %v2444
    %v3733 = vunpack.c.h.b16 %v2444
    %v3734 = vunpack.c.l.b16 %v2445
    %v3735 = vunpack.c.h.b16 %v2445
    %v3736 = vunpack.c.l.b16 %v2446
    %v3737 = vunpack.c.h.b16 %v2446
    %v3738 = vunpack.c.l.b16 %v2447
    %v3739 = vunpack.c.h.b16 %v2447
    %v3740 = vunpack.c.l.b16 %v2448
    %v3741 = vunpack.c.h.b16 %v2448
    %v3742 = vunpack.c.l.b16 %v2449
    %v3743 = vunpack.c.h.b16 %v2449
    %v3744 = vunpack.c.l.b16 %v2450
    %v3745 = vunpack.c.h.b16 %v2450
    %v3746 = vunpack.c.l.b16 %v2451
    %v3747 = vunpack.c.h.b16 %v2451
    %v3748 = vunpack.c.l.b16 %v2452
    %v3749 = vunpack.c.h.b16 %v2452
    %v3750 = vunpack.c.l.b16 %v2453
    %v3751 = vunpack.c.h.b16 %v2453
    %v3752 = vunpack.c.l.b16 %v2454
    %v3753 = vunpack.c.h.b16 %v2454
    %v3754 = vunpack.c.l.b16 %v2455
    %v3755 = vunpack.c.h.b16 %v2455
    %v3756 = vunpack.c.l.b16 %v2456
    %v3757 = vunpack.c.h.b16 %v2456
    %v3758 = vunpack.c.l.b16 %v2457
    %v3759 = vunpack.c.h.b16 %v2457
    %v3760 = vunpack.c.l.b16 %v2458
    %v3761 = vunpack.c.h.b16 %v2458
    %v3762 = vunpack.c.l.b16 %v2459
    %v3763 = vunpack.c.h.b16 %v2459
    %v3764 = vunpack.c.l.b16 %v2460
    %v3765 = vunpack.c.h.b16 %v2460
    %v3766 = vunpack.c.l.b16 %v2461
    %v3767 = vunpack.c.h.b16 %v2461
    %v3768 = vunpack.c.l.b16 %v2462
    %v3769 = vunpack.c.h.b16 %v2462
    %v3770 = vunpack.c.l.b16 %v2463
    %v3771 = vunpack.c.h.b16 %v2463
    %v3772 = vunpack.c.l.b16 %v2464
    %v3773 = vunpack.c.h.b16 %v2464
    %v3774 = vunpack.c.l.b16 %v2465
    %v3775 = vunpack.c.h.b16 %v2465
    %v3776 = vunpack.c.l.b16 %v2466
    %v3777 = vunpack.c.h.b16 %v2466
    %v3778 = vunpack.c.l.b16 %v2467
    %v3779 = vunpack.c.h.b16 %v2467
    %v3780 = vunpack.c.l.b16 %v2468
    %v3781 = vunpack.c.h.b16 %v2468
    %v3782 = vunpack.c.l.b16 %v2469
    %v3783 = vunpack.c.h.b16 %v2469
    %v3784 = vunpack.c.l.b16 %v2470
    %v3785 = vunpack.c.h.b16 %v2470
    %v3786 = vunpack.c.l.b16 %v2471
    %v3787 = vunpack.c.h.b16 %v2471
    %v3788 = vunpack.c.l.b16 %v2472
    %v3789 = vunpack.c.h.b16 %v2472
    %v3790 = vunpack.c.l.b16 %v2473
    %v3791 = vunpack.c.h.b16 %v2473
    %v3792 = vunpack.c.l.b16 %v2474
    %v3793 = vunpack.c.h.b16 %v2474
    %v3794 = vunpack.c.l.b16 %v2475
    %v3795 = vunpack.c.h.b16 %v2475
    %v3796 = vunpack.c.l.b16 %v2476
    %v3797 = vunpack.c.h.b16 %v2476
    %v3798 = vunpack.c.l.b16 %v2477
    %v3799 = vunpack.c.h.b16 %v2477
    %v3800 = vunpack.c.l.b16 %v2478
    %v3801 = vunpack.c.h.b16 %v2478
    %v3802 = vunpack.c.l.b16 %v2479
    %v3803 = vunpack.c.h.b16 %v2479
    %v3804 = vunpack.c.l.b16 %v2480
    %v3805 = vunpack.c.h.b16 %v2480
    %v3806 = vunpack.c.l.b16 %v2481
    %v3807 = vunpack.c.h.b16 %v2481
    %v3808 = vunpack.c.l.b16 %v2482
    %v3809 = vunpack.c.h.b16 %v2482
    %v3810 = vunpack.c.l.b16 %v2483
    %v3811 = vunpack.c.h.b16 %v2483
    %v3812 = vunpack.c.l.b16 %v2484
    %v3813 = vunpack.c.h.b16 %v2484
    %v3814 = vunpack.c.l.b16 %v2485
    %v3815 = vunpack.c.h.b16 %v2485
    %v3816 = vunpack.c.l.b16 %v2486
    %v3817 = vunpack.c.h.b16 %v2486
    %v3818 = vunpack.c.l.b16 %v2487
    %v3819 = vunpack.c.h.b16 %v2487
    %v3820 = vunpack.c.l.b16 %v2488
    %v3821 = vunpack.c.h.b16 %v2488
    %v3822 = vunpack.c.l.b16 %v2489
    %v3823 = vunpack.c.h.b16 %v2489
    %v3824 = vunpack.c.l.b16 %v2490
    %v3825 = vunpack.c.h.b16 %v2490
    %v3826 = vunpack.c.l.b16 %v2491
    %v3827 = vunpack.c.h.b16 %v2491
    %v3828 = vunpack.c.l.b16 %v2492
    %v3829 = vunpack.c.h.b16 %v2492
    %v3830 = vunpack.c.l.b16 %v2493
    %v3831 = vunpack.c.h.b16 %v2493
    %v3832 = vunpack.c.l.b16 %v2494
    %v3833 = vunpack.c.h.b16 %v2494
    %v3834 = vunpack.c.l.b16 %v2495
    %v3835 = vunpack.c.h.b16 %v2495
    %v3836 = vunpack.c.l.b16 %v2496
    %v3837 = vunpack.c.h.b16 %v2496
    %v3838 = vunpack.c.l.b16 %v2497
    %v3839 = vunpack.c.h.b16 %v2497
    %v3840 = vunpack.c.l.b16 %v2498
    %v3841 = vunpack.c.h.b16 %v2498
    %v3842 = vunpack.c.l.b16 %v2499
    %v3843 = vunpack.c.h.b16 %v2499
    %v3844 = vunpack.c.l.b16 %v2500
    %v3845 = vunpack.c.h.b16 %v2500
    %v3846 = vunpack.c.l.b16 %v2501
    %v3847 = vunpack.c.h.b16 %v2501
    %v3848 = vunpack.c.l.b16 %v2502
    %v3849 = vunpack.c.h.b16 %v2502
    %v3850 = vunpack.c.l.b16 %v2503
    %v3851 = vunpack.c.h.b16 %v2503
    %v3852 = vunpack.c.l.b16 %v2504
    %v3853 = vunpack.c.h.b16 %v2504
    %v3854 = vunpack.c.l.b16 %v2505
    %v3855 = vunpack.c.h.b16 %v2505
    %v3856 = vunpack.c.l.b16 %v2506
    %v3857 = vunpack.c.h.b16 %v2506
    %v3858 = vunpack.c.l.b16 %v2507
    %v3859 = vunpack.c.h.b16 %v2507
    %v3860 = vunpack.c.l.b16 %v2508
    %v3861 = vunpack.c.h.b16 %v2508
    %v3862 = vunpack.c.l.b16 %v2509
    %v3863 = vunpack.c.h.b16 %v2509
    %v3864 = vunpack.c.l.b16 %v2510
    %v3865 = vunpack.c.h.b16 %v2510
    %v3866 = vunpack.c.l.b16 %v2511
    %v3867 = vunpack.c.h.b16 %v2511
    %v3868 = vunpack.c.l.b16 %v2512
    %v3869 = vunpack.c.h.b16 %v2512
    %v3870 = vunpack.c.l.b16 %v2513
    %v3871 = vunpack.c.h.b16 %v2513
    %v3872 = vunpack.c.l.b16 %v2514
    %v3873 = vunpack.c.h.b16 %v2514
    %v3874 = vunpack.c.l.b16 %v2515
    %v3875 = vunpack.c.h.b16 %v2515
    %v3876 = vunpack.c.l.b16 %v2516
    %v3877 = vunpack.c.h.b16 %v2516
    %v3878 = vunpack.c.l.b16 %v2517
    %v3879 = vunpack.c.h.b16 %v2517
    %v3880 = vunpack.c.l.b16 %v2518
    %v3881 = vunpack.c.h.b16 %v2518
    %v3882 = vunpack.c.l.b16 %v2519
    %v3883 = vunpack.c.h.b16 %v2519
    %v3884 = vunpack.c.l.b16 %v2520
    %v3885 = vunpack.c.h.b16 %v2520
    %v3886 = vunpack.c.l.b16 %v2521
    %v3887 = vunpack.c.h.b16 %v2521
    %v3888 = vunpack.c.l.b16 %v2522
    %v3889 = vunpack.c.h.b16 %v2522
    %v3890 = vunpack.c.l.b16 %v2523
    %v3891 = vunpack.c.h.b16 %v2523
    %v3892 = vunpack.c.l.b16 %v2524
    %v3893 = vunpack.c.h.b16 %v2524
    %v3894 = vunpack.c.l.b16 %v2525
    %v3895 = vunpack.c.h.b16 %v2525
    %v3896 = vunpack.c.l.b16 %v2526
    %v3897 = vunpack.c.h.b16 %v2526
    %v3898 = vunpack.c.l.b16 %v2527
    %v3899 = vunpack.c.h.b16 %v2527
    %v3900 = vunpack.c.l.b16 %v2528
    %v3901 = vunpack.c.h.b16 %v2528
    %v3902 = vunpack.c.l.b16 %v2529
    %v3903 = vunpack.c.h.b16 %v2529
    %v3904 = vunpack.c.l.b16 %v2530
    %v3905 = vunpack.c.h.b16 %v2530
    %v3906 = vunpack.c.l.b16 %v2531
    %v3907 = vunpack.c.h.b16 %v2531
    %v3908 = vunpack.c.l.b16 %v2532
    %v3909 = vunpack.c.h.b16 %v2532
    %v3910 = vunpack.c.l.b16 %v2533
    %v3911 = vunpack.c.h.b16 %v2533
    %v3912 = vunpack.c.l.b16 %v2534
    %v3913 = vunpack.c.h.b16 %v2534
    %v3914 = vunpack.c.l.b16 %v2535
    %v3915 = vunpack.c.h.b16 %v2535
    %v3916 = vunpack.c.l.b16 %v2536
    %v3917 = vunpack.c.h.b16 %v2536
    %v3918 = vunpack.c.l.b16 %v2537
    %v3919 = vunpack.c.h.b16 %v2537
    %v3920 = vunpack.c.l.b16 %v2538
    %v3921 = vunpack.c.h.b16 %v2538
    %v3922 = vunpack.c.l.b16 %v2539
    %v3923 = vunpack.c.h.b16 %v2539
    %v3924 = vunpack.c.l.b16 %v2540
    %v3925 = vunpack.c.h.b16 %v2540
    %v3926 = vunpack.c.l.b16 %v2541
    %v3927 = vunpack.c.h.b16 %v2541
    %v3928 = vunpack.c.l.b16 %v2542
    %v3929 = vunpack.c.h.b16 %v2542
    %v3930 = vunpack.c.l.b16 %v2543
    %v3931 = vunpack.c.h.b16 %v2543
    %v3932 = vunpack.c.l.b16 %v2544
    %v3933 = vunpack.c.h.b16 %v2544
    %v3934 = vunpack.c.l.b16 %v2545
    %v3935 = vunpack.c.h.b16 %v2545
    %v3936 = vunpack.c.l.b16 %v2546
    %v3937 = vunpack.c.h.b16 %v2546
    %v3938 = vunpack.c.l.b16 %v2547
    %v3939 = vunpack.c.h.b16 %v2547
    %v3940 = vunpack.c.l.b16 %v2548
    %v3941 = vunpack.c.h.b16 %v2548
    %v3942 = vunpack.c.l.b16 %v2549
    %v3943 = vunpack.c.h.b16 %v2549
    %v3944 = vunpack.c.l.b16 %v2550
    %v3945 = vunpack.c.h.b16 %v2550
    %v3946 = vunpack.c.l.b16 %v2551
    %v3947 = vunpack.c.h.b16 %v2551
    %v3948 = vunpack.c.l.b16 %v2552
    %v3949 = vunpack.c.h.b16 %v2552
    %v3950 = vunpack.c.l.b16 %v2553
    %v3951 = vunpack.c.h.b16 %v2553
    %v3952 = vunpack.c.l.b16 %v2554
    %v3953 = vunpack.c.h.b16 %v2554
    %v3954 = vunpack.c.l.b16 %v2555
    %v3955 = vunpack.c.h.b16 %v2555
    %v3956 = vunpack.c.l.b16 %v2556
    %v3957 = vunpack.c.h.b16 %v2556
    %v3958 = vunpack.c.l.b16 %v2557
    %v3959 = vunpack.c.h.b16 %v2557
    %v3960 = vunpack.c.l.b16 %v2558
    %v3961 = vunpack.c.h.b16 %v2558
    %v3962 = vunpack.c.l.b16 %v2559
    %v3963 = vunpack.c.h.b16 %v2559
    %v3964 = vunpack.c.l.b16 %v2560
    %v3965 = vunpack.c.h.b16 %v2560
    %v3966 = vunpack.c.l.b16 %v2561
    %v3967 = vunpack.c.h.b16 %v2561
    %v3968 = vunpack.c.l.b16 %v2562
    %v3969 = vunpack.c.h.b16 %v2562
    %v3970 = vunpack.c.l.b16 %v2563
    %v3971 = vunpack.c.h.b16 %v2563
    %v3972 = vunpack.c.l.b16 %v2564
    %v3973 = vunpack.c.h.b16 %v2564
    %v3974 = vunpack.c.l.b16 %v2565
    %v3975 = vunpack.c.h.b16 %v2565
    %v3976 = vunpack.c.l.b16 %v2566
    %v3977 = vunpack.c.h.b16 %v2566
    %v3978 = vunpack.c.l.b16 %v2567
    %v3979 = vunpack.c.h.b16 %v2567
    %v3980 = vunpack.c.l.b16 %v2568
    %v3981 = vunpack.c.h.b16 %v2568
    %v3982 = vunpack.c.l.b16 %v2569
    %v3983 = vunpack.c.h.b16 %v2569
    %v3984 = vunpack.c.l.b16 %v2570
    %v3985 = vunpack.c.h.b16 %v2570
    %v3986 = vunpack.c.l.b16 %v2571
    %v3987 = vunpack.c.h.b16 %v2571
    %v3988 = vunpack.c.l.b16 %v2572
    %v3989 = vunpack.c.h.b16 %v2572
    %v3990 = vunpack.c.l.b16 %v2573
    %v3991 = vunpack.c.h.b16 %v2573
    %v3992 = vunpack.c.l.b16 %v2574
    %v3993 = vunpack.c.h.b16 %v2574
    %v3994 = vunpack.c.l.b16 %v2575
    %v3995 = vunpack.c.h.b16 %v2575
    %v3996 = vunpack.c.l.b16 %v2576
    %v3997 = vunpack.c.h.b16 %v2576
    %v3998 = vunpack.c.l.b16 %v2577
    %v3999 = vunpack.c.h.b16 %v2577
    %v4000 = vunpack.c.l.b16 %v2578
    %v4001 = vunpack.c.h.b16 %v2578
    %v4002 = vunpack.c.l.b16 %v2579
    %v4003 = vunpack.c.h.b16 %v2579
    %v4004 = vunpack.c.l.b16 %v2580
    %v4005 = vunpack.c.h.b16 %v2580
    %v4006 = vunpack.c.l.b16 %v2581
    %v4007 = vunpack.c.h.b16 %v2581
    %v4008 = vunpack.c.l.b16 %v2582
    %v4009 = vunpack.c.h.b16 %v2582
    %v4010 = vunpack.c.l.b16 %v2583
    %v4011 = vunpack.c.h.b16 %v2583
    %v4012 = vunpack.c.l.b16 %v2584
    %v4013 = vunpack.c.h.b16 %v2584
    %v4014 = vunpack.c.l.b16 %v2585
    %v4015 = vunpack.c.h.b16 %v2585
    %v4016 = vunpack.c.l.b16 %v2586
    %v4017 = vunpack.c.h.b16 %v2586
    %v4018 = vunpack.c.l.b16 %v2587
    %v4019 = vunpack.c.h.b16 %v2587
    %v4020 = vunpack.c.l.b16 %v2588
    %v4021 = vunpack.c.h.b16 %v2588
    %v4022 = vunpack.c.l.b16 %v2589
    %v4023 = vunpack.c.h.b16 %v2589
    %v4024 = vunpack.c.l.b16 %v2590
    %v4025 = vunpack.c.h.b16 %v2590
    %v4026 = vunpack.c.l.b16 %v2591
    %v4027 = vunpack.c.h.b16 %v2591
    %v4028 = vunpack.c.l.b16 %v2592
    %v4029 = vunpack.c.h.b16 %v2592
    %v4030 = vunpack.c.l.b16 %v2593
    %v4031 = vunpack.c.h.b16 %v2593
    %v4032 = vunpack.c.l.b16 %v2594
    %v4033 = vunpack.c.h.b16 %v2594
    %v4034 = vunpack.c.l.b16 %v2595
    %v4035 = vunpack.c.h.b16 %v2595
    %v4036 = vunpack.c.l.b16 %v2596
    %v4037 = vunpack.c.h.b16 %v2596
    %v4038 = vunpack.c.l.b16 %v2597
    %v4039 = vunpack.c.h.b16 %v2597
    %v4040 = vunpack.c.l.b16 %v2598
    %v4041 = vunpack.c.h.b16 %v2598
    %v4042 = vunpack.c.l.b16 %v2599
    %v4043 = vunpack.c.h.b16 %v2599
    %v4044 = vunpack.c.l.b16 %v2600
    %v4045 = vunpack.c.h.b16 %v2600
    %v4046 = vunpack.c.l.b16 %v2601
    %v4047 = vunpack.c.h.b16 %v2601
    %v4048 = vunpack.c.l.b16 %v2602
    %v4049 = vunpack.c.h.b16 %v2602
    %v4050 = vunpack.c.l.b16 %v2603
    %v4051 = vunpack.c.h.b16 %v2603
    %v4052 = vunpack.c.l.b16 %v2604
    %v4053 = vunpack.c.h.b16 %v2604
    %v4054 = vunpack.c.l.b16 %v2605
    %v4055 = vunpack.c.h.b16 %v2605
    %v4056 = vunpack.c.l.b16 %v2606
    %v4057 = vunpack.c.h.b16 %v2606
    %v4058 = vunpack.c.l.b16 %v2607
    %v4059 = vunpack.c.h.b16 %v2607
    %v4060 = vunpack.c.l.b16 %v2608
    %v4061 = vunpack.c.h.b16 %v2608
    %v4062 = vunpack.c.l.b16 %v2609
    %v4063 = vunpack.c.h.b16 %v2609
    %v4064 = vunpack.c.l.b16 %v2610
    %v4065 = vunpack.c.h.b16 %v2610
    %v4066 = vunpack.c.l.b16 %v2611
    %v4067 = vunpack.c.h.b16 %v2611
    %v4068 = vunpack.c.l.b16 %v2612
    %v4069 = vunpack.c.h.b16 %v2612
    %v4070 = vunpack.c.l.b16 %v2613
    %v4071 = vunpack.c.h.b16 %v2613
    %v4072 = vunpack.c.l.b16 %v2614
    %v4073 = vunpack.c.h.b16 %v2614
    %v4074 = vunpack.c.l.b16 %v2615
    %v4075 = vunpack.c.h.b16 %v2615
    %v4076 = vunpack.c.l.b16 %v2616
    %v4077 = vunpack.c.h.b16 %v2616
    %v4078 = vunpack.c.l.b16 %v2617
    %v4079 = vunpack.c.h.b16 %v2617
    %v4080 = vunpack.c.l.b16 %v2618
    %v4081 = vunpack.c.h.b16 %v2618
    %v4082 = vunpack.c.l.b16 %v2619
    %v4083 = vunpack.c.h.b16 %v2619
    %v4084 = vunpack.c.l.b16 %v2620
    %v4085 = vunpack.c.h.b16 %v2620
    %v4086 = vunpack.c.l.b16 %v2621
    %v4087 = vunpack.c.h.b16 %v2621
    %v4088 = vunpack.c.l.b16 %v2622
    %v4089 = vunpack.c.h.b16 %v2622
    %v4090 = vunpack.c.l.b16 %v2623
    %v4091 = vunpack.c.h.b16 %v2623
    %v4092 = vunpack.c.l.b16 %v2624
    %v4093 = vunpack.c.h.b16 %v2624
    %v4094 = vunpack.c.l.b16 %v2625
    %v4095 = vunpack.c.h.b16 %v2625
    %v4096 = vunpack.c.l.b16 %v2626
    %v4097 = vunpack.c.h.b16 %v2626
    %v4098 = vunpack.c.l.b16 %v2627
    %v4099 = vunpack.c.h.b16 %v2627
    %v4100 = vunpack.c.l.b16 %v2628
    %v4101 = vunpack.c.h.b16 %v2628
    %v4102 = vunpack.c.l.b16 %v2629
    %v4103 = vunpack.c.h.b16 %v2629
    %v4104 = vunpack.c.l.b16 %v2630
    %v4105 = vunpack.c.h.b16 %v2630
    %v4106 = vunpack.c.l.b16 %v2631
    %v4107 = vunpack.c.h.b16 %v2631
    %v4108 = vunpack.c.l.b16 %v2632
    %v4109 = vunpack.c.h.b16 %v2632
    %v4110 = vunpack.c.l.b16 %v2633
    %v4111 = vunpack.c.h.b16 %v2633
    %v4112 = vunpack.c.l.b16 %v2634
    %v4113 = vunpack.c.h.b16 %v2634
    %v4114 = vunpack.c.l.b16 %v2635
    %v4115 = vunpack.c.h.b16 %v2635
    %v4116 = vunpack.c.l.b16 %v2636
    %v4117 = vunpack.c.h.b16 %v2636
    %v4118 = vunpack.c.l.b16 %v2637
    %v4119 = vunpack.c.h.b16 %v2637
    %v4120 = vunpack.c.l.b16 %v2638
    %v4121 = vunpack.c.h.b16 %v2638
    %v4122 = vunpack.c.l.b16 %v2639
    %v4123 = vunpack.c.h.b16 %v2639
    %v4124 = vunpack.c.l.b16 %v2640
    %v4125 = vunpack.c.h.b16 %v2640
    %v4126 = vunpack.c.l.b16 %v2641
    %v4127 = vunpack.c.h.b16 %v2641
    %v4128 = vunpack.c.l.b16 %v2642
    %v4129 = vunpack.c.h.b16 %v2642
    %v4130 = vunpack.c.l.b16 %v2643
    %v4131 = vunpack.c.h.b16 %v2643
    %v4132 = vunpack.c.l.b16 %v2644
    %v4133 = vunpack.c.h.b16 %v2644
    %v4134 = vunpack.c.l.b16 %v2645
    %v4135 = vunpack.c.h.b16 %v2645
    %v4136 = vunpack.c.l.b16 %v2646
    %v4137 = vunpack.c.h.b16 %v2646
    %v4138 = vunpack.c.l.b16 %v2647
    %v4139 = vunpack.c.h.b16 %v2647
    %v4140 = vunpack.c.l.b16 %v2648
    %v4141 = vunpack.c.h.b16 %v2648
    %v4142 = vunpack.c.l.b16 %v2649
    %v4143 = vunpack.c.h.b16 %v2649
    %v4144 = vunpack.c.l.b16 %v2650
    %v4145 = vunpack.c.h.b16 %v2650
    %v4146 = vunpack.c.l.b16 %v2651
    %v4147 = vunpack.c.h.b16 %v2651
    %v4148 = vunpack.c.l.b16 %v2652
    %v4149 = vunpack.c.h.b16 %v2652
    %v4150 = vunpack.c.l.b16 %v2653
    %v4151 = vunpack.c.h.b16 %v2653
    %v4152 = vunpack.c.l.b16 %v2654
    %v4153 = vunpack.c.h.b16 %v2654
    %v4154 = vunpack.c.l.b16 %v2655
    %v4155 = vunpack.c.h.b16 %v2655
    %v4156 = vunpack.c.l.b16 %v2656
    %v4157 = vunpack.c.h.b16 %v2656
    %v4158 = vunpack.c.l.b16 %v2657
    %v4159 = vunpack.c.h.b16 %v2657
    %v4160 = vunpack.c.l.b16 %v2658
    %v4161 = vunpack.c.h.b16 %v2658
    %v4162 = vunpack.c.l.b16 %v2659
    %v4163 = vunpack.c.h.b16 %v2659
    %v4164 = vunpack.c.l.b16 %v2660
    %v4165 = vunpack.c.h.b16 %v2660
    %v4166 = vunpack.c.l.b16 %v2661
    %v4167 = vunpack.c.h.b16 %v2661
    %v4168 = vunpack.c.l.b16 %v2662
    %v4169 = vunpack.c.h.b16 %v2662
    %v4170 = vunpack.c.l.b16 %v2663
    %v4171 = vunpack.c.h.b16 %v2663
    %v4172 = vunpack.c.l.b16 %v2664
    %v4173 = vunpack.c.h.b16 %v2664
    %v4174 = vunpack.c.l.b16 %v2665
    %v4175 = vunpack.c.h.b16 %v2665
    %v4176 = vunpack.c.l.b16 %v2666
    %v4177 = vunpack.c.h.b16 %v2666
    %v4178 = vunpack.c.l.b16 %v2667
    %v4179 = vunpack.c.h.b16 %v2667
    %v4180 = vunpack.c.l.b16 %v2668
    %v4181 = vunpack.c.h.b16 %v2668
    %v4182 = vunpack.c.l.b16 %v2669
    %v4183 = vunpack.c.h.b16 %v2669
    %v4184 = vunpack.c.l.b16 %v2670
    %v4185 = vunpack.c.h.b16 %v2670
    %v4186 = vunpack.c.l.b16 %v2671
    %v4187 = vunpack.c.h.b16 %v2671
    %v4188 = vunpack.c.l.b16 %v2672
    %v4189 = vunpack.c.h.b16 %v2672
    %v4190 = vunpack.c.l.b16 %v2673
    %v4191 = vunpack.c.h.b16 %v2673
    %v4192 = vunpack.c.l.b16 %v2674
    %v4193 = vunpack.c.h.b16 %v2674
    %v4194 = vunpack.c.l.b16 %v2675
    %v4195 = vunpack.c.h.b16 %v2675
    %v4196 = vunpack.c.l.b16 %v2676
    %v4197 = vunpack.c.h.b16 %v2676
    %v4198 = vunpack.c.l.b16 %v2677
    %v4199 = vunpack.c.h.b16 %v2677
    %v4200 = vunpack.c.l.b16 %v2678
    %v4201 = vunpack.c.h.b16 %v2678
    %v4202 = vunpack.c.l.b16 %v2679
    %v4203 = vunpack.c.h.b16 %v2679
    %v4204 = vunpack.c.l.b16 %v2680
    %v4205 = vunpack.c.h.b16 %v2680
    %v4206 = vunpack.c.l.b16 %v2681
    %v4207 = vunpack.c.h.b16 %v2681
    %v4208 = vunpack.c.l.b16 %v2682
    %v4209 = vunpack.c.h.b16 %v2682
    %v4210 = vunpack.c.l.b16 %v2683
    %v4211 = vunpack.c.h.b16 %v2683
    %v4212 = vunpack.c.l.b16 %v2684
    %v4213 = vunpack.c.h.b16 %v2684
    %v4214 = vunpack.c.l.b16 %v2685
    %v4215 = vunpack.c.h.b16 %v2685
    %v4216 = vunpack.c.l.b16 %v2686
    %v4217 = vunpack.c.h.b16 %v2686
    %v4218 = vunpack.c.l.b16 %v2687
    %v4219 = vunpack.c.h.b16 %v2687
    %v4220 = vunpack.c.l.b16 %v2688
    %v4221 = vunpack.c.h.b16 %v2688
    %v4222 = vunpack.c.l.b16 %v2689
    %v4223 = vunpack.c.h.b16 %v2689
    %v4224 = vunpack.c.l.b16 %v2690
    %v4225 = vunpack.c.h.b16 %v2690
    %v4226 = vunpack.c.l.b16 %v2691
    %v4227 = vunpack.c.h.b16 %v2691
    %v4228 = vunpack.c.l.b16 %v2692
    %v4229 = vunpack.c.h.b16 %v2692
    %v4230 = vunpack.c.l.b16 %v2693
    %v4231 = vunpack.c.h.b16 %v2693
    %v4232 = vunpack.c.l.b16 %v2694
    %v4233 = vunpack.c.h.b16 %v2694
    %v4234 = vunpack.c.l.b16 %v2695
    %v4235 = vunpack.c.h.b16 %v2695
    %v4236 = vunpack.c.l.b16 %v2696
    %v4237 = vunpack.c.h.b16 %v2696
    %v4238 = vunpack.c.l.b16 %v2697
    %v4239 = vunpack.c.h.b16 %v2697
    %v4240 = vunpack.c.l.b16 %v2698
    %v4241 = vunpack.c.h.b16 %v2698
    %v4242 = vunpack.c.l.b16 %v2699
    %v4243 = vunpack.c.h.b16 %v2699
    %v4244 = vunpack.c.l.b16 %v2700
    %v4245 = vunpack.c.h.b16 %v2700
    %v4246 = vunpack.c.l.b16 %v2701
    %v4247 = vunpack.c.h.b16 %v2701
    %v4248 = vunpack.c.l.b16 %v2702
    %v4249 = vunpack.c.h.b16 %v2702
    %v4250 = vunpack.c.l.b16 %v2703
    %v4251 = vunpack.c.h.b16 %v2703
    %v4252 = vunpack.c.l.b16 %v2704
    %v4253 = vunpack.c.h.b16 %v2704
    %v4254 = vunpack.c.l.b16 %v2705
    %v4255 = vunpack.c.h.b16 %v2705
    %v4256 = vunpack.c.l.b16 %v2706
    %v4257 = vunpack.c.h.b16 %v2706
    %v4258 = vunpack.c.l.b16 %v2707
    %v4259 = vunpack.c.h.b16 %v2707
    %v4260 = vunpack.c.l.b16 %v2708
    %v4261 = vunpack.c.h.b16 %v2708
    %v4262 = vunpack.c.l.b16 %v2709
    %v4263 = vunpack.c.h.b16 %v2709
    %v4264 = vunpack.c.l.b16 %v2710
    %v4265 = vunpack.c.h.b16 %v2710
    %v4266 = vunpack.c.l.b16 %v2711
    %v4267 = vunpack.c.h.b16 %v2711
    %v4268 = vunpack.c.l.b16 %v2712
    %v4269 = vunpack.c.h.b16 %v2712
    %v4270 = vunpack.c.l.b16 %v2713
    %v4271 = vunpack.c.h.b16 %v2713
    %v4272 = vunpack.c.l.b16 %v2714
    %v4273 = vunpack.c.h.b16 %v2714
    %v4274 = vunpack.c.l.b16 %v2715
    %v4275 = vunpack.c.h.b16 %v2715
    %v4276 = vpack.c.b16 %v3320, %v3316
    %v4277 = vpack.c.b16 %v3321, %v3317
    %v4278 = vpack.c.b16 %v3322, %v3318
    %v4279 = vpack.c.b16 %v3323, %v3319
    %v4280 = vpack.c.b16 %v3328, %v3324
    %v4281 = vpack.c.b16 %v3329, %v3325
    %v4282 = vpack.c.b16 %v3330, %v3326
    %v4283 = vpack.c.b16 %v3331, %v3327
    %v4284 = vpack.c.b16 %v3336, %v3332
    %v4285 = vpack.c.b16 %v3337, %v3333
    %v4286 = vpack.c.b16 %v3338, %v3334
    %v4287 = vpack.c.b16 %v3339, %v3335
    %v4288 = vpack.c.b16 %v3344, %v3340
    %v4289 = vpack.c.b16 %v3345, %v3341
    %v4290 = vpack.c.b16 %v3346, %v3342
    %v4291 = vpack.c.b16 %v3347, %v3343
    %v4292 = vpack.c.b16 %v3352, %v3348
    %v4293 = vpack.c.b16 %v3353, %v3349
    %v4294 = vpack.c.b16 %v3354, %v3350
    %v4295 = vpack.c.b16 %v3355, %v3351
    %v4296 = vpack.c.b16 %v3360, %v3356
    %v4297 = vpack.c.b16 %v3361, %v3357
    %v4298 = vpack.c.b16 %v3362, %v3358
    %v4299 = vpack.c.b16 %v3363, %v3359
    %v4300 = vpack.c.b16 %v3368, %v3364
    %v4301 = vpack.c.b16 %v3369, %v3365
    %v4302 = vpack.c.b16 %v3370, %v3366
    %v4303 = vpack.c.b16 %v3371, %v3367
    %v4304 = vpack.c.b16 %v3376, %v3372
    %v4305 = vpack.c.b16 %v3377, %v3373
    %v4306 = vpack.c.b16 %v3378, %v3374
    %v4307 = vpack.c.b16 %v3379, %v3375
    %v4308 = vpack.c.b16 %v3384, %v3380
    %v4309 = vpack.c.b16 %v3385, %v3381
    %v4310 = vpack.c.b16 %v3386, %v3382
    %v4311 = vpack.c.b16 %v3387, %v3383
    %v4312 = vpack.c.b16 %v3392, %v3388
    %v4313 = vpack.c.b16 %v3393, %v3389
    %v4314 = vpack.c.b16 %v3394, %v3390
    %v4315 = vpack.c.b16 %v3395, %v3391
    %v4316 = vpack.c.b16 %v3400, %v3396
    %v4317 = vpack.c.b16 %v3401, %v3397
    %v4318 = vpack.c.b16 %v3402, %v3398
    %v4319 = vpack.c.b16 %v3403, %v3399
    %v4320 = vpack.c.b16 %v3408, %v3404
    %v4321 = vpack.c.b16 %v3409, %v3405
    %v4322 = vpack.c.b16 %v3410, %v3406
    %v4323 = vpack.c.b16 %v3411, %v3407
    %v4324 = vpack.c.b16 %v3416, %v3412
    %v4325 = vpack.c.b16 %v3417, %v3413
    %v4326 = vpack.c.b16 %v3418, %v3414
    %v4327 = vpack.c.b16 %v3419, %v3415
    %v4328 = vpack.c.b16 %v3424, %v3420
    %v4329 = vpack.c.b16 %v3425, %v3421
    %v4330 = vpack.c.b16 %v3426, %v3422
    %v4331 = vpack.c.b16 %v3427, %v3423
    %v4332 = vpack.c.b16 %v3432, %v3428
    %v4333 = vpack.c.b16 %v3433, %v3429
    %v4334 = vpack.c.b16 %v3434, %v3430
    %v4335 = vpack.c.b16 %v3435, %v3431
    %v4336 = vpack.c.b16 %v3440, %v3436
    %v4337 = vpack.c.b16 %v3441, %v3437
    %v4338 = vpack.c.b16 %v3442, %v3438
    %v4339 = vpack.c.b16 %v3443, %v3439
    %v4340 = vpack.c.b16 %v3448, %v3444
    %v4341 = vpack.c.b16 %v3449, %v3445
    %v4342 = vpack.c.b16 %v3450, %v3446
    %v4343 = vpack.c.b16 %v3451, %v3447
    %v4344 = vpack.c.b16 %v3456, %v3452
    %v4345 = vpack.c.b16 %v3457, %v3453
    %v4346 = vpack.c.b16 %v3458, %v3454
    %v4347 = vpack.c.b16 %v3459, %v3455
    %v4348 = vpack.c.b16 %v3464, %v3460
    %v4349 = vpack.c.b16 %v3465, %v3461
    %v4350 = vpack.c.b16 %v3466, %v3462
    %v4351 = vpack.c.b16 %v3467, %v3463
    %v4352 = vpack.c.b16 %v3472, %v3468
    %v4353 = vpack.c.b16 %v3473, %v3469
    %v4354 = vpack.c.b16 %v3474, %v3470
    %v4355 = vpack.c.b16 %v3475, %v3471
    %v4356 = vpack.c.b16 %v3480, %v3476
    %v4357 = vpack.c.b16 %v3481, %v3477
    %v4358 = vpack.c.b16 %v3482, %v3478
    %v4359 = vpack.c.b16 %v3483, %v3479
    %v4360 = vpack.c.b16 %v3488, %v3484
    %v4361 = vpack.c.b16 %v3489, %v3485
    %v4362 = vpack.c.b16 %v3490, %v3486
    %v4363 = vpack.c.b16 %v3491, %v3487
    %v4364 = vpack.c.b16 %v3496, %v3492
    %v4365 = vpack.c.b16 %v3497, %v3493
    %v4366 = vpack.c.b16 %v3498, %v3494
    %v4367 = vpack.c.b16 %v3499, %v3495
    %v4368 = vpack.c.b16 %v3504, %v3500
    %v4369 = vpack.c.b16 %v3505, %v3501
    %v4370 = vpack.c.b16 %v3506, %v3502
    %v4371 = vpack.c.b16 %v3507, %v3503
    %v4372 = vpack.c.b16 %v3512, %v3508
    %v4373 = vpack.c.b16 %v3513, %v3509
    %v4374 = vpack.c.b16 %v3514, %v3510
    %v4375 = vpack.c.b16 %v3515, %v3511
    %v4376 = vpack.c.b16 %v3520, %v3516
    %v4377 = vpack.c.b16 %v3521, %v3517
    %v4378 = vpack.c.b16 %v3522, %v3518
    %v4379 = vpack.c.b16 %v3523, %v3519
    %v4380 = vpack.c.b16 %v3528, %v3524
    %v4381 = vpack.c.b16 %v3529, %v3525
    %v4382 = vpack.c.b16 %v3530, %v3526
    %v4383 = vpack.c.b16 %v3531, %v3527
    %v4384 = vpack.c.b16 %v3536, %v3532
    %v4385 = vpack.c.b16 %v3537, %v3533
    %v4386 = vpack.c.b16 %v3538, %v3534
    %v4387 = vpack.c.b16 %v3539, %v3535
    %v4388 = vpack.c.b16 %v3544, %v3540
    %v4389 = vpack.c.b16 %v3545, %v3541
    %v4390 = vpack.c.b16 %v3546, %v3542
    %v4391 = vpack.c.b16 %v3547, %v3543
    %v4392 = vpack.c.b16 %v3552, %v3548
    %v4393 = vpack.c.b16 %v3553, %v3549
    %v4394 = vpack.c.b16 %v3554, %v3550
    %v4395 = vpack.c.b16 %v3555, %v3551
    %v4396 = vpack.c.b16 %v3560, %v3556
    %v4397 = vpack.c.b16 %v3561, %v3557
    %v4398 = vpack.c.b16 %v3562, %v3558
    %v4399 = vpack.c.b16 %v3563, %v3559
    %v4400 = vpack.c.b16 %v3568, %v3564
    %v4401 = vpack.c.b16 %v3569, %v3565
    %v4402 = vpack.c.b16 %v3570, %v3566
    %v4403 = vpack.c.b16 %v3571, %v3567
    %v4404 = vpack.c.b16 %v3576, %v3572
    %v4405 = vpack.c.b16 %v3577, %v3573
    %v4406 = vpack.c.b16 %v3578, %v3574
    %v4407 = vpack.c.b16 %v3579, %v3575
    %v4408 = vpack.c.b16 %v3584, %v3580
    %v4409 = vpack.c.b16 %v3585, %v3581
    %v4410 = vpack.c.b16 %v3586, %v3582
    %v4411 = vpack.c.b16 %v3587, %v3583
    %v4412 = vpack.c.b16 %v3592, %v3588
    %v4413 = vpack.c.b16 %v3593, %v3589
    %v4414 = vpack.c.b16 %v3594, %v3590
    %v4415 = vpack.c.b16 %v3595, %v3591
    %v4416 = vpack.c.b16 %v3600, %v3596
    %v4417 = vpack.c.b16 %v3601, %v3597
    %v4418 = vpack.c.b16 %v3602, %v3598
    %v4419 = vpack.c.b16 %v3603, %v3599
    %v4420 = vpack.c.b16 %v3608, %v3604
    %v4421 = vpack.c.b16 %v3609, %v3605
    %v4422 = vpack.c.b16 %v3610, %v3606
    %v4423 = vpack.c.b16 %v3611, %v3607
    %v4424 = vpack.c.b16 %v3616, %v3612
    %v4425 = vpack.c.b16 %v3617, %v3613
    %v4426 = vpack.c.b16 %v3618, %v3614
    %v4427 = vpack.c.b16 %v3619, %v3615
    %v4428 = vpack.c.b16 %v3624, %v3620
    %v4429 = vpack.c.b16 %v3625, %v3621
    %v4430 = vpack.c.b16 %v3626, %v3622
    %v4431 = vpack.c.b16 %v3627, %v3623
    %v4432 = vpack.c.b16 %v3632, %v3628
    %v4433 = vpack.c.b16 %v3633, %v3629
    %v4434 = vpack.c.b16 %v3634, %v3630
    %v4435 = vpack.c.b16 %v3635, %v3631
    %v4436 = vpack.c.b16 %v3640, %v3636
    %v4437 = vpack.c.b16 %v3641, %v3637
    %v4438 = vpack.c.b16 %v3642, %v3638
    %v4439 = vpack.c.b16 %v3643, %v3639
    %v4440 = vpack.c.b16 %v3648, %v3644
    %v4441 = vpack.c.b16 %v3649, %v3645
    %v4442 = vpack.c.b16 %v3650, %v3646
    %v4443 = vpack.c.b16 %v3651, %v3647
    %v4444 = vpack.c.b16 %v3656, %v3652
    %v4445 = vpack.c.b16 %v3657, %v3653
    %v4446 = vpack.c.b16 %v3658, %v3654
    %v4447 = vpack.c.b16 %v3659, %v3655
    %v4448 = vpack.c.b16 %v3664, %v3660
    %v4449 = vpack.c.b16 %v3665, %v3661
    %v4450 = vpack.c.b16 %v3666, %v3662
    %v4451 = vpack.c.b16 %v3667, %v3663
    %v4452 = vpack.c.b16 %v3672, %v3668
    %v4453 = vpack.c.b16 %v3673, %v3669
    %v4454 = vpack.c.b16 %v3674, %v3670
    %v4455 = vpack.c.b16 %v3675, %v3671
    %v4456 = vpack.c.b16 %v3680, %v3676
    %v4457 = vpack.c.b16 %v3681, %v3677
    %v4458 = vpack.c.b16 %v3682, %v3678
    %v4459 = vpack.c.b16 %v3683, %v3679
    %v4460 = vpack.c.b16 %v3688, %v3684
    %v4461 = vpack.c.b16 %v3689, %v3685
    %v4462 = vpack.c.b16 %v3690, %v3686
    %v4463 = vpack.c.b16 %v3691, %v3687
    %v4464 = vpack.c.b16 %v3696, %v3692
    %v4465 = vpack.c.b16 %v3697, %v3693
    %v4466 = vpack.c.b16 %v3698, %v3694
    %v4467 = vpack.c.b16 %v3699, %v3695
    %v4468 = vpack.c.b16 %v3704, %v3700
    %v4469 = vpack.c.b16 %v3705, %v3701
    %v4470 = vpack.c.b16 %v3706, %v3702
    %v4471 = vpack.c.b16 %v3707, %v3703
    %v4472 = vpack.c.b16 %v3712, %v3708
    %v4473 = vpack.c.b16 %v3713, %v3709
    %v4474 = vpack.c.b16 %v3714, %v3710
    %v4475 = vpack.c.b16 %v3715, %v3711
    %v4476 = vpack.c.b16 %v3720, %v3716
    %v4477 = vpack.c.b16 %v3721, %v3717
    %v4478 = vpack.c.b16 %v3722, %v3718
    %v4479 = vpack.c.b16 %v3723, %v3719
    %v4480 = vpack.c.b16 %v3728, %v3724
    %v4481 = vpack.c.b16 %v3729, %v3725
    %v4482 = vpack.c.b16 %v3730, %v3726
    %v4483 = vpack.c.b16 %v3731, %v3727
    %v4484 = vpack.c.b16 %v3736, %v3732
    %v4485 = vpack.c.b16 %v3737, %v3733
    %v4486 = vpack.c.b16 %v3738, %v3734
    %v4487 = vpack.c.b16 %v3739, %v3735
    %v4488 = vpack.c.b16 %v3744, %v3740
    %v4489 = vpack.c.b16 %v3745, %v3741
    %v4490 = vpack.c.b16 %v3746, %v3742
    %v4491 = vpack.c.b16 %v3747, %v3743
    %v4492 = vpack.c.b16 %v3752, %v3748
    %v4493 = vpack.c.b16 %v3753, %v3749
    %v4494 = vpack.c.b16 %v3754, %v3750
    %v4495 = vpack.c.b16 %v3755, %v3751
    %v4496 = vpack.c.b16 %v3760, %v3756
    %v4497 = vpack.c.b16 %v3761, %v3757
    %v4498 = vpack.c.b16 %v3762, %v3758
    %v4499 = vpack.c.b16 %v3763, %v3759
    %v4500 = vpack.c.b16 %v3768, %v3764
    %v4501 = vpack.c.b16 %v3769, %v3765
    %v4502 = vpack.c.b16 %v3770, %v3766
    %v4503 = vpack.c.b16 %v3771, %v3767
    %v4504 = vpack.c.b16 %v3776, %v3772
    %v4505 = vpack.c.b16 %v3777, %v3773
    %v4506 = vpack.c.b16 %v3778, %v3774
    %v4507 = vpack.c.b16 %v3779, %v3775
    %v4508 = vpack.c.b16 %v3784, %v3780
    %v4509 = vpack.c.b16 %v3785, %v3781
    %v4510 = vpack.c.b16 %v3786, %v3782
    %v4511 = vpack.c.b16 %v3787, %v3783
    %v4512 = vpack.c.b16 %v3792, %v3788
    %v4513 = vpack.c.b16 %v3793, %v3789
    %v4514 = vpack.c.b16 %v3794, %v3790
    %v4515 = vpack.c.b16 %v3795, %v3791
    %v4516 = vpack.c.b16 %v3800, %v3796
    %v4517 = vpack.c.b16 %v3801, %v3797
    %v4518 = vpack.c.b16 %v3802, %v3798
    %v4519 = vpack.c.b16 %v3803, %v3799
    %v4520 = vpack.c.b16 %v3808, %v3804
    %v4521 = vpack.c.b16 %v3809, %v3805
    %v4522 = vpack.c.b16 %v3810, %v3806
    %v4523 = vpack.c.b16 %v3811, %v3807
    %v4524 = vpack.c.b16 %v3816, %v3812
    %v4525 = vpack.c.b16 %v3817, %v3813
    %v4526 = vpack.c.b16 %v3818, %v3814
    %v4527 = vpack.c.b16 %v3819, %v3815
    %v4528 = vpack.c.b16 %v3824, %v3820
    %v4529 = vpack.c.b16 %v3825, %v3821
    %v4530 = vpack.c.b16 %v3826, %v3822
    %v4531 = vpack.c.b16 %v3827, %v3823
    %v4532 = vpack.c.b16 %v3832, %v3828
    %v4533 = vpack.c.b16 %v3833, %v3829
    %v4534 = vpack.c.b16 %v3834, %v3830
    %v4535 = vpack.c.b16 %v3835, %v3831
    %v4536 = vpack.c.b16 %v3840, %v3836
    %v4537 = vpack.c.b16 %v3841, %v3837
    %v4538 = vpack.c.b16 %v3842, %v3838
    %v4539 = vpack.c.b16 %v3843, %v3839
    %v4540 = vpack.c.b16 %v3848, %v3844
    %v4541 = vpack.c.b16 %v3849, %v3845
    %v4542 = vpack.c.b16 %v3850, %v3846
    %v4543 = vpack.c.b16 %v3851, %v3847
    %v4544 = vpack.c.b16 %v3856, %v3852
    %v4545 = vpack.c.b16 %v3857, %v3853
    %v4546 = vpack.c.b16 %v3858, %v3854
    %v4547 = vpack.c.b16 %v3859, %v3855
    %v4548 = vpack.c.b16 %v3864, %v3860
    %v4549 = vpack.c.b16 %v3865, %v3861
    %v4550 = vpack.c.b16 %v3866, %v3862
    %v4551 = vpack.c.b16 %v3867, %v3863
    %v4552 = vpack.c.b16 %v3872, %v3868
    %v4553 = vpack.c.b16 %v3873, %v3869
    %v4554 = vpack.c.b16 %v3874, %v3870
    %v4555 = vpack.c.b16 %v3875, %v3871
    %v4556 = vpack.c.b16 %v3880, %v3876
    %v4557 = vpack.c.b16 %v3881, %v3877
    %v4558 = vpack.c.b16 %v3882, %v3878
    %v4559 = vpack.c.b16 %v3883, %v3879
    %v4560 = vpack.c.b16 %v3888, %v3884
    %v4561 = vpack.c.b16 %v3889, %v3885
    %v4562 = vpack.c.b16 %v3890, %v3886
    %v4563 = vpack.c.b16 %v3891, %v3887
    %v4564 = vpack.c.b16 %v3896, %v3892
    %v4565 = vpack.c.b16 %v3897, %v3893
    %v4566 = vpack.c.b16 %v3898, %v3894
    %v4567 = vpack.c.b16 %v3899, %v3895
    %v4568 = vpack.c.b16 %v3904, %v3900
    %v4569 = vpack.c.b16 %v3905, %v3901
    %v4570 = vpack.c.b16 %v3906, %v3902
    %v4571 = vpack.c.b16 %v3907, %v3903
    %v4572 = vpack.c.b16 %v3912, %v3908
    %v4573 = vpack.c.b16 %v3913, %v3909
    %v4574 = vpack.c.b16 %v3914, %v3910
    %v4575 = vpack.c.b16 %v3915, %v3911
    %v4576 = vpack.c.b16 %v3920, %v3916
    %v4577 = vpack.c.b16 %v3921, %v3917
    %v4578 = vpack.c.b16 %v3922, %v3918
    %v4579 = vpack.c.b16 %v3923, %v3919
    %v4580 = vpack.c.b16 %v3928, %v3924
    %v4581 = vpack.c.b16 %v3929, %v3925
    %v4582 = vpack.c.b16 %v3930, %v3926
    %v4583 = vpack.c.b16 %v3931, %v3927
    %v4584 = vpack.c.b16 %v3936, %v3932
    %v4585 = vpack.c.b16 %v3937, %v3933
    %v4586 = vpack.c.b16 %v3938, %v3934
    %v4587 = vpack.c.b16 %v3939, %v3935
    %v4588 = vpack.c.b16 %v3944, %v3940
    %v4589 = vpack.c.b16 %v3945, %v3941
    %v4590 = vpack.c.b16 %v3946, %v3942
    %v4591 = vpack.c.b16 %v3947, %v3943
    %v4592 = vpack.c.b16 %v3952, %v3948
    %v4593 = vpack.c.b16 %v3953, %v3949
    %v4594 = vpack.c.b16 %v3954, %v3950
    %v4595 = vpack.c.b16 %v3955, %v3951
    %v4596 = vpack.c.b16 %v3960, %v3956
    %v4597 = vpack.c.b16 %v3961, %v3957
    %v4598 = vpack.c.b16 %v3962, %v3958
    %v4599 = vpack.c.b16 %v3963, %v3959
    %v4600 = vpack.c.b16 %v3968, %v3964
    %v4601 = vpack.c.b16 %v3969, %v3965
    %v4602 = vpack.c.b16 %v3970, %v3966
    %v4603 = vpack.c.b16 %v3971, %v3967
    %v4604 = vpack.c.b16 %v3976, %v3972
    %v4605 = vpack.c.b16 %v3977, %v3973
    %v4606 = vpack.c.b16 %v3978, %v3974
    %v4607 = vpack.c.b16 %v3979, %v3975
    %v4608 = vpack.c.b16 %v3984, %v3980
    %v4609 = vpack.c.b16 %v3985, %v3981
    %v4610 = vpack.c.b16 %v3986, %v3982
    %v4611 = vpack.c.b16 %v3987, %v3983
    %v4612 = vpack.c.b16 %v3992, %v3988
    %v4613 = vpack.c.b16 %v3993, %v3989
    %v4614 = vpack.c.b16 %v3994, %v3990
    %v4615 = vpack.c.b16 %v3995, %v3991
    %v4616 = vpack.c.b16 %v4000, %v3996
    %v4617 = vpack.c.b16 %v4001, %v3997
    %v4618 = vpack.c.b16 %v4002, %v3998
    %v4619 = vpack.c.b16 %v4003, %v3999
    %v4620 = vpack.c.b16 %v4008, %v4004
    %v4621 = vpack.c.b16 %v4009, %v4005
    %v4622 = vpack.c.b16 %v4010, %v4006
    %v4623 = vpack.c.b16 %v4011, %v4007
    %v4624 = vpack.c.b16 %v4016, %v4012
    %v4625 = vpack.c.b16 %v4017, %v4013
    %v4626 = vpack.c.b16 %v4018, %v4014
    %v4627 = vpack.c.b16 %v4019, %v4015
    %v4628 = vpack.c.b16 %v4024, %v4020
    %v4629 = vpack.c.b16 %v4025, %v4021
    %v4630 = vpack.c.b16 %v4026, %v4022
    %v4631 = vpack.c.b16 %v4027, %v4023
    %v4632 = vpack.c.b16 %v4032, %v4028
    %v4633 = vpack.c.b16 %v4033, %v4029
    %v4634 = vpack.c.b16 %v4034, %v4030
    %v4635 = vpack.c.b16 %v4035, %v4031
    %v4636 = vpack.c.b16 %v4040, %v4036
    %v4637 = vpack.c.b16 %v4041, %v4037
    %v4638 = vpack.c.b16 %v4042, %v4038
    %v4639 = vpack.c.b16 %v4043, %v4039
    %v4640 = vpack.c.b16 %v4048, %v4044
    %v4641 = vpack.c.b16 %v4049, %v4045
    %v4642 = vpack.c.b16 %v4050, %v4046
    %v4643 = vpack.c.b16 %v4051, %v4047
    %v4644 = vpack.c.b16 %v4056, %v4052
    %v4645 = vpack.c.b16 %v4057, %v4053
    %v4646 = vpack.c.b16 %v4058, %v4054
    %v4647 = vpack.c.b16 %v4059, %v4055
    %v4648 = vpack.c.b16 %v4064, %v4060
    %v4649 = vpack.c.b16 %v4065, %v4061
    %v4650 = vpack.c.b16 %v4066, %v4062
    %v4651 = vpack.c.b16 %v4067, %v4063
    %v4652 = vpack.c.b16 %v4072, %v4068
    %v4653 = vpack.c.b16 %v4073, %v4069
    %v4654 = vpack.c.b16 %v4074, %v4070
    %v4655 = vpack.c.b16 %v4075, %v4071
    %v4656 = vpack.c.b16 %v4080, %v4076
    %v4657 = vpack.c.b16 %v4081, %v4077
    %v4658 = vpack.c.b16 %v4082, %v4078
    %v4659 = vpack.c.b16 %v4083, %v4079
    %v4660 = vpack.c.b16 %v4088, %v4084
    %v4661 = vpack.c.b16 %v4089, %v4085
    %v4662 = vpack.c.b16 %v4090, %v4086
    %v4663 = vpack.c.b16 %v4091, %v4087
    %v4664 = vpack.c.b16 %v4096, %v4092
    %v4665 = vpack.c.b16 %v4097, %v4093
    %v4666 = vpack.c.b16 %v4098, %v4094
    %v4667 = vpack.c.b16 %v4099, %v4095
    %v4668 = vpack.c.b16 %v4104, %v4100
    %v4669 = vpack.c.b16 %v4105, %v4101
    %v4670 = vpack.c.b16 %v4106, %v4102
    %v4671 = vpack.c.b16 %v4107, %v4103
    %v4672 = vpack.c.b16 %v4112, %v4108
    %v4673 = vpack.c.b16 %v4113, %v4109
    %v4674 = vpack.c.b16 %v4114, %v4110
    %v4675 = vpack.c.b16 %v4115, %v4111
    %v4676 = vpack.c.b16 %v4120, %v4116
    %v4677 = vpack.c.b16 %v4121, %v4117
    %v4678 = vpack.c.b16 %v4122, %v4118
    %v4679 = vpack.c.b16 %v4123, %v4119
    %v4680 = vpack.c.b16 %v4128, %v4124
    %v4681 = vpack.c.b16 %v4129, %v4125
    %v4682 = vpack.c.b16 %v4130, %v4126
    %v4683 = vpack.c.b16 %v4131, %v4127
    %v4684 = vpack.c.b16 %v4136, %v4132
    %v4685 = vpack.c.b16 %v4137, %v4133
    %v4686 = vpack.c.b16 %v4138, %v4134
    %v4687 = vpack.c.b16 %v4139, %v4135
    %v4688 = vpack.c.b16 %v4144, %v4140
    %v4689 = vpack.c.b16 %v4145, %v4141
    %v4690 = vpack.c.b16 %v4146, %v4142
    %v4691 = vpack.c.b16 %v4147, %v4143
    %v4692 = vpack.c.b16 %v4152, %v4148
    %v4693 = vpack.c.b16 %v4153, %v4149
    %v4694 = vpack.c.b16 %v4154, %v4150
    %v4695 = vpack.c.b16 %v4155, %v4151
    %v4696 = vpack.c.b16 %v4160, %v4156
    %v4697 = vpack.c.b16 %v4161, %v4157
    %v4698 = vpack.c.b16 %v4162, %v4158
    %v4699 = vpack.c.b16 %v4163, %v4159
    %v4700 = vpack.c.b16 %v4168, %v4164
    %v4701 = vpack.c.b16 %v4169, %v4165
    %v4702 = vpack.c.b16 %v4170, %v4166
    %v4703 = vpack.c.b16 %v4171, %v4167
    %v4704 = vpack.c.b16 %v4176, %v4172
    %v4705 = vpack.c.b16 %v4177, %v4173
    %v4706 = vpack.c.b16 %v4178, %v4174
    %v4707 = vpack.c.b16 %v4179, %v4175
    %v4708 = vpack.c.b16 %v4184, %v4180
    %v4709 = vpack.c.b16 %v4185, %v4181
    %v4710 = vpack.c.b16 %v4186, %v4182
    %v4711 = vpack.c.b16 %v4187, %v4183
    %v4712 = vpack.c.b16 %v4192, %v4188
    %v4713 = vpack.c.b16 %v4193, %v4189
    %v4714 = vpack.c.b16 %v4194, %v4190
    %v4715 = vpack.c.b16 %v4195, %v4191
    %v4716 = vpack.c.b16 %v4200, %v4196
    %v4717 = vpack.c.b16 %v4201, %v4197
    %v4718 = vpack.c.b16 %v4202, %v4198
    %v4719 = vpack.c.b16 %v4203, %v4199
    %v4720 = vpack.c.b16 %v4208, %v4204
    %v4721 = vpack.c.b16 %v4209, %v4205
    %v4722 = vpack.c.b16 %v4210, %v4206
    %v4723 = vpack.c.b16 %v4211, %v4207
    %v4724 = vpack.c.b16 %v4216, %v4212
    %v4725 = vpack.c.b16 %v4217, %v4213
    %v4726 = vpack.c.b16 %v4218, %v4214
    %v4727 = vpack.c.b16 %v4219, %v4215
    %v4728 = vpack.c.b16 %v4224, %v4220
    %v4729 = vpack.c.b16 %v4225, %v4221
    %v4730 = vpack.c.b16 %v4226, %v4222
    %v4731 = vpack.c.b16 %v4227, %v4223
    %v4732 = vpack.c.b16 %v4232, %v4228
    %v4733 = vpack.c.b16 %v4233, %v4229
    %v4734 = vpack.c.b16 %v4234, %v4230
    %v4735 = vpack.c.b16 %v4235, %v4231
    %v4736 = vpack.c.b16 %v4240, %v4236
    %v4737 = vpack.c.b16 %v4241, %v4237
    %v4738 = vpack.c.b16 %v4242, %v4238
    %v4739 = vpack.c.b16 %v4243, %v4239
    %v4740 = vpack.c.b16 %v4248, %v4244
    %v4741 = vpack.c.b16 %v4249, %v4245
    %v4742 = vpack.c.b16 %v4250, %v4246
    %v4743 = vpack.c.b16 %v4251, %v4247
    %v4744 = vpack.c.b16 %v4256, %v4252
    %v4745 = vpack.c.b16 %v4257, %v4253
    %v4746 = vpack.c.b16 %v4258, %v4254
    %v4747 = vpack.c.b16 %v4259, %v4255
    %v4748 = vpack.c.b16 %v4264, %v4260
    %v4749 = vpack.c.b16 %v4265, %v4261
    %v4750 = vpack.c.b16 %v4266, %v4262
    %v4751 = vpack.c.b16 %v4267, %v4263
    %v4752 = vpack.c.b16 %v4272, %v4268
    %v4753 = vpack.c.b16 %v4273, %v4269
    %v4754 = vpack.c.b16 %v4274, %v4270
    %v4755 = vpack.c.b16 %v4275, %v4271
    %5236 = vmatprep.subr.bf16.mxu0 %v4305
    %5237 = vmatpush1.bf16.msra.mxu0 %v4304
    %5238 = vmatprep.subr.bf16.mxu0 %v4301
    %5239 = vmatpush1.bf16.msra.mxu0 %v4300
    %5240 = vmatprep.subr.bf16.mxu0 %v4297
    %5241 = vmatpush1.bf16.msra.mxu0 %v4296
    %5242 = vmatprep.subr.bf16.mxu0 %v4293
    %5243 = vmatpush1.bf16.msra.mxu0 %v4292
    %5244 = vmatprep.subr.bf16.mxu0 %v4289
    %5245 = vmatpush1.bf16.msra.mxu0 %v4288
    %5246 = vmatprep.subr.bf16.mxu0 %v4285
    %5247 = vmatpush1.bf16.msra.mxu0 %v4284
    %5248 = vmatprep.subr.bf16.mxu0 %v4281
    %5249 = vmatpush1.bf16.msra.mxu0 %v4280
    %5250 = vmatprep.subr.bf16.mxu0 %v4277
    %5251 = vmatpush1.bf16.msra.mxu0 %v4276
    %5252 = vmatprep.subr.bf16.mxu0 %v4337
    %5253 = vmatpush2.bf16.msra.mxu0 %v4336
    %5254 = vmatprep.subr.bf16.mxu0 %v4333
    %5255 = vmatpush2.bf16.msra.mxu0 %v4332
    %5256 = vmatprep.subr.bf16.mxu0 %v4329
    %5257 = vmatpush2.bf16.msra.mxu0 %v4328
    %5258 = vmatprep.subr.bf16.mxu0 %v4325
    %5259 = vmatpush2.bf16.msra.mxu0 %v4324
    %5260 = vmatprep.subr.bf16.mxu0 %v4321
    %5261 = vmatpush2.bf16.msra.mxu0 %v4320
    %5262 = vmatprep.subr.bf16.mxu0 %v4317
    %5263 = vmatpush2.bf16.msra.mxu0 %v4316
    %5264 = vmatprep.subr.bf16.mxu0 %v4313
    %5265 = vmatpush2.bf16.msra.mxu0 %v4312
    %5266 = vmatprep.subr.bf16.mxu0 %v4309
    %5267 = vmatpush2.bf16.msra.mxu0 %v4308
    %5268 = vmatprep.mubr.bf16.mxu0 %v2717
    %5269 = vmatmul.mubr.bf16.gmra.mxu0 %v2716
    %v5270 = vpop.f32.mrf.mxu0
    %v5271 = vadd.f32 0.0, %v5270
    %v5272 = vpop.f32.mrf.mxu0
    %v5273 = vadd.f32 0.0, %v5272
    %v5274 = vpop.f32.mrf.mxu0
    %v5275 = vadd.f32 0.0, %v5274
    %v5276 = vpop.f32.mrf.mxu0
    %v5277 = vadd.f32 0.0, %v5276
    %5278 = vmatprep.mubr.bf16.mxu0 %v2732
    %5279 = vmatmul.mubr.bf16.gmra.mxu0 %v2731
    %v5280 = vpop.f32.mrf.mxu0
    %v5281 = vadd.f32 0.0, %v5280
    %v5282 = vpop.f32.mrf.mxu0
    %v5283 = vadd.f32 0.0, %v5282
    %v5284 = vpop.f32.mrf.mxu0
    %v5285 = vadd.f32 0.0, %v5284
    %v5286 = vpop.f32.mrf.mxu0
    %v5287 = vadd.f32 0.0, %v5286
    %5288 = vmatprep.mubr.bf16.mxu0 %v2747
    %5289 = vmatmul.mubr.bf16.gmra.mxu0 %v2746
    %v5290 = vpop.f32.mrf.mxu0
    %v5291 = vadd.f32 0.0, %v5290
    %v5292 = vpop.f32.mrf.mxu0
    %v5293 = vadd.f32 0.0, %v5292
    %v5294 = vpop.f32.mrf.mxu0
    %v5295 = vadd.f32 0.0, %v5294
    %v5296 = vpop.f32.mrf.mxu0
    %v5297 = vadd.f32 0.0, %v5296
    %5298 = vmatprep.mubr.bf16.mxu0 %v2762
    %5299 = vmatmul.mubr.bf16.gmra.mxu0 %v2761
    %v5300 = vpop.f32.mrf.mxu0
    %v5301 = vadd.f32 0.0, %v5300
    %v5302 = vpop.f32.mrf.mxu0
    %v5303 = vadd.f32 0.0, %v5302
    %v5304 = vpop.f32.mrf.mxu0
    %v5305 = vadd.f32 0.0, %v5304
    %v5306 = vpop.f32.mrf.mxu0
    %v5307 = vadd.f32 0.0, %v5306
    %5308 = vdwg.mxu0
    %5309 = vmatprep.subr.bf16.mxu0 %v4369
    %5310 = vmatpush1.bf16.msra.mxu0 %v4368
    %5311 = vmatprep.subr.bf16.mxu0 %v4365
    %5312 = vmatpush1.bf16.msra.mxu0 %v4364
    %5313 = vmatprep.subr.bf16.mxu0 %v4361
    %5314 = vmatpush1.bf16.msra.mxu0 %v4360
    %5315 = vmatprep.subr.bf16.mxu0 %v4357
    %5316 = vmatpush1.bf16.msra.mxu0 %v4356
    %5317 = vmatprep.subr.bf16.mxu0 %v4353
    %5318 = vmatpush1.bf16.msra.mxu0 %v4352
    %5319 = vmatprep.subr.bf16.mxu0 %v4349
    %5320 = vmatpush1.bf16.msra.mxu0 %v4348
    %5321 = vmatprep.subr.bf16.mxu0 %v4345
    %5322 = vmatpush1.bf16.msra.mxu0 %v4344
    %5323 = vmatprep.subr.bf16.mxu0 %v4341
    %5324 = vmatpush1.bf16.msra.mxu0 %v4340
    %5325 = vmatprep.subr.bf16.mxu0 %v4401
    %5326 = vmatpush2.bf16.msra.mxu0 %v4400
    %5327 = vmatprep.subr.bf16.mxu0 %v4397
    %5328 = vmatpush2.bf16.msra.mxu0 %v4396
    %5329 = vmatprep.subr.bf16.mxu0 %v4393
    %5330 = vmatpush2.bf16.msra.mxu0 %v4392
    %5331 = vmatprep.subr.bf16.mxu0 %v4389
    %5332 = vmatpush2.bf16.msra.mxu0 %v4388
    %5333 = vmatprep.subr.bf16.mxu0 %v4385
    %5334 = vmatpush2.bf16.msra.mxu0 %v4384
    %5335 = vmatprep.subr.bf16.mxu0 %v4381
    %5336 = vmatpush2.bf16.msra.mxu0 %v4380
    %5337 = vmatprep.subr.bf16.mxu0 %v4377
    %5338 = vmatpush2.bf16.msra.mxu0 %v4376
    %5339 = vmatprep.subr.bf16.mxu0 %v4373
    %5340 = vmatpush2.bf16.msra.mxu0 %v4372
    %5341 = vmatprep.mubr.bf16.mxu0 %v2719
    %5342 = vmatmul.mubr.bf16.gmra.mxu0 %v2718
    %v5343 = vpop.f32.mrf.mxu0
    %v5344 = vadd.f32 %v5271, %v5343
    %v5345 = vpop.f32.mrf.mxu0
    %v5346 = vadd.f32 %v5273, %v5345
    %v5347 = vpop.f32.mrf.mxu0
    %v5348 = vadd.f32 %v5275, %v5347
    %v5349 = vpop.f32.mrf.mxu0
    %v5350 = vadd.f32 %v5277, %v5349
    %5351 = vmatprep.mubr.bf16.mxu0 %v2734
    %5352 = vmatmul.mubr.bf16.gmra.mxu0 %v2733
    %v5353 = vpop.f32.mrf.mxu0
    %v5354 = vadd.f32 %v5281, %v5353
    %v5355 = vpop.f32.mrf.mxu0
    %v5356 = vadd.f32 %v5283, %v5355
    %v5357 = vpop.f32.mrf.mxu0
    %v5358 = vadd.f32 %v5285, %v5357
    %v5359 = vpop.f32.mrf.mxu0
    %v5360 = vadd.f32 %v5287, %v5359
    %5361 = vmatprep.mubr.bf16.mxu0 %v2749
    %5362 = vmatmul.mubr.bf16.gmra.mxu0 %v2748
    %v5363 = vpop.f32.mrf.mxu0
    %v5364 = vadd.f32 %v5291, %v5363
    %v5365 = vpop.f32.mrf.mxu0
    %v5366 = vadd.f32 %v5293, %v5365
    %v5367 = vpop.f32.mrf.mxu0
    %v5368 = vadd.f32 %v5295, %v5367
    %v5369 = vpop.f32.mrf.mxu0
    %v5370 = vadd.f32 %v5297, %v5369
    %5371 = vmatprep.mubr.bf16.mxu0 %v2764
    %5372 = vmatmul.mubr.bf16.gmra.mxu0 %v2763
    %v5373 = vpop.f32.mrf.mxu0
    %v5374 = vadd.f32 %v5301, %v5373
    %v5375 = vpop.f32.mrf.mxu0
    %v5376 = vadd.f32 %v5303, %v5375
    %v5377 = vpop.f32.mrf.mxu0
    %v5378 = vadd.f32 %v5305, %v5377
    %v5379 = vpop.f32.mrf.mxu0
    %v5380 = vadd.f32 %v5307, %v5379
    %5381 = vdwg.mxu0
    %5382 = vmatprep.subr.bf16.mxu0 %v4433
    %5383 = vmatpush1.bf16.msra.mxu0 %v4432
    %5384 = vmatprep.subr.bf16.mxu0 %v4429
    %5385 = vmatpush1.bf16.msra.mxu0 %v4428
    %5386 = vmatprep.subr.bf16.mxu0 %v4425
    %5387 = vmatpush1.bf16.msra.mxu0 %v4424
    %5388 = vmatprep.subr.bf16.mxu0 %v4421
    %5389 = vmatpush1.bf16.msra.mxu0 %v4420
    %5390 = vmatprep.subr.bf16.mxu0 %v4417
    %5391 = vmatpush1.bf16.msra.mxu0 %v4416
    %5392 = vmatprep.subr.bf16.mxu0 %v4413
    %5393 = vmatpush1.bf16.msra.mxu0 %v4412
    %5394 = vmatprep.subr.bf16.mxu0 %v4409
    %5395 = vmatpush1.bf16.msra.mxu0 %v4408
    %5396 = vmatprep.subr.bf16.mxu0 %v4405
    %5397 = vmatpush1.bf16.msra.mxu0 %v4404
    %5398 = vmatprep.subr.bf16.mxu0 %v4465
    %5399 = vmatpush2.bf16.msra.mxu0 %v4464
    %5400 = vmatprep.subr.bf16.mxu0 %v4461
    %5401 = vmatpush2.bf16.msra.mxu0 %v4460
    %5402 = vmatprep.subr.bf16.mxu0 %v4457
    %5403 = vmatpush2.bf16.msra.mxu0 %v4456
    %5404 = vmatprep.subr.bf16.mxu0 %v4453
    %5405 = vmatpush2.bf16.msra.mxu0 %v4452
    %5406 = vmatprep.subr.bf16.mxu0 %v4449
    %5407 = vmatpush2.bf16.msra.mxu0 %v4448
    %5408 = vmatprep.subr.bf16.mxu0 %v4445
    %5409 = vmatpush2.bf16.msra.mxu0 %v4444
    %5410 = vmatprep.subr.bf16.mxu0 %v4441
    %5411 = vmatpush2.bf16.msra.mxu0 %v4440
    %5412 = vmatprep.subr.bf16.mxu0 %v4437
    %5413 = vmatpush2.bf16.msra.mxu0 %v4436
    %5414 = vmatprep.mubr.bf16.mxu0 %v2721
    %5415 = vmatmul.mubr.bf16.gmra.mxu0 %v2720
    %v5416 = vpop.f32.mrf.mxu0
    %v5417 = vadd.f32 %v5344, %v5416
    %v5418 = vpop.f32.mrf.mxu0
    %v5419 = vadd.f32 %v5346, %v5418
    %v5420 = vpop.f32.mrf.mxu0
    %v5421 = vadd.f32 %v5348, %v5420
    %v5422 = vpop.f32.mrf.mxu0
    %v5423 = vadd.f32 %v5350, %v5422
    %5424 = vmatprep.mubr.bf16.mxu0 %v2736
    %5425 = vmatmul.mubr.bf16.gmra.mxu0 %v2735
    %v5426 = vpop.f32.mrf.mxu0
    %v5427 = vadd.f32 %v5354, %v5426
    %v5428 = vpop.f32.mrf.mxu0
    %v5429 = vadd.f32 %v5356, %v5428
    %v5430 = vpop.f32.mrf.mxu0
    %v5431 = vadd.f32 %v5358, %v5430
    %v5432 = vpop.f32.mrf.mxu0
    %v5433 = vadd.f32 %v5360, %v5432
    %5434 = vmatprep.mubr.bf16.mxu0 %v2751
    %5435 = vmatmul.mubr.bf16.gmra.mxu0 %v2750
    %v5436 = vpop.f32.mrf.mxu0
    %v5437 = vadd.f32 %v5364, %v5436
    %v5438 = vpop.f32.mrf.mxu0
    %v5439 = vadd.f32 %v5366, %v5438
    %v5440 = vpop.f32.mrf.mxu0
    %v5441 = vadd.f32 %v5368, %v5440
    %v5442 = vpop.f32.mrf.mxu0
    %v5443 = vadd.f32 %v5370, %v5442
    %5444 = vmatprep.mubr.bf16.mxu0 %v2766
    %5445 = vmatmul.mubr.bf16.gmra.mxu0 %v2765
    %v5446 = vpop.f32.mrf.mxu0
    %v5447 = vadd.f32 %v5374, %v5446
    %v5448 = vpop.f32.mrf.mxu0
    %v5449 = vadd.f32 %v5376, %v5448
    %v5450 = vpop.f32.mrf.mxu0
    %v5451 = vadd.f32 %v5378, %v5450
    %v5452 = vpop.f32.mrf.mxu0
    %v5453 = vadd.f32 %v5380, %v5452
    %5454 = vdwg.mxu0
    %5455 = vmatprep.subr.bf16.mxu0 %v4497
    %5456 = vmatpush1.bf16.msra.mxu0 %v4496
    %5457 = vmatprep.subr.bf16.mxu0 %v4493
    %5458 = vmatpush1.bf16.msra.mxu0 %v4492
    %5459 = vmatprep.subr.bf16.mxu0 %v4489
    %5460 = vmatpush1.bf16.msra.mxu0 %v4488
    %5461 = vmatprep.subr.bf16.mxu0 %v4485
    %5462 = vmatpush1.bf16.msra.mxu0 %v4484
    %5463 = vmatprep.subr.bf16.mxu0 %v4481
    %5464 = vmatpush1.bf16.msra.mxu0 %v4480
    %5465 = vmatprep.subr.bf16.mxu0 %v4477
    %5466 = vmatpush1.bf16.msra.mxu0 %v4476
    %5467 = vmatprep.subr.bf16.mxu0 %v4473
    %5468 = vmatpush1.bf16.msra.mxu0 %v4472
    %5469 = vmatprep.subr.bf16.mxu0 %v4469
    %5470 = vmatpush1.bf16.msra.mxu0 %v4468
    %5471 = vmatprep.subr.bf16.mxu0 %v4529
    %5472 = vmatpush2.bf16.msra.mxu0 %v4528
    %5473 = vmatprep.subr.bf16.mxu0 %v4525
    %5474 = vmatpush2.bf16.msra.mxu0 %v4524
    %5475 = vmatprep.subr.bf16.mxu0 %v4521
    %5476 = vmatpush2.bf16.msra.mxu0 %v4520
    %5477 = vmatprep.subr.bf16.mxu0 %v4517
    %5478 = vmatpush2.bf16.msra.mxu0 %v4516
    %5479 = vmatprep.subr.bf16.mxu0 %v4513
    %5480 = vmatpush2.bf16.msra.mxu0 %v4512
    %5481 = vmatprep.subr.bf16.mxu0 %v4509
    %5482 = vmatpush2.bf16.msra.mxu0 %v4508
    %5483 = vmatprep.subr.bf16.mxu0 %v4505
    %5484 = vmatpush2.bf16.msra.mxu0 %v4504
    %5485 = vmatprep.subr.bf16.mxu0 %v4501
    %5486 = vmatpush2.bf16.msra.mxu0 %v4500
    %5487 = vmatprep.mubr.bf16.mxu0 %v2723
    %5488 = vmatmul.mubr.bf16.gmra.mxu0 %v2722
    %v5489 = vpop.f32.mrf.mxu0
    %v5490 = vadd.f32 %v5417, %v5489
    %v5491 = vpop.f32.mrf.mxu0
    %v5492 = vadd.f32 %v5419, %v5491
    %v5493 = vpop.f32.mrf.mxu0
    %v5494 = vadd.f32 %v5421, %v5493
    %v5495 = vpop.f32.mrf.mxu0
    %v5496 = vadd.f32 %v5423, %v5495
    %5497 = vmatprep.mubr.bf16.mxu0 %v2738
    %5498 = vmatmul.mubr.bf16.gmra.mxu0 %v2737
    %v5499 = vpop.f32.mrf.mxu0
    %v5500 = vadd.f32 %v5427, %v5499
    %v5501 = vpop.f32.mrf.mxu0
    %v5502 = vadd.f32 %v5429, %v5501
    %v5503 = vpop.f32.mrf.mxu0
    %v5504 = vadd.f32 %v5431, %v5503
    %v5505 = vpop.f32.mrf.mxu0
    %v5506 = vadd.f32 %v5433, %v5505
    %5507 = vmatprep.mubr.bf16.mxu0 %v2753
    %5508 = vmatmul.mubr.bf16.gmra.mxu0 %v2752
    %v5509 = vpop.f32.mrf.mxu0
    %v5510 = vadd.f32 %v5437, %v5509
    %v5511 = vpop.f32.mrf.mxu0
    %v5512 = vadd.f32 %v5439, %v5511
    %v5513 = vpop.f32.mrf.mxu0
    %v5514 = vadd.f32 %v5441, %v5513
    %v5515 = vpop.f32.mrf.mxu0
    %v5516 = vadd.f32 %v5443, %v5515
    %5517 = vmatprep.mubr.bf16.mxu0 %v2768
    %5518 = vmatmul.mubr.bf16.gmra.mxu0 %v2767
    %v5519 = vpop.f32.mrf.mxu0
    %v5520 = vadd.f32 %v5447, %v5519
    %v5521 = vpop.f32.mrf.mxu0
    %v5522 = vadd.f32 %v5449, %v5521
    %v5523 = vpop.f32.mrf.mxu0
    %v5524 = vadd.f32 %v5451, %v5523
    %v5525 = vpop.f32.mrf.mxu0
    %v5526 = vadd.f32 %v5453, %v5525
    %5527 = vdwg.mxu0
    %5528 = vmatprep.subr.bf16.mxu0 %v4561
    %5529 = vmatpush1.bf16.msra.mxu0 %v4560
    %5530 = vmatprep.subr.bf16.mxu0 %v4557
    %5531 = vmatpush1.bf16.msra.mxu0 %v4556
    %5532 = vmatprep.subr.bf16.mxu0 %v4553
    %5533 = vmatpush1.bf16.msra.mxu0 %v4552
    %5534 = vmatprep.subr.bf16.mxu0 %v4549
    %5535 = vmatpush1.bf16.msra.mxu0 %v4548
    %5536 = vmatprep.subr.bf16.mxu0 %v4545
    %5537 = vmatpush1.bf16.msra.mxu0 %v4544
    %5538 = vmatprep.subr.bf16.mxu0 %v4541
    %5539 = vmatpush1.bf16.msra.mxu0 %v4540
    %5540 = vmatprep.subr.bf16.mxu0 %v4537
    %5541 = vmatpush1.bf16.msra.mxu0 %v4536
    %5542 = vmatprep.subr.bf16.mxu0 %v4533
    %5543 = vmatpush1.bf16.msra.mxu0 %v4532
    %5544 = vmatprep.subr.bf16.mxu0 %v4593
    %5545 = vmatpush2.bf16.msra.mxu0 %v4592
    %5546 = vmatprep.subr.bf16.mxu0 %v4589
    %5547 = vmatpush2.bf16.msra.mxu0 %v4588
    %5548 = vmatprep.subr.bf16.mxu0 %v4585
    %5549 = vmatpush2.bf16.msra.mxu0 %v4584
    %5550 = vmatprep.subr.bf16.mxu0 %v4581
    %5551 = vmatpush2.bf16.msra.mxu0 %v4580
    %5552 = vmatprep.subr.bf16.mxu0 %v4577
    %5553 = vmatpush2.bf16.msra.mxu0 %v4576
    %5554 = vmatprep.subr.bf16.mxu0 %v4573
    %5555 = vmatpush2.bf16.msra.mxu0 %v4572
    %5556 = vmatprep.subr.bf16.mxu0 %v4569
    %5557 = vmatpush2.bf16.msra.mxu0 %v4568
    %5558 = vmatprep.subr.bf16.mxu0 %v4565
    %5559 = vmatpush2.bf16.msra.mxu0 %v4564
    %5560 = vmatprep.mubr.bf16.mxu0 %v2725
    %5561 = vmatmul.mubr.bf16.gmra.mxu0 %v2724
    %v5562 = vpop.f32.mrf.mxu0
    %v5563 = vadd.f32 %v5490, %v5562
    %v5564 = vpop.f32.mrf.mxu0
    %v5565 = vadd.f32 %v5492, %v5564
    %v5566 = vpop.f32.mrf.mxu0
    %v5567 = vadd.f32 %v5494, %v5566
    %v5568 = vpop.f32.mrf.mxu0
    %v5569 = vadd.f32 %v5496, %v5568
    %5570 = vmatprep.mubr.bf16.mxu0 %v2740
    %5571 = vmatmul.mubr.bf16.gmra.mxu0 %v2739
    %v5572 = vpop.f32.mrf.mxu0
    %v5573 = vadd.f32 %v5500, %v5572
    %v5574 = vpop.f32.mrf.mxu0
    %v5575 = vadd.f32 %v5502, %v5574
    %v5576 = vpop.f32.mrf.mxu0
    %v5577 = vadd.f32 %v5504, %v5576
    %v5578 = vpop.f32.mrf.mxu0
    %v5579 = vadd.f32 %v5506, %v5578
    %5580 = vmatprep.mubr.bf16.mxu0 %v2755
    %5581 = vmatmul.mubr.bf16.gmra.mxu0 %v2754
    %v5582 = vpop.f32.mrf.mxu0
    %v5583 = vadd.f32 %v5510, %v5582
    %v5584 = vpop.f32.mrf.mxu0
    %v5585 = vadd.f32 %v5512, %v5584
    %v5586 = vpop.f32.mrf.mxu0
    %v5587 = vadd.f32 %v5514, %v5586
    %v5588 = vpop.f32.mrf.mxu0
    %v5589 = vadd.f32 %v5516, %v5588
    %5590 = vmatprep.mubr.bf16.mxu0 %v2770
    %5591 = vmatmul.mubr.bf16.gmra.mxu0 %v2769
    %v5592 = vpop.f32.mrf.mxu0
    %v5593 = vadd.f32 %v5520, %v5592
    %v5594 = vpop.f32.mrf.mxu0
    %v5595 = vadd.f32 %v5522, %v5594
    %v5596 = vpop.f32.mrf.mxu0
    %v5597 = vadd.f32 %v5524, %v5596
    %v5598 = vpop.f32.mrf.mxu0
    %v5599 = vadd.f32 %v5526, %v5598
    %5600 = vdwg.mxu0
    %5601 = vmatprep.subr.bf16.mxu0 %v4625
    %5602 = vmatpush1.bf16.msra.mxu0 %v4624
    %5603 = vmatprep.subr.bf16.mxu0 %v4621
    %5604 = vmatpush1.bf16.msra.mxu0 %v4620
    %5605 = vmatprep.subr.bf16.mxu0 %v4617
    %5606 = vmatpush1.bf16.msra.mxu0 %v4616
    %5607 = vmatprep.subr.bf16.mxu0 %v4613
    %5608 = vmatpush1.bf16.msra.mxu0 %v4612
    %5609 = vmatprep.subr.bf16.mxu0 %v4609
    %5610 = vmatpush1.bf16.msra.mxu0 %v4608
    %5611 = vmatprep.subr.bf16.mxu0 %v4605
    %5612 = vmatpush1.bf16.msra.mxu0 %v4604
    %5613 = vmatprep.subr.bf16.mxu0 %v4601
    %5614 = vmatpush1.bf16.msra.mxu0 %v4600
    %5615 = vmatprep.subr.bf16.mxu0 %v4597
    %5616 = vmatpush1.bf16.msra.mxu0 %v4596
    %5617 = vmatprep.subr.bf16.mxu0 %v4657
    %5618 = vmatpush2.bf16.msra.mxu0 %v4656
    %5619 = vmatprep.subr.bf16.mxu0 %v4653
    %5620 = vmatpush2.bf16.msra.mxu0 %v4652
    %5621 = vmatprep.subr.bf16.mxu0 %v4649
    %5622 = vmatpush2.bf16.msra.mxu0 %v4648
    %5623 = vmatprep.subr.bf16.mxu0 %v4645
    %5624 = vmatpush2.bf16.msra.mxu0 %v4644
    %5625 = vmatprep.subr.bf16.mxu0 %v4641
    %5626 = vmatpush2.bf16.msra.mxu0 %v4640
    %5627 = vmatprep.subr.bf16.mxu0 %v4637
    %5628 = vmatpush2.bf16.msra.mxu0 %v4636
    %5629 = vmatprep.subr.bf16.mxu0 %v4633
    %5630 = vmatpush2.bf16.msra.mxu0 %v4632
    %5631 = vmatprep.subr.bf16.mxu0 %v4629
    %5632 = vmatpush2.bf16.msra.mxu0 %v4628
    %5633 = vmatprep.mubr.bf16.mxu0 %v2727
    %5634 = vmatmul.mubr.bf16.gmra.mxu0 %v2726
    %v5635 = vpop.f32.mrf.mxu0
    %v5636 = vadd.f32 %v5563, %v5635
    %v5637 = vpop.f32.mrf.mxu0
    %v5638 = vadd.f32 %v5565, %v5637
    %v5639 = vpop.f32.mrf.mxu0
    %v5640 = vadd.f32 %v5567, %v5639
    %v5641 = vpop.f32.mrf.mxu0
    %v5642 = vadd.f32 %v5569, %v5641
    %5643 = vmatprep.mubr.bf16.mxu0 %v2742
    %5644 = vmatmul.mubr.bf16.gmra.mxu0 %v2741
    %v5645 = vpop.f32.mrf.mxu0
    %v5646 = vadd.f32 %v5573, %v5645
    %v5647 = vpop.f32.mrf.mxu0
    %v5648 = vadd.f32 %v5575, %v5647
    %v5649 = vpop.f32.mrf.mxu0
    %v5650 = vadd.f32 %v5577, %v5649
    %v5651 = vpop.f32.mrf.mxu0
    %v5652 = vadd.f32 %v5579, %v5651
    %5653 = vmatprep.mubr.bf16.mxu0 %v2757
    %5654 = vmatmul.mubr.bf16.gmra.mxu0 %v2756
    %v5655 = vpop.f32.mrf.mxu0
    %v5656 = vadd.f32 %v5583, %v5655
    %v5657 = vpop.f32.mrf.mxu0
    %v5658 = vadd.f32 %v5585, %v5657
    %v5659 = vpop.f32.mrf.mxu0
    %v5660 = vadd.f32 %v5587, %v5659
    %v5661 = vpop.f32.mrf.mxu0
    %v5662 = vadd.f32 %v5589, %v5661
    %5663 = vmatprep.mubr.bf16.mxu0 %v2772
    %5664 = vmatmul.mubr.bf16.gmra.mxu0 %v2771
    %v5665 = vpop.f32.mrf.mxu0
    %v5666 = vadd.f32 %v5593, %v5665
    %v5667 = vpop.f32.mrf.mxu0
    %v5668 = vadd.f32 %v5595, %v5667
    %v5669 = vpop.f32.mrf.mxu0
    %v5670 = vadd.f32 %v5597, %v5669
    %v5671 = vpop.f32.mrf.mxu0
    %v5672 = vadd.f32 %v5599, %v5671
    %5673 = vdwg.mxu0
    %5674 = vmatprep.subr.bf16.mxu0 %v4689
    %5675 = vmatpush1.bf16.msra.mxu0 %v4688
    %5676 = vmatprep.subr.bf16.mxu0 %v4685
    %5677 = vmatpush1.bf16.msra.mxu0 %v4684
    %5678 = vmatprep.subr.bf16.mxu0 %v4681
    %5679 = vmatpush1.bf16.msra.mxu0 %v4680
    %5680 = vmatprep.subr.bf16.mxu0 %v4677
    %5681 = vmatpush1.bf16.msra.mxu0 %v4676
    %5682 = vmatprep.subr.bf16.mxu0 %v4673
    %5683 = vmatpush1.bf16.msra.mxu0 %v4672
    %5684 = vmatprep.subr.bf16.mxu0 %v4669
    %5685 = vmatpush1.bf16.msra.mxu0 %v4668
    %5686 = vmatprep.subr.bf16.mxu0 %v4665
    %5687 = vmatpush1.bf16.msra.mxu0 %v4664
    %5688 = vmatprep.subr.bf16.mxu0 %v4661
    %5689 = vmatpush1.bf16.msra.mxu0 %v4660
    %5690 = vmatprep.subr.bf16.mxu0 %v4721
    %5691 = vmatpush2.bf16.msra.mxu0 %v4720
    %5692 = vmatprep.subr.bf16.mxu0 %v4717
    %5693 = vmatpush2.bf16.msra.mxu0 %v4716
    %5694 = vmatprep.subr.bf16.mxu0 %v4713
    %5695 = vmatpush2.bf16.msra.mxu0 %v4712
    %5696 = vmatprep.subr.bf16.mxu0 %v4709
    %5697 = vmatpush2.bf16.msra.mxu0 %v4708
    %5698 = vmatprep.subr.bf16.mxu0 %v4705
    %5699 = vmatpush2.bf16.msra.mxu0 %v4704
    %5700 = vmatprep.subr.bf16.mxu0 %v4701
    %5701 = vmatpush2.bf16.msra.mxu0 %v4700
    %5702 = vmatprep.subr.bf16.mxu0 %v4697
    %5703 = vmatpush2.bf16.msra.mxu0 %v4696
    %5704 = vmatprep.subr.bf16.mxu0 %v4693
    %5705 = vmatpush2.bf16.msra.mxu0 %v4692
    %5706 = vmatprep.mubr.bf16.mxu0 %v2729
    %5707 = vmatmul.mubr.bf16.gmra.mxu0 %v2728
    %v5708 = vpop.f32.mrf.mxu0
    %v5709 = vadd.f32 %v5636, %v5708
    %v5710 = vpop.f32.mrf.mxu0
    %v5711 = vadd.f32 %v5638, %v5710
    %v5712 = vpop.f32.mrf.mxu0
    %v5713 = vadd.f32 %v5640, %v5712
    %v5714 = vpop.f32.mrf.mxu0
    %v5715 = vadd.f32 %v5642, %v5714
    %5716 = vmatprep.mubr.bf16.mxu0 %v2744
    %5717 = vmatmul.mubr.bf16.gmra.mxu0 %v2743
    %v5718 = vpop.f32.mrf.mxu0
    %v5719 = vadd.f32 %v5646, %v5718
    %v5720 = vpop.f32.mrf.mxu0
    %v5721 = vadd.f32 %v5648, %v5720
    %v5722 = vpop.f32.mrf.mxu0
    %v5723 = vadd.f32 %v5650, %v5722
    %v5724 = vpop.f32.mrf.mxu0
    %v5725 = vadd.f32 %v5652, %v5724
    %5726 = vmatprep.mubr.bf16.mxu0 %v2759
    %5727 = vmatmul.mubr.bf16.gmra.mxu0 %v2758
    %v5728 = vpop.f32.mrf.mxu0
    %v5729 = vadd.f32 %v5656, %v5728
    %v5730 = vpop.f32.mrf.mxu0
    %v5731 = vadd.f32 %v5658, %v5730
    %v5732 = vpop.f32.mrf.mxu0
    %v5733 = vadd.f32 %v5660, %v5732
    %v5734 = vpop.f32.mrf.mxu0
    %v5735 = vadd.f32 %v5662, %v5734
    %5736 = vmatprep.mubr.bf16.mxu0 %v2774
    %5737 = vmatmul.mubr.bf16.gmra.mxu0 %v2773
    %v5738 = vpop.f32.mrf.mxu0
    %v5739 = vadd.f32 %v5666, %v5738
    %v5740 = vpop.f32.mrf.mxu0
    %v5741 = vadd.f32 %v5668, %v5740
    %v5742 = vpop.f32.mrf.mxu0
    %v5743 = vadd.f32 %v5670, %v5742
    %v5744 = vpop.f32.mrf.mxu0
    %v5745 = vadd.f32 %v5672, %v5744
    %5746 = vdwg.mxu0
    %5747 = vmatprep.subr.bf16.mxu0 %v4753
    %5748 = vmatpush1.bf16.msra.mxu0 %v4752
    %5749 = vmatprep.subr.bf16.mxu0 %v4749
    %5750 = vmatpush1.bf16.msra.mxu0 %v4748
    %5751 = vmatprep.subr.bf16.mxu0 %v4745
    %5752 = vmatpush1.bf16.msra.mxu0 %v4744
    %5753 = vmatprep.subr.bf16.mxu0 %v4741
    %5754 = vmatpush1.bf16.msra.mxu0 %v4740
    %5755 = vmatprep.subr.bf16.mxu0 %v4737
    %5756 = vmatpush1.bf16.msra.mxu0 %v4736
    %5757 = vmatprep.subr.bf16.mxu0 %v4733
    %5758 = vmatpush1.bf16.msra.mxu0 %v4732
    %5759 = vmatprep.subr.bf16.mxu0 %v4729
    %5760 = vmatpush1.bf16.msra.mxu0 %v4728
    %5761 = vmatprep.subr.bf16.mxu0 %v4725
    %5762 = vmatpush1.bf16.msra.mxu0 %v4724
    %5763 = vmatprep.subr.bf16.mxu0 0
    %5764 = vmatpush2.bf16.msra.mxu0 0
    %5765 = vmatprep.subr.bf16.mxu0 0
    %5766 = vmatpush2.bf16.msra.mxu0 0
    %5767 = vmatprep.subr.bf16.mxu0 0
    %5768 = vmatpush2.bf16.msra.mxu0 0
    %5769 = vmatprep.subr.bf16.mxu0 0
    %5770 = vmatpush2.bf16.msra.mxu0 0
    %5771 = vmatprep.subr.bf16.mxu0 0
    %5772 = vmatpush2.bf16.msra.mxu0 0
    %5773 = vmatprep.subr.bf16.mxu0 0
    %5774 = vmatpush2.bf16.msra.mxu0 0
    %5775 = vmatprep.subr.bf16.mxu0 0
    %5776 = vmatpush2.bf16.msra.mxu0 0
    %5777 = vmatprep.subr.bf16.mxu0 0
    %5778 = vmatpush2.bf16.msra.mxu0 0
    %5779 = vmatprep.mubr.bf16.mxu0 0
    %5780 = vmatmul.mubr.bf16.gmra.mxu0 %v2730
    %v5781 = vpop.f32.mrf.mxu0
    %v5782 = vadd.f32 %v5709, %v5781
    %v5783 = vpop.f32.mrf.mxu0
    %v5784 = vadd.f32 %v5711, %v5783
    %v5785 = vpop.f32.mrf.mxu0
    %v5786 = vadd.f32 %v5713, %v5785
    %v5787 = vpop.f32.mrf.mxu0
    %v5788 = vadd.f32 %v5715, %v5787
    %5789 = vmatprep.mubr.bf16.mxu0 0
    %5790 = vmatmul.mubr.bf16.gmra.mxu0 %v2745
    %v5791 = vpop.f32.mrf.mxu0
    %v5792 = vadd.f32 %v5719, %v5791
    %v5793 = vpop.f32.mrf.mxu0
    %v5794 = vadd.f32 %v5721, %v5793
    %v5795 = vpop.f32.mrf.mxu0
    %v5796 = vadd.f32 %v5723, %v5795
    %v5797 = vpop.f32.mrf.mxu0
    %v5798 = vadd.f32 %v5725, %v5797
    %5799 = vmatprep.mubr.bf16.mxu0 0
    %5800 = vmatmul.mubr.bf16.gmra.mxu0 %v2760
    %v5801 = vpop.f32.mrf.mxu0
    %v5802 = vadd.f32 %v5729, %v5801
    %v5803 = vpop.f32.mrf.mxu0
    %v5804 = vadd.f32 %v5731, %v5803
    %v5805 = vpop.f32.mrf.mxu0
    %v5806 = vadd.f32 %v5733, %v5805
    %v5807 = vpop.f32.mrf.mxu0
    %v5808 = vadd.f32 %v5735, %v5807
    %5809 = vmatprep.mubr.bf16.mxu0 0
    %5810 = vmatmul.mubr.bf16.gmra.mxu0 %v2775
    %v5811 = vpop.f32.mrf.mxu0
    %v5812 = vadd.f32 %v5739, %v5811
    %v5813 = vpop.f32.mrf.mxu0
    %v5814 = vadd.f32 %v5741, %v5813
    %v5815 = vpop.f32.mrf.mxu0
    %v5816 = vadd.f32 %v5743, %v5815
    %v5817 = vpop.f32.mrf.mxu0
    %v5818 = vadd.f32 %v5745, %v5817
    %5819 = vdwg.mxu0
    %5820 = vmatprep.subr.bf16.mxu0 %v4307
    %5821 = vmatpush1.bf16.msra.mxu0 %v4306
    %5822 = vmatprep.subr.bf16.mxu0 %v4303
    %5823 = vmatpush1.bf16.msra.mxu0 %v4302
    %5824 = vmatprep.subr.bf16.mxu0 %v4299
    %5825 = vmatpush1.bf16.msra.mxu0 %v4298
    %5826 = vmatprep.subr.bf16.mxu0 %v4295
    %5827 = vmatpush1.bf16.msra.mxu0 %v4294
    %5828 = vmatprep.subr.bf16.mxu0 %v4291
    %5829 = vmatpush1.bf16.msra.mxu0 %v4290
    %5830 = vmatprep.subr.bf16.mxu0 %v4287
    %5831 = vmatpush1.bf16.msra.mxu0 %v4286
    %5832 = vmatprep.subr.bf16.mxu0 %v4283
    %5833 = vmatpush1.bf16.msra.mxu0 %v4282
    %5834 = vmatprep.subr.bf16.mxu0 %v4279
    %5835 = vmatpush1.bf16.msra.mxu0 %v4278
    %5836 = vmatprep.subr.bf16.mxu0 %v4339
    %5837 = vmatpush2.bf16.msra.mxu0 %v4338
    %5838 = vmatprep.subr.bf16.mxu0 %v4335
    %5839 = vmatpush2.bf16.msra.mxu0 %v4334
    %5840 = vmatprep.subr.bf16.mxu0 %v4331
    %5841 = vmatpush2.bf16.msra.mxu0 %v4330
    %5842 = vmatprep.subr.bf16.mxu0 %v4327
    %5843 = vmatpush2.bf16.msra.mxu0 %v4326
    %5844 = vmatprep.subr.bf16.mxu0 %v4323
    %5845 = vmatpush2.bf16.msra.mxu0 %v4322
    %5846 = vmatprep.subr.bf16.mxu0 %v4319
    %5847 = vmatpush2.bf16.msra.mxu0 %v4318
    %5848 = vmatprep.subr.bf16.mxu0 %v4315
    %5849 = vmatpush2.bf16.msra.mxu0 %v4314
    %5850 = vmatprep.subr.bf16.mxu0 %v4311
    %5851 = vmatpush2.bf16.msra.mxu0 %v4310
    %5852 = vmatprep.mubr.bf16.mxu0 %v2717
    %5853 = vmatmul.mubr.bf16.gmra.mxu0 %v2716
    %v5854 = vpop.f32.mrf.mxu0
    %v5855 = vadd.f32 0.0, %v5854
    %v5856 = vpop.f32.mrf.mxu0
    %v5857 = vadd.f32 0.0, %v5856
    %v5858 = vpop.f32.mrf.mxu0
    %v5859 = vadd.f32 0.0, %v5858
    %v5860 = vpop.f32.mrf.mxu0
    %v5861 = vadd.f32 0.0, %v5860
    %5862 = vmatprep.mubr.bf16.mxu0 %v2732
    %5863 = vmatmul.mubr.bf16.gmra.mxu0 %v2731
    %v5864 = vpop.f32.mrf.mxu0
    %v5865 = vadd.f32 0.0, %v5864
    %v5866 = vpop.f32.mrf.mxu0
    %v5867 = vadd.f32 0.0, %v5866
    %v5868 = vpop.f32.mrf.mxu0
    %v5869 = vadd.f32 0.0, %v5868
    %v5870 = vpop.f32.mrf.mxu0
    %v5871 = vadd.f32 0.0, %v5870
    %5872 = vmatprep.mubr.bf16.mxu0 %v2747
    %5873 = vmatmul.mubr.bf16.gmra.mxu0 %v2746
    %v5874 = vpop.f32.mrf.mxu0
    %v5875 = vadd.f32 0.0, %v5874
    %v5876 = vpop.f32.mrf.mxu0
    %v5877 = vadd.f32 0.0, %v5876
    %v5878 = vpop.f32.mrf.mxu0
    %v5879 = vadd.f32 0.0, %v5878
    %v5880 = vpop.f32.mrf.mxu0
    %v5881 = vadd.f32 0.0, %v5880
    %5882 = vmatprep.mubr.bf16.mxu0 %v2762
    %5883 = vmatmul.mubr.bf16.gmra.mxu0 %v2761
    %v5884 = vpop.f32.mrf.mxu0
    %v5885 = vadd.f32 0.0, %v5884
    %v5886 = vpop.f32.mrf.mxu0
    %v5887 = vadd.f32 0.0, %v5886
    %v5888 = vpop.f32.mrf.mxu0
    %v5889 = vadd.f32 0.0, %v5888
    %v5890 = vpop.f32.mrf.mxu0
    %v5891 = vadd.f32 0.0, %v5890
    %5892 = vdwg.mxu0
    %5893 = vmatprep.subr.bf16.mxu0 %v4371
    %5894 = vmatpush1.bf16.msra.mxu0 %v4370
    %5895 = vmatprep.subr.bf16.mxu0 %v4367
    %5896 = vmatpush1.bf16.msra.mxu0 %v4366
    %5897 = vmatprep.subr.bf16.mxu0 %v4363
    %5898 = vmatpush1.bf16.msra.mxu0 %v4362
    %5899 = vmatprep.subr.bf16.mxu0 %v4359
    %5900 = vmatpush1.bf16.msra.mxu0 %v4358
    %5901 = vmatprep.subr.bf16.mxu0 %v4355
    %5902 = vmatpush1.bf16.msra.mxu0 %v4354
    %5903 = vmatprep.subr.bf16.mxu0 %v4351
    %5904 = vmatpush1.bf16.msra.mxu0 %v4350
    %5905 = vmatprep.subr.bf16.mxu0 %v4347
    %5906 = vmatpush1.bf16.msra.mxu0 %v4346
    %5907 = vmatprep.subr.bf16.mxu0 %v4343
    %5908 = vmatpush1.bf16.msra.mxu0 %v4342
    %5909 = vmatprep.subr.bf16.mxu0 %v4403
    %5910 = vmatpush2.bf16.msra.mxu0 %v4402
    %5911 = vmatprep.subr.bf16.mxu0 %v4399
    %5912 = vmatpush2.bf16.msra.mxu0 %v4398
    %5913 = vmatprep.subr.bf16.mxu0 %v4395
    %5914 = vmatpush2.bf16.msra.mxu0 %v4394
    %5915 = vmatprep.subr.bf16.mxu0 %v4391
    %5916 = vmatpush2.bf16.msra.mxu0 %v4390
    %5917 = vmatprep.subr.bf16.mxu0 %v4387
    %5918 = vmatpush2.bf16.msra.mxu0 %v4386
    %5919 = vmatprep.subr.bf16.mxu0 %v4383
    %5920 = vmatpush2.bf16.msra.mxu0 %v4382
    %5921 = vmatprep.subr.bf16.mxu0 %v4379
    %5922 = vmatpush2.bf16.msra.mxu0 %v4378
    %5923 = vmatprep.subr.bf16.mxu0 %v4375
    %5924 = vmatpush2.bf16.msra.mxu0 %v4374
    %5925 = vmatprep.mubr.bf16.mxu0 %v2719
    %5926 = vmatmul.mubr.bf16.gmra.mxu0 %v2718
    %v5927 = vpop.f32.mrf.mxu0
    %v5928 = vadd.f32 %v5855, %v5927
    %v5929 = vpop.f32.mrf.mxu0
    %v5930 = vadd.f32 %v5857, %v5929
    %v5931 = vpop.f32.mrf.mxu0
    %v5932 = vadd.f32 %v5859, %v5931
    %v5933 = vpop.f32.mrf.mxu0
    %v5934 = vadd.f32 %v5861, %v5933
    %5935 = vmatprep.mubr.bf16.mxu0 %v2734
    %5936 = vmatmul.mubr.bf16.gmra.mxu0 %v2733
    %v5937 = vpop.f32.mrf.mxu0
    %v5938 = vadd.f32 %v5865, %v5937
    %v5939 = vpop.f32.mrf.mxu0
    %v5940 = vadd.f32 %v5867, %v5939
    %v5941 = vpop.f32.mrf.mxu0
    %v5942 = vadd.f32 %v5869, %v5941
    %v5943 = vpop.f32.mrf.mxu0
    %v5944 = vadd.f32 %v5871, %v5943
    %5945 = vmatprep.mubr.bf16.mxu0 %v2749
    %5946 = vmatmul.mubr.bf16.gmra.mxu0 %v2748
    %v5947 = vpop.f32.mrf.mxu0
    %v5948 = vadd.f32 %v5875, %v5947
    %v5949 = vpop.f32.mrf.mxu0
    %v5950 = vadd.f32 %v5877, %v5949
    %v5951 = vpop.f32.mrf.mxu0
    %v5952 = vadd.f32 %v5879, %v5951
    %v5953 = vpop.f32.mrf.mxu0
    %v5954 = vadd.f32 %v5881, %v5953
    %5955 = vmatprep.mubr.bf16.mxu0 %v2764
    %5956 = vmatmul.mubr.bf16.gmra.mxu0 %v2763
    %v5957 = vpop.f32.mrf.mxu0
    %v5958 = vadd.f32 %v5885, %v5957
    %v5959 = vpop.f32.mrf.mxu0
    %v5960 = vadd.f32 %v5887, %v5959
    %v5961 = vpop.f32.mrf.mxu0
    %v5962 = vadd.f32 %v5889, %v5961
    %v5963 = vpop.f32.mrf.mxu0
    %v5964 = vadd.f32 %v5891, %v5963
    %5965 = vdwg.mxu0
    %5966 = vmatprep.subr.bf16.mxu0 %v4435
    %5967 = vmatpush1.bf16.msra.mxu0 %v4434
    %5968 = vmatprep.subr.bf16.mxu0 %v4431
    %5969 = vmatpush1.bf16.msra.mxu0 %v4430
    %5970 = vmatprep.subr.bf16.mxu0 %v4427
    %5971 = vmatpush1.bf16.msra.mxu0 %v4426
    %5972 = vmatprep.subr.bf16.mxu0 %v4423
    %5973 = vmatpush1.bf16.msra.mxu0 %v4422
    %5974 = vmatprep.subr.bf16.mxu0 %v4419
    %5975 = vmatpush1.bf16.msra.mxu0 %v4418
    %5976 = vmatprep.subr.bf16.mxu0 %v4415
    %5977 = vmatpush1.bf16.msra.mxu0 %v4414
    %5978 = vmatprep.subr.bf16.mxu0 %v4411
    %5979 = vmatpush1.bf16.msra.mxu0 %v4410
    %5980 = vmatprep.subr.bf16.mxu0 %v4407
    %5981 = vmatpush1.bf16.msra.mxu0 %v4406
    %5982 = vmatprep.subr.bf16.mxu0 %v4467
    %5983 = vmatpush2.bf16.msra.mxu0 %v4466
    %5984 = vmatprep.subr.bf16.mxu0 %v4463
    %5985 = vmatpush2.bf16.msra.mxu0 %v4462
    %5986 = vmatprep.subr.bf16.mxu0 %v4459
    %5987 = vmatpush2.bf16.msra.mxu0 %v4458
    %5988 = vmatprep.subr.bf16.mxu0 %v4455
    %5989 = vmatpush2.bf16.msra.mxu0 %v4454
    %5990 = vmatprep.subr.bf16.mxu0 %v4451
    %5991 = vmatpush2.bf16.msra.mxu0 %v4450
    %5992 = vmatprep.subr.bf16.mxu0 %v4447
    %5993 = vmatpush2.bf16.msra.mxu0 %v4446
    %5994 = vmatprep.subr.bf16.mxu0 %v4443
    %5995 = vmatpush2.bf16.msra.mxu0 %v4442
    %5996 = vmatprep.subr.bf16.mxu0 %v4439
    %5997 = vmatpush2.bf16.msra.mxu0 %v4438
    %5998 = vmatprep.mubr.bf16.mxu0 %v2721
    %5999 = vmatmul.mubr.bf16.gmra.mxu0 %v2720
    %v6000 = vpop.f32.mrf.mxu0
    %v6001 = vadd.f32 %v5928, %v6000
    %v6002 = vpop.f32.mrf.mxu0
    %v6003 = vadd.f32 %v5930, %v6002
    %v6004 = vpop.f32.mrf.mxu0
    %v6005 = vadd.f32 %v5932, %v6004
    %v6006 = vpop.f32.mrf.mxu0
    %v6007 = vadd.f32 %v5934, %v6006
    %6008 = vmatprep.mubr.bf16.mxu0 %v2736
    %6009 = vmatmul.mubr.bf16.gmra.mxu0 %v2735
    %v6010 = vpop.f32.mrf.mxu0
    %v6011 = vadd.f32 %v5938, %v6010
    %v6012 = vpop.f32.mrf.mxu0
    %v6013 = vadd.f32 %v5940, %v6012
    %v6014 = vpop.f32.mrf.mxu0
    %v6015 = vadd.f32 %v5942, %v6014
    %v6016 = vpop.f32.mrf.mxu0
    %v6017 = vadd.f32 %v5944, %v6016
    %6018 = vmatprep.mubr.bf16.mxu0 %v2751
    %6019 = vmatmul.mubr.bf16.gmra.mxu0 %v2750
    %v6020 = vpop.f32.mrf.mxu0
    %v6021 = vadd.f32 %v5948, %v6020
    %v6022 = vpop.f32.mrf.mxu0
    %v6023 = vadd.f32 %v5950, %v6022
    %v6024 = vpop.f32.mrf.mxu0
    %v6025 = vadd.f32 %v5952, %v6024
    %v6026 = vpop.f32.mrf.mxu0
    %v6027 = vadd.f32 %v5954, %v6026
    %6028 = vmatprep.mubr.bf16.mxu0 %v2766
    %6029 = vmatmul.mubr.bf16.gmra.mxu0 %v2765
    %v6030 = vpop.f32.mrf.mxu0
    %v6031 = vadd.f32 %v5958, %v6030
    %v6032 = vpop.f32.mrf.mxu0
    %v6033 = vadd.f32 %v5960, %v6032
    %v6034 = vpop.f32.mrf.mxu0
    %v6035 = vadd.f32 %v5962, %v6034
    %v6036 = vpop.f32.mrf.mxu0
    %v6037 = vadd.f32 %v5964, %v6036
    %6038 = vdwg.mxu0
    %6039 = vmatprep.subr.bf16.mxu0 %v4499
    %6040 = vmatpush1.bf16.msra.mxu0 %v4498
    %6041 = vmatprep.subr.bf16.mxu0 %v4495
    %6042 = vmatpush1.bf16.msra.mxu0 %v4494
    %6043 = vmatprep.subr.bf16.mxu0 %v4491
    %6044 = vmatpush1.bf16.msra.mxu0 %v4490
    %6045 = vmatprep.subr.bf16.mxu0 %v4487
    %6046 = vmatpush1.bf16.msra.mxu0 %v4486
    %6047 = vmatprep.subr.bf16.mxu0 %v4483
    %6048 = vmatpush1.bf16.msra.mxu0 %v4482
    %6049 = vmatprep.subr.bf16.mxu0 %v4479
    %6050 = vmatpush1.bf16.msra.mxu0 %v4478
    %6051 = vmatprep.subr.bf16.mxu0 %v4475
    %6052 = vmatpush1.bf16.msra.mxu0 %v4474
    %6053 = vmatprep.subr.bf16.mxu0 %v4471
    %6054 = vmatpush1.bf16.msra.mxu0 %v4470
    %6055 = vmatprep.subr.bf16.mxu0 %v4531
    %6056 = vmatpush2.bf16.msra.mxu0 %v4530
    %6057 = vmatprep.subr.bf16.mxu0 %v4527
    %6058 = vmatpush2.bf16.msra.mxu0 %v4526
    %6059 = vmatprep.subr.bf16.mxu0 %v4523
    %6060 = vmatpush2.bf16.msra.mxu0 %v4522
    %6061 = vmatprep.subr.bf16.mxu0 %v4519
    %6062 = vmatpush2.bf16.msra.mxu0 %v4518
    %6063 = vmatprep.subr.bf16.mxu0 %v4515
    %6064 = vmatpush2.bf16.msra.mxu0 %v4514
    %6065 = vmatprep.subr.bf16.mxu0 %v4511
    %6066 = vmatpush2.bf16.msra.mxu0 %v4510
    %6067 = vmatprep.subr.bf16.mxu0 %v4507
    %6068 = vmatpush2.bf16.msra.mxu0 %v4506
    %6069 = vmatprep.subr.bf16.mxu0 %v4503
    %6070 = vmatpush2.bf16.msra.mxu0 %v4502
    %6071 = vmatprep.mubr.bf16.mxu0 %v2723
    %6072 = vmatmul.mubr.bf16.gmra.mxu0 %v2722
    %v6073 = vpop.f32.mrf.mxu0
    %v6074 = vadd.f32 %v6001, %v6073
    %v6075 = vpop.f32.mrf.mxu0
    %v6076 = vadd.f32 %v6003, %v6075
    %v6077 = vpop.f32.mrf.mxu0
    %v6078 = vadd.f32 %v6005, %v6077
    %v6079 = vpop.f32.mrf.mxu0
    %v6080 = vadd.f32 %v6007, %v6079
    %6081 = vmatprep.mubr.bf16.mxu0 %v2738
    %6082 = vmatmul.mubr.bf16.gmra.mxu0 %v2737
    %v6083 = vpop.f32.mrf.mxu0
    %v6084 = vadd.f32 %v6011, %v6083
    %v6085 = vpop.f32.mrf.mxu0
    %v6086 = vadd.f32 %v6013, %v6085
    %v6087 = vpop.f32.mrf.mxu0
    %v6088 = vadd.f32 %v6015, %v6087
    %v6089 = vpop.f32.mrf.mxu0
    %v6090 = vadd.f32 %v6017, %v6089
    %6091 = vmatprep.mubr.bf16.mxu0 %v2753
    %6092 = vmatmul.mubr.bf16.gmra.mxu0 %v2752
    %v6093 = vpop.f32.mrf.mxu0
    %v6094 = vadd.f32 %v6021, %v6093
    %v6095 = vpop.f32.mrf.mxu0
    %v6096 = vadd.f32 %v6023, %v6095
    %v6097 = vpop.f32.mrf.mxu0
    %v6098 = vadd.f32 %v6025, %v6097
    %v6099 = vpop.f32.mrf.mxu0
    %v6100 = vadd.f32 %v6027, %v6099
    %6101 = vmatprep.mubr.bf16.mxu0 %v2768
    %6102 = vmatmul.mubr.bf16.gmra.mxu0 %v2767
    %v6103 = vpop.f32.mrf.mxu0
    %v6104 = vadd.f32 %v6031, %v6103
    %v6105 = vpop.f32.mrf.mxu0
    %v6106 = vadd.f32 %v6033, %v6105
    %v6107 = vpop.f32.mrf.mxu0
    %v6108 = vadd.f32 %v6035, %v6107
    %v6109 = vpop.f32.mrf.mxu0
    %v6110 = vadd.f32 %v6037, %v6109
    %6111 = vdwg.mxu0
    %6112 = vmatprep.subr.bf16.mxu0 %v4563
    %6113 = vmatpush1.bf16.msra.mxu0 %v4562
    %6114 = vmatprep.subr.bf16.mxu0 %v4559
    %6115 = vmatpush1.bf16.msra.mxu0 %v4558
    %6116 = vmatprep.subr.bf16.mxu0 %v4555
    %6117 = vmatpush1.bf16.msra.mxu0 %v4554
    %6118 = vmatprep.subr.bf16.mxu0 %v4551
    %6119 = vmatpush1.bf16.msra.mxu0 %v4550
    %6120 = vmatprep.subr.bf16.mxu0 %v4547
    %6121 = vmatpush1.bf16.msra.mxu0 %v4546
    %6122 = vmatprep.subr.bf16.mxu0 %v4543
    %6123 = vmatpush1.bf16.msra.mxu0 %v4542
    %6124 = vmatprep.subr.bf16.mxu0 %v4539
    %6125 = vmatpush1.bf16.msra.mxu0 %v4538
    %6126 = vmatprep.subr.bf16.mxu0 %v4535
    %6127 = vmatpush1.bf16.msra.mxu0 %v4534
    %6128 = vmatprep.subr.bf16.mxu0 %v4595
    %6129 = vmatpush2.bf16.msra.mxu0 %v4594
    %6130 = vmatprep.subr.bf16.mxu0 %v4591
    %6131 = vmatpush2.bf16.msra.mxu0 %v4590
    %6132 = vmatprep.subr.bf16.mxu0 %v4587
    %6133 = vmatpush2.bf16.msra.mxu0 %v4586
    %6134 = vmatprep.subr.bf16.mxu0 %v4583
    %6135 = vmatpush2.bf16.msra.mxu0 %v4582
    %6136 = vmatprep.subr.bf16.mxu0 %v4579
    %6137 = vmatpush2.bf16.msra.mxu0 %v4578
    %6138 = vmatprep.subr.bf16.mxu0 %v4575
    %6139 = vmatpush2.bf16.msra.mxu0 %v4574
    %6140 = vmatprep.subr.bf16.mxu0 %v4571
    %6141 = vmatpush2.bf16.msra.mxu0 %v4570
    %6142 = vmatprep.subr.bf16.mxu0 %v4567
    %6143 = vmatpush2.bf16.msra.mxu0 %v4566
    %6144 = vmatprep.mubr.bf16.mxu0 %v2725
    %6145 = vmatmul.mubr.bf16.gmra.mxu0 %v2724
    %v6146 = vpop.f32.mrf.mxu0
    %v6147 = vadd.f32 %v6074, %v6146
    %v6148 = vpop.f32.mrf.mxu0
    %v6149 = vadd.f32 %v6076, %v6148
    %v6150 = vpop.f32.mrf.mxu0
    %v6151 = vadd.f32 %v6078, %v6150
    %v6152 = vpop.f32.mrf.mxu0
    %v6153 = vadd.f32 %v6080, %v6152
    %6154 = vmatprep.mubr.bf16.mxu0 %v2740
    %6155 = vmatmul.mubr.bf16.gmra.mxu0 %v2739
    %v6156 = vpop.f32.mrf.mxu0
    %v6157 = vadd.f32 %v6084, %v6156
    %v6158 = vpop.f32.mrf.mxu0
    %v6159 = vadd.f32 %v6086, %v6158
    %v6160 = vpop.f32.mrf.mxu0
    %v6161 = vadd.f32 %v6088, %v6160
    %v6162 = vpop.f32.mrf.mxu0
    %v6163 = vadd.f32 %v6090, %v6162
    %6164 = vmatprep.mubr.bf16.mxu0 %v2755
    %6165 = vmatmul.mubr.bf16.gmra.mxu0 %v2754
    %v6166 = vpop.f32.mrf.mxu0
    %v6167 = vadd.f32 %v6094, %v6166
    %v6168 = vpop.f32.mrf.mxu0
    %v6169 = vadd.f32 %v6096, %v6168
    %v6170 = vpop.f32.mrf.mxu0
    %v6171 = vadd.f32 %v6098, %v6170
    %v6172 = vpop.f32.mrf.mxu0
    %v6173 = vadd.f32 %v6100, %v6172
    %6174 = vmatprep.mubr.bf16.mxu0 %v2770
    %6175 = vmatmul.mubr.bf16.gmra.mxu0 %v2769
    %v6176 = vpop.f32.mrf.mxu0
    %v6177 = vadd.f32 %v6104, %v6176
    %v6178 = vpop.f32.mrf.mxu0
    %v6179 = vadd.f32 %v6106, %v6178
    %v6180 = vpop.f32.mrf.mxu0
    %v6181 = vadd.f32 %v6108, %v6180
    %v6182 = vpop.f32.mrf.mxu0
    %v6183 = vadd.f32 %v6110, %v6182
    %6184 = vdwg.mxu0
    %6185 = vmatprep.subr.bf16.mxu0 %v4627
    %6186 = vmatpush1.bf16.msra.mxu0 %v4626
    %6187 = vmatprep.subr.bf16.mxu0 %v4623
    %6188 = vmatpush1.bf16.msra.mxu0 %v4622
    %6189 = vmatprep.subr.bf16.mxu0 %v4619
    %6190 = vmatpush1.bf16.msra.mxu0 %v4618
    %6191 = vmatprep.subr.bf16.mxu0 %v4615
    %6192 = vmatpush1.bf16.msra.mxu0 %v4614
    %6193 = vmatprep.subr.bf16.mxu0 %v4611
    %6194 = vmatpush1.bf16.msra.mxu0 %v4610
    %6195 = vmatprep.subr.bf16.mxu0 %v4607
    %6196 = vmatpush1.bf16.msra.mxu0 %v4606
    %6197 = vmatprep.subr.bf16.mxu0 %v4603
    %6198 = vmatpush1.bf16.msra.mxu0 %v4602
    %6199 = vmatprep.subr.bf16.mxu0 %v4599
    %6200 = vmatpush1.bf16.msra.mxu0 %v4598
    %6201 = vmatprep.subr.bf16.mxu0 %v4659
    %6202 = vmatpush2.bf16.msra.mxu0 %v4658
    %6203 = vmatprep.subr.bf16.mxu0 %v4655
    %6204 = vmatpush2.bf16.msra.mxu0 %v4654
    %6205 = vmatprep.subr.bf16.mxu0 %v4651
    %6206 = vmatpush2.bf16.msra.mxu0 %v4650
    %6207 = vmatprep.subr.bf16.mxu0 %v4647
    %6208 = vmatpush2.bf16.msra.mxu0 %v4646
    %6209 = vmatprep.subr.bf16.mxu0 %v4643
    %6210 = vmatpush2.bf16.msra.mxu0 %v4642
    %6211 = vmatprep.subr.bf16.mxu0 %v4639
    %6212 = vmatpush2.bf16.msra.mxu0 %v4638
    %6213 = vmatprep.subr.bf16.mxu0 %v4635
    %6214 = vmatpush2.bf16.msra.mxu0 %v4634
    %6215 = vmatprep.subr.bf16.mxu0 %v4631
    %6216 = vmatpush2.bf16.msra.mxu0 %v4630
    %6217 = vmatprep.mubr.bf16.mxu0 %v2727
    %6218 = vmatmul.mubr.bf16.gmra.mxu0 %v2726
    %v6219 = vpop.f32.mrf.mxu0
    %v6220 = vadd.f32 %v6147, %v6219
    %v6221 = vpop.f32.mrf.mxu0
    %v6222 = vadd.f32 %v6149, %v6221
    %v6223 = vpop.f32.mrf.mxu0
    %v6224 = vadd.f32 %v6151, %v6223
    %v6225 = vpop.f32.mrf.mxu0
    %v6226 = vadd.f32 %v6153, %v6225
    %6227 = vmatprep.mubr.bf16.mxu0 %v2742
    %6228 = vmatmul.mubr.bf16.gmra.mxu0 %v2741
    %v6229 = vpop.f32.mrf.mxu0
    %v6230 = vadd.f32 %v6157, %v6229
    %v6231 = vpop.f32.mrf.mxu0
    %v6232 = vadd.f32 %v6159, %v6231
    %v6233 = vpop.f32.mrf.mxu0
    %v6234 = vadd.f32 %v6161, %v6233
    %v6235 = vpop.f32.mrf.mxu0
    %v6236 = vadd.f32 %v6163, %v6235
    %6237 = vmatprep.mubr.bf16.mxu0 %v2757
    %6238 = vmatmul.mubr.bf16.gmra.mxu0 %v2756
    %v6239 = vpop.f32.mrf.mxu0
    %v6240 = vadd.f32 %v6167, %v6239
    %v6241 = vpop.f32.mrf.mxu0
    %v6242 = vadd.f32 %v6169, %v6241
    %v6243 = vpop.f32.mrf.mxu0
    %v6244 = vadd.f32 %v6171, %v6243
    %v6245 = vpop.f32.mrf.mxu0
    %v6246 = vadd.f32 %v6173, %v6245
    %6247 = vmatprep.mubr.bf16.mxu0 %v2772
    %6248 = vmatmul.mubr.bf16.gmra.mxu0 %v2771
    %v6249 = vpop.f32.mrf.mxu0
    %v6250 = vadd.f32 %v6177, %v6249
    %v6251 = vpop.f32.mrf.mxu0
    %v6252 = vadd.f32 %v6179, %v6251
    %v6253 = vpop.f32.mrf.mxu0
    %v6254 = vadd.f32 %v6181, %v6253
    %v6255 = vpop.f32.mrf.mxu0
    %v6256 = vadd.f32 %v6183, %v6255
    %6257 = vdwg.mxu0
    %6258 = vmatprep.subr.bf16.mxu0 %v4691
    %6259 = vmatpush1.bf16.msra.mxu0 %v4690
    %6260 = vmatprep.subr.bf16.mxu0 %v4687
    %6261 = vmatpush1.bf16.msra.mxu0 %v4686
    %6262 = vmatprep.subr.bf16.mxu0 %v4683
    %6263 = vmatpush1.bf16.msra.mxu0 %v4682
    %6264 = vmatprep.subr.bf16.mxu0 %v4679
    %6265 = vmatpush1.bf16.msra.mxu0 %v4678
    %6266 = vmatprep.subr.bf16.mxu0 %v4675
    %6267 = vmatpush1.bf16.msra.mxu0 %v4674
    %6268 = vmatprep.subr.bf16.mxu0 %v4671
    %6269 = vmatpush1.bf16.msra.mxu0 %v4670
    %6270 = vmatprep.subr.bf16.mxu0 %v4667
    %6271 = vmatpush1.bf16.msra.mxu0 %v4666
    %6272 = vmatprep.subr.bf16.mxu0 %v4663
    %6273 = vmatpush1.bf16.msra.mxu0 %v4662
    %6274 = vmatprep.subr.bf16.mxu0 %v4723
    %6275 = vmatpush2.bf16.msra.mxu0 %v4722
    %6276 = vmatprep.subr.bf16.mxu0 %v4719
    %6277 = vmatpush2.bf16.msra.mxu0 %v4718
    %6278 = vmatprep.subr.bf16.mxu0 %v4715
    %6279 = vmatpush2.bf16.msra.mxu0 %v4714
    %6280 = vmatprep.subr.bf16.mxu0 %v4711
    %6281 = vmatpush2.bf16.msra.mxu0 %v4710
    %6282 = vmatprep.subr.bf16.mxu0 %v4707
    %6283 = vmatpush2.bf16.msra.mxu0 %v4706
    %6284 = vmatprep.subr.bf16.mxu0 %v4703
    %6285 = vmatpush2.bf16.msra.mxu0 %v4702
    %6286 = vmatprep.subr.bf16.mxu0 %v4699
    %6287 = vmatpush2.bf16.msra.mxu0 %v4698
    %6288 = vmatprep.subr.bf16.mxu0 %v4695
    %6289 = vmatpush2.bf16.msra.mxu0 %v4694
    %6290 = vmatprep.mubr.bf16.mxu0 %v2729
    %6291 = vmatmul.mubr.bf16.gmra.mxu0 %v2728
    %v6292 = vpop.f32.mrf.mxu0
    %v6293 = vadd.f32 %v6220, %v6292
    %v6294 = vpop.f32.mrf.mxu0
    %v6295 = vadd.f32 %v6222, %v6294
    %v6296 = vpop.f32.mrf.mxu0
    %v6297 = vadd.f32 %v6224, %v6296
    %v6298 = vpop.f32.mrf.mxu0
    %v6299 = vadd.f32 %v6226, %v6298
    %6300 = vmatprep.mubr.bf16.mxu0 %v2744
    %6301 = vmatmul.mubr.bf16.gmra.mxu0 %v2743
    %v6302 = vpop.f32.mrf.mxu0
    %v6303 = vadd.f32 %v6230, %v6302
    %v6304 = vpop.f32.mrf.mxu0
    %v6305 = vadd.f32 %v6232, %v6304
    %v6306 = vpop.f32.mrf.mxu0
    %v6307 = vadd.f32 %v6234, %v6306
    %v6308 = vpop.f32.mrf.mxu0
    %v6309 = vadd.f32 %v6236, %v6308
    %6310 = vmatprep.mubr.bf16.mxu0 %v2759
    %6311 = vmatmul.mubr.bf16.gmra.mxu0 %v2758
    %v6312 = vpop.f32.mrf.mxu0
    %v6313 = vadd.f32 %v6240, %v6312
    %v6314 = vpop.f32.mrf.mxu0
    %v6315 = vadd.f32 %v6242, %v6314
    %v6316 = vpop.f32.mrf.mxu0
    %v6317 = vadd.f32 %v6244, %v6316
    %v6318 = vpop.f32.mrf.mxu0
    %v6319 = vadd.f32 %v6246, %v6318
    %6320 = vmatprep.mubr.bf16.mxu0 %v2774
    %6321 = vmatmul.mubr.bf16.gmra.mxu0 %v2773
    %v6322 = vpop.f32.mrf.mxu0
    %v6323 = vadd.f32 %v6250, %v6322
    %v6324 = vpop.f32.mrf.mxu0
    %v6325 = vadd.f32 %v6252, %v6324
    %v6326 = vpop.f32.mrf.mxu0
    %v6327 = vadd.f32 %v6254, %v6326
    %v6328 = vpop.f32.mrf.mxu0
    %v6329 = vadd.f32 %v6256, %v6328
    %6330 = vdwg.mxu0
    %6331 = vmatprep.subr.bf16.mxu0 %v4755
    %6332 = vmatpush1.bf16.msra.mxu0 %v4754
    %6333 = vmatprep.subr.bf16.mxu0 %v4751
    %6334 = vmatpush1.bf16.msra.mxu0 %v4750
    %6335 = vmatprep.subr.bf16.mxu0 %v4747
    %6336 = vmatpush1.bf16.msra.mxu0 %v4746
    %6337 = vmatprep.subr.bf16.mxu0 %v4743
    %6338 = vmatpush1.bf16.msra.mxu0 %v4742
    %6339 = vmatprep.subr.bf16.mxu0 %v4739
    %6340 = vmatpush1.bf16.msra.mxu0 %v4738
    %6341 = vmatprep.subr.bf16.mxu0 %v4735
    %6342 = vmatpush1.bf16.msra.mxu0 %v4734
    %6343 = vmatprep.subr.bf16.mxu0 %v4731
    %6344 = vmatpush1.bf16.msra.mxu0 %v4730
    %6345 = vmatprep.subr.bf16.mxu0 %v4727
    %6346 = vmatpush1.bf16.msra.mxu0 %v4726
    %6347 = vmatprep.subr.bf16.mxu0 0
    %6348 = vmatpush2.bf16.msra.mxu0 0
    %6349 = vmatprep.subr.bf16.mxu0 0
    %6350 = vmatpush2.bf16.msra.mxu0 0
    %6351 = vmatprep.subr.bf16.mxu0 0
    %6352 = vmatpush2.bf16.msra.mxu0 0
    %6353 = vmatprep.subr.bf16.mxu0 0
    %6354 = vmatpush2.bf16.msra.mxu0 0
    %6355 = vmatprep.subr.bf16.mxu0 0
    %6356 = vmatpush2.bf16.msra.mxu0 0
    %6357 = vmatprep.subr.bf16.mxu0 0
    %6358 = vmatpush2.bf16.msra.mxu0 0
    %6359 = vmatprep.subr.bf16.mxu0 0
    %6360 = vmatpush2.bf16.msra.mxu0 0
    %6361 = vmatprep.subr.bf16.mxu0 0
    %6362 = vmatpush2.bf16.msra.mxu0 0
    %6363 = vmatprep.mubr.bf16.mxu0 0
    %6364 = vmatmul.mubr.bf16.gmra.mxu0 %v2730
    %v6365 = vpop.f32.mrf.mxu0
    %v6366 = vadd.f32 %v6293, %v6365
    %v6367 = vpop.f32.mrf.mxu0
    %v6368 = vadd.f32 %v6295, %v6367
    %v6369 = vpop.f32.mrf.mxu0
    %v6370 = vadd.f32 %v6297, %v6369
    %v6371 = vpop.f32.mrf.mxu0
    %v6372 = vadd.f32 %v6299, %v6371
    %6373 = vmatprep.mubr.bf16.mxu0 0
    %6374 = vmatmul.mubr.bf16.gmra.mxu0 %v2745
    %v6375 = vpop.f32.mrf.mxu0
    %v6376 = vadd.f32 %v6303, %v6375
    %v6377 = vpop.f32.mrf.mxu0
    %v6378 = vadd.f32 %v6305, %v6377
    %v6379 = vpop.f32.mrf.mxu0
    %v6380 = vadd.f32 %v6307, %v6379
    %v6381 = vpop.f32.mrf.mxu0
    %v6382 = vadd.f32 %v6309, %v6381
    %6383 = vmatprep.mubr.bf16.mxu0 0
    %6384 = vmatmul.mubr.bf16.gmra.mxu0 %v2760
    %v6385 = vpop.f32.mrf.mxu0
    %v6386 = vadd.f32 %v6313, %v6385
    %v6387 = vpop.f32.mrf.mxu0
    %v6388 = vadd.f32 %v6315, %v6387
    %v6389 = vpop.f32.mrf.mxu0
    %v6390 = vadd.f32 %v6317, %v6389
    %v6391 = vpop.f32.mrf.mxu0
    %v6392 = vadd.f32 %v6319, %v6391
    %6393 = vmatprep.mubr.bf16.mxu0 0
    %6394 = vmatmul.mubr.bf16.gmra.mxu0 %v2775
    %v6395 = vpop.f32.mrf.mxu0
    %v6396 = vadd.f32 %v6323, %v6395
    %v6397 = vpop.f32.mrf.mxu0
    %v6398 = vadd.f32 %v6325, %v6397
    %v6399 = vpop.f32.mrf.mxu0
    %v6400 = vadd.f32 %v6327, %v6399
    %v6401 = vpop.f32.mrf.mxu0
    %v6402 = vadd.f32 %v6329, %v6401
    %6403 = vdwg.mxu0
    %v6404 = vmax.f32 %v5782, %v6366
    %v6405 = vmax.f32 %v5784, %v6368
    %v6406 = vmax.f32 %v5786, %v6370
    %v6407 = vmax.f32 %v5788, %v6372
    %v6408 = vmax.f32 %v5792, %v6376
    %v6409 = vmax.f32 %v5794, %v6378
    %v6410 = vmax.f32 %v5796, %v6380
    %v6411 = vmax.f32 %v5798, %v6382
    %v6412 = vmax.f32 %v5802, %v6386
    %v6413 = vmax.f32 %v5804, %v6388
    %v6414 = vmax.f32 %v5806, %v6390
    %v6415 = vmax.f32 %v5808, %v6392
    %v6416 = vmax.f32 %v5812, %v6396
    %v6417 = vmax.f32 %v5814, %v6398
    %v6418 = vmax.f32 %v5816, %v6400
    %v6419 = vmax.f32 %v5818, %v6402
    %v6420 = vld [vmem:[#allocation8] sm:$0x3]
    %v6422 = vlaneseq
    %v6423 = vshrl.u32 %v6422, 7
    %v6424 = vsub.s32 0, %v6423
    %v6425 = vrot.slane %v6420, %v6424
    %v6426 = vlaneseq
    %v6427 = vshrl.u32 %v6426, 7
    %v6428 = vsub.s32 1, %v6427
    %v6429 = vrot.slane %v6420, %v6428
    %v6432 = vadd.f32 %v6404, %v6425
    %v6433 = vadd.f32 %v6405, %v6429
    %v6434 = vadd.f32 %v6406, %v6425
    %v6435 = vadd.f32 %v6407, %v6429
    %v6436 = vadd.f32 %v6408, %v6425
    %v6437 = vadd.f32 %v6409, %v6429
    %v6438 = vadd.f32 %v6410, %v6425
    %v6439 = vadd.f32 %v6411, %v6429
    %v6440 = vadd.f32 %v6412, %v6425
    %v6441 = vadd.f32 %v6413, %v6429
    %v6442 = vadd.f32 %v6414, %v6425
    %v6443 = vadd.f32 %v6415, %v6429
    %v6444 = vadd.f32 %v6416, %v6425
    %v6445 = vadd.f32 %v6417, %v6429
    %v6446 = vadd.f32 %v6418, %v6425
    %v6447 = vadd.f32 %v6419, %v6429
    %v6448 = vmax.f32 %v6432, 0.0
    %v6449 = vmax.f32 %v6433, 0.0
    %v6450 = vmax.f32 %v6434, 0.0
    %v6451 = vmax.f32 %v6435, 0.0
    %v6452 = vmax.f32 %v6436, 0.0
    %v6453 = vmax.f32 %v6437, 0.0
    %v6454 = vmax.f32 %v6438, 0.0
    %v6455 = vmax.f32 %v6439, 0.0
    %v6456 = vmax.f32 %v6440, 0.0
    %v6457 = vmax.f32 %v6441, 0.0
    %v6458 = vmax.f32 %v6442, 0.0
    %v6459 = vmax.f32 %v6443, 0.0
    %v6460 = vmax.f32 %v6444, 0.0
    %v6461 = vmax.f32 %v6445, 0.0
    %v6462 = vmax.f32 %v6446, 0.0
    %v6463 = vmax.f32 %v6447, 0.0
    %v6464 = vmax.f32 %v6448, %v6450
    %v6465 = vmax.f32 %v6449, %v6451
    %v6466 = vpack.c.bf16 %v6464, %v6464
    %v6467 = vpack.c.bf16 %v6465, %v6465
    %v6468 = vmax.f32 %v6452, %v6454
    %v6469 = vmax.f32 %v6453, %v6455
    %v6470 = vpack.c.bf16 %v6468, %v6468
    %v6471 = vpack.c.bf16 %v6469, %v6469
    %v6472 = vmax.f32 %v6456, %v6458
    %v6473 = vmax.f32 %v6457, %v6459
    %v6474 = vpack.c.bf16 %v6472, %v6472
    %v6475 = vpack.c.bf16 %v6473, %v6473
    %v6476 = vmax.f32 %v6460, %v6462
    %v6477 = vmax.f32 %v6461, %v6463
    %v6478 = vpack.c.bf16 %v6476, %v6476
    %v6479 = vpack.c.bf16 %v6477, %v6477
    %v6480 = vld [vmem:[#allocation10] sm:$0xff]
    %v6481 = vld [vmem:[#allocation10 + $0x8] sm:$0xff]
    %v6482 = vld [vmem:[#allocation10 + $0x10] sm:$0xff]
    %v6483 = vld [vmem:[#allocation10 + $0x18] sm:$0xff]
    %v6484 = vld [vmem:[#allocation10 + $0x20] sm:$0xff]
    %v6485 = vld [vmem:[#allocation10 + $0x28] sm:$0xff]
    %v6486 = vld [vmem:[#allocation10 + $0x30] sm:$0xff]
    %v6487 = vld [vmem:[#allocation10 + $0x38] sm:$0xff]
    %v6488 = vld [vmem:[#allocation10 + $0x40] sm:$0xff]
    %v6489 = vld [vmem:[#allocation10 + $0x48] sm:$0xff]
    %v6490 = vld [vmem:[#allocation10 + $0x50] sm:$0xff]
    %v6491 = vld [vmem:[#allocation10 + $0x58] sm:$0xff]
    %v6492 = vld [vmem:[#allocation10 + $0x60] sm:$0xff]
    %v6493 = vld [vmem:[#allocation10 + $0x68] sm:$0xff]
    %v6494 = vld [vmem:[#allocation10 + $0x70] sm:$0xff]
    %v6495 = vld [vmem:[#allocation10 + $0x78] sm:$0xff]
    %v6496 = vld [vmem:[#allocation10 + $0x80] sm:$0xff]
    %v6497 = vld [vmem:[#allocation10 + $0x88] sm:$0xff]
    %v6498 = vld [vmem:[#allocation10 + $0x90] sm:$0xff]
    %v6499 = vld [vmem:[#allocation10 + $0x98] sm:$0xff]
    %v6500 = vld [vmem:[#allocation10 + $0xa0] sm:$0xff]
    %v6501 = vld [vmem:[#allocation10 + $0xa8] sm:$0xff]
    %v6502 = vld [vmem:[#allocation10 + $0xb0] sm:$0xff]
    %v6503 = vld [vmem:[#allocation10 + $0xb8] sm:$0xff]
    %v6504 = vld [vmem:[#allocation10 + $0xc0] sm:$0xff]
    %v6505 = vld [vmem:[#allocation10 + $0xc8] sm:$0xff]
    %v6506 = vld [vmem:[#allocation10 + $0xd0] sm:$0xff]
    %v6507 = vld [vmem:[#allocation10 + $0xd8] sm:$0xff]
    %v6508 = vld [vmem:[#allocation10 + $0xe0] sm:$0xff]
    %v6509 = vld [vmem:[#allocation10 + $0xe8] sm:$0xff]
    %v6510 = vld [vmem:[#allocation10 + $0xf0] sm:$0xff]
    %v6511 = vld [vmem:[#allocation10 + $0xf8] sm:$0xff]
    %v6512 = vld [vmem:[#allocation10 + $0x100] sm:$0xff]
    %v6513 = vld [vmem:[#allocation10 + $0x108] sm:$0xff]
    %v6514 = vld [vmem:[#allocation10 + $0x110] sm:$0xff]
    %v6515 = vld [vmem:[#allocation10 + $0x118] sm:$0xff]
    %v6516 = vld [vmem:[#allocation10 + $0x120] sm:$0xff]
    %v6517 = vld [vmem:[#allocation10 + $0x128] sm:$0xff]
    %v6518 = vld [vmem:[#allocation10 + $0x130] sm:$0xff]
    %v6519 = vld [vmem:[#allocation10 + $0x138] sm:$0xff]
    %v6520 = vld [vmem:[#allocation10 + $0x140] sm:$0xff]
    %v6521 = vld [vmem:[#allocation10 + $0x148] sm:$0xff]
    %v6522 = vld [vmem:[#allocation10 + $0x150] sm:$0xff]
    %v6523 = vld [vmem:[#allocation10 + $0x158] sm:$0xff]
    %v6524 = vld [vmem:[#allocation10 + $0x160] sm:$0xff]
    %v6525 = vld [vmem:[#allocation10 + $0x168] sm:$0xff]
    %v6526 = vld [vmem:[#allocation10 + $0x170] sm:$0xff]
    %v6527 = vld [vmem:[#allocation10 + $0x178] sm:$0xff]
    %v6528 = vld [vmem:[#allocation10 + $0x180] sm:$0xff]
    %v6529 = vld [vmem:[#allocation10 + $0x188] sm:$0xff]
    %v6530 = vld [vmem:[#allocation10 + $0x190] sm:$0xff]
    %v6531 = vld [vmem:[#allocation10 + $0x198] sm:$0xff]
    %v6532 = vld [vmem:[#allocation10 + $0x1a0] sm:$0xff]
    %v6533 = vld [vmem:[#allocation10 + $0x1a8] sm:$0xff]
    %v6534 = vld [vmem:[#allocation10 + $0x1b0] sm:$0xff]
    %v6535 = vld [vmem:[#allocation10 + $0x1b8] sm:$0xff]
    %v6536 = vld [vmem:[#allocation10 + $0x1c0] sm:$0xff]
    %v6537 = vld [vmem:[#allocation10 + $0x1c8] sm:$0xff]
    %v6538 = vld [vmem:[#allocation10 + $0x1d0] sm:$0xff]
    %v6539 = vld [vmem:[#allocation10 + $0x1d8] sm:$0xff]
    %v6540 = vld [vmem:[#allocation10 + $0x1e0] sm:$0xff]
    %v6541 = vld [vmem:[#allocation10 + $0x1e8] sm:$0xff]
    %v6542 = vld [vmem:[#allocation10 + $0x1f0] sm:$0xff]
    %v6543 = vld [vmem:[#allocation10 + $0x1f8] sm:$0xff]
    %v6544 = vld [vmem:[#allocation10 + $0x200] sm:$0xff]
    %v6545 = vld [vmem:[#allocation10 + $0x208] sm:$0xff]
    %v6546 = vld [vmem:[#allocation10 + $0x210] sm:$0xff]
    %v6547 = vld [vmem:[#allocation10 + $0x218] sm:$0xff]
    %v6548 = vld [vmem:[#allocation10 + $0x220] sm:$0xff]
    %v6549 = vld [vmem:[#allocation10 + $0x228] sm:$0xff]
    %v6550 = vld [vmem:[#allocation10 + $0x230] sm:$0xff]
    %v6551 = vld [vmem:[#allocation10 + $0x238] sm:$0xff]
    %v6552 = vld [vmem:[#allocation10 + $0x240] sm:$0xff]
    %v6553 = vld [vmem:[#allocation10 + $0x248] sm:$0xff]
    %v6554 = vld [vmem:[#allocation10 + $0x250] sm:$0xff]
    %v6555 = vld [vmem:[#allocation10 + $0x258] sm:$0xff]
    %v6556 = vld [vmem:[#allocation10 + $0x260] sm:$0xff]
    %v6557 = vld [vmem:[#allocation10 + $0x268] sm:$0xff]
    %v6558 = vld [vmem:[#allocation10 + $0x270] sm:$0xff]
    %v6559 = vld [vmem:[#allocation10 + $0x278] sm:$0xff]
    %v6560 = vld [vmem:[#allocation10 + $0x280] sm:$0xff]
    %v6561 = vld [vmem:[#allocation10 + $0x288] sm:$0xff]
    %v6562 = vld [vmem:[#allocation10 + $0x290] sm:$0xff]
    %v6563 = vld [vmem:[#allocation10 + $0x298] sm:$0xff]
    %v6564 = vld [vmem:[#allocation10 + $0x2a0] sm:$0xff]
    %v6565 = vld [vmem:[#allocation10 + $0x2a8] sm:$0xff]
    %v6566 = vld [vmem:[#allocation10 + $0x2b0] sm:$0xff]
    %v6567 = vld [vmem:[#allocation10 + $0x2b8] sm:$0xff]
    %v6568 = vld [vmem:[#allocation10 + $0x2c0] sm:$0xff]
    %v6569 = vld [vmem:[#allocation10 + $0x2c8] sm:$0xff]
    %v6570 = vld [vmem:[#allocation10 + $0x2d0] sm:$0xff]
    %v6571 = vld [vmem:[#allocation10 + $0x2d8] sm:$0xff]
    %v6572 = vld [vmem:[#allocation10 + $0x2e0] sm:$0xff]
    %v6573 = vld [vmem:[#allocation10 + $0x2e8] sm:$0xff]
    %v6574 = vld [vmem:[#allocation10 + $0x2f0] sm:$0xff]
    %v6575 = vld [vmem:[#allocation10 + $0x2f8] sm:$0xff]
    %v6576 = vld [vmem:[#allocation10 + $0x300] sm:$0xff]
    %v6577 = vld [vmem:[#allocation10 + $0x308] sm:$0xff]
    %v6578 = vld [vmem:[#allocation10 + $0x310] sm:$0xff]
    %v6579 = vld [vmem:[#allocation10 + $0x318] sm:$0xff]
    %v6580 = vld [vmem:[#allocation10 + $0x320] sm:$0xff]
    %v6581 = vld [vmem:[#allocation10 + $0x328] sm:$0xff]
    %v6582 = vld [vmem:[#allocation10 + $0x330] sm:$0xff]
    %v6583 = vld [vmem:[#allocation10 + $0x338] sm:$0xff]
    %v6584 = vld [vmem:[#allocation10 + $0x340] sm:$0xff]
    %v6585 = vld [vmem:[#allocation10 + $0x348] sm:$0xff]
    %v6586 = vld [vmem:[#allocation10 + $0x350] sm:$0xff]
    %v6587 = vld [vmem:[#allocation10 + $0x358] sm:$0xff]
    %v6588 = vld [vmem:[#allocation10 + $0x360] sm:$0xff]
    %v6589 = vld [vmem:[#allocation10 + $0x368] sm:$0xff]
    %v6590 = vld [vmem:[#allocation10 + $0x370] sm:$0xff]
    %v6591 = vld [vmem:[#allocation10 + $0x378] sm:$0xff]
    %v6592 = vld [vmem:[#allocation10 + $0x380] sm:$0xff]
    %v6593 = vld [vmem:[#allocation10 + $0x388] sm:$0xff]
    %v6594 = vld [vmem:[#allocation10 + $0x390] sm:$0xff]
    %v6595 = vld [vmem:[#allocation10 + $0x398] sm:$0xff]
    %v6596 = vld [vmem:[#allocation10 + $0x3a0] sm:$0xff]
    %v6597 = vld [vmem:[#allocation10 + $0x3a8] sm:$0xff]
    %v6598 = vld [vmem:[#allocation10 + $0x3b0] sm:$0xff]
    %v6599 = vld [vmem:[#allocation10 + $0x3b8] sm:$0xff]
    %v6600 = vld [vmem:[#allocation10 + $0x3c0] sm:$0xff]
    %v6601 = vld [vmem:[#allocation10 + $0x3c8] sm:$0xff]
    %v6602 = vld [vmem:[#allocation10 + $0x3d0] sm:$0xff]
    %v6603 = vld [vmem:[#allocation10 + $0x3d8] sm:$0xff]
    %v6604 = vld [vmem:[#allocation10 + $0x3e0] sm:$0xff]
    %v6605 = vld [vmem:[#allocation10 + $0x3e8] sm:$0xff]
    %v6606 = vld [vmem:[#allocation10 + $0x3f0] sm:$0xff]
    %v6607 = vld [vmem:[#allocation10 + $0x3f8] sm:$0xff]
    %v6608 = vld [vmem:[#allocation10 + $0x400] sm:$0xff]
    %v6609 = vld [vmem:[#allocation10 + $0x408] sm:$0xff]
    %v6610 = vld [vmem:[#allocation10 + $0x410] sm:$0xff]
    %v6611 = vld [vmem:[#allocation10 + $0x418] sm:$0xff]
    %v6612 = vld [vmem:[#allocation10 + $0x420] sm:$0xff]
    %v6613 = vld [vmem:[#allocation10 + $0x428] sm:$0xff]
    %v6614 = vld [vmem:[#allocation10 + $0x430] sm:$0xff]
    %v6615 = vld [vmem:[#allocation10 + $0x438] sm:$0xff]
    %v6616 = vld [vmem:[#allocation10 + $0x440] sm:$0xff]
    %v6617 = vld [vmem:[#allocation10 + $0x448] sm:$0xff]
    %v6618 = vld [vmem:[#allocation10 + $0x450] sm:$0xff]
    %v6619 = vld [vmem:[#allocation10 + $0x458] sm:$0xff]
    %v6620 = vld [vmem:[#allocation10 + $0x460] sm:$0xff]
    %v6621 = vld [vmem:[#allocation10 + $0x468] sm:$0xff]
    %v6622 = vld [vmem:[#allocation10 + $0x470] sm:$0xff]
    %v6623 = vld [vmem:[#allocation10 + $0x478] sm:$0xff]
    %v6624 = vld [vmem:[#allocation10 + $0x480] sm:$0xff]
    %v6625 = vld [vmem:[#allocation10 + $0x488] sm:$0xff]
    %v6626 = vld [vmem:[#allocation10 + $0x490] sm:$0xff]
    %v6627 = vld [vmem:[#allocation10 + $0x498] sm:$0xff]
    %v6628 = vld [vmem:[#allocation10 + $0x4a0] sm:$0xff]
    %v6629 = vld [vmem:[#allocation10 + $0x4a8] sm:$0xff]
    %v6630 = vld [vmem:[#allocation10 + $0x4b0] sm:$0xff]
    %v6631 = vld [vmem:[#allocation10 + $0x4b8] sm:$0xff]
    %v6632 = vld [vmem:[#allocation10 + $0x4c0] sm:$0xff]
    %v6633 = vld [vmem:[#allocation10 + $0x4c8] sm:$0xff]
    %v6634 = vld [vmem:[#allocation10 + $0x4d0] sm:$0xff]
    %v6635 = vld [vmem:[#allocation10 + $0x4d8] sm:$0xff]
    %v6636 = vld [vmem:[#allocation10 + $0x4e0] sm:$0xff]
    %v6637 = vld [vmem:[#allocation10 + $0x4e8] sm:$0xff]
    %v6638 = vld [vmem:[#allocation10 + $0x4f0] sm:$0xff]
    %v6639 = vld [vmem:[#allocation10 + $0x4f8] sm:$0xff]
    %v6640 = vld [vmem:[#allocation10 + $0x500] sm:$0xff]
    %v6641 = vld [vmem:[#allocation10 + $0x508] sm:$0xff]
    %v6642 = vld [vmem:[#allocation10 + $0x510] sm:$0xff]
    %v6643 = vld [vmem:[#allocation10 + $0x518] sm:$0xff]
    %v6644 = vld [vmem:[#allocation10 + $0x520] sm:$0xff]
    %v6645 = vld [vmem:[#allocation10 + $0x528] sm:$0xff]
    %v6646 = vld [vmem:[#allocation10 + $0x530] sm:$0xff]
    %v6647 = vld [vmem:[#allocation10 + $0x538] sm:$0xff]
    %v6648 = vld [vmem:[#allocation10 + $0x540] sm:$0xff]
    %v6649 = vld [vmem:[#allocation10 + $0x548] sm:$0xff]
    %v6650 = vld [vmem:[#allocation10 + $0x550] sm:$0xff]
    %v6651 = vld [vmem:[#allocation10 + $0x558] sm:$0xff]
    %v6652 = vld [vmem:[#allocation10 + $0x560] sm:$0xff]
    %v6653 = vld [vmem:[#allocation10 + $0x568] sm:$0xff]
    %v6654 = vld [vmem:[#allocation10 + $0x570] sm:$0xff]
    %v6655 = vld [vmem:[#allocation10 + $0x578] sm:$0xff]
    %v6656 = vld [vmem:[#allocation10 + $0x580] sm:$0xff]
    %v6657 = vld [vmem:[#allocation10 + $0x588] sm:$0xff]
    %v6658 = vld [vmem:[#allocation10 + $0x590] sm:$0xff]
    %v6659 = vld [vmem:[#allocation10 + $0x598] sm:$0xff]
    %v6660 = vld [vmem:[#allocation10 + $0x5a0] sm:$0xff]
    %v6661 = vld [vmem:[#allocation10 + $0x5a8] sm:$0xff]
    %v6662 = vld [vmem:[#allocation10 + $0x5b0] sm:$0xff]
    %v6663 = vld [vmem:[#allocation10 + $0x5b8] sm:$0xff]
    %v6664 = vld [vmem:[#allocation10 + $0x5c0] sm:$0xff]
    %v6665 = vld [vmem:[#allocation10 + $0x5c8] sm:$0xff]
    %v6666 = vld [vmem:[#allocation10 + $0x5d0] sm:$0xff]
    %v6667 = vld [vmem:[#allocation10 + $0x5d8] sm:$0xff]
    %v6668 = vld [vmem:[#allocation10 + $0x5e0] sm:$0xff]
    %v6669 = vld [vmem:[#allocation10 + $0x5e8] sm:$0xff]
    %v6670 = vld [vmem:[#allocation10 + $0x5f0] sm:$0xff]
    %v6671 = vld [vmem:[#allocation10 + $0x5f8] sm:$0xff]
    %v6672 = vld [vmem:[#allocation10 + $0x600] sm:$0xff]
    %v6673 = vld [vmem:[#allocation10 + $0x608] sm:$0xff]
    %v6674 = vld [vmem:[#allocation10 + $0x610] sm:$0xff]
    %v6675 = vld [vmem:[#allocation10 + $0x618] sm:$0xff]
    %v6676 = vld [vmem:[#allocation10 + $0x620] sm:$0xff]
    %v6677 = vld [vmem:[#allocation10 + $0x628] sm:$0xff]
    %v6678 = vld [vmem:[#allocation10 + $0x630] sm:$0xff]
    %v6679 = vld [vmem:[#allocation10 + $0x638] sm:$0xff]
    %v6680 = vld [vmem:[#allocation10 + $0x640] sm:$0xff]
    %v6681 = vld [vmem:[#allocation10 + $0x648] sm:$0xff]
    %v6682 = vld [vmem:[#allocation10 + $0x650] sm:$0xff]
    %v6683 = vld [vmem:[#allocation10 + $0x658] sm:$0xff]
    %v6684 = vld [vmem:[#allocation10 + $0x660] sm:$0xff]
    %v6685 = vld [vmem:[#allocation10 + $0x668] sm:$0xff]
    %v6686 = vld [vmem:[#allocation10 + $0x670] sm:$0xff]
    %v6687 = vld [vmem:[#allocation10 + $0x678] sm:$0xff]
    %v6688 = vld [vmem:[#allocation10 + $0x680] sm:$0xff]
    %v6689 = vld [vmem:[#allocation10 + $0x688] sm:$0xff]
    %v6690 = vld [vmem:[#allocation10 + $0x690] sm:$0xff]
    %v6691 = vld [vmem:[#allocation10 + $0x698] sm:$0xff]
    %v6692 = vld [vmem:[#allocation10 + $0x6a0] sm:$0xff]
    %v6693 = vld [vmem:[#allocation10 + $0x6a8] sm:$0xff]
    %v6694 = vld [vmem:[#allocation10 + $0x6b0] sm:$0xff]
    %v6695 = vld [vmem:[#allocation10 + $0x6b8] sm:$0xff]
    %v6696 = vld [vmem:[#allocation10 + $0x6c0] sm:$0xff]
    %v6697 = vld [vmem:[#allocation10 + $0x6c8] sm:$0xff]
    %v6698 = vld [vmem:[#allocation10 + $0x6d0] sm:$0xff]
    %v6699 = vld [vmem:[#allocation10 + $0x6d8] sm:$0xff]
    %v6700 = vld [vmem:[#allocation10 + $0x6e0] sm:$0xff]
    %v6701 = vld [vmem:[#allocation10 + $0x6e8] sm:$0xff]
    %v6702 = vld [vmem:[#allocation10 + $0x6f0] sm:$0xff]
    %v6703 = vld [vmem:[#allocation10 + $0x6f8] sm:$0xff]
    %v6704 = vld [vmem:[#allocation10 + $0x700] sm:$0xff]
    %v6705 = vld [vmem:[#allocation10 + $0x708] sm:$0xff]
    %v6706 = vld [vmem:[#allocation10 + $0x710] sm:$0xff]
    %v6707 = vld [vmem:[#allocation10 + $0x718] sm:$0xff]
    %v6708 = vld [vmem:[#allocation10 + $0x720] sm:$0xff]
    %v6709 = vld [vmem:[#allocation10 + $0x728] sm:$0xff]
    %v6710 = vld [vmem:[#allocation10 + $0x730] sm:$0xff]
    %v6711 = vld [vmem:[#allocation10 + $0x738] sm:$0xff]
    %v6712 = vld [vmem:[#allocation10 + $0x740] sm:$0xff]
    %v6713 = vld [vmem:[#allocation10 + $0x748] sm:$0xff]
    %v6714 = vld [vmem:[#allocation10 + $0x750] sm:$0xff]
    %v6715 = vld [vmem:[#allocation10 + $0x758] sm:$0xff]
    %v6716 = vld [vmem:[#allocation10 + $0x760] sm:$0xff]
    %v6717 = vld [vmem:[#allocation10 + $0x768] sm:$0xff]
    %v6718 = vld [vmem:[#allocation10 + $0x770] sm:$0xff]
    %v6719 = vld [vmem:[#allocation10 + $0x778] sm:$0xff]
    %v6720 = vld [vmem:[#allocation10 + $0x780] sm:$0xff]
    %v6721 = vld [vmem:[#allocation10 + $0x788] sm:$0xff]
    %v6722 = vld [vmem:[#allocation10 + $0x790] sm:$0xff]
    %v6723 = vld [vmem:[#allocation10 + $0x798] sm:$0xff]
    %v6724 = vld [vmem:[#allocation10 + $0x7a0] sm:$0xff]
    %v6725 = vld [vmem:[#allocation10 + $0x7a8] sm:$0xff]
    %v6726 = vld [vmem:[#allocation10 + $0x7b0] sm:$0xff]
    %v6727 = vld [vmem:[#allocation10 + $0x7b8] sm:$0xff]
    %v6728 = vld [vmem:[#allocation10 + $0x7c0] sm:$0xff]
    %v6729 = vld [vmem:[#allocation10 + $0x7c8] sm:$0xff]
    %v6730 = vld [vmem:[#allocation10 + $0x7d0] sm:$0xff]
    %v6731 = vld [vmem:[#allocation10 + $0x7d8] sm:$0xff]
    %v6732 = vld [vmem:[#allocation10 + $0x7e0] sm:$0xff]
    %v6733 = vld [vmem:[#allocation10 + $0x7e8] sm:$0xff]
    %v6734 = vld [vmem:[#allocation10 + $0x7f0] sm:$0xff]
    %v6735 = vld [vmem:[#allocation10 + $0x7f8] sm:$0xff]
    %v6736 = vld [vmem:[#allocation11] sm:$0xf]
    %v6738 = vlaneseq
    %v6739 = vshrl.u32 %v6738, 7
    %v6740 = vsub.s32 0, %v6739
    %v6741 = vrot.slane %v6736, %v6740
    %v6742 = vlaneseq
    %v6743 = vshrl.u32 %v6742, 7
    %v6744 = vsub.s32 1, %v6743
    %v6745 = vrot.slane %v6736, %v6744
    %v6746 = vlaneseq
    %v6747 = vshrl.u32 %v6746, 7
    %v6748 = vsub.s32 2, %v6747
    %v6749 = vrot.slane %v6736, %v6748
    %v6750 = vlaneseq
    %v6751 = vshrl.u32 %v6750, 7
    %v6752 = vsub.s32 3, %v6751
    %v6753 = vrot.slane %v6736, %v6752
    %v7014 = vunpack.c.l.b16 %v6480
    %v7015 = vunpack.c.h.b16 %v6480
    %v7016 = vunpack.c.l.b16 %v6481
    %v7017 = vunpack.c.h.b16 %v6481
    %v7018 = vunpack.c.l.b16 %v6482
    %v7019 = vunpack.c.h.b16 %v6482
    %v7020 = vunpack.c.l.b16 %v6483
    %v7021 = vunpack.c.h.b16 %v6483
    %v7022 = vunpack.c.l.b16 %v6484
    %v7023 = vunpack.c.h.b16 %v6484
    %v7024 = vunpack.c.l.b16 %v6485
    %v7025 = vunpack.c.h.b16 %v6485
    %v7026 = vunpack.c.l.b16 %v6486
    %v7027 = vunpack.c.h.b16 %v6486
    %v7028 = vunpack.c.l.b16 %v6487
    %v7029 = vunpack.c.h.b16 %v6487
    %v7030 = vunpack.c.l.b16 %v6488
    %v7031 = vunpack.c.h.b16 %v6488
    %v7032 = vunpack.c.l.b16 %v6489
    %v7033 = vunpack.c.h.b16 %v6489
    %v7034 = vunpack.c.l.b16 %v6490
    %v7035 = vunpack.c.h.b16 %v6490
    %v7036 = vunpack.c.l.b16 %v6491
    %v7037 = vunpack.c.h.b16 %v6491
    %v7038 = vunpack.c.l.b16 %v6492
    %v7039 = vunpack.c.h.b16 %v6492
    %v7040 = vunpack.c.l.b16 %v6493
    %v7041 = vunpack.c.h.b16 %v6493
    %v7042 = vunpack.c.l.b16 %v6494
    %v7043 = vunpack.c.h.b16 %v6494
    %v7044 = vunpack.c.l.b16 %v6495
    %v7045 = vunpack.c.h.b16 %v6495
    %v7046 = vunpack.c.l.b16 %v6496
    %v7047 = vunpack.c.h.b16 %v6496
    %v7048 = vunpack.c.l.b16 %v6497
    %v7049 = vunpack.c.h.b16 %v6497
    %v7050 = vunpack.c.l.b16 %v6498
    %v7051 = vunpack.c.h.b16 %v6498
    %v7052 = vunpack.c.l.b16 %v6499
    %v7053 = vunpack.c.h.b16 %v6499
    %v7054 = vunpack.c.l.b16 %v6500
    %v7055 = vunpack.c.h.b16 %v6500
    %v7056 = vunpack.c.l.b16 %v6501
    %v7057 = vunpack.c.h.b16 %v6501
    %v7058 = vunpack.c.l.b16 %v6502
    %v7059 = vunpack.c.h.b16 %v6502
    %v7060 = vunpack.c.l.b16 %v6503
    %v7061 = vunpack.c.h.b16 %v6503
    %v7062 = vunpack.c.l.b16 %v6504
    %v7063 = vunpack.c.h.b16 %v6504
    %v7064 = vunpack.c.l.b16 %v6505
    %v7065 = vunpack.c.h.b16 %v6505
    %v7066 = vunpack.c.l.b16 %v6506
    %v7067 = vunpack.c.h.b16 %v6506
    %v7068 = vunpack.c.l.b16 %v6507
    %v7069 = vunpack.c.h.b16 %v6507
    %v7070 = vunpack.c.l.b16 %v6508
    %v7071 = vunpack.c.h.b16 %v6508
    %v7072 = vunpack.c.l.b16 %v6509
    %v7073 = vunpack.c.h.b16 %v6509
    %v7074 = vunpack.c.l.b16 %v6510
    %v7075 = vunpack.c.h.b16 %v6510
    %v7076 = vunpack.c.l.b16 %v6511
    %v7077 = vunpack.c.h.b16 %v6511
    %v7078 = vunpack.c.l.b16 %v6512
    %v7079 = vunpack.c.h.b16 %v6512
    %v7080 = vunpack.c.l.b16 %v6513
    %v7081 = vunpack.c.h.b16 %v6513
    %v7082 = vunpack.c.l.b16 %v6514
    %v7083 = vunpack.c.h.b16 %v6514
    %v7084 = vunpack.c.l.b16 %v6515
    %v7085 = vunpack.c.h.b16 %v6515
    %v7086 = vunpack.c.l.b16 %v6516
    %v7087 = vunpack.c.h.b16 %v6516
    %v7088 = vunpack.c.l.b16 %v6517
    %v7089 = vunpack.c.h.b16 %v6517
    %v7090 = vunpack.c.l.b16 %v6518
    %v7091 = vunpack.c.h.b16 %v6518
    %v7092 = vunpack.c.l.b16 %v6519
    %v7093 = vunpack.c.h.b16 %v6519
    %v7094 = vunpack.c.l.b16 %v6520
    %v7095 = vunpack.c.h.b16 %v6520
    %v7096 = vunpack.c.l.b16 %v6521
    %v7097 = vunpack.c.h.b16 %v6521
    %v7098 = vunpack.c.l.b16 %v6522
    %v7099 = vunpack.c.h.b16 %v6522
    %v7100 = vunpack.c.l.b16 %v6523
    %v7101 = vunpack.c.h.b16 %v6523
    %v7102 = vunpack.c.l.b16 %v6524
    %v7103 = vunpack.c.h.b16 %v6524
    %v7104 = vunpack.c.l.b16 %v6525
    %v7105 = vunpack.c.h.b16 %v6525
    %v7106 = vunpack.c.l.b16 %v6526
    %v7107 = vunpack.c.h.b16 %v6526
    %v7108 = vunpack.c.l.b16 %v6527
    %v7109 = vunpack.c.h.b16 %v6527
    %v7110 = vunpack.c.l.b16 %v6528
    %v7111 = vunpack.c.h.b16 %v6528
    %v7112 = vunpack.c.l.b16 %v6529
    %v7113 = vunpack.c.h.b16 %v6529
    %v7114 = vunpack.c.l.b16 %v6530
    %v7115 = vunpack.c.h.b16 %v6530
    %v7116 = vunpack.c.l.b16 %v6531
    %v7117 = vunpack.c.h.b16 %v6531
    %v7118 = vunpack.c.l.b16 %v6532
    %v7119 = vunpack.c.h.b16 %v6532
    %v7120 = vunpack.c.l.b16 %v6533
    %v7121 = vunpack.c.h.b16 %v6533
    %v7122 = vunpack.c.l.b16 %v6534
    %v7123 = vunpack.c.h.b16 %v6534
    %v7124 = vunpack.c.l.b16 %v6535
    %v7125 = vunpack.c.h.b16 %v6535
    %v7126 = vunpack.c.l.b16 %v6536
    %v7127 = vunpack.c.h.b16 %v6536
    %v7128 = vunpack.c.l.b16 %v6537
    %v7129 = vunpack.c.h.b16 %v6537
    %v7130 = vunpack.c.l.b16 %v6538
    %v7131 = vunpack.c.h.b16 %v6538
    %v7132 = vunpack.c.l.b16 %v6539
    %v7133 = vunpack.c.h.b16 %v6539
    %v7134 = vunpack.c.l.b16 %v6540
    %v7135 = vunpack.c.h.b16 %v6540
    %v7136 = vunpack.c.l.b16 %v6541
    %v7137 = vunpack.c.h.b16 %v6541
    %v7138 = vunpack.c.l.b16 %v6542
    %v7139 = vunpack.c.h.b16 %v6542
    %v7140 = vunpack.c.l.b16 %v6543
    %v7141 = vunpack.c.h.b16 %v6543
    %v7142 = vunpack.c.l.b16 %v6544
    %v7143 = vunpack.c.h.b16 %v6544
    %v7144 = vunpack.c.l.b16 %v6545
    %v7145 = vunpack.c.h.b16 %v6545
    %v7146 = vunpack.c.l.b16 %v6546
    %v7147 = vunpack.c.h.b16 %v6546
    %v7148 = vunpack.c.l.b16 %v6547
    %v7149 = vunpack.c.h.b16 %v6547
    %v7150 = vunpack.c.l.b16 %v6548
    %v7151 = vunpack.c.h.b16 %v6548
    %v7152 = vunpack.c.l.b16 %v6549
    %v7153 = vunpack.c.h.b16 %v6549
    %v7154 = vunpack.c.l.b16 %v6550
    %v7155 = vunpack.c.h.b16 %v6550
    %v7156 = vunpack.c.l.b16 %v6551
    %v7157 = vunpack.c.h.b16 %v6551
    %v7158 = vunpack.c.l.b16 %v6552
    %v7159 = vunpack.c.h.b16 %v6552
    %v7160 = vunpack.c.l.b16 %v6553
    %v7161 = vunpack.c.h.b16 %v6553
    %v7162 = vunpack.c.l.b16 %v6554
    %v7163 = vunpack.c.h.b16 %v6554
    %v7164 = vunpack.c.l.b16 %v6555
    %v7165 = vunpack.c.h.b16 %v6555
    %v7166 = vunpack.c.l.b16 %v6556
    %v7167 = vunpack.c.h.b16 %v6556
    %v7168 = vunpack.c.l.b16 %v6557
    %v7169 = vunpack.c.h.b16 %v6557
    %v7170 = vunpack.c.l.b16 %v6558
    %v7171 = vunpack.c.h.b16 %v6558
    %v7172 = vunpack.c.l.b16 %v6559
    %v7173 = vunpack.c.h.b16 %v6559
    %v7174 = vunpack.c.l.b16 %v6560
    %v7175 = vunpack.c.h.b16 %v6560
    %v7176 = vunpack.c.l.b16 %v6561
    %v7177 = vunpack.c.h.b16 %v6561
    %v7178 = vunpack.c.l.b16 %v6562
    %v7179 = vunpack.c.h.b16 %v6562
    %v7180 = vunpack.c.l.b16 %v6563
    %v7181 = vunpack.c.h.b16 %v6563
    %v7182 = vunpack.c.l.b16 %v6564
    %v7183 = vunpack.c.h.b16 %v6564
    %v7184 = vunpack.c.l.b16 %v6565
    %v7185 = vunpack.c.h.b16 %v6565
    %v7186 = vunpack.c.l.b16 %v6566
    %v7187 = vunpack.c.h.b16 %v6566
    %v7188 = vunpack.c.l.b16 %v6567
    %v7189 = vunpack.c.h.b16 %v6567
    %v7190 = vunpack.c.l.b16 %v6568
    %v7191 = vunpack.c.h.b16 %v6568
    %v7192 = vunpack.c.l.b16 %v6569
    %v7193 = vunpack.c.h.b16 %v6569
    %v7194 = vunpack.c.l.b16 %v6570
    %v7195 = vunpack.c.h.b16 %v6570
    %v7196 = vunpack.c.l.b16 %v6571
    %v7197 = vunpack.c.h.b16 %v6571
    %v7198 = vunpack.c.l.b16 %v6572
    %v7199 = vunpack.c.h.b16 %v6572
    %v7200 = vunpack.c.l.b16 %v6573
    %v7201 = vunpack.c.h.b16 %v6573
    %v7202 = vunpack.c.l.b16 %v6574
    %v7203 = vunpack.c.h.b16 %v6574
    %v7204 = vunpack.c.l.b16 %v6575
    %v7205 = vunpack.c.h.b16 %v6575
    %v7206 = vunpack.c.l.b16 %v6576
    %v7207 = vunpack.c.h.b16 %v6576
    %v7208 = vunpack.c.l.b16 %v6577
    %v7209 = vunpack.c.h.b16 %v6577
    %v7210 = vunpack.c.l.b16 %v6578
    %v7211 = vunpack.c.h.b16 %v6578
    %v7212 = vunpack.c.l.b16 %v6579
    %v7213 = vunpack.c.h.b16 %v6579
    %v7214 = vunpack.c.l.b16 %v6580
    %v7215 = vunpack.c.h.b16 %v6580
    %v7216 = vunpack.c.l.b16 %v6581
    %v7217 = vunpack.c.h.b16 %v6581
    %v7218 = vunpack.c.l.b16 %v6582
    %v7219 = vunpack.c.h.b16 %v6582
    %v7220 = vunpack.c.l.b16 %v6583
    %v7221 = vunpack.c.h.b16 %v6583
    %v7222 = vunpack.c.l.b16 %v6584
    %v7223 = vunpack.c.h.b16 %v6584
    %v7224 = vunpack.c.l.b16 %v6585
    %v7225 = vunpack.c.h.b16 %v6585
    %v7226 = vunpack.c.l.b16 %v6586
    %v7227 = vunpack.c.h.b16 %v6586
    %v7228 = vunpack.c.l.b16 %v6587
    %v7229 = vunpack.c.h.b16 %v6587
    %v7230 = vunpack.c.l.b16 %v6588
    %v7231 = vunpack.c.h.b16 %v6588
    %v7232 = vunpack.c.l.b16 %v6589
    %v7233 = vunpack.c.h.b16 %v6589
    %v7234 = vunpack.c.l.b16 %v6590
    %v7235 = vunpack.c.h.b16 %v6590
    %v7236 = vunpack.c.l.b16 %v6591
    %v7237 = vunpack.c.h.b16 %v6591
    %v7238 = vunpack.c.l.b16 %v6592
    %v7239 = vunpack.c.h.b16 %v6592
    %v7240 = vunpack.c.l.b16 %v6593
    %v7241 = vunpack.c.h.b16 %v6593
    %v7242 = vunpack.c.l.b16 %v6594
    %v7243 = vunpack.c.h.b16 %v6594
    %v7244 = vunpack.c.l.b16 %v6595
    %v7245 = vunpack.c.h.b16 %v6595
    %v7246 = vunpack.c.l.b16 %v6596
    %v7247 = vunpack.c.h.b16 %v6596
    %v7248 = vunpack.c.l.b16 %v6597
    %v7249 = vunpack.c.h.b16 %v6597
    %v7250 = vunpack.c.l.b16 %v6598
    %v7251 = vunpack.c.h.b16 %v6598
    %v7252 = vunpack.c.l.b16 %v6599
    %v7253 = vunpack.c.h.b16 %v6599
    %v7254 = vunpack.c.l.b16 %v6600
    %v7255 = vunpack.c.h.b16 %v6600
    %v7256 = vunpack.c.l.b16 %v6601
    %v7257 = vunpack.c.h.b16 %v6601
    %v7258 = vunpack.c.l.b16 %v6602
    %v7259 = vunpack.c.h.b16 %v6602
    %v7260 = vunpack.c.l.b16 %v6603
    %v7261 = vunpack.c.h.b16 %v6603
    %v7262 = vunpack.c.l.b16 %v6604
    %v7263 = vunpack.c.h.b16 %v6604
    %v7264 = vunpack.c.l.b16 %v6605
    %v7265 = vunpack.c.h.b16 %v6605
    %v7266 = vunpack.c.l.b16 %v6606
    %v7267 = vunpack.c.h.b16 %v6606
    %v7268 = vunpack.c.l.b16 %v6607
    %v7269 = vunpack.c.h.b16 %v6607
    %v7270 = vunpack.c.l.b16 %v6608
    %v7271 = vunpack.c.h.b16 %v6608
    %v7272 = vunpack.c.l.b16 %v6609
    %v7273 = vunpack.c.h.b16 %v6609
    %v7274 = vunpack.c.l.b16 %v6610
    %v7275 = vunpack.c.h.b16 %v6610
    %v7276 = vunpack.c.l.b16 %v6611
    %v7277 = vunpack.c.h.b16 %v6611
    %v7278 = vunpack.c.l.b16 %v6612
    %v7279 = vunpack.c.h.b16 %v6612
    %v7280 = vunpack.c.l.b16 %v6613
    %v7281 = vunpack.c.h.b16 %v6613
    %v7282 = vunpack.c.l.b16 %v6614
    %v7283 = vunpack.c.h.b16 %v6614
    %v7284 = vunpack.c.l.b16 %v6615
    %v7285 = vunpack.c.h.b16 %v6615
    %v7286 = vunpack.c.l.b16 %v6616
    %v7287 = vunpack.c.h.b16 %v6616
    %v7288 = vunpack.c.l.b16 %v6617
    %v7289 = vunpack.c.h.b16 %v6617
    %v7290 = vunpack.c.l.b16 %v6618
    %v7291 = vunpack.c.h.b16 %v6618
    %v7292 = vunpack.c.l.b16 %v6619
    %v7293 = vunpack.c.h.b16 %v6619
    %v7294 = vunpack.c.l.b16 %v6620
    %v7295 = vunpack.c.h.b16 %v6620
    %v7296 = vunpack.c.l.b16 %v6621
    %v7297 = vunpack.c.h.b16 %v6621
    %v7298 = vunpack.c.l.b16 %v6622
    %v7299 = vunpack.c.h.b16 %v6622
    %v7300 = vunpack.c.l.b16 %v6623
    %v7301 = vunpack.c.h.b16 %v6623
    %v7302 = vunpack.c.l.b16 %v6624
    %v7303 = vunpack.c.h.b16 %v6624
    %v7304 = vunpack.c.l.b16 %v6625
    %v7305 = vunpack.c.h.b16 %v6625
    %v7306 = vunpack.c.l.b16 %v6626
    %v7307 = vunpack.c.h.b16 %v6626
    %v7308 = vunpack.c.l.b16 %v6627
    %v7309 = vunpack.c.h.b16 %v6627
    %v7310 = vunpack.c.l.b16 %v6628
    %v7311 = vunpack.c.h.b16 %v6628
    %v7312 = vunpack.c.l.b16 %v6629
    %v7313 = vunpack.c.h.b16 %v6629
    %v7314 = vunpack.c.l.b16 %v6630
    %v7315 = vunpack.c.h.b16 %v6630
    %v7316 = vunpack.c.l.b16 %v6631
    %v7317 = vunpack.c.h.b16 %v6631
    %v7318 = vunpack.c.l.b16 %v6632
    %v7319 = vunpack.c.h.b16 %v6632
    %v7320 = vunpack.c.l.b16 %v6633
    %v7321 = vunpack.c.h.b16 %v6633
    %v7322 = vunpack.c.l.b16 %v6634
    %v7323 = vunpack.c.h.b16 %v6634
    %v7324 = vunpack.c.l.b16 %v6635
    %v7325 = vunpack.c.h.b16 %v6635
    %v7326 = vunpack.c.l.b16 %v6636
    %v7327 = vunpack.c.h.b16 %v6636
    %v7328 = vunpack.c.l.b16 %v6637
    %v7329 = vunpack.c.h.b16 %v6637
    %v7330 = vunpack.c.l.b16 %v6638
    %v7331 = vunpack.c.h.b16 %v6638
    %v7332 = vunpack.c.l.b16 %v6639
    %v7333 = vunpack.c.h.b16 %v6639
    %v7334 = vunpack.c.l.b16 %v6640
    %v7335 = vunpack.c.h.b16 %v6640
    %v7336 = vunpack.c.l.b16 %v6641
    %v7337 = vunpack.c.h.b16 %v6641
    %v7338 = vunpack.c.l.b16 %v6642
    %v7339 = vunpack.c.h.b16 %v6642
    %v7340 = vunpack.c.l.b16 %v6643
    %v7341 = vunpack.c.h.b16 %v6643
    %v7342 = vunpack.c.l.b16 %v6644
    %v7343 = vunpack.c.h.b16 %v6644
    %v7344 = vunpack.c.l.b16 %v6645
    %v7345 = vunpack.c.h.b16 %v6645
    %v7346 = vunpack.c.l.b16 %v6646
    %v7347 = vunpack.c.h.b16 %v6646
    %v7348 = vunpack.c.l.b16 %v6647
    %v7349 = vunpack.c.h.b16 %v6647
    %v7350 = vunpack.c.l.b16 %v6648
    %v7351 = vunpack.c.h.b16 %v6648
    %v7352 = vunpack.c.l.b16 %v6649
    %v7353 = vunpack.c.h.b16 %v6649
    %v7354 = vunpack.c.l.b16 %v6650
    %v7355 = vunpack.c.h.b16 %v6650
    %v7356 = vunpack.c.l.b16 %v6651
    %v7357 = vunpack.c.h.b16 %v6651
    %v7358 = vunpack.c.l.b16 %v6652
    %v7359 = vunpack.c.h.b16 %v6652
    %v7360 = vunpack.c.l.b16 %v6653
    %v7361 = vunpack.c.h.b16 %v6653
    %v7362 = vunpack.c.l.b16 %v6654
    %v7363 = vunpack.c.h.b16 %v6654
    %v7364 = vunpack.c.l.b16 %v6655
    %v7365 = vunpack.c.h.b16 %v6655
    %v7366 = vunpack.c.l.b16 %v6656
    %v7367 = vunpack.c.h.b16 %v6656
    %v7368 = vunpack.c.l.b16 %v6657
    %v7369 = vunpack.c.h.b16 %v6657
    %v7370 = vunpack.c.l.b16 %v6658
    %v7371 = vunpack.c.h.b16 %v6658
    %v7372 = vunpack.c.l.b16 %v6659
    %v7373 = vunpack.c.h.b16 %v6659
    %v7374 = vunpack.c.l.b16 %v6660
    %v7375 = vunpack.c.h.b16 %v6660
    %v7376 = vunpack.c.l.b16 %v6661
    %v7377 = vunpack.c.h.b16 %v6661
    %v7378 = vunpack.c.l.b16 %v6662
    %v7379 = vunpack.c.h.b16 %v6662
    %v7380 = vunpack.c.l.b16 %v6663
    %v7381 = vunpack.c.h.b16 %v6663
    %v7382 = vunpack.c.l.b16 %v6664
    %v7383 = vunpack.c.h.b16 %v6664
    %v7384 = vunpack.c.l.b16 %v6665
    %v7385 = vunpack.c.h.b16 %v6665
    %v7386 = vunpack.c.l.b16 %v6666
    %v7387 = vunpack.c.h.b16 %v6666
    %v7388 = vunpack.c.l.b16 %v6667
    %v7389 = vunpack.c.h.b16 %v6667
    %v7390 = vunpack.c.l.b16 %v6668
    %v7391 = vunpack.c.h.b16 %v6668
    %v7392 = vunpack.c.l.b16 %v6669
    %v7393 = vunpack.c.h.b16 %v6669
    %v7394 = vunpack.c.l.b16 %v6670
    %v7395 = vunpack.c.h.b16 %v6670
    %v7396 = vunpack.c.l.b16 %v6671
    %v7397 = vunpack.c.h.b16 %v6671
    %v7398 = vunpack.c.l.b16 %v6672
    %v7399 = vunpack.c.h.b16 %v6672
    %v7400 = vunpack.c.l.b16 %v6673
    %v7401 = vunpack.c.h.b16 %v6673
    %v7402 = vunpack.c.l.b16 %v6674
    %v7403 = vunpack.c.h.b16 %v6674
    %v7404 = vunpack.c.l.b16 %v6675
    %v7405 = vunpack.c.h.b16 %v6675
    %v7406 = vunpack.c.l.b16 %v6676
    %v7407 = vunpack.c.h.b16 %v6676
    %v7408 = vunpack.c.l.b16 %v6677
    %v7409 = vunpack.c.h.b16 %v6677
    %v7410 = vunpack.c.l.b16 %v6678
    %v7411 = vunpack.c.h.b16 %v6678
    %v7412 = vunpack.c.l.b16 %v6679
    %v7413 = vunpack.c.h.b16 %v6679
    %v7414 = vunpack.c.l.b16 %v6680
    %v7415 = vunpack.c.h.b16 %v6680
    %v7416 = vunpack.c.l.b16 %v6681
    %v7417 = vunpack.c.h.b16 %v6681
    %v7418 = vunpack.c.l.b16 %v6682
    %v7419 = vunpack.c.h.b16 %v6682
    %v7420 = vunpack.c.l.b16 %v6683
    %v7421 = vunpack.c.h.b16 %v6683
    %v7422 = vunpack.c.l.b16 %v6684
    %v7423 = vunpack.c.h.b16 %v6684
    %v7424 = vunpack.c.l.b16 %v6685
    %v7425 = vunpack.c.h.b16 %v6685
    %v7426 = vunpack.c.l.b16 %v6686
    %v7427 = vunpack.c.h.b16 %v6686
    %v7428 = vunpack.c.l.b16 %v6687
    %v7429 = vunpack.c.h.b16 %v6687
    %v7430 = vunpack.c.l.b16 %v6688
    %v7431 = vunpack.c.h.b16 %v6688
    %v7432 = vunpack.c.l.b16 %v6689
    %v7433 = vunpack.c.h.b16 %v6689
    %v7434 = vunpack.c.l.b16 %v6690
    %v7435 = vunpack.c.h.b16 %v6690
    %v7436 = vunpack.c.l.b16 %v6691
    %v7437 = vunpack.c.h.b16 %v6691
    %v7438 = vunpack.c.l.b16 %v6692
    %v7439 = vunpack.c.h.b16 %v6692
    %v7440 = vunpack.c.l.b16 %v6693
    %v7441 = vunpack.c.h.b16 %v6693
    %v7442 = vunpack.c.l.b16 %v6694
    %v7443 = vunpack.c.h.b16 %v6694
    %v7444 = vunpack.c.l.b16 %v6695
    %v7445 = vunpack.c.h.b16 %v6695
    %v7446 = vunpack.c.l.b16 %v6696
    %v7447 = vunpack.c.h.b16 %v6696
    %v7448 = vunpack.c.l.b16 %v6697
    %v7449 = vunpack.c.h.b16 %v6697
    %v7450 = vunpack.c.l.b16 %v6698
    %v7451 = vunpack.c.h.b16 %v6698
    %v7452 = vunpack.c.l.b16 %v6699
    %v7453 = vunpack.c.h.b16 %v6699
    %v7454 = vunpack.c.l.b16 %v6700
    %v7455 = vunpack.c.h.b16 %v6700
    %v7456 = vunpack.c.l.b16 %v6701
    %v7457 = vunpack.c.h.b16 %v6701
    %v7458 = vunpack.c.l.b16 %v6702
    %v7459 = vunpack.c.h.b16 %v6702
    %v7460 = vunpack.c.l.b16 %v6703
    %v7461 = vunpack.c.h.b16 %v6703
    %v7462 = vunpack.c.l.b16 %v6704
    %v7463 = vunpack.c.h.b16 %v6704
    %v7464 = vunpack.c.l.b16 %v6705
    %v7465 = vunpack.c.h.b16 %v6705
    %v7466 = vunpack.c.l.b16 %v6706
    %v7467 = vunpack.c.h.b16 %v6706
    %v7468 = vunpack.c.l.b16 %v6707
    %v7469 = vunpack.c.h.b16 %v6707
    %v7470 = vunpack.c.l.b16 %v6708
    %v7471 = vunpack.c.h.b16 %v6708
    %v7472 = vunpack.c.l.b16 %v6709
    %v7473 = vunpack.c.h.b16 %v6709
    %v7474 = vunpack.c.l.b16 %v6710
    %v7475 = vunpack.c.h.b16 %v6710
    %v7476 = vunpack.c.l.b16 %v6711
    %v7477 = vunpack.c.h.b16 %v6711
    %v7478 = vunpack.c.l.b16 %v6712
    %v7479 = vunpack.c.h.b16 %v6712
    %v7480 = vunpack.c.l.b16 %v6713
    %v7481 = vunpack.c.h.b16 %v6713
    %v7482 = vunpack.c.l.b16 %v6714
    %v7483 = vunpack.c.h.b16 %v6714
    %v7484 = vunpack.c.l.b16 %v6715
    %v7485 = vunpack.c.h.b16 %v6715
    %v7486 = vunpack.c.l.b16 %v6716
    %v7487 = vunpack.c.h.b16 %v6716
    %v7488 = vunpack.c.l.b16 %v6717
    %v7489 = vunpack.c.h.b16 %v6717
    %v7490 = vunpack.c.l.b16 %v6718
    %v7491 = vunpack.c.h.b16 %v6718
    %v7492 = vunpack.c.l.b16 %v6719
    %v7493 = vunpack.c.h.b16 %v6719
    %v7494 = vunpack.c.l.b16 %v6720
    %v7495 = vunpack.c.h.b16 %v6720
    %v7496 = vunpack.c.l.b16 %v6721
    %v7497 = vunpack.c.h.b16 %v6721
    %v7498 = vunpack.c.l.b16 %v6722
    %v7499 = vunpack.c.h.b16 %v6722
    %v7500 = vunpack.c.l.b16 %v6723
    %v7501 = vunpack.c.h.b16 %v6723
    %v7502 = vunpack.c.l.b16 %v6724
    %v7503 = vunpack.c.h.b16 %v6724
    %v7504 = vunpack.c.l.b16 %v6725
    %v7505 = vunpack.c.h.b16 %v6725
    %v7506 = vunpack.c.l.b16 %v6726
    %v7507 = vunpack.c.h.b16 %v6726
    %v7508 = vunpack.c.l.b16 %v6727
    %v7509 = vunpack.c.h.b16 %v6727
    %v7510 = vunpack.c.l.b16 %v6728
    %v7511 = vunpack.c.h.b16 %v6728
    %v7512 = vunpack.c.l.b16 %v6729
    %v7513 = vunpack.c.h.b16 %v6729
    %v7514 = vunpack.c.l.b16 %v6730
    %v7515 = vunpack.c.h.b16 %v6730
    %v7516 = vunpack.c.l.b16 %v6731
    %v7517 = vunpack.c.h.b16 %v6731
    %v7518 = vunpack.c.l.b16 %v6732
    %v7519 = vunpack.c.h.b16 %v6732
    %v7520 = vunpack.c.l.b16 %v6733
    %v7521 = vunpack.c.h.b16 %v6733
    %v7522 = vunpack.c.l.b16 %v6734
    %v7523 = vunpack.c.h.b16 %v6734
    %v7524 = vunpack.c.l.b16 %v6735
    %v7525 = vunpack.c.h.b16 %v6735
    %v7526 = vpack.c.b16 %v7018, %v7014
    %v7527 = vpack.c.b16 %v7019, %v7015
    %v7528 = vpack.c.b16 %v7020, %v7016
    %v7529 = vpack.c.b16 %v7021, %v7017
    %v7530 = vpack.c.b16 %v7026, %v7022
    %v7531 = vpack.c.b16 %v7027, %v7023
    %v7532 = vpack.c.b16 %v7028, %v7024
    %v7533 = vpack.c.b16 %v7029, %v7025
    %v7534 = vpack.c.b16 %v7034, %v7030
    %v7535 = vpack.c.b16 %v7035, %v7031
    %v7536 = vpack.c.b16 %v7036, %v7032
    %v7537 = vpack.c.b16 %v7037, %v7033
    %v7538 = vpack.c.b16 %v7042, %v7038
    %v7539 = vpack.c.b16 %v7043, %v7039
    %v7540 = vpack.c.b16 %v7044, %v7040
    %v7541 = vpack.c.b16 %v7045, %v7041
    %v7542 = vpack.c.b16 %v7050, %v7046
    %v7543 = vpack.c.b16 %v7051, %v7047
    %v7544 = vpack.c.b16 %v7052, %v7048
    %v7545 = vpack.c.b16 %v7053, %v7049
    %v7546 = vpack.c.b16 %v7058, %v7054
    %v7547 = vpack.c.b16 %v7059, %v7055
    %v7548 = vpack.c.b16 %v7060, %v7056
    %v7549 = vpack.c.b16 %v7061, %v7057
    %v7550 = vpack.c.b16 %v7066, %v7062
    %v7551 = vpack.c.b16 %v7067, %v7063
    %v7552 = vpack.c.b16 %v7068, %v7064
    %v7553 = vpack.c.b16 %v7069, %v7065
    %v7554 = vpack.c.b16 %v7074, %v7070
    %v7555 = vpack.c.b16 %v7075, %v7071
    %v7556 = vpack.c.b16 %v7076, %v7072
    %v7557 = vpack.c.b16 %v7077, %v7073
    %v7558 = vpack.c.b16 %v7082, %v7078
    %v7559 = vpack.c.b16 %v7083, %v7079
    %v7560 = vpack.c.b16 %v7084, %v7080
    %v7561 = vpack.c.b16 %v7085, %v7081
    %v7562 = vpack.c.b16 %v7090, %v7086
    %v7563 = vpack.c.b16 %v7091, %v7087
    %v7564 = vpack.c.b16 %v7092, %v7088
    %v7565 = vpack.c.b16 %v7093, %v7089
    %v7566 = vpack.c.b16 %v7098, %v7094
    %v7567 = vpack.c.b16 %v7099, %v7095
    %v7568 = vpack.c.b16 %v7100, %v7096
    %v7569 = vpack.c.b16 %v7101, %v7097
    %v7570 = vpack.c.b16 %v7106, %v7102
    %v7571 = vpack.c.b16 %v7107, %v7103
    %v7572 = vpack.c.b16 %v7108, %v7104
    %v7573 = vpack.c.b16 %v7109, %v7105
    %v7574 = vpack.c.b16 %v7114, %v7110
    %v7575 = vpack.c.b16 %v7115, %v7111
    %v7576 = vpack.c.b16 %v7116, %v7112
    %v7577 = vpack.c.b16 %v7117, %v7113
    %v7578 = vpack.c.b16 %v7122, %v7118
    %v7579 = vpack.c.b16 %v7123, %v7119
    %v7580 = vpack.c.b16 %v7124, %v7120
    %v7581 = vpack.c.b16 %v7125, %v7121
    %v7582 = vpack.c.b16 %v7130, %v7126
    %v7583 = vpack.c.b16 %v7131, %v7127
    %v7584 = vpack.c.b16 %v7132, %v7128
    %v7585 = vpack.c.b16 %v7133, %v7129
    %v7586 = vpack.c.b16 %v7138, %v7134
    %v7587 = vpack.c.b16 %v7139, %v7135
    %v7588 = vpack.c.b16 %v7140, %v7136
    %v7589 = vpack.c.b16 %v7141, %v7137
    %v7590 = vpack.c.b16 %v7146, %v7142
    %v7591 = vpack.c.b16 %v7147, %v7143
    %v7592 = vpack.c.b16 %v7148, %v7144
    %v7593 = vpack.c.b16 %v7149, %v7145
    %v7594 = vpack.c.b16 %v7154, %v7150
    %v7595 = vpack.c.b16 %v7155, %v7151
    %v7596 = vpack.c.b16 %v7156, %v7152
    %v7597 = vpack.c.b16 %v7157, %v7153
    %v7598 = vpack.c.b16 %v7162, %v7158
    %v7599 = vpack.c.b16 %v7163, %v7159
    %v7600 = vpack.c.b16 %v7164, %v7160
    %v7601 = vpack.c.b16 %v7165, %v7161
    %v7602 = vpack.c.b16 %v7170, %v7166
    %v7603 = vpack.c.b16 %v7171, %v7167
    %v7604 = vpack.c.b16 %v7172, %v7168
    %v7605 = vpack.c.b16 %v7173, %v7169
    %v7606 = vpack.c.b16 %v7178, %v7174
    %v7607 = vpack.c.b16 %v7179, %v7175
    %v7608 = vpack.c.b16 %v7180, %v7176
    %v7609 = vpack.c.b16 %v7181, %v7177
    %v7610 = vpack.c.b16 %v7186, %v7182
    %v7611 = vpack.c.b16 %v7187, %v7183
    %v7612 = vpack.c.b16 %v7188, %v7184
    %v7613 = vpack.c.b16 %v7189, %v7185
    %v7614 = vpack.c.b16 %v7194, %v7190
    %v7615 = vpack.c.b16 %v7195, %v7191
    %v7616 = vpack.c.b16 %v7196, %v7192
    %v7617 = vpack.c.b16 %v7197, %v7193
    %v7618 = vpack.c.b16 %v7202, %v7198
    %v7619 = vpack.c.b16 %v7203, %v7199
    %v7620 = vpack.c.b16 %v7204, %v7200
    %v7621 = vpack.c.b16 %v7205, %v7201
    %v7622 = vpack.c.b16 %v7210, %v7206
    %v7623 = vpack.c.b16 %v7211, %v7207
    %v7624 = vpack.c.b16 %v7212, %v7208
    %v7625 = vpack.c.b16 %v7213, %v7209
    %v7626 = vpack.c.b16 %v7218, %v7214
    %v7627 = vpack.c.b16 %v7219, %v7215
    %v7628 = vpack.c.b16 %v7220, %v7216
    %v7629 = vpack.c.b16 %v7221, %v7217
    %v7630 = vpack.c.b16 %v7226, %v7222
    %v7631 = vpack.c.b16 %v7227, %v7223
    %v7632 = vpack.c.b16 %v7228, %v7224
    %v7633 = vpack.c.b16 %v7229, %v7225
    %v7634 = vpack.c.b16 %v7234, %v7230
    %v7635 = vpack.c.b16 %v7235, %v7231
    %v7636 = vpack.c.b16 %v7236, %v7232
    %v7637 = vpack.c.b16 %v7237, %v7233
    %v7638 = vpack.c.b16 %v7242, %v7238
    %v7639 = vpack.c.b16 %v7243, %v7239
    %v7640 = vpack.c.b16 %v7244, %v7240
    %v7641 = vpack.c.b16 %v7245, %v7241
    %v7642 = vpack.c.b16 %v7250, %v7246
    %v7643 = vpack.c.b16 %v7251, %v7247
    %v7644 = vpack.c.b16 %v7252, %v7248
    %v7645 = vpack.c.b16 %v7253, %v7249
    %v7646 = vpack.c.b16 %v7258, %v7254
    %v7647 = vpack.c.b16 %v7259, %v7255
    %v7648 = vpack.c.b16 %v7260, %v7256
    %v7649 = vpack.c.b16 %v7261, %v7257
    %v7650 = vpack.c.b16 %v7266, %v7262
    %v7651 = vpack.c.b16 %v7267, %v7263
    %v7652 = vpack.c.b16 %v7268, %v7264
    %v7653 = vpack.c.b16 %v7269, %v7265
    %v7654 = vpack.c.b16 %v7274, %v7270
    %v7655 = vpack.c.b16 %v7275, %v7271
    %v7656 = vpack.c.b16 %v7276, %v7272
    %v7657 = vpack.c.b16 %v7277, %v7273
    %v7658 = vpack.c.b16 %v7282, %v7278
    %v7659 = vpack.c.b16 %v7283, %v7279
    %v7660 = vpack.c.b16 %v7284, %v7280
    %v7661 = vpack.c.b16 %v7285, %v7281
    %v7662 = vpack.c.b16 %v7290, %v7286
    %v7663 = vpack.c.b16 %v7291, %v7287
    %v7664 = vpack.c.b16 %v7292, %v7288
    %v7665 = vpack.c.b16 %v7293, %v7289
    %v7666 = vpack.c.b16 %v7298, %v7294
    %v7667 = vpack.c.b16 %v7299, %v7295
    %v7668 = vpack.c.b16 %v7300, %v7296
    %v7669 = vpack.c.b16 %v7301, %v7297
    %v7670 = vpack.c.b16 %v7306, %v7302
    %v7671 = vpack.c.b16 %v7307, %v7303
    %v7672 = vpack.c.b16 %v7308, %v7304
    %v7673 = vpack.c.b16 %v7309, %v7305
    %v7674 = vpack.c.b16 %v7314, %v7310
    %v7675 = vpack.c.b16 %v7315, %v7311
    %v7676 = vpack.c.b16 %v7316, %v7312
    %v7677 = vpack.c.b16 %v7317, %v7313
    %v7678 = vpack.c.b16 %v7322, %v7318
    %v7679 = vpack.c.b16 %v7323, %v7319
    %v7680 = vpack.c.b16 %v7324, %v7320
    %v7681 = vpack.c.b16 %v7325, %v7321
    %v7682 = vpack.c.b16 %v7330, %v7326
    %v7683 = vpack.c.b16 %v7331, %v7327
    %v7684 = vpack.c.b16 %v7332, %v7328
    %v7685 = vpack.c.b16 %v7333, %v7329
    %v7686 = vpack.c.b16 %v7338, %v7334
    %v7687 = vpack.c.b16 %v7339, %v7335
    %v7688 = vpack.c.b16 %v7340, %v7336
    %v7689 = vpack.c.b16 %v7341, %v7337
    %v7690 = vpack.c.b16 %v7346, %v7342
    %v7691 = vpack.c.b16 %v7347, %v7343
    %v7692 = vpack.c.b16 %v7348, %v7344
    %v7693 = vpack.c.b16 %v7349, %v7345
    %v7694 = vpack.c.b16 %v7354, %v7350
    %v7695 = vpack.c.b16 %v7355, %v7351
    %v7696 = vpack.c.b16 %v7356, %v7352
    %v7697 = vpack.c.b16 %v7357, %v7353
    %v7698 = vpack.c.b16 %v7362, %v7358
    %v7699 = vpack.c.b16 %v7363, %v7359
    %v7700 = vpack.c.b16 %v7364, %v7360
    %v7701 = vpack.c.b16 %v7365, %v7361
    %v7702 = vpack.c.b16 %v7370, %v7366
    %v7703 = vpack.c.b16 %v7371, %v7367
    %v7704 = vpack.c.b16 %v7372, %v7368
    %v7705 = vpack.c.b16 %v7373, %v7369
    %v7706 = vpack.c.b16 %v7378, %v7374
    %v7707 = vpack.c.b16 %v7379, %v7375
    %v7708 = vpack.c.b16 %v7380, %v7376
    %v7709 = vpack.c.b16 %v7381, %v7377
    %v7710 = vpack.c.b16 %v7386, %v7382
    %v7711 = vpack.c.b16 %v7387, %v7383
    %v7712 = vpack.c.b16 %v7388, %v7384
    %v7713 = vpack.c.b16 %v7389, %v7385
    %v7714 = vpack.c.b16 %v7394, %v7390
    %v7715 = vpack.c.b16 %v7395, %v7391
    %v7716 = vpack.c.b16 %v7396, %v7392
    %v7717 = vpack.c.b16 %v7397, %v7393
    %v7718 = vpack.c.b16 %v7402, %v7398
    %v7719 = vpack.c.b16 %v7403, %v7399
    %v7720 = vpack.c.b16 %v7404, %v7400
    %v7721 = vpack.c.b16 %v7405, %v7401
    %v7722 = vpack.c.b16 %v7410, %v7406
    %v7723 = vpack.c.b16 %v7411, %v7407
    %v7724 = vpack.c.b16 %v7412, %v7408
    %v7725 = vpack.c.b16 %v7413, %v7409
    %v7726 = vpack.c.b16 %v7418, %v7414
    %v7727 = vpack.c.b16 %v7419, %v7415
    %v7728 = vpack.c.b16 %v7420, %v7416
    %v7729 = vpack.c.b16 %v7421, %v7417
    %v7730 = vpack.c.b16 %v7426, %v7422
    %v7731 = vpack.c.b16 %v7427, %v7423
    %v7732 = vpack.c.b16 %v7428, %v7424
    %v7733 = vpack.c.b16 %v7429, %v7425
    %v7734 = vpack.c.b16 %v7434, %v7430
    %v7735 = vpack.c.b16 %v7435, %v7431
    %v7736 = vpack.c.b16 %v7436, %v7432
    %v7737 = vpack.c.b16 %v7437, %v7433
    %v7738 = vpack.c.b16 %v7442, %v7438
    %v7739 = vpack.c.b16 %v7443, %v7439
    %v7740 = vpack.c.b16 %v7444, %v7440
    %v7741 = vpack.c.b16 %v7445, %v7441
    %v7742 = vpack.c.b16 %v7450, %v7446
    %v7743 = vpack.c.b16 %v7451, %v7447
    %v7744 = vpack.c.b16 %v7452, %v7448
    %v7745 = vpack.c.b16 %v7453, %v7449
    %v7746 = vpack.c.b16 %v7458, %v7454
    %v7747 = vpack.c.b16 %v7459, %v7455
    %v7748 = vpack.c.b16 %v7460, %v7456
    %v7749 = vpack.c.b16 %v7461, %v7457
    %v7750 = vpack.c.b16 %v7466, %v7462
    %v7751 = vpack.c.b16 %v7467, %v7463
    %v7752 = vpack.c.b16 %v7468, %v7464
    %v7753 = vpack.c.b16 %v7469, %v7465
    %v7754 = vpack.c.b16 %v7474, %v7470
    %v7755 = vpack.c.b16 %v7475, %v7471
    %v7756 = vpack.c.b16 %v7476, %v7472
    %v7757 = vpack.c.b16 %v7477, %v7473
    %v7758 = vpack.c.b16 %v7482, %v7478
    %v7759 = vpack.c.b16 %v7483, %v7479
    %v7760 = vpack.c.b16 %v7484, %v7480
    %v7761 = vpack.c.b16 %v7485, %v7481
    %v7762 = vpack.c.b16 %v7490, %v7486
    %v7763 = vpack.c.b16 %v7491, %v7487
    %v7764 = vpack.c.b16 %v7492, %v7488
    %v7765 = vpack.c.b16 %v7493, %v7489
    %v7766 = vpack.c.b16 %v7498, %v7494
    %v7767 = vpack.c.b16 %v7499, %v7495
    %v7768 = vpack.c.b16 %v7500, %v7496
    %v7769 = vpack.c.b16 %v7501, %v7497
    %v7770 = vpack.c.b16 %v7506, %v7502
    %v7771 = vpack.c.b16 %v7507, %v7503
    %v7772 = vpack.c.b16 %v7508, %v7504
    %v7773 = vpack.c.b16 %v7509, %v7505
    %v7774 = vpack.c.b16 %v7514, %v7510
    %v7775 = vpack.c.b16 %v7515, %v7511
    %v7776 = vpack.c.b16 %v7516, %v7512
    %v7777 = vpack.c.b16 %v7517, %v7513
    %v7778 = vpack.c.b16 %v7522, %v7518
    %v7779 = vpack.c.b16 %v7523, %v7519
    %v7780 = vpack.c.b16 %v7524, %v7520
    %v7781 = vpack.c.b16 %v7525, %v7521
    %8038 = vmatprep.subr.bf16.mxu0 %v7555
    %8039 = vmatpush1.bf16.msra.mxu0 %v7554
    %8040 = vmatprep.subr.bf16.mxu0 %v7551
    %8041 = vmatpush1.bf16.msra.mxu0 %v7550
    %8042 = vmatprep.subr.bf16.mxu0 %v7547
    %8043 = vmatpush1.bf16.msra.mxu0 %v7546
    %8044 = vmatprep.subr.bf16.mxu0 %v7543
    %8045 = vmatpush1.bf16.msra.mxu0 %v7542
    %8046 = vmatprep.subr.bf16.mxu0 %v7539
    %8047 = vmatpush1.bf16.msra.mxu0 %v7538
    %8048 = vmatprep.subr.bf16.mxu0 %v7535
    %8049 = vmatpush1.bf16.msra.mxu0 %v7534
    %8050 = vmatprep.subr.bf16.mxu0 %v7531
    %8051 = vmatpush1.bf16.msra.mxu0 %v7530
    %8052 = vmatprep.subr.bf16.mxu0 %v7527
    %8053 = vmatpush1.bf16.msra.mxu0 %v7526
    %8054 = vmatprep.subr.bf16.mxu0 %v7587
    %8055 = vmatpush2.bf16.msra.mxu0 %v7586
    %8056 = vmatprep.subr.bf16.mxu0 %v7583
    %8057 = vmatpush2.bf16.msra.mxu0 %v7582
    %8058 = vmatprep.subr.bf16.mxu0 %v7579
    %8059 = vmatpush2.bf16.msra.mxu0 %v7578
    %8060 = vmatprep.subr.bf16.mxu0 %v7575
    %8061 = vmatpush2.bf16.msra.mxu0 %v7574
    %8062 = vmatprep.subr.bf16.mxu0 %v7571
    %8063 = vmatpush2.bf16.msra.mxu0 %v7570
    %8064 = vmatprep.subr.bf16.mxu0 %v7567
    %8065 = vmatpush2.bf16.msra.mxu0 %v7566
    %8066 = vmatprep.subr.bf16.mxu0 %v7563
    %8067 = vmatpush2.bf16.msra.mxu0 %v7562
    %8068 = vmatprep.subr.bf16.mxu0 %v7559
    %8069 = vmatpush2.bf16.msra.mxu0 %v7558
    %8070 = vmatprep.mubr.bf16.mxu0 %v6467
    %8071 = vmatmul.mubr.bf16.gmra.mxu0 %v6466
    %v8072 = vpop.f32.mrf.mxu0
    %v8073 = vadd.f32 %v6741, %v8072
    %v8074 = vpop.f32.mrf.mxu0
    %v8075 = vadd.f32 %v6745, %v8074
    %v8076 = vpop.f32.mrf.mxu0
    %v8077 = vpop.f32.mrf.mxu0
    %8078 = vdwg.mxu0
    %8079 = vmatprep.subr.bf16.mxu0 %v7619
    %8080 = vmatpush1.bf16.msra.mxu0 %v7618
    %8081 = vmatprep.subr.bf16.mxu0 %v7615
    %8082 = vmatpush1.bf16.msra.mxu0 %v7614
    %8083 = vmatprep.subr.bf16.mxu0 %v7611
    %8084 = vmatpush1.bf16.msra.mxu0 %v7610
    %8085 = vmatprep.subr.bf16.mxu0 %v7607
    %8086 = vmatpush1.bf16.msra.mxu0 %v7606
    %8087 = vmatprep.subr.bf16.mxu0 %v7603
    %8088 = vmatpush1.bf16.msra.mxu0 %v7602
    %8089 = vmatprep.subr.bf16.mxu0 %v7599
    %8090 = vmatpush1.bf16.msra.mxu0 %v7598
    %8091 = vmatprep.subr.bf16.mxu0 %v7595
    %8092 = vmatpush1.bf16.msra.mxu0 %v7594
    %8093 = vmatprep.subr.bf16.mxu0 %v7591
    %8094 = vmatpush1.bf16.msra.mxu0 %v7590
    %8095 = vmatprep.subr.bf16.mxu0 %v7651
    %8096 = vmatpush2.bf16.msra.mxu0 %v7650
    %8097 = vmatprep.subr.bf16.mxu0 %v7647
    %8098 = vmatpush2.bf16.msra.mxu0 %v7646
    %8099 = vmatprep.subr.bf16.mxu0 %v7643
    %8100 = vmatpush2.bf16.msra.mxu0 %v7642
    %8101 = vmatprep.subr.bf16.mxu0 %v7639
    %8102 = vmatpush2.bf16.msra.mxu0 %v7638
    %8103 = vmatprep.subr.bf16.mxu0 %v7635
    %8104 = vmatpush2.bf16.msra.mxu0 %v7634
    %8105 = vmatprep.subr.bf16.mxu0 %v7631
    %8106 = vmatpush2.bf16.msra.mxu0 %v7630
    %8107 = vmatprep.subr.bf16.mxu0 %v7627
    %8108 = vmatpush2.bf16.msra.mxu0 %v7626
    %8109 = vmatprep.subr.bf16.mxu0 %v7623
    %8110 = vmatpush2.bf16.msra.mxu0 %v7622
    %8111 = vmatprep.mubr.bf16.mxu0 %v6471
    %8112 = vmatmul.mubr.bf16.gmra.mxu0 %v6470
    %v8113 = vpop.f32.mrf.mxu0
    %v8114 = vadd.f32 %v8073, %v8113
    %v8115 = vpop.f32.mrf.mxu0
    %v8116 = vadd.f32 %v8075, %v8115
    %v8117 = vpop.f32.mrf.mxu0
    %v8118 = vpop.f32.mrf.mxu0
    %8119 = vdwg.mxu0
    %8120 = vmatprep.subr.bf16.mxu0 %v7683
    %8121 = vmatpush1.bf16.msra.mxu0 %v7682
    %8122 = vmatprep.subr.bf16.mxu0 %v7679
    %8123 = vmatpush1.bf16.msra.mxu0 %v7678
    %8124 = vmatprep.subr.bf16.mxu0 %v7675
    %8125 = vmatpush1.bf16.msra.mxu0 %v7674
    %8126 = vmatprep.subr.bf16.mxu0 %v7671
    %8127 = vmatpush1.bf16.msra.mxu0 %v7670
    %8128 = vmatprep.subr.bf16.mxu0 %v7667
    %8129 = vmatpush1.bf16.msra.mxu0 %v7666
    %8130 = vmatprep.subr.bf16.mxu0 %v7663
    %8131 = vmatpush1.bf16.msra.mxu0 %v7662
    %8132 = vmatprep.subr.bf16.mxu0 %v7659
    %8133 = vmatpush1.bf16.msra.mxu0 %v7658
    %8134 = vmatprep.subr.bf16.mxu0 %v7655
    %8135 = vmatpush1.bf16.msra.mxu0 %v7654
    %8136 = vmatprep.subr.bf16.mxu0 %v7715
    %8137 = vmatpush2.bf16.msra.mxu0 %v7714
    %8138 = vmatprep.subr.bf16.mxu0 %v7711
    %8139 = vmatpush2.bf16.msra.mxu0 %v7710
    %8140 = vmatprep.subr.bf16.mxu0 %v7707
    %8141 = vmatpush2.bf16.msra.mxu0 %v7706
    %8142 = vmatprep.subr.bf16.mxu0 %v7703
    %8143 = vmatpush2.bf16.msra.mxu0 %v7702
    %8144 = vmatprep.subr.bf16.mxu0 %v7699
    %8145 = vmatpush2.bf16.msra.mxu0 %v7698
    %8146 = vmatprep.subr.bf16.mxu0 %v7695
    %8147 = vmatpush2.bf16.msra.mxu0 %v7694
    %8148 = vmatprep.subr.bf16.mxu0 %v7691
    %8149 = vmatpush2.bf16.msra.mxu0 %v7690
    %8150 = vmatprep.subr.bf16.mxu0 %v7687
    %8151 = vmatpush2.bf16.msra.mxu0 %v7686
    %8152 = vmatprep.mubr.bf16.mxu0 %v6475
    %8153 = vmatmul.mubr.bf16.gmra.mxu0 %v6474
    %v8154 = vpop.f32.mrf.mxu0
    %v8155 = vadd.f32 %v8114, %v8154
    %v8156 = vpop.f32.mrf.mxu0
    %v8157 = vadd.f32 %v8116, %v8156
    %v8158 = vpop.f32.mrf.mxu0
    %v8159 = vpop.f32.mrf.mxu0
    %8160 = vdwg.mxu0
    %8161 = vmatprep.subr.bf16.mxu0 %v7747
    %8162 = vmatpush1.bf16.msra.mxu0 %v7746
    %8163 = vmatprep.subr.bf16.mxu0 %v7743
    %8164 = vmatpush1.bf16.msra.mxu0 %v7742
    %8165 = vmatprep.subr.bf16.mxu0 %v7739
    %8166 = vmatpush1.bf16.msra.mxu0 %v7738
    %8167 = vmatprep.subr.bf16.mxu0 %v7735
    %8168 = vmatpush1.bf16.msra.mxu0 %v7734
    %8169 = vmatprep.subr.bf16.mxu0 %v7731
    %8170 = vmatpush1.bf16.msra.mxu0 %v7730
    %8171 = vmatprep.subr.bf16.mxu0 %v7727
    %8172 = vmatpush1.bf16.msra.mxu0 %v7726
    %8173 = vmatprep.subr.bf16.mxu0 %v7723
    %8174 = vmatpush1.bf16.msra.mxu0 %v7722
    %8175 = vmatprep.subr.bf16.mxu0 %v7719
    %8176 = vmatpush1.bf16.msra.mxu0 %v7718
    %8177 = vmatprep.subr.bf16.mxu0 %v7779
    %8178 = vmatpush2.bf16.msra.mxu0 %v7778
    %8179 = vmatprep.subr.bf16.mxu0 %v7775
    %8180 = vmatpush2.bf16.msra.mxu0 %v7774
    %8181 = vmatprep.subr.bf16.mxu0 %v7771
    %8182 = vmatpush2.bf16.msra.mxu0 %v7770
    %8183 = vmatprep.subr.bf16.mxu0 %v7767
    %8184 = vmatpush2.bf16.msra.mxu0 %v7766
    %8185 = vmatprep.subr.bf16.mxu0 %v7763
    %8186 = vmatpush2.bf16.msra.mxu0 %v7762
    %8187 = vmatprep.subr.bf16.mxu0 %v7759
    %8188 = vmatpush2.bf16.msra.mxu0 %v7758
    %8189 = vmatprep.subr.bf16.mxu0 %v7755
    %8190 = vmatpush2.bf16.msra.mxu0 %v7754
    %8191 = vmatprep.subr.bf16.mxu0 %v7751
    %8192 = vmatpush2.bf16.msra.mxu0 %v7750
    %8193 = vmatprep.mubr.bf16.mxu0 %v6479
    %8194 = vmatmul.mubr.bf16.gmra.mxu0 %v6478
    %v8195 = vpop.f32.mrf.mxu0
    %v8196 = vadd.f32 %v8155, %v8195
    %v8197 = vpop.f32.mrf.mxu0
    %v8198 = vadd.f32 %v8157, %v8197
    %v8199 = vpop.f32.mrf.mxu0
    %v8200 = vpop.f32.mrf.mxu0
    %8201 = vdwg.mxu0
    %8202 = vmatprep.subr.bf16.mxu0 %v7557
    %8203 = vmatpush1.bf16.msra.mxu0 %v7556
    %8204 = vmatprep.subr.bf16.mxu0 %v7553
    %8205 = vmatpush1.bf16.msra.mxu0 %v7552
    %8206 = vmatprep.subr.bf16.mxu0 %v7549
    %8207 = vmatpush1.bf16.msra.mxu0 %v7548
    %8208 = vmatprep.subr.bf16.mxu0 %v7545
    %8209 = vmatpush1.bf16.msra.mxu0 %v7544
    %8210 = vmatprep.subr.bf16.mxu0 %v7541
    %8211 = vmatpush1.bf16.msra.mxu0 %v7540
    %8212 = vmatprep.subr.bf16.mxu0 %v7537
    %8213 = vmatpush1.bf16.msra.mxu0 %v7536
    %8214 = vmatprep.subr.bf16.mxu0 %v7533
    %8215 = vmatpush1.bf16.msra.mxu0 %v7532
    %8216 = vmatprep.subr.bf16.mxu0 %v7529
    %8217 = vmatpush1.bf16.msra.mxu0 %v7528
    %8218 = vmatprep.subr.bf16.mxu0 %v7589
    %8219 = vmatpush2.bf16.msra.mxu0 %v7588
    %8220 = vmatprep.subr.bf16.mxu0 %v7585
    %8221 = vmatpush2.bf16.msra.mxu0 %v7584
    %8222 = vmatprep.subr.bf16.mxu0 %v7581
    %8223 = vmatpush2.bf16.msra.mxu0 %v7580
    %8224 = vmatprep.subr.bf16.mxu0 %v7577
    %8225 = vmatpush2.bf16.msra.mxu0 %v7576
    %8226 = vmatprep.subr.bf16.mxu0 %v7573
    %8227 = vmatpush2.bf16.msra.mxu0 %v7572
    %8228 = vmatprep.subr.bf16.mxu0 %v7569
    %8229 = vmatpush2.bf16.msra.mxu0 %v7568
    %8230 = vmatprep.subr.bf16.mxu0 %v7565
    %8231 = vmatpush2.bf16.msra.mxu0 %v7564
    %8232 = vmatprep.subr.bf16.mxu0 %v7561
    %8233 = vmatpush2.bf16.msra.mxu0 %v7560
    %8234 = vmatprep.mubr.bf16.mxu0 %v6467
    %8235 = vmatmul.mubr.bf16.gmra.mxu0 %v6466
    %v8236 = vpop.f32.mrf.mxu0
    %v8237 = vadd.f32 %v6749, %v8236
    %v8238 = vpop.f32.mrf.mxu0
    %v8239 = vadd.f32 %v6753, %v8238
    %v8240 = vpop.f32.mrf.mxu0
    %v8241 = vpop.f32.mrf.mxu0
    %8242 = vdwg.mxu0
    %8243 = vmatprep.subr.bf16.mxu0 %v7621
    %8244 = vmatpush1.bf16.msra.mxu0 %v7620
    %8245 = vmatprep.subr.bf16.mxu0 %v7617
    %8246 = vmatpush1.bf16.msra.mxu0 %v7616
    %8247 = vmatprep.subr.bf16.mxu0 %v7613
    %8248 = vmatpush1.bf16.msra.mxu0 %v7612
    %8249 = vmatprep.subr.bf16.mxu0 %v7609
    %8250 = vmatpush1.bf16.msra.mxu0 %v7608
    %8251 = vmatprep.subr.bf16.mxu0 %v7605
    %8252 = vmatpush1.bf16.msra.mxu0 %v7604
    %8253 = vmatprep.subr.bf16.mxu0 %v7601
    %8254 = vmatpush1.bf16.msra.mxu0 %v7600
    %8255 = vmatprep.subr.bf16.mxu0 %v7597
    %8256 = vmatpush1.bf16.msra.mxu0 %v7596
    %8257 = vmatprep.subr.bf16.mxu0 %v7593
    %8258 = vmatpush1.bf16.msra.mxu0 %v7592
    %8259 = vmatprep.subr.bf16.mxu0 %v7653
    %8260 = vmatpush2.bf16.msra.mxu0 %v7652
    %8261 = vmatprep.subr.bf16.mxu0 %v7649
    %8262 = vmatpush2.bf16.msra.mxu0 %v7648
    %8263 = vmatprep.subr.bf16.mxu0 %v7645
    %8264 = vmatpush2.bf16.msra.mxu0 %v7644
    %8265 = vmatprep.subr.bf16.mxu0 %v7641
    %8266 = vmatpush2.bf16.msra.mxu0 %v7640
    %8267 = vmatprep.subr.bf16.mxu0 %v7637
    %8268 = vmatpush2.bf16.msra.mxu0 %v7636
    %8269 = vmatprep.subr.bf16.mxu0 %v7633
    %8270 = vmatpush2.bf16.msra.mxu0 %v7632
    %8271 = vmatprep.subr.bf16.mxu0 %v7629
    %8272 = vmatpush2.bf16.msra.mxu0 %v7628
    %8273 = vmatprep.subr.bf16.mxu0 %v7625
    %8274 = vmatpush2.bf16.msra.mxu0 %v7624
    %8275 = vmatprep.mubr.bf16.mxu0 %v6471
    %8276 = vmatmul.mubr.bf16.gmra.mxu0 %v6470
    %v8277 = vpop.f32.mrf.mxu0
    %v8278 = vadd.f32 %v8237, %v8277
    %v8279 = vpop.f32.mrf.mxu0
    %v8280 = vadd.f32 %v8239, %v8279
    %v8281 = vpop.f32.mrf.mxu0
    %v8282 = vpop.f32.mrf.mxu0
    %8283 = vdwg.mxu0
    %8284 = vmatprep.subr.bf16.mxu0 %v7685
    %8285 = vmatpush1.bf16.msra.mxu0 %v7684
    %8286 = vmatprep.subr.bf16.mxu0 %v7681
    %8287 = vmatpush1.bf16.msra.mxu0 %v7680
    %8288 = vmatprep.subr.bf16.mxu0 %v7677
    %8289 = vmatpush1.bf16.msra.mxu0 %v7676
    %8290 = vmatprep.subr.bf16.mxu0 %v7673
    %8291 = vmatpush1.bf16.msra.mxu0 %v7672
    %8292 = vmatprep.subr.bf16.mxu0 %v7669
    %8293 = vmatpush1.bf16.msra.mxu0 %v7668
    %8294 = vmatprep.subr.bf16.mxu0 %v7665
    %8295 = vmatpush1.bf16.msra.mxu0 %v7664
    %8296 = vmatprep.subr.bf16.mxu0 %v7661
    %8297 = vmatpush1.bf16.msra.mxu0 %v7660
    %8298 = vmatprep.subr.bf16.mxu0 %v7657
    %8299 = vmatpush1.bf16.msra.mxu0 %v7656
    %8300 = vmatprep.subr.bf16.mxu0 %v7717
    %8301 = vmatpush2.bf16.msra.mxu0 %v7716
    %8302 = vmatprep.subr.bf16.mxu0 %v7713
    %8303 = vmatpush2.bf16.msra.mxu0 %v7712
    %8304 = vmatprep.subr.bf16.mxu0 %v7709
    %8305 = vmatpush2.bf16.msra.mxu0 %v7708
    %8306 = vmatprep.subr.bf16.mxu0 %v7705
    %8307 = vmatpush2.bf16.msra.mxu0 %v7704
    %8308 = vmatprep.subr.bf16.mxu0 %v7701
    %8309 = vmatpush2.bf16.msra.mxu0 %v7700
    %8310 = vmatprep.subr.bf16.mxu0 %v7697
    %8311 = vmatpush2.bf16.msra.mxu0 %v7696
    %8312 = vmatprep.subr.bf16.mxu0 %v7693
    %8313 = vmatpush2.bf16.msra.mxu0 %v7692
    %8314 = vmatprep.subr.bf16.mxu0 %v7689
    %8315 = vmatpush2.bf16.msra.mxu0 %v7688
    %8316 = vmatprep.mubr.bf16.mxu0 %v6475
    %8317 = vmatmul.mubr.bf16.gmra.mxu0 %v6474
    %v8318 = vpop.f32.mrf.mxu0
    %v8319 = vadd.f32 %v8278, %v8318
    %v8320 = vpop.f32.mrf.mxu0
    %v8321 = vadd.f32 %v8280, %v8320
    %v8322 = vpop.f32.mrf.mxu0
    %v8323 = vpop.f32.mrf.mxu0
    %8324 = vdwg.mxu0
    %8325 = vmatprep.subr.bf16.mxu0 %v7749
    %8326 = vmatpush1.bf16.msra.mxu0 %v7748
    %8327 = vmatprep.subr.bf16.mxu0 %v7745
    %8328 = vmatpush1.bf16.msra.mxu0 %v7744
    %8329 = vmatprep.subr.bf16.mxu0 %v7741
    %8330 = vmatpush1.bf16.msra.mxu0 %v7740
    %8331 = vmatprep.subr.bf16.mxu0 %v7737
    %8332 = vmatpush1.bf16.msra.mxu0 %v7736
    %8333 = vmatprep.subr.bf16.mxu0 %v7733
    %8334 = vmatpush1.bf16.msra.mxu0 %v7732
    %8335 = vmatprep.subr.bf16.mxu0 %v7729
    %8336 = vmatpush1.bf16.msra.mxu0 %v7728
    %8337 = vmatprep.subr.bf16.mxu0 %v7725
    %8338 = vmatpush1.bf16.msra.mxu0 %v7724
    %8339 = vmatprep.subr.bf16.mxu0 %v7721
    %8340 = vmatpush1.bf16.msra.mxu0 %v7720
    %8341 = vmatprep.subr.bf16.mxu0 %v7781
    %8342 = vmatpush2.bf16.msra.mxu0 %v7780
    %8343 = vmatprep.subr.bf16.mxu0 %v7777
    %8344 = vmatpush2.bf16.msra.mxu0 %v7776
    %8345 = vmatprep.subr.bf16.mxu0 %v7773
    %8346 = vmatpush2.bf16.msra.mxu0 %v7772
    %8347 = vmatprep.subr.bf16.mxu0 %v7769
    %8348 = vmatpush2.bf16.msra.mxu0 %v7768
    %8349 = vmatprep.subr.bf16.mxu0 %v7765
    %8350 = vmatpush2.bf16.msra.mxu0 %v7764
    %8351 = vmatprep.subr.bf16.mxu0 %v7761
    %8352 = vmatpush2.bf16.msra.mxu0 %v7760
    %8353 = vmatprep.subr.bf16.mxu0 %v7757
    %8354 = vmatpush2.bf16.msra.mxu0 %v7756
    %8355 = vmatprep.subr.bf16.mxu0 %v7753
    %8356 = vmatpush2.bf16.msra.mxu0 %v7752
    %8357 = vmatprep.mubr.bf16.mxu0 %v6479
    %8358 = vmatmul.mubr.bf16.gmra.mxu0 %v6478
    %v8359 = vpop.f32.mrf.mxu0
    %v8360 = vadd.f32 %v8319, %v8359
    %v8361 = vpop.f32.mrf.mxu0
    %v8362 = vadd.f32 %v8321, %v8361
    %v8363 = vpop.f32.mrf.mxu0
    %v8364 = vpop.f32.mrf.mxu0
    %8365 = vdwg.mxu0
    %v8366 = vmax.f32 %v8196, 0.0
    %v8367 = vmax.f32 %v8198, 0.0
    %v8368 = vmax.f32 %v8360, 0.0
    %v8369 = vmax.f32 %v8362, 0.0
    %v8370 = vpack.c.bf16 %v8366, %v8366
    %v8371 = vpack.c.bf16 %v8367, %v8367
    %v8372 = vpack.c.bf16 %v8368, %v8368
    %v8373 = vpack.c.bf16 %v8369, %v8369
    %v8374 = vld [vmem:[#allocation13] sm:$0xf]
    %v8375 = vld [vmem:[#allocation13 + $0x4] sm:$0xf]
    %v8376 = vld [vmem:[#allocation13 + $0x8] sm:$0xf]
    %v8377 = vld [vmem:[#allocation13 + $0xc] sm:$0xf]
    %v8378 = vld [vmem:[#allocation13 + $0x10] sm:$0xf]
    %v8379 = vld [vmem:[#allocation13 + $0x14] sm:$0xf]
    %v8380 = vld [vmem:[#allocation13 + $0x18] sm:$0xf]
    %v8381 = vld [vmem:[#allocation13 + $0x1c] sm:$0xf]
    %v8382 = vld [vmem:[#allocation13 + $0x20] sm:$0xf]
    %v8383 = vld [vmem:[#allocation13 + $0x24] sm:$0xf]
    %v8384 = vld [vmem:[#allocation13 + $0x28] sm:$0xf]
    %v8385 = vld [vmem:[#allocation13 + $0x2c] sm:$0xf]
    %v8386 = vld [vmem:[#allocation13 + $0x30] sm:$0xf]
    %v8387 = vld [vmem:[#allocation13 + $0x34] sm:$0xf]
    %v8388 = vld [vmem:[#allocation13 + $0x38] sm:$0xf]
    %v8389 = vld [vmem:[#allocation13 + $0x3c] sm:$0xf]
    %v8390 = vld [vmem:[#allocation13 + $0x40] sm:$0xf]
    %v8391 = vld [vmem:[#allocation13 + $0x44] sm:$0xf]
    %v8392 = vld [vmem:[#allocation13 + $0x48] sm:$0xf]
    %v8393 = vld [vmem:[#allocation13 + $0x4c] sm:$0xf]
    %v8394 = vld [vmem:[#allocation13 + $0x50] sm:$0xf]
    %v8395 = vld [vmem:[#allocation13 + $0x54] sm:$0xf]
    %v8396 = vld [vmem:[#allocation13 + $0x58] sm:$0xf]
    %v8397 = vld [vmem:[#allocation13 + $0x5c] sm:$0xf]
    %v8398 = vld [vmem:[#allocation13 + $0x60] sm:$0xf]
    %v8399 = vld [vmem:[#allocation13 + $0x64] sm:$0xf]
    %v8400 = vld [vmem:[#allocation13 + $0x68] sm:$0xf]
    %v8401 = vld [vmem:[#allocation13 + $0x6c] sm:$0xf]
    %v8402 = vld [vmem:[#allocation13 + $0x70] sm:$0xf]
    %v8403 = vld [vmem:[#allocation13 + $0x74] sm:$0xf]
    %v8404 = vld [vmem:[#allocation13 + $0x78] sm:$0xf]
    %v8405 = vld [vmem:[#allocation13 + $0x7c] sm:$0xf]
    %v8406 = vld [vmem:[#allocation13 + $0x80] sm:$0xf]
    %v8407 = vld [vmem:[#allocation13 + $0x84] sm:$0xf]
    %v8408 = vld [vmem:[#allocation13 + $0x88] sm:$0xf]
    %v8409 = vld [vmem:[#allocation13 + $0x8c] sm:$0xf]
    %v8410 = vld [vmem:[#allocation13 + $0x90] sm:$0xf]
    %v8411 = vld [vmem:[#allocation13 + $0x94] sm:$0xf]
    %v8412 = vld [vmem:[#allocation13 + $0x98] sm:$0xf]
    %v8413 = vld [vmem:[#allocation13 + $0x9c] sm:$0xf]
    %v8414 = vld [vmem:[#allocation13 + $0xa0] sm:$0xf]
    %v8415 = vld [vmem:[#allocation13 + $0xa4] sm:$0xf]
    %v8416 = vld [vmem:[#allocation13 + $0xa8] sm:$0xf]
    %v8417 = vld [vmem:[#allocation13 + $0xac] sm:$0xf]
    %v8418 = vld [vmem:[#allocation13 + $0xb0] sm:$0xf]
    %v8419 = vld [vmem:[#allocation13 + $0xb4] sm:$0xf]
    %v8420 = vld [vmem:[#allocation13 + $0xb8] sm:$0xf]
    %v8421 = vld [vmem:[#allocation13 + $0xbc] sm:$0xf]
    %v8422 = vld [vmem:[#allocation13 + $0xc0] sm:$0xf]
    %v8423 = vld [vmem:[#allocation13 + $0xc4] sm:$0xf]
    %v8424 = vld [vmem:[#allocation13 + $0xc8] sm:$0xf]
    %v8425 = vld [vmem:[#allocation13 + $0xcc] sm:$0xf]
    %v8426 = vld [vmem:[#allocation13 + $0xd0] sm:$0xf]
    %v8427 = vld [vmem:[#allocation13 + $0xd4] sm:$0xf]
    %v8428 = vld [vmem:[#allocation13 + $0xd8] sm:$0xf]
    %v8429 = vld [vmem:[#allocation13 + $0xdc] sm:$0xf]
    %v8430 = vld [vmem:[#allocation13 + $0xe0] sm:$0xf]
    %v8431 = vld [vmem:[#allocation13 + $0xe4] sm:$0xf]
    %v8432 = vld [vmem:[#allocation13 + $0xe8] sm:$0xf]
    %v8433 = vld [vmem:[#allocation13 + $0xec] sm:$0xf]
    %v8434 = vld [vmem:[#allocation13 + $0xf0] sm:$0xf]
    %v8435 = vld [vmem:[#allocation13 + $0xf4] sm:$0xf]
    %v8436 = vld [vmem:[#allocation13 + $0xf8] sm:$0xf]
    %v8437 = vld [vmem:[#allocation13 + $0xfc] sm:$0xf]
    %v8438 = vld [vmem:[#allocation14] sm:$0x1]
    %v8440 = vlaneseq
    %v8441 = vshrl.u32 %v8440, 7
    %v8442 = vsub.s32 0, %v8441
    %v8443 = vrot.slane %v8438, %v8442
    %v8509 = vunpack.c.l.b16 %v8374
    %v8510 = vunpack.c.l.b16 %v8375
    %v8511 = vunpack.c.l.b16 %v8376
    %v8512 = vunpack.c.l.b16 %v8377
    %v8513 = vunpack.c.l.b16 %v8378
    %v8514 = vunpack.c.l.b16 %v8379
    %v8515 = vunpack.c.l.b16 %v8380
    %v8516 = vunpack.c.l.b16 %v8381
    %v8517 = vunpack.c.l.b16 %v8382
    %v8518 = vunpack.c.l.b16 %v8383
    %v8519 = vunpack.c.l.b16 %v8384
    %v8520 = vunpack.c.l.b16 %v8385
    %v8521 = vunpack.c.l.b16 %v8386
    %v8522 = vunpack.c.l.b16 %v8387
    %v8523 = vunpack.c.l.b16 %v8388
    %v8524 = vunpack.c.l.b16 %v8389
    %v8525 = vunpack.c.l.b16 %v8390
    %v8526 = vunpack.c.l.b16 %v8391
    %v8527 = vunpack.c.l.b16 %v8392
    %v8528 = vunpack.c.l.b16 %v8393
    %v8529 = vunpack.c.l.b16 %v8394
    %v8530 = vunpack.c.l.b16 %v8395
    %v8531 = vunpack.c.l.b16 %v8396
    %v8532 = vunpack.c.l.b16 %v8397
    %v8533 = vunpack.c.l.b16 %v8398
    %v8534 = vunpack.c.l.b16 %v8399
    %v8535 = vunpack.c.l.b16 %v8400
    %v8536 = vunpack.c.l.b16 %v8401
    %v8537 = vunpack.c.l.b16 %v8402
    %v8538 = vunpack.c.l.b16 %v8403
    %v8539 = vunpack.c.l.b16 %v8404
    %v8540 = vunpack.c.l.b16 %v8405
    %v8541 = vunpack.c.l.b16 %v8406
    %v8542 = vunpack.c.l.b16 %v8407
    %v8543 = vunpack.c.l.b16 %v8408
    %v8544 = vunpack.c.l.b16 %v8409
    %v8545 = vunpack.c.l.b16 %v8410
    %v8546 = vunpack.c.l.b16 %v8411
    %v8547 = vunpack.c.l.b16 %v8412
    %v8548 = vunpack.c.l.b16 %v8413
    %v8549 = vunpack.c.l.b16 %v8414
    %v8550 = vunpack.c.l.b16 %v8415
    %v8551 = vunpack.c.l.b16 %v8416
    %v8552 = vunpack.c.l.b16 %v8417
    %v8553 = vunpack.c.l.b16 %v8418
    %v8554 = vunpack.c.l.b16 %v8419
    %v8555 = vunpack.c.l.b16 %v8420
    %v8556 = vunpack.c.l.b16 %v8421
    %v8557 = vunpack.c.l.b16 %v8422
    %v8558 = vunpack.c.l.b16 %v8423
    %v8559 = vunpack.c.l.b16 %v8424
    %v8560 = vunpack.c.l.b16 %v8425
    %v8561 = vunpack.c.l.b16 %v8426
    %v8562 = vunpack.c.l.b16 %v8427
    %v8563 = vunpack.c.l.b16 %v8428
    %v8564 = vunpack.c.l.b16 %v8429
    %v8565 = vunpack.c.l.b16 %v8430
    %v8566 = vunpack.c.l.b16 %v8431
    %v8567 = vunpack.c.l.b16 %v8432
    %v8568 = vunpack.c.l.b16 %v8433
    %v8569 = vunpack.c.l.b16 %v8434
    %v8570 = vunpack.c.l.b16 %v8435
    %v8571 = vunpack.c.l.b16 %v8436
    %v8572 = vunpack.c.l.b16 %v8437
    %v8573 = vpack.c.b16 %v8510, %v8509
    %v8574 = vpack.c.b16 %v8512, %v8511
    %v8575 = vpack.c.b16 %v8514, %v8513
    %v8576 = vpack.c.b16 %v8516, %v8515
    %v8577 = vpack.c.b16 %v8518, %v8517
    %v8578 = vpack.c.b16 %v8520, %v8519
    %v8579 = vpack.c.b16 %v8522, %v8521
    %v8580 = vpack.c.b16 %v8524, %v8523
    %v8581 = vpack.c.b16 %v8526, %v8525
    %v8582 = vpack.c.b16 %v8528, %v8527
    %v8583 = vpack.c.b16 %v8530, %v8529
    %v8584 = vpack.c.b16 %v8532, %v8531
    %v8585 = vpack.c.b16 %v8534, %v8533
    %v8586 = vpack.c.b16 %v8536, %v8535
    %v8587 = vpack.c.b16 %v8538, %v8537
    %v8588 = vpack.c.b16 %v8540, %v8539
    %v8589 = vpack.c.b16 %v8542, %v8541
    %v8590 = vpack.c.b16 %v8544, %v8543
    %v8591 = vpack.c.b16 %v8546, %v8545
    %v8592 = vpack.c.b16 %v8548, %v8547
    %v8593 = vpack.c.b16 %v8550, %v8549
    %v8594 = vpack.c.b16 %v8552, %v8551
    %v8595 = vpack.c.b16 %v8554, %v8553
    %v8596 = vpack.c.b16 %v8556, %v8555
    %v8597 = vpack.c.b16 %v8558, %v8557
    %v8598 = vpack.c.b16 %v8560, %v8559
    %v8599 = vpack.c.b16 %v8562, %v8561
    %v8600 = vpack.c.b16 %v8564, %v8563
    %v8601 = vpack.c.b16 %v8566, %v8565
    %v8602 = vpack.c.b16 %v8568, %v8567
    %v8603 = vpack.c.b16 %v8570, %v8569
    %v8604 = vpack.c.b16 %v8572, %v8571
    %8637 = vmatprep.subr.bf16.mxu0 0
    %8638 = vmatpush1.bf16.msra.mxu0 %v8580
    %8639 = vmatprep.subr.bf16.mxu0 0
    %8640 = vmatpush1.bf16.msra.mxu0 %v8579
    %8641 = vmatprep.subr.bf16.mxu0 0
    %8642 = vmatpush1.bf16.msra.mxu0 %v8578
    %8643 = vmatprep.subr.bf16.mxu0 0
    %8644 = vmatpush1.bf16.msra.mxu0 %v8577
    %8645 = vmatprep.subr.bf16.mxu0 0
    %8646 = vmatpush1.bf16.msra.mxu0 %v8576
    %8647 = vmatprep.subr.bf16.mxu0 0
    %8648 = vmatpush1.bf16.msra.mxu0 %v8575
    %8649 = vmatprep.subr.bf16.mxu0 0
    %8650 = vmatpush1.bf16.msra.mxu0 %v8574
    %8651 = vmatprep.subr.bf16.mxu0 0
    %8652 = vmatpush1.bf16.msra.mxu0 %v8573
    %8653 = vmatprep.subr.bf16.mxu0 0
    %8654 = vmatpush2.bf16.msra.mxu0 %v8588
    %8655 = vmatprep.subr.bf16.mxu0 0
    %8656 = vmatpush2.bf16.msra.mxu0 %v8587
    %8657 = vmatprep.subr.bf16.mxu0 0
    %8658 = vmatpush2.bf16.msra.mxu0 %v8586
    %8659 = vmatprep.subr.bf16.mxu0 0
    %8660 = vmatpush2.bf16.msra.mxu0 %v8585
    %8661 = vmatprep.subr.bf16.mxu0 0
    %8662 = vmatpush2.bf16.msra.mxu0 %v8584
    %8663 = vmatprep.subr.bf16.mxu0 0
    %8664 = vmatpush2.bf16.msra.mxu0 %v8583
    %8665 = vmatprep.subr.bf16.mxu0 0
    %8666 = vmatpush2.bf16.msra.mxu0 %v8582
    %8667 = vmatprep.subr.bf16.mxu0 0
    %8668 = vmatpush2.bf16.msra.mxu0 %v8581
    %8669 = vmatprep.mubr.bf16.mxu0 %v8371
    %8670 = vmatmul.mubr.bf16.gmra.mxu0 %v8370
    %v8671 = vpop.f32.mrf.mxu0
    %v8672 = vadd.f32 %v8443, %v8671
    %v8673 = vpop.f32.mrf.mxu0
    %v8674 = vpop.f32.mrf.mxu0
    %v8675 = vpop.f32.mrf.mxu0
    %8676 = vdwg.mxu0
    %8677 = vmatprep.subr.bf16.mxu0 0
    %8678 = vmatpush1.bf16.msra.mxu0 %v8596
    %8679 = vmatprep.subr.bf16.mxu0 0
    %8680 = vmatpush1.bf16.msra.mxu0 %v8595
    %8681 = vmatprep.subr.bf16.mxu0 0
    %8682 = vmatpush1.bf16.msra.mxu0 %v8594
    %8683 = vmatprep.subr.bf16.mxu0 0
    %8684 = vmatpush1.bf16.msra.mxu0 %v8593
    %8685 = vmatprep.subr.bf16.mxu0 0
    %8686 = vmatpush1.bf16.msra.mxu0 %v8592
    %8687 = vmatprep.subr.bf16.mxu0 0
    %8688 = vmatpush1.bf16.msra.mxu0 %v8591
    %8689 = vmatprep.subr.bf16.mxu0 0
    %8690 = vmatpush1.bf16.msra.mxu0 %v8590
    %8691 = vmatprep.subr.bf16.mxu0 0
    %8692 = vmatpush1.bf16.msra.mxu0 %v8589
    %8693 = vmatprep.subr.bf16.mxu0 0
    %8694 = vmatpush2.bf16.msra.mxu0 %v8604
    %8695 = vmatprep.subr.bf16.mxu0 0
    %8696 = vmatpush2.bf16.msra.mxu0 %v8603
    %8697 = vmatprep.subr.bf16.mxu0 0
    %8698 = vmatpush2.bf16.msra.mxu0 %v8602
    %8699 = vmatprep.subr.bf16.mxu0 0
    %8700 = vmatpush2.bf16.msra.mxu0 %v8601
    %8701 = vmatprep.subr.bf16.mxu0 0
    %8702 = vmatpush2.bf16.msra.mxu0 %v8600
    %8703 = vmatprep.subr.bf16.mxu0 0
    %8704 = vmatpush2.bf16.msra.mxu0 %v8599
    %8705 = vmatprep.subr.bf16.mxu0 0
    %8706 = vmatpush2.bf16.msra.mxu0 %v8598
    %8707 = vmatprep.subr.bf16.mxu0 0
    %8708 = vmatpush2.bf16.msra.mxu0 %v8597
    %8709 = vmatprep.mubr.bf16.mxu0 %v8373
    %8710 = vmatmul.mubr.bf16.gmra.mxu0 %v8372
    %v8711 = vpop.f32.mrf.mxu0
    %v8712 = vadd.f32 %v8672, %v8711
    %v8713 = vpop.f32.mrf.mxu0
    %v8714 = vpop.f32.mrf.mxu0
    %v8715 = vpop.f32.mrf.mxu0
    %8716 = vdwg.mxu0
    %v8717 = vlaneseq
    %v8718 = vand.u32 %v8717, 127
    %vm8719 = vcmp.lt.s32.totalorder %v8718, 10
    %v8720 = vsel %vm8719, %v8712, -1e+30
    %8721 = vmax.xlane.f32.xlu0 %v8720
    %v8722 = vpop.xlane.xlu0 %8721
    %v8723 = vsub.f32 %v8720, %v8722
    %v8724 = vmul.f32 %v8723, 1.442695
    %v8725 = vpow.pop %v8724
    %v8726 = vsel %vm8719, %v8725, 0.0
    %8727 = vadd.xlane.f32.xlu0 %v8726
    %v8728 = vpop.xlane.xlu0 %8727
    %v8729 = vlog2.pop %v8728
    %v8730 = vmul.f32 %v8729, 0.6931472
    %v8731 = vsub.f32 %v8723, %v8730
    %v8732 = vsel %vm8719, %v8731, 0.0
    %8733 = vst [vmem:[%s9] sm:$0xff] %v8732
    // Predicated region
    $region70: #{mnistnet_forward.1} parent=1 // pred_check
      _
    $region71: #{mnistnet_forward.1} parent=1 // pred_check_branch
      %8735 = sbr.rel (0) target = $region73
    $region72: #{mnistnet_forward.1} parent=1 // pred_region
      _
    $region73: #{mnistnet_forward.1} parent=1 // pred_fallthru
      _
    // Predicated region
    $region74: #{mnistnet_forward.1} parent=1 // pred_check
      _
    $region75: #{mnistnet_forward.1} parent=1 // pred_check_branch
      %8737 = sbr.rel (0) target = $region77
    $region76: #{mnistnet_forward.1} parent=1 // pred_region
      _
    $region77: #{mnistnet_forward.1} parent=1 // pred_fallthru
      _
    %8738 = vsyncpa [#allocation4], 1
    %8739 = vsyncpa [#allocation6], 1
    %8740 = vsyncpa [#allocation9], 1
    %8741 = vsyncpa [#allocation12], 1
    %8742 = vsyncpa [#allocation15], 1

</llo_original>
